<compile_context>
chip_gen: v5e
topology: v5e:2x2
jax: 0.10.0
libtpu: 0.0.40
codegen_flags: <defaults>
</compile_context>

<pallas_src>
import functools

import jax
import jax.numpy as jnp
from jax import lax
from jax.experimental import pallas as pl
from jax.experimental.pallas import tpu as pltpu

N_EMBED = 6 * 64                  # 384
N_HEADS = 6
HEAD_SIZE = N_EMBED // N_HEADS    # 64
CONTEXT_LENGTH = 256
LN_EPS = 1e-5


def _vmem_capacity_bytes():
    # Trace-time hardware query; conservative (v7x-sized) fallback.
    try:
        info = pltpu.get_tpu_info()
        return int(getattr(info, "vmem_capacity_bytes", 64 << 20))
    except Exception:
        return 64 << 20


def _layer_norm_f32(x, gamma, beta):
    mu = jnp.mean(x, axis=-1, keepdims=True)
    var = jnp.mean((x - mu) ** 2, axis=-1, keepdims=True)
    return (x - mu) * lax.rsqrt(var + LN_EPS) * gamma + beta


# ---------- fused LN1 + multi-head attention + output proj + residual -------
def _attn_block_kernel(x_ref, g_ref, b_ref, wqkv_ref, wproj_ref, bproj_ref,
                       o_ref, *, n_heads):
    Bblk, T, C = x_ref.shape
    hs = C // n_heads

    gamma = g_ref[...]
    beta = b_ref[...]
    bproj = bproj_ref[...]
    wqkv = wqkv_ref[...]          # (C, 3C) bf16, Q columns pre-scaled
    wproj = wproj_ref[...]        # (C, C)  bf16

    row = lax.broadcasted_iota(jnp.int32, (T, T), 0)
    col = lax.broadcasted_iota(jnp.int32, (T, T), 1)
    causal = col <= row           # diagonal always unmasked -> no NaN rows

    for b in range(Bblk):         # Bblk is a compile-time constant
        x = x_ref[b].astype(jnp.float32)                      # (T, C)
        xn = _layer_norm_f32(x, gamma, beta)

        # one wide QKV matmul: (T, C) @ (C, 3C); cast to bf16 exactly once
        qkv = jnp.dot(xn.astype(jnp.bfloat16), wqkv,
                      preferred_element_type=jnp.float32).astype(jnp.bfloat16)

        outs = []
        for h in range(n_heads):
            q = qkv[:, h * hs:(h + 1) * hs]
            k = qkv[:, C + h * hs:C + (h + 1) * hs]
            v = qkv[:, 2 * C + h * hs:2 * C + (h + 1) * hs]

            # q @ k^T via dot_general (contract last dims) — no explicit k^T;
            # the n_embed**-0.5 scale is already folded into the Q weights.
            wei = lax.dot_general(q, k, (((1,), (1,)), ((), ())),
                                  preferred_element_type=jnp.float32)
            wei = jnp.where(causal, wei, -jnp.inf)
            wei = wei - jnp.max(wei, axis=-1, keepdims=True)
            p = jnp.exp(wei)
            p = p * pl.reciprocal(jnp.sum(p, axis=-1, keepdims=True),
                                  approx=True)
            outs.append(jnp.dot(p.astype(jnp.bfloat16), v,
                                preferred_element_type=jnp.float32))

        # concat heads -> single K=384 output projection (fills MXU K dim)
        heads = jnp.concatenate(outs, axis=-1).astype(jnp.bfloat16)   # (T, C)
        y = jnp.dot(heads, wproj, preferred_element_type=jnp.float32)
        o_ref[b] = (x + y + bproj).astype(o_ref.dtype)    # lane-dense store


def _pick_bblk(B, T):
    """Batch elements per attention grid step.

    Targets ~256 MXU rows per step while keeping >= 2 grid steps whenever
    B >= 2 so both v7x TensorCores get work.
    """
    if B <= 1:
        return 1
    target = max(1, 256 // T)
    best = 1
    for d in range(1, B + 1):
        if B % d == 0 and d <= target and B // d >= 2:
            best = d
    return best


def attn_block(x, ln_g, ln_b, w_qkv, w_proj, b_proj, *, n_heads):
    B, T, C = x.shape
    bblk = _pick_bblk(B, T)
    kernel = functools.partial(_attn_block_kernel, n_heads=n_heads)
    return pl.pallas_call(
        kernel,
        out_shape=jax.ShapeDtypeStruct((B, T, C), x.dtype),
        grid_spec=pltpu.PrefetchScalarGridSpec(
            num_scalar_prefetch=0,
            grid=(B // bblk,),
            in_specs=[
                pl.BlockSpec((bblk, T, C), lambda b: (b, 0, 0)),
                pl.BlockSpec((1, C), lambda b: (0, 0)),
                pl.BlockSpec((1, C), lambda b: (0, 0)),
                pl.BlockSpec((C, 3 * C), lambda b: (0, 0)),
                pl.BlockSpec((C, C), lambda b: (0, 0)),
                pl.BlockSpec((1, C), lambda b: (0, 0)),
            ],
            out_specs=pl.BlockSpec((bblk, T, C), lambda b: (b, 0, 0)),
        ),
        compiler_params=pltpu.CompilerParams(
            dimension_semantics=("parallel",)),
    )(x, ln_g.reshape(1, C), ln_b.reshape(1, C), w_qkv, w_proj,
      b_proj.reshape(1, C))


# -------------------- fused LN2 + FFN (MLP) + residual -----------------------
def _ffn_block_kernel(x_ref, g_ref, b_ref, w1_ref, b1_ref, w2_ref, b2_ref,
                      o_ref):
    x = x_ref[...].astype(jnp.float32)                    # (TR, C)
    xn = _layer_norm_f32(x, g_ref[...], b_ref[...])
    h = jnp.dot(xn.astype(jnp.bfloat16), w1_ref[...],
                preferred_element_type=jnp.float32) + b1_ref[...]
    h = jnp.maximum(h, 0.0)                               # ReLU
    y = jnp.dot(h.astype(jnp.bfloat16), w2_ref[...],
                preferred_element_type=jnp.float32) + b2_ref[...]
    o_ref[...] = (x + y).astype(o_ref.dtype)


def _row_tile(R, vmem_bytes):
    # Largest (8,128)-friendly row tile dividing R. Cap per generation:
    # <= 512 on 64 MiB-VMEM parts (v7x), up to 1024 on 128 MiB parts (v5e/v6e).
    cap = 1024 if vmem_bytes >= (100 << 20) else 512
    for cand in (1024, 512, 256, 128, 64, 32, 16, 8):
        if cand <= cap and R % cand == 0:
            return cand
    return R   # full-array block (always legal)


def ffn_block(x2d, ln_g, ln_b, w1, b1, w2, b2):
    R, C = x2d.shape
    Hid = w1.shape[1]
    vmem_bytes = _vmem_capacity_bytes()
    tr = _row_tile(R, vmem_bytes)
    vmem_limit = min(int(vmem_bytes * 3 // 4), 96 << 20)
    return pl.pallas_call(
        _ffn_block_kernel,
        out_shape=jax.ShapeDtypeStruct((R, C), x2d.dtype),
        grid_spec=pltpu.PrefetchScalarGridSpec(
            num_scalar_prefetch=0,
            grid=(R // tr,),
            in_specs=[
                pl.BlockSpec((tr, C), lambda i: (i, 0)),
                pl.BlockSpec((1, C), lambda i: (0, 0)),
                pl.BlockSpec((1, C), lambda i: (0, 0)),
                pl.BlockSpec((C, Hid), lambda i: (0, 0)),
                pl.BlockSpec((1, Hid), lambda i: (0, 0)),
                pl.BlockSpec((Hid, C), lambda i: (0, 0)),
                pl.BlockSpec((1, C), lambda i: (0, 0)),
            ],
            out_specs=pl.BlockSpec((tr, C), lambda i: (i, 0)),
        ),
        compiler_params=pltpu.CompilerParams(
            dimension_semantics=("parallel",),
            vmem_limit_bytes=vmem_limit),
    )(x2d, ln_g.reshape(1, C), ln_b.reshape(1, C), w1, b1.reshape(1, Hid),
      w2, b2.reshape(1, C))


# ------------------------------ Block forward -------------------------------
def block_forward(x, p):
    B, T, C = x.shape
    H = p["wq"].shape[0]
    scale = float(C) ** (-0.5)   # PyTorch Head scales by n_embed**-0.5

    # Fuse per-head Q/K/V weights into one (C, 3C) bf16 matrix:
    # columns [0:C)=Q (head-major, pre-scaled), [C:2C)=K, [2C:3C)=V.
    def _stack(w):           # (H, C, hs) -> (C, H*hs)
        return jnp.transpose(w, (1, 0, 2)).reshape(C, -1)

    w_qkv = jnp.concatenate(
        [_stack(p["wq"] * scale), _stack(p["wk"]), _stack(p["wv"])], axis=1
    ).astype(jnp.bfloat16)
    w_proj = p["w_proj"].astype(jnp.bfloat16)
    w1 = p["w1"].astype(jnp.bfloat16)
    w2 = p["w2"].astype(jnp.bfloat16)

    # x = x + proj(concat_heads(attn(ln1(x)))) + b_proj   (fused kernel 1)
    x = attn_block(x, p["ln1_g"], p["ln1_b"], w_qkv, w_proj, p["b_proj"],
                   n_heads=H)

    # x = x + W2 @ relu(W1 @ ln2(x) + b1) + b2            (fused kernel 2)
    x2d = ffn_block(x.reshape(B * T, C), p["ln2_g"], p["ln2_b"],
                    w1, p["b1"], w2, p["b2"])
    return x2d.reshape(B, T, C)


# ----------------------------- pure-JAX reference ----------------------------
def ref_block(x, p):
    def ln(v, g, b):
        mu = v.mean(-1, keepdims=True)
        var = ((v - mu) ** 2).mean(-1, keepdims=True)
        return (v - mu) / jnp.sqrt(var + LN_EPS) * g + b

    B, T, C = x.shape
    h = ln(x, p["ln1_g"], p["ln1_b"])
    outs = []
    mask = jnp.tril(jnp.ones((T, T), dtype=bool))
    for i in range(N_HEADS):
        q = h @ p["wq"][i]
        k = h @ p["wk"][i]
        v = h @ p["wv"][i]
        wei = (q @ jnp.swapaxes(k, -1, -2)) * (float(C) ** -0.5)
        wei = jnp.where(mask, wei, -jnp.inf)
        wei = jax.nn.softmax(wei, axis=-1)
        outs.append(wei @ v)
    cat = jnp.concatenate(outs, axis=-1)
    x = x + cat @ p["w_proj"] + p["b_proj"]
    h2 = ln(x, p["ln2_g"], p["ln2_b"])
    x = x + jnp.maximum(h2 @ p["w1"] + p["b1"], 0.0) @ p["w2"] + p["b2"]
    return x


# ------------------------------ parameter init -------------------------------
def init_params(key, n_embed, n_heads):
    hs = n_embed // n_heads
    ks = jax.random.split(key, 8)
    s = 0.02
    return {
        "ln1_g": jnp.ones((n_embed,), jnp.float32),
        "ln1_b": jnp.zeros((n_embed,), jnp.float32),
        "ln2_g": jnp.ones((n_embed,), jnp.float32),
        "ln2_b": jnp.zeros((n_embed,), jnp.float32),
        # per-head Q/K/V projections (no bias), stored as (H, in, out)
        "wq": jax.random.normal(ks[0], (n_heads, n_embed, hs), jnp.float32) * s,
        "wk": jax.random.normal(ks[1], (n_heads, n_embed, hs), jnp.float32) * s,
        "wv": jax.random.normal(ks[2], (n_heads, n_embed, hs), jnp.float32) * s,
        # output projection (stored as (in, out), i.e. transposed vs torch)
        "w_proj": jax.random.normal(ks[3], (n_embed, n_embed), jnp.float32) * s,
        "b_proj": jax.random.normal(ks[4], (n_embed,), jnp.float32) * s,
        # feed-forward
        "w1": jax.random.normal(ks[5], (n_embed, 4 * n_embed), jnp.float32) * s,
        "b1": jnp.zeros((4 * n_embed,), jnp.float32),
        "w2": jax.random.normal(ks[6], (4 * n_embed, n_embed), jnp.float32) * s,
        "b2": jnp.zeros((n_embed,), jnp.float32),
    }


if __name__ == "__main__":
    key = jax.random.PRNGKey(0)
    k_x, k_p = jax.random.split(key)

    B, T, C = 2, 32, N_EMBED   # T <= context_length
    x = jax.random.normal(k_x, (B, T, C), jnp.float32)
    params = init_params(k_p, N_EMBED, N_HEADS)

    out = jax.block_until_ready(jax.jit(block_forward)(x, params))
    ref = jax.block_until_ready(jax.jit(ref_block)(x, params))

    assert out.shape == (B, T, C)
    max_err = float(jnp.max(jnp.abs(out - ref)))
    assert max_err < 2e-2, f"mismatch vs reference: {max_err}"

    print("KERNEL_OK")
</pallas_src>

<mosaic_0001>
module attributes {stable_mosaic.version = 11 : i64} {
  func.func @_attn_block_kernel(%arg0: i32, %arg1: memref<1x32x384xf32, #tpu.memory_space<vmem>>, %arg2: memref<1x384xf32, #tpu.memory_space<vmem>>, %arg3: memref<1x384xf32, #tpu.memory_space<vmem>>, %arg4: memref<384x1152xbf16, #tpu.memory_space<vmem>>, %arg5: memref<384x384xbf16, #tpu.memory_space<vmem>>, %arg6: memref<1x384xf32, #tpu.memory_space<vmem>>, %arg7: memref<1x32x384xf32, #tpu.memory_space<vmem>>) attributes {dimension_semantics = [#tpu.dimension_semantics<parallel>], iteration_bounds = array<i64: 2>, scalar_prefetch = 0 : i64, scratch_operands = 0 : i64, tpu.core_type = #tpu.core_type<tc>, window_params = [{transform_indices = @transform_0, window_bounds = array<i64: 1, 32, 384>}, {pipeline_mode = #tpu.pipeline_mode<synchronous>, transform_indices = @transform_1, window_bounds = array<i64: 1, 384>}, {pipeline_mode = #tpu.pipeline_mode<synchronous>, transform_indices = @transform_2, window_bounds = array<i64: 1, 384>}, {pipeline_mode = #tpu.pipeline_mode<synchronous>, transform_indices = @transform_3, window_bounds = array<i64: 384, 1152>}, {pipeline_mode = #tpu.pipeline_mode<synchronous>, transform_indices = @transform_4, window_bounds = array<i64: 384, 384>}, {pipeline_mode = #tpu.pipeline_mode<synchronous>, transform_indices = @transform_5, window_bounds = array<i64: 1, 384>}, {transform_indices = @transform_6, window_bounds = array<i64: 1, 32, 384>}]} {
    %c0 = arith.constant 0 : index
    %c0_0 = arith.constant 0 : index
    %0 = vector.load %arg2[%c0, %c0_0] : memref<1x384xf32, #tpu.memory_space<vmem>>, vector<1x384xf32>
    %c0_1 = arith.constant 0 : index
    %c0_2 = arith.constant 0 : index
    %1 = vector.load %arg3[%c0_1, %c0_2] : memref<1x384xf32, #tpu.memory_space<vmem>>, vector<1x384xf32>
    %c0_3 = arith.constant 0 : index
    %c0_4 = arith.constant 0 : index
    %2 = vector.load %arg6[%c0_3, %c0_4] : memref<1x384xf32, #tpu.memory_space<vmem>>, vector<1x384xf32>
    %c0_5 = arith.constant 0 : index
    %c0_6 = arith.constant 0 : index
    %3 = vector.load %arg4[%c0_5, %c0_6] : memref<384x1152xbf16, #tpu.memory_space<vmem>>, vector<384x1152xbf16>
    %c0_7 = arith.constant 0 : index
    %c0_8 = arith.constant 0 : index
    %4 = vector.load %arg5[%c0_7, %c0_8] : memref<384x384xbf16, #tpu.memory_space<vmem>>, vector<384x384xbf16>
    %5 = tpu.iota {dimensions = array<i32: 0>} : vector<32x32xi32>
    %6 = tpu.iota {dimensions = array<i32: 1>} : vector<32x32xi32>
    %7 = arith.cmpi sle, %6, %5 : vector<32x32xi32>
    %c0_9 = arith.constant 0 : index
    %c0_10 = arith.constant 0 : index
    %c0_11 = arith.constant 0 : index
    %8 = vector.load %arg1[%c0_9, %c0_10, %c0_11] : memref<1x32x384xf32, #tpu.memory_space<vmem>>, vector<1x32x384xf32>
    %9 = vector.shape_cast %8 : vector<1x32x384xf32> to vector<32x384xf32>
    %cst = arith.constant dense<0.000000e+00> : vector<32xf32>
    %10 = vector.multi_reduction <add>, %9, %cst [1] : vector<32x384xf32> to vector<32xf32>
    %11 = vector.shape_cast %10 : vector<32xf32> to vector<32x1xf32>
    %cst_12 = arith.constant 3.840000e+02 : f32
    %12 = vector.broadcast %cst_12 : f32 to vector<32x1xf32>
    %13 = arith.divf %11, %12 : vector<32x1xf32>
    %14 = vector.broadcast %13 : vector<32x1xf32> to vector<32x384xf32>
    %15 = arith.subf %9, %14 : vector<32x384xf32>
    %16 = arith.mulf %15, %15 : vector<32x384xf32>
    %cst_13 = arith.constant dense<0.000000e+00> : vector<32xf32>
    %17 = vector.multi_reduction <add>, %16, %cst_13 [1] : vector<32x384xf32> to vector<32xf32>
    %18 = vector.shape_cast %17 : vector<32xf32> to vector<32x1xf32>
    %cst_14 = arith.constant 3.840000e+02 : f32
    %19 = vector.broadcast %cst_14 : f32 to vector<32x1xf32>
    %20 = arith.divf %18, %19 : vector<32x1xf32>
    %21 = vector.broadcast %13 : vector<32x1xf32> to vector<32x384xf32>
    %22 = arith.subf %9, %21 : vector<32x384xf32>
    %cst_15 = arith.constant 9.99999974E-6 : f32
    %23 = vector.broadcast %cst_15 : f32 to vector<32x1xf32>
    %24 = arith.addf %20, %23 : vector<32x1xf32>
    %25 = math.rsqrt %24 : vector<32x1xf32>
    %26 = vector.broadcast %25 : vector<32x1xf32> to vector<32x384xf32>
    %27 = arith.mulf %22, %26 : vector<32x384xf32>
    %28 = vector.broadcast %0 : vector<1x384xf32> to vector<32x384xf32>
    %29 = arith.mulf %27, %28 : vector<32x384xf32>
    %30 = vector.broadcast %1 : vector<1x384xf32> to vector<32x384xf32>
    %31 = arith.addf %29, %30 : vector<32x384xf32>
    %32 = arith.truncf %31 : vector<32x384xf32> to vector<32x384xbf16>
    %cst_16 = arith.constant dense<0.000000e+00> : vector<32x1152xf32>
    %33 = tpu.matmul %32, %3, %cst_16 {dimension_numbers = #tpu.dot_dimension_numbers<[1], [0], [0], [1], [0, 0, 1, 1], [], []>} : vector<32x384xbf16>, vector<384x1152xbf16>, vector<32x1152xf32> -> vector<32x1152xf32>
    %34 = arith.truncf %33 : vector<32x1152xf32> to vector<32x1152xbf16>
    %35 = vector.extract_strided_slice %34 {offsets = [0, 0], sizes = [32, 64], strides = [1, 1]} : vector<32x1152xbf16> to vector<32x64xbf16>
    %36 = vector.extract_strided_slice %34 {offsets = [0, 384], sizes = [32, 64], strides = [1, 1]} : vector<32x1152xbf16> to vector<32x64xbf16>
    %37 = vector.extract_strided_slice %34 {offsets = [0, 768], sizes = [32, 64], strides = [1, 1]} : vector<32x1152xbf16> to vector<32x64xbf16>
    %cst_17 = arith.constant dense<0.000000e+00> : vector<32x32xf32>
    %38 = tpu.matmul %35, %36, %cst_17 {dimension_numbers = #tpu.dot_dimension_numbers<[1], [1], [0], [0], [0, 0, 1, 0], [], []>} : vector<32x64xbf16>, vector<32x64xbf16>, vector<32x32xf32> -> vector<32x32xf32>
    %cst_18 = arith.constant 0xFF800000 : f32
    %39 = vector.broadcast %cst_18 : f32 to vector<32x32xf32>
    %40 = arith.select %7, %38, %39 : vector<32x32xi1>, vector<32x32xf32>
    %cst_19 = arith.constant dense<0xFF800000> : vector<32xf32>
    %41 = vector.multi_reduction <maximumf>, %40, %cst_19 [1] : vector<32x32xf32> to vector<32xf32>
    %42 = vector.shape_cast %41 : vector<32xf32> to vector<32x1xf32>
    %43 = vector.broadcast %42 : vector<32x1xf32> to vector<32x32xf32>
    %44 = arith.subf %40, %43 : vector<32x32xf32>
    %45 = math.exp %44 : vector<32x32xf32>
    %cst_20 = arith.constant dense<0.000000e+00> : vector<32xf32>
    %46 = vector.multi_reduction <add>, %45, %cst_20 [1] : vector<32x32xf32> to vector<32xf32>
    %47 = vector.shape_cast %46 : vector<32xf32> to vector<32x1xf32>
    %48 = tpu.reciprocal %47 {approx = true} : vector<32x1xf32> -> vector<32x1xf32>
    %49 = vector.broadcast %48 : vector<32x1xf32> to vector<32x32xf32>
    %50 = arith.mulf %45, %49 : vector<32x32xf32>
    %51 = arith.truncf %50 : vector<32x32xf32> to vector<32x32xbf16>
    %cst_21 = arith.constant dense<0.000000e+00> : vector<32x64xf32>
    %52 = tpu.matmul %51, %37, %cst_21 {dimension_numbers = #tpu.dot_dimension_numbers<[1], [0], [0], [1], [0, 0, 1, 1], [], []>} : vector<32x32xbf16>, vector<32x64xbf16>, vector<32x64xf32> -> vector<32x64xf32>
    %53 = vector.extract_strided_slice %34 {offsets = [0, 64], sizes = [32, 64], strides = [1, 1]} : vector<32x1152xbf16> to vector<32x64xbf16>
    %54 = vector.extract_strided_slice %34 {offsets = [0, 448], sizes = [32, 64], strides = [1, 1]} : vector<32x1152xbf16> to vector<32x64xbf16>
    %55 = vector.extract_strided_slice %34 {offsets = [0, 832], sizes = [32, 64], strides = [1, 1]} : vector<32x1152xbf16> to vector<32x64xbf16>
    %cst_22 = arith.constant dense<0.000000e+00> : vector<32x32xf32>
    %56 = tpu.matmul %53, %54, %cst_22 {dimension_numbers = #tpu.dot_dimension_numbers<[1], [1], [0], [0], [0, 0, 1, 0], [], []>} : vector<32x64xbf16>, vector<32x64xbf16>, vector<32x32xf32> -> vector<32x32xf32>
    %cst_23 = arith.constant 0xFF800000 : f32
    %57 = vector.broadcast %cst_23 : f32 to vector<32x32xf32>
    %58 = arith.select %7, %56, %57 : vector<32x32xi1>, vector<32x32xf32>
    %cst_24 = arith.constant dense<0xFF800000> : vector<32xf32>
    %59 = vector.multi_reduction <maximumf>, %58, %cst_24 [1] : vector<32x32xf32> to vector<32xf32>
    %60 = vector.shape_cast %59 : vector<32xf32> to vector<32x1xf32>
    %61 = vector.broadcast %60 : vector<32x1xf32> to vector<32x32xf32>
    %62 = arith.subf %58, %61 : vector<32x32xf32>
    %63 = math.exp %62 : vector<32x32xf32>
    %cst_25 = arith.constant dense<0.000000e+00> : vector<32xf32>
    %64 = vector.multi_reduction <add>, %63, %cst_25 [1] : vector<32x32xf32> to vector<32xf32>
    %65 = vector.shape_cast %64 : vector<32xf32> to vector<32x1xf32>
    %66 = tpu.reciprocal %65 {approx = true} : vector<32x1xf32> -> vector<32x1xf32>
    %67 = vector.broadcast %66 : vector<32x1xf32> to vector<32x32xf32>
    %68 = arith.mulf %63, %67 : vector<32x32xf32>
    %69 = arith.truncf %68 : vector<32x32xf32> to vector<32x32xbf16>
    %cst_26 = arith.constant dense<0.000000e+00> : vector<32x64xf32>
    %70 = tpu.matmul %69, %55, %cst_26 {dimension_numbers = #tpu.dot_dimension_numbers<[1], [0], [0], [1], [0, 0, 1, 1], [], []>} : vector<32x32xbf16>, vector<32x64xbf16>, vector<32x64xf32> -> vector<32x64xf32>
    %71 = vector.extract_strided_slice %34 {offsets = [0, 128], sizes = [32, 64], strides = [1, 1]} : vector<32x1152xbf16> to vector<32x64xbf16>
    %72 = vector.extract_strided_slice %34 {offsets = [0, 512], sizes = [32, 64], strides = [1, 1]} : vector<32x1152xbf16> to vector<32x64xbf16>
    %73 = vector.extract_strided_slice %34 {offsets = [0, 896], sizes = [32, 64], strides = [1, 1]} : vector<32x1152xbf16> to vector<32x64xbf16>
    %cst_27 = arith.constant dense<0.000000e+00> : vector<32x32xf32>
    %74 = tpu.matmul %71, %72, %cst_27 {dimension_numbers = #tpu.dot_dimension_numbers<[1], [1], [0], [0], [0, 0, 1, 0], [], []>} : vector<32x64xbf16>, vector<32x64xbf16>, vector<32x32xf32> -> vector<32x32xf32>
    %cst_28 = arith.constant 0xFF800000 : f32
    %75 = vector.broadcast %cst_28 : f32 to vector<32x32xf32>
    %76 = arith.select %7, %74, %75 : vector<32x32xi1>, vector<32x32xf32>
    %cst_29 = arith.constant dense<0xFF800000> : vector<32xf32>
    %77 = vector.multi_reduction <maximumf>, %76, %cst_29 [1] : vector<32x32xf32> to vector<32xf32>
    %78 = vector.shape_cast %77 : vector<32xf32> to vector<32x1xf32>
    %79 = vector.broadcast %78 : vector<32x1xf32> to vector<32x32xf32>
    %80 = arith.subf %76, %79 : vector<32x32xf32>
    %81 = math.exp %80 : vector<32x32xf32>
    %cst_30 = arith.constant dense<0.000000e+00> : vector<32xf32>
    %82 = vector.multi_reduction <add>, %81, %cst_30 [1] : vector<32x32xf32> to vector<32xf32>
    %83 = vector.shape_cast %82 : vector<32xf32> to vector<32x1xf32>
    %84 = tpu.reciprocal %83 {approx = true} : vector<32x1xf32> -> vector<32x1xf32>
    %85 = vector.broadcast %84 : vector<32x1xf32> to vector<32x32xf32>
    %86 = arith.mulf %81, %85 : vector<32x32xf32>
    %87 = arith.truncf %86 : vector<32x32xf32> to vector<32x32xbf16>
    %cst_31 = arith.constant dense<0.000000e+00> : vector<32x64xf32>
    %88 = tpu.matmul %87, %73, %cst_31 {dimension_numbers = #tpu.dot_dimension_numbers<[1], [0], [0], [1], [0, 0, 1, 1], [], []>} : vector<32x32xbf16>, vector<32x64xbf16>, vector<32x64xf32> -> vector<32x64xf32>
    %89 = vector.extract_strided_slice %34 {offsets = [0, 192], sizes = [32, 64], strides = [1, 1]} : vector<32x1152xbf16> to vector<32x64xbf16>
    %90 = vector.extract_strided_slice %34 {offsets = [0, 576], sizes = [32, 64], strides = [1, 1]} : vector<32x1152xbf16> to vector<32x64xbf16>
    %91 = vector.extract_strided_slice %34 {offsets = [0, 960], sizes = [32, 64], strides = [1, 1]} : vector<32x1152xbf16> to vector<32x64xbf16>
    %cst_32 = arith.constant dense<0.000000e+00> : vector<32x32xf32>
    %92 = tpu.matmul %89, %90, %cst_32 {dimension_numbers = #tpu.dot_dimension_numbers<[1], [1], [0], [0], [0, 0, 1, 0], [], []>} : vector<32x64xbf16>, vector<32x64xbf16>, vector<32x32xf32> -> vector<32x32xf32>
    %cst_33 = arith.constant 0xFF800000 : f32
    %93 = vector.broadcast %cst_33 : f32 to vector<32x32xf32>
    %94 = arith.select %7, %92, %93 : vector<32x32xi1>, vector<32x32xf32>
    %cst_34 = arith.constant dense<0xFF800000> : vector<32xf32>
    %95 = vector.multi_reduction <maximumf>, %94, %cst_34 [1] : vector<32x32xf32> to vector<32xf32>
    %96 = vector.shape_cast %95 : vector<32xf32> to vector<32x1xf32>
    %97 = vector.broadcast %96 : vector<32x1xf32> to vector<32x32xf32>
    %98 = arith.subf %94, %97 : vector<32x32xf32>
    %99 = math.exp %98 : vector<32x32xf32>
    %cst_35 = arith.constant dense<0.000000e+00> : vector<32xf32>
    %100 = vector.multi_reduction <add>, %99, %cst_35 [1] : vector<32x32xf32> to vector<32xf32>
    %101 = vector.shape_cast %100 : vector<32xf32> to vector<32x1xf32>
    %102 = tpu.reciprocal %101 {approx = true} : vector<32x1xf32> -> vector<32x1xf32>
    %103 = vector.broadcast %102 : vector<32x1xf32> to vector<32x32xf32>
    %104 = arith.mulf %99, %103 : vector<32x32xf32>
    %105 = arith.truncf %104 : vector<32x32xf32> to vector<32x32xbf16>
    %cst_36 = arith.constant dense<0.000000e+00> : vector<32x64xf32>
    %106 = tpu.matmul %105, %91, %cst_36 {dimension_numbers = #tpu.dot_dimension_numbers<[1], [0], [0], [1], [0, 0, 1, 1], [], []>} : vector<32x32xbf16>, vector<32x64xbf16>, vector<32x64xf32> -> vector<32x64xf32>
    %107 = vector.extract_strided_slice %34 {offsets = [0, 256], sizes = [32, 64], strides = [1, 1]} : vector<32x1152xbf16> to vector<32x64xbf16>
    %108 = vector.extract_strided_slice %34 {offsets = [0, 640], sizes = [32, 64], strides = [1, 1]} : vector<32x1152xbf16> to vector<32x64xbf16>
    %109 = vector.extract_strided_slice %34 {offsets = [0, 1024], sizes = [32, 64], strides = [1, 1]} : vector<32x1152xbf16> to vector<32x64xbf16>
    %cst_37 = arith.constant dense<0.000000e+00> : vector<32x32xf32>
    %110 = tpu.matmul %107, %108, %cst_37 {dimension_numbers = #tpu.dot_dimension_numbers<[1], [1], [0], [0], [0, 0, 1, 0], [], []>} : vector<32x64xbf16>, vector<32x64xbf16>, vector<32x32xf32> -> vector<32x32xf32>
    %cst_38 = arith.constant 0xFF800000 : f32
    %111 = vector.broadcast %cst_38 : f32 to vector<32x32xf32>
    %112 = arith.select %7, %110, %111 : vector<32x32xi1>, vector<32x32xf32>
    %cst_39 = arith.constant dense<0xFF800000> : vector<32xf32>
    %113 = vector.multi_reduction <maximumf>, %112, %cst_39 [1] : vector<32x32xf32> to vector<32xf32>
    %114 = vector.shape_cast %113 : vector<32xf32> to vector<32x1xf32>
    %115 = vector.broadcast %114 : vector<32x1xf32> to vector<32x32xf32>
    %116 = arith.subf %112, %115 : vector<32x32xf32>
    %117 = math.exp %116 : vector<32x32xf32>
    %cst_40 = arith.constant dense<0.000000e+00> : vector<32xf32>
    %118 = vector.multi_reduction <add>, %117, %cst_40 [1] : vector<32x32xf32> to vector<32xf32>
    %119 = vector.shape_cast %118 : vector<32xf32> to vector<32x1xf32>
    %120 = tpu.reciprocal %119 {approx = true} : vector<32x1xf32> -> vector<32x1xf32>
    %121 = vector.broadcast %120 : vector<32x1xf32> to vector<32x32xf32>
    %122 = arith.mulf %117, %121 : vector<32x32xf32>
    %123 = arith.truncf %122 : vector<32x32xf32> to vector<32x32xbf16>
    %cst_41 = arith.constant dense<0.000000e+00> : vector<32x64xf32>
    %124 = tpu.matmul %123, %109, %cst_41 {dimension_numbers = #tpu.dot_dimension_numbers<[1], [0], [0], [1], [0, 0, 1, 1], [], []>} : vector<32x32xbf16>, vector<32x64xbf16>, vector<32x64xf32> -> vector<32x64xf32>
    %125 = vector.extract_strided_slice %34 {offsets = [0, 320], sizes = [32, 64], strides = [1, 1]} : vector<32x1152xbf16> to vector<32x64xbf16>
    %126 = vector.extract_strided_slice %34 {offsets = [0, 704], sizes = [32, 64], strides = [1, 1]} : vector<32x1152xbf16> to vector<32x64xbf16>
    %127 = vector.extract_strided_slice %34 {offsets = [0, 1088], sizes = [32, 64], strides = [1, 1]} : vector<32x1152xbf16> to vector<32x64xbf16>
    %cst_42 = arith.constant dense<0.000000e+00> : vector<32x32xf32>
    %128 = tpu.matmul %125, %126, %cst_42 {dimension_numbers = #tpu.dot_dimension_numbers<[1], [1], [0], [0], [0, 0, 1, 0], [], []>} : vector<32x64xbf16>, vector<32x64xbf16>, vector<32x32xf32> -> vector<32x32xf32>
    %cst_43 = arith.constant 0xFF800000 : f32
    %129 = vector.broadcast %cst_43 : f32 to vector<32x32xf32>
    %130 = arith.select %7, %128, %129 : vector<32x32xi1>, vector<32x32xf32>
    %cst_44 = arith.constant dense<0xFF800000> : vector<32xf32>
    %131 = vector.multi_reduction <maximumf>, %130, %cst_44 [1] : vector<32x32xf32> to vector<32xf32>
    %132 = vector.shape_cast %131 : vector<32xf32> to vector<32x1xf32>
    %133 = vector.broadcast %132 : vector<32x1xf32> to vector<32x32xf32>
    %134 = arith.subf %130, %133 : vector<32x32xf32>
    %135 = math.exp %134 : vector<32x32xf32>
    %cst_45 = arith.constant dense<0.000000e+00> : vector<32xf32>
    %136 = vector.multi_reduction <add>, %135, %cst_45 [1] : vector<32x32xf32> to vector<32xf32>
    %137 = vector.shape_cast %136 : vector<32xf32> to vector<32x1xf32>
    %138 = tpu.reciprocal %137 {approx = true} : vector<32x1xf32> -> vector<32x1xf32>
    %139 = vector.broadcast %138 : vector<32x1xf32> to vector<32x32xf32>
    %140 = arith.mulf %135, %139 : vector<32x32xf32>
    %141 = arith.truncf %140 : vector<32x32xf32> to vector<32x32xbf16>
    %cst_46 = arith.constant dense<0.000000e+00> : vector<32x64xf32>
    %142 = tpu.matmul %141, %127, %cst_46 {dimension_numbers = #tpu.dot_dimension_numbers<[1], [0], [0], [1], [0, 0, 1, 1], [], []>} : vector<32x32xbf16>, vector<32x64xbf16>, vector<32x64xf32> -> vector<32x64xf32>
    %143 = tpu.concatenate %52, %70, %88, %106, %124, %142 in 1 : vector<32x64xf32>, vector<32x64xf32>, vector<32x64xf32>, vector<32x64xf32>, vector<32x64xf32>, vector<32x64xf32> -> vector<32x384xf32>
    %144 = arith.truncf %143 : vector<32x384xf32> to vector<32x384xbf16>
    %cst_47 = arith.constant dense<0.000000e+00> : vector<32x384xf32>
    %145 = tpu.matmul %144, %4, %cst_47 {dimension_numbers = #tpu.dot_dimension_numbers<[1], [0], [0], [1], [0, 0, 1, 1], [], []>} : vector<32x384xbf16>, vector<384x384xbf16>, vector<32x384xf32> -> vector<32x384xf32>
    %146 = arith.addf %9, %145 : vector<32x384xf32>
    %147 = vector.broadcast %2 : vector<1x384xf32> to vector<32x384xf32>
    %148 = arith.addf %146, %147 : vector<32x384xf32>
    %c0_48 = arith.constant 0 : index
    %c0_49 = arith.constant 0 : index
    %c0_50 = arith.constant 0 : index
    %149 = vector.load %arg7[%c0_48, %c0_49, %c0_50] : memref<1x32x384xf32, #tpu.memory_space<vmem>>, vector<1x32x384xf32>
    %150 = vector.shape_cast %149 : vector<1x32x384xf32> to vector<32x384xf32>
    %151 = vector.shape_cast %148 : vector<32x384xf32> to vector<1x32x384xf32>
    tpu.vector_store %arg7[%c0_48, %c0_49, %c0_50], %151 {strides = array<i32>} : memref<1x32x384xf32, #tpu.memory_space<vmem>>, vector<1x32x384xf32>,
    return
  }
  func.func @transform_0(%arg0: i32) -> (i32, i32, i32) {
    %c0_i32 = arith.constant 0 : i32
    %c0_i32_0 = arith.constant 0 : i32
    %c0_i32_1 = arith.constant 0 : i32
    return %arg0, %c0_i32, %c0_i32_0 : i32, i32, i32
  }
  func.func @transform_1(%arg0: i32) -> (i32, i32) {
    %c0_i32 = arith.constant 0 : i32
    %c0_i32_0 = arith.constant 0 : i32
    %c0_i32_1 = arith.constant 0 : i32
    return %c0_i32, %c0_i32_0 : i32, i32
  }
  func.func @transform_2(%arg0: i32) -> (i32, i32) {
    %c0_i32 = arith.constant 0 : i32
    %c0_i32_0 = arith.constant 0 : i32
    %c0_i32_1 = arith.constant 0 : i32
    return %c0_i32, %c0_i32_0 : i32, i32
  }
  func.func @transform_3(%arg0: i32) -> (i32, i32) {
    %c0_i32 = arith.constant 0 : i32
    %c0_i32_0 = arith.constant 0 : i32
    %c0_i32_1 = arith.constant 0 : i32
    return %c0_i32, %c0_i32_0 : i32, i32
  }
  func.func @transform_4(%arg0: i32) -> (i32, i32) {
    %c0_i32 = arith.constant 0 : i32
    %c0_i32_0 = arith.constant 0 : i32
    %c0_i32_1 = arith.constant 0 : i32
    return %c0_i32, %c0_i32_0 : i32, i32
  }
  func.func @transform_5(%arg0: i32) -> (i32, i32) {
    %c0_i32 = arith.constant 0 : i32
    %c0_i32_0 = arith.constant 0 : i32
    %c0_i32_1 = arith.constant 0 : i32
    return %c0_i32, %c0_i32_0 : i32, i32
  }
  func.func @transform_6(%arg0: i32) -> (i32, i32, i32) {
    %c0_i32 = arith.constant 0 : i32
    %c0_i32_0 = arith.constant 0 : i32
    %c0_i32_1 = arith.constant 0 : i32
    return %arg0, %c0_i32, %c0_i32_0 : i32, i32, i32
  }
}

module attributes {stable_mosaic.version = 11 : i64} {
  func.func @_ffn_block_kernel(%arg0: i32, %arg1: memref<64x384xf32, #tpu.memory_space<vmem>>, %arg2: memref<1x384xf32, #tpu.memory_space<vmem>>, %arg3: memref<1x384xf32, #tpu.memory_space<vmem>>, %arg4: memref<384x1536xbf16, #tpu.memory_space<vmem>>, %arg5: memref<1x1536xf32, #tpu.memory_space<vmem>>, %arg6: memref<1536x384xbf16, #tpu.memory_space<vmem>>, %arg7: memref<1x384xf32, #tpu.memory_space<vmem>>, %arg8: memref<64x384xf32, #tpu.memory_space<vmem>>) attributes {dimension_semantics = [#tpu.dimension_semantics<parallel>], iteration_bounds = array<i64: 1>, scalar_prefetch = 0 : i64, scratch_operands = 0 : i64, tpu.core_type = #tpu.core_type<tc>, window_params = [{transform_indices = @transform_0, window_bounds = array<i64: 64, 384>}, {pipeline_mode = #tpu.pipeline_mode<synchronous>, transform_indices = @transform_1, window_bounds = array<i64: 1, 384>}, {pipeline_mode = #tpu.pipeline_mode<synchronous>, transform_indices = @transform_2, window_bounds = array<i64: 1, 384>}, {pipeline_mode = #tpu.pipeline_mode<synchronous>, transform_indices = @transform_3, window_bounds = array<i64: 384, 1536>}, {pipeline_mode = #tpu.pipeline_mode<synchronous>, transform_indices = @transform_4, window_bounds = array<i64: 1, 1536>}, {pipeline_mode = #tpu.pipeline_mode<synchronous>, transform_indices = @transform_5, window_bounds = array<i64: 1536, 384>}, {pipeline_mode = #tpu.pipeline_mode<synchronous>, transform_indices = @transform_6, window_bounds = array<i64: 1, 384>}, {transform_indices = @transform_7, window_bounds = array<i64: 64, 384>}]} {
    %c0 = arith.constant 0 : index
    %c0_0 = arith.constant 0 : index
    %0 = vector.load %arg1[%c0, %c0_0] : memref<64x384xf32, #tpu.memory_space<vmem>>, vector<64x384xf32>
    %c0_1 = arith.constant 0 : index
    %c0_2 = arith.constant 0 : index
    %1 = vector.load %arg2[%c0_1, %c0_2] : memref<1x384xf32, #tpu.memory_space<vmem>>, vector<1x384xf32>
    %c0_3 = arith.constant 0 : index
    %c0_4 = arith.constant 0 : index
    %2 = vector.load %arg3[%c0_3, %c0_4] : memref<1x384xf32, #tpu.memory_space<vmem>>, vector<1x384xf32>
    %cst = arith.constant dense<0.000000e+00> : vector<64xf32>
    %3 = vector.multi_reduction <add>, %0, %cst [1] : vector<64x384xf32> to vector<64xf32>
    %4 = vector.shape_cast %3 : vector<64xf32> to vector<64x1xf32>
    %cst_5 = arith.constant 3.840000e+02 : f32
    %5 = vector.broadcast %cst_5 : f32 to vector<64x1xf32>
    %6 = arith.divf %4, %5 : vector<64x1xf32>
    %7 = vector.broadcast %6 : vector<64x1xf32> to vector<64x384xf32>
    %8 = arith.subf %0, %7 : vector<64x384xf32>
    %9 = arith.mulf %8, %8 : vector<64x384xf32>
    %cst_6 = arith.constant dense<0.000000e+00> : vector<64xf32>
    %10 = vector.multi_reduction <add>, %9, %cst_6 [1] : vector<64x384xf32> to vector<64xf32>
    %11 = vector.shape_cast %10 : vector<64xf32> to vector<64x1xf32>
    %cst_7 = arith.constant 3.840000e+02 : f32
    %12 = vector.broadcast %cst_7 : f32 to vector<64x1xf32>
    %13 = arith.divf %11, %12 : vector<64x1xf32>
    %14 = vector.broadcast %6 : vector<64x1xf32> to vector<64x384xf32>
    %15 = arith.subf %0, %14 : vector<64x384xf32>
    %cst_8 = arith.constant 9.99999974E-6 : f32
    %16 = vector.broadcast %cst_8 : f32 to vector<64x1xf32>
    %17 = arith.addf %13, %16 : vector<64x1xf32>
    %18 = math.rsqrt %17 : vector<64x1xf32>
    %19 = vector.broadcast %18 : vector<64x1xf32> to vector<64x384xf32>
    %20 = arith.mulf %15, %19 : vector<64x384xf32>
    %21 = vector.broadcast %1 : vector<1x384xf32> to vector<64x384xf32>
    %22 = arith.mulf %20, %21 : vector<64x384xf32>
    %23 = vector.broadcast %2 : vector<1x384xf32> to vector<64x384xf32>
    %24 = arith.addf %22, %23 : vector<64x384xf32>
    %25 = arith.truncf %24 : vector<64x384xf32> to vector<64x384xbf16>
    %c0_9 = arith.constant 0 : index
    %c0_10 = arith.constant 0 : index
    %26 = vector.load %arg4[%c0_9, %c0_10] : memref<384x1536xbf16, #tpu.memory_space<vmem>>, vector<384x1536xbf16>
    %cst_11 = arith.constant dense<0.000000e+00> : vector<64x1536xf32>
    %27 = tpu.matmul %25, %26, %cst_11 {dimension_numbers = #tpu.dot_dimension_numbers<[1], [0], [0], [1], [0, 0, 1, 1], [], []>} : vector<64x384xbf16>, vector<384x1536xbf16>, vector<64x1536xf32> -> vector<64x1536xf32>
    %c0_12 = arith.constant 0 : index
    %c0_13 = arith.constant 0 : index
    %28 = vector.load %arg5[%c0_12, %c0_13] : memref<1x1536xf32, #tpu.memory_space<vmem>>, vector<1x1536xf32>
    %29 = vector.broadcast %28 : vector<1x1536xf32> to vector<64x1536xf32>
    %30 = arith.addf %27, %29 : vector<64x1536xf32>
    %cst_14 = arith.constant 0.000000e+00 : f32
    %31 = vector.broadcast %cst_14 : f32 to vector<64x1536xf32>
    %32 = arith.maximumf %30, %31 : vector<64x1536xf32>
    %33 = arith.truncf %32 : vector<64x1536xf32> to vector<64x1536xbf16>
    %c0_15 = arith.constant 0 : index
    %c0_16 = arith.constant 0 : index
    %34 = vector.load %arg6[%c0_15, %c0_16] : memref<1536x384xbf16, #tpu.memory_space<vmem>>, vector<1536x384xbf16>
    %cst_17 = arith.constant dense<0.000000e+00> : vector<64x384xf32>
    %35 = tpu.matmul %33, %34, %cst_17 {dimension_numbers = #tpu.dot_dimension_numbers<[1], [0], [0], [1], [0, 0, 1, 1], [], []>} : vector<64x1536xbf16>, vector<1536x384xbf16>, vector<64x384xf32> -> vector<64x384xf32>
    %c0_18 = arith.constant 0 : index
    %c0_19 = arith.constant 0 : index
    %36 = vector.load %arg7[%c0_18, %c0_19] : memref<1x384xf32, #tpu.memory_space<vmem>>, vector<1x384xf32>
    %37 = vector.broadcast %36 : vector<1x384xf32> to vector<64x384xf32>
    %38 = arith.addf %35, %37 : vector<64x384xf32>
    %39 = arith.addf %0, %38 : vector<64x384xf32>
    %c0_20 = arith.constant 0 : index
    %c0_21 = arith.constant 0 : index
    %40 = vector.load %arg8[%c0_20, %c0_21] : memref<64x384xf32, #tpu.memory_space<vmem>>, vector<64x384xf32>
    tpu.vector_store %arg8[%c0_20, %c0_21], %39 {strides = array<i32>} : memref<64x384xf32, #tpu.memory_space<vmem>>, vector<64x384xf32>,
    return
  }
  func.func @transform_0(%arg0: i32) -> (i32, i32) {
    %c0_i32 = arith.constant 0 : i32
    %c0_i32_0 = arith.constant 0 : i32
    return %arg0, %c0_i32 : i32, i32
  }
  func.func @transform_1(%arg0: i32) -> (i32, i32) {
    %c0_i32 = arith.constant 0 : i32
    %c0_i32_0 = arith.constant 0 : i32
    %c0_i32_1 = arith.constant 0 : i32
    return %c0_i32, %c0_i32_0 : i32, i32
  }
  func.func @transform_2(%arg0: i32) -> (i32, i32) {
    %c0_i32 = arith.constant 0 : i32
    %c0_i32_0 = arith.constant 0 : i32
    %c0_i32_1 = arith.constant 0 : i32
    return %c0_i32, %c0_i32_0 : i32, i32
  }
  func.func @transform_3(%arg0: i32) -> (i32, i32) {
    %c0_i32 = arith.constant 0 : i32
    %c0_i32_0 = arith.constant 0 : i32
    %c0_i32_1 = arith.constant 0 : i32
    return %c0_i32, %c0_i32_0 : i32, i32
  }
  func.func @transform_4(%arg0: i32) -> (i32, i32) {
    %c0_i32 = arith.constant 0 : i32
    %c0_i32_0 = arith.constant 0 : i32
    %c0_i32_1 = arith.constant 0 : i32
    return %c0_i32, %c0_i32_0 : i32, i32
  }
  func.func @transform_5(%arg0: i32) -> (i32, i32) {
    %c0_i32 = arith.constant 0 : i32
    %c0_i32_0 = arith.constant 0 : i32
    %c0_i32_1 = arith.constant 0 : i32
    return %c0_i32, %c0_i32_0 : i32, i32
  }
  func.func @transform_6(%arg0: i32) -> (i32, i32) {
    %c0_i32 = arith.constant 0 : i32
    %c0_i32_0 = arith.constant 0 : i32
    %c0_i32_1 = arith.constant 0 : i32
    return %c0_i32, %c0_i32_0 : i32, i32
  }
  func.func @transform_7(%arg0: i32) -> (i32, i32) {
    %c0_i32 = arith.constant 0 : i32
    %c0_i32_0 = arith.constant 0 : i32
    return %arg0, %c0_i32 : i32, i32
  }
}

</mosaic_0001>

<llo_original>
// kernel: block_forward.2
$region0: #{block_forward.2}
  #allocation0 [shape = 'u32[]', space=smem, size = 0x4, offset = 0x4, fixed_abs, tag = 'smem constant byte address 0x4 - core index']
  #allocation1 [shape = 'u32[72,128]{1,0:T(1,128)}', space=vmem, size = 0x9000, scoped, tag = 'internal scratch']
  %s0 = inlined_call_operand.vmem [shape: f32[2,32,384], index: 0, kind: input, shape index: {}]
  %s1 = inlined_call_operand.vmem [shape: f32[1,384], index: 1, kind: input, shape index: {}]
  %s2 = inlined_call_operand.vmem [shape: f32[1,384], index: 2, kind: input, shape index: {}]
  %s3 = inlined_call_operand.vmem [shape: bf16[384,1152], index: 3, kind: input, shape index: {}]
  %s4 = inlined_call_operand.vmem [shape: bf16[384,384], index: 4, kind: input, shape index: {}]
  %s5 = inlined_call_operand.vmem [shape: f32[1,384], index: 5, kind: input, shape index: {}]
  %s6 = inlined_call_operand.vmem [shape: f32[2,32,384], index: 6, kind: output, shape index: {}]
  %s7 = sld [smem:[#allocation0]]
  $region57: #{block_forward.2} parent=0
    _
  %s9 = ssub.s32 1, %s7
  %s10 = scalar_select 0, %s9, %s7
  loop: start=0, step=1, limit=4
  $region2: #{block_forward.2} parent=0 // loop_pre_header
    _
  $region3: #{block_forward.2} parent=0 // loop_header
    %s12 = sphi 0, %s16
    %p13 = scmp.ge.s32.totalorder %s12, 4
    %s22 = sphi 0, %s24
    %s25 = sphi 0, %s22
    %s26 = sphi 0, %s25
    %s42 = sphi 0, %s26
    %s46 = sphi 0, %s46
    %s48 = sphi 0, %s46
    %s49 = sphi 0, %s48
    %s63 = sphi 0, %s49
    %s67 = sphi 0, %s67
    %s69 = sphi 0, %s67
    %s70 = sphi 0, %s69
    %s84 = sphi 0, %s70
    %s88 = sphi 0, %s88
    %s90 = sphi 0, %s88
    %s91 = sphi 0, %s90
    %s105 = sphi 0, %s91
    %s109 = sphi 0, %s109
    %s111 = sphi 0, %s109
    %s112 = sphi 0, %s111
    %s126 = sphi 0, %s112
    %s130 = sphi 0, %s130
    %s132 = sphi 0, %s130
    %s133 = sphi 0, %s132
    %s147 = sphi 0, %s133
    %s153 = sphi 0, %s155
    %s156 = sphi 0, %s153
    %s157 = sphi 0, %s156
    %s173 = sphi 0, %s157
  $region4: #{block_forward.2} parent=0 // loop_header_branch
    %15 = sbr.rel (%p13) target = $region8
  $region5: #{block_forward.2} parent=0 // loop_body
    %s17 = ssub.s32 %s12, 1
    %s18 = ssub.s32 %s12, 2
    %s19 = sadd.s32 %s12, 1
    %s20 = ssub.s32 %s12, %s19
    %p21 = scmp.eq.s32.totalorder %s20, 0
    %s23 = sadd.s32 %s22, 1
    %s24 = scalar_select %p21, %s22, %s23
    %p27 = pneg %p21
    %p28 = scmp.eq.s32.totalorder %s12, 1
    %p29 = por %p27, %p28
    %p30 = scmp.ne.s32.totalorder %s22, %s25
    %p31 = scmp.eq.s32.totalorder %s12, 0
    %p32 = por %p30, %p31
    %p33 = scmp.ne.s32.totalorder %s22, %s25
    %p34 = scmp.eq.s32.totalorder %s17, 1
    %p35 = por %p33, %p34
    %p36 = scmp.ne.s32.totalorder %s25, %s26
    %p37 = scmp.eq.s32.totalorder %s17, 0
    %p38 = por %p36, %p37
    %p39 = scmp.ne.s32.totalorder %s25, %s26
    %p40 = scmp.eq.s32.totalorder %s18, 1
    %p41 = por %p39, %p40
    %p43 = scmp.ne.s32.totalorder %s26, %s42
    %p44 = scmp.eq.s32.totalorder %s18, 0
    %p45 = por %p43, %p44
    %s47 = sadd.s32 %s46, 1
    %p50 = scmp.eq.s32.totalorder %s12, 1
    %p51 = scmp.ne.s32.totalorder %s46, %s48
    %p52 = scmp.eq.s32.totalorder %s12, 0
    %p53 = por %p51, %p52
    %p54 = scmp.ne.s32.totalorder %s46, %s48
    %p55 = scmp.eq.s32.totalorder %s17, 1
    %p56 = por %p54, %p55
    %p57 = scmp.ne.s32.totalorder %s48, %s49
    %p58 = scmp.eq.s32.totalorder %s17, 0
    %p59 = por %p57, %p58
    %p60 = scmp.ne.s32.totalorder %s48, %s49
    %p61 = scmp.eq.s32.totalorder %s18, 1
    %p62 = por %p60, %p61
    %p64 = scmp.ne.s32.totalorder %s49, %s63
    %p65 = scmp.eq.s32.totalorder %s18, 0
    %p66 = por %p64, %p65
    %s68 = sadd.s32 %s67, 1
    %p71 = scmp.eq.s32.totalorder %s12, 1
    %p72 = scmp.ne.s32.totalorder %s67, %s69
    %p73 = scmp.eq.s32.totalorder %s12, 0
    %p74 = por %p72, %p73
    %p75 = scmp.ne.s32.totalorder %s67, %s69
    %p76 = scmp.eq.s32.totalorder %s17, 1
    %p77 = por %p75, %p76
    %p78 = scmp.ne.s32.totalorder %s69, %s70
    %p79 = scmp.eq.s32.totalorder %s17, 0
    %p80 = por %p78, %p79
    %p81 = scmp.ne.s32.totalorder %s69, %s70
    %p82 = scmp.eq.s32.totalorder %s18, 1
    %p83 = por %p81, %p82
    %p85 = scmp.ne.s32.totalorder %s70, %s84
    %p86 = scmp.eq.s32.totalorder %s18, 0
    %p87 = por %p85, %p86
    %s89 = sadd.s32 %s88, 1
    %p92 = scmp.eq.s32.totalorder %s12, 1
    %p93 = scmp.ne.s32.totalorder %s88, %s90
    %p94 = scmp.eq.s32.totalorder %s12, 0
    %p95 = por %p93, %p94
    %p96 = scmp.ne.s32.totalorder %s88, %s90
    %p97 = scmp.eq.s32.totalorder %s17, 1
    %p98 = por %p96, %p97
    %p99 = scmp.ne.s32.totalorder %s90, %s91
    %p100 = scmp.eq.s32.totalorder %s17, 0
    %p101 = por %p99, %p100
    %p102 = scmp.ne.s32.totalorder %s90, %s91
    %p103 = scmp.eq.s32.totalorder %s18, 1
    %p104 = por %p102, %p103
    %p106 = scmp.ne.s32.totalorder %s91, %s105
    %p107 = scmp.eq.s32.totalorder %s18, 0
    %p108 = por %p106, %p107
    %s110 = sadd.s32 %s109, 1
    %p113 = scmp.eq.s32.totalorder %s12, 1
    %p114 = scmp.ne.s32.totalorder %s109, %s111
    %p115 = scmp.eq.s32.totalorder %s12, 0
    %p116 = por %p114, %p115
    %p117 = scmp.ne.s32.totalorder %s109, %s111
    %p118 = scmp.eq.s32.totalorder %s17, 1
    %p119 = por %p117, %p118
    %p120 = scmp.ne.s32.totalorder %s111, %s112
    %p121 = scmp.eq.s32.totalorder %s17, 0
    %p122 = por %p120, %p121
    %p123 = scmp.ne.s32.totalorder %s111, %s112
    %p124 = scmp.eq.s32.totalorder %s18, 1
    %p125 = por %p123, %p124
    %p127 = scmp.ne.s32.totalorder %s112, %s126
    %p128 = scmp.eq.s32.totalorder %s18, 0
    %p129 = por %p127, %p128
    %s131 = sadd.s32 %s130, 1
    %p134 = scmp.eq.s32.totalorder %s12, 1
    %p135 = scmp.ne.s32.totalorder %s130, %s132
    %p136 = scmp.eq.s32.totalorder %s12, 0
    %p137 = por %p135, %p136
    %p138 = scmp.ne.s32.totalorder %s130, %s132
    %p139 = scmp.eq.s32.totalorder %s17, 1
    %p140 = por %p138, %p139
    %p141 = scmp.ne.s32.totalorder %s132, %s133
    %p142 = scmp.eq.s32.totalorder %s17, 0
    %p143 = por %p141, %p142
    %p144 = scmp.ne.s32.totalorder %s132, %s133
    %p145 = scmp.eq.s32.totalorder %s18, 1
    %p146 = por %p144, %p145
    %p148 = scmp.ne.s32.totalorder %s133, %s147
    %p149 = scmp.eq.s32.totalorder %s18, 0
    %p150 = por %p148, %p149
    %s151 = ssub.s32 %s12, %s19
    %p152 = scmp.eq.s32.totalorder %s151, 0
    %s154 = sadd.s32 %s153, 1
    %s155 = scalar_select %p152, %s153, %s154
    %p158 = pneg %p152
    %p159 = scmp.eq.s32.totalorder %s12, 1
    %p160 = por %p158, %p159
    %p161 = scmp.ne.s32.totalorder %s153, %s156
    %p162 = scmp.eq.s32.totalorder %s12, 0
    %p163 = por %p161, %p162
    %p164 = scmp.ne.s32.totalorder %s153, %s156
    %p165 = scmp.eq.s32.totalorder %s17, 1
    %p166 = por %p164, %p165
    %p167 = scmp.ne.s32.totalorder %s156, %s157
    %p168 = scmp.eq.s32.totalorder %s17, 0
    %p169 = por %p167, %p168
    %p170 = scmp.ne.s32.totalorder %s156, %s157
    %p171 = scmp.eq.s32.totalorder %s18, 1
    %p172 = por %p170, %p171
    %p174 = scmp.ne.s32.totalorder %s157, %s173
    %p175 = scmp.eq.s32.totalorder %s18, 0
    %p176 = por %p174, %p175
    %p177 = scmp.le.s32.totalorder 1, %s12
    %p178 = scmp.lt.s32.totalorder %s12, 3
    %p179 = pnand %p177, %p178
    %p180 = pneg %p179
    // Predicated region
    $region9: #{block_forward.2} parent=5 // pred_check
      _
    $region10: #{block_forward.2} parent=5 // pred_check_branch
      %182 = sbr.rel (%p179) target = $region12
    $region11: #{block_forward.2} parent=5 // pred_region
      %s183 = ssub.s32 %s12, 1
      // Predicated region
      $region13: #{block_forward.2} parent=11 // pred_check
        %p184 = pneg %p59
      $region14: #{block_forward.2} parent=11 // pred_check_branch
        %186 = sbr.rel (%p184) target = $region16
      $region15: #{block_forward.2} parent=11 // pred_region
        _
      $region16: #{block_forward.2} parent=11 // pred_fallthru
        _
      // Predicated region
      $region17: #{block_forward.2} parent=11 // pred_check
        %p187 = pneg %p80
      $region18: #{block_forward.2} parent=11 // pred_check_branch
        %189 = sbr.rel (%p187) target = $region20
      $region19: #{block_forward.2} parent=11 // pred_region
        _
      $region20: #{block_forward.2} parent=11 // pred_fallthru
        _
      // Predicated region
      $region21: #{block_forward.2} parent=11 // pred_check
        %p190 = pneg %p101
      $region22: #{block_forward.2} parent=11 // pred_check_branch
        %192 = sbr.rel (%p190) target = $region24
      $region23: #{block_forward.2} parent=11 // pred_region
        _
      $region24: #{block_forward.2} parent=11 // pred_fallthru
        _
      // Predicated region
      $region25: #{block_forward.2} parent=11 // pred_check
        %p193 = pneg %p122
      $region26: #{block_forward.2} parent=11 // pred_check_branch
        %195 = sbr.rel (%p193) target = $region28
      $region27: #{block_forward.2} parent=11 // pred_region
        _
      $region28: #{block_forward.2} parent=11 // pred_fallthru
        _
      // Predicated region
      $region29: #{block_forward.2} parent=11 // pred_check
        %p196 = pneg %p143
      $region30: #{block_forward.2} parent=11 // pred_check_branch
        %198 = sbr.rel (%p196) target = $region32
      $region31: #{block_forward.2} parent=11 // pred_region
        _
      $region32: #{block_forward.2} parent=11 // pred_fallthru
        _
    $region12: #{block_forward.2} parent=5 // pred_fallthru
      _
    %p199 = scmp.lt.s32.totalorder %s12, 2
    // Predicated region
    $region33: #{block_forward.2} parent=5 // pred_check
      %p200 = pneg %p199
    $region34: #{block_forward.2} parent=5 // pred_check_branch
      %202 = sbr.rel (%p200) target = $region36
    $region35: #{block_forward.2} parent=5 // pred_region
      // Predicated region
      $region37: #{block_forward.2} parent=35 // pred_check
        %p203 = pneg %p32
      $region38: #{block_forward.2} parent=35 // pred_check_branch
        %205 = sbr.rel (%p203) target = $region40
      $region39: #{block_forward.2} parent=35 // pred_region
        %p206 = scmp.lt.s32.totalorder %s12, 1
        %s207 = scalar_select %p206, %s12, 1
        %s208 = smul.addr %s207, 12
        %s209 = smul.addr %s208, 8
        %s210 = scalar_lea.vmem %s0, %s209
      $region40: #{block_forward.2} parent=35 // pred_fallthru
        _
    $region36: #{block_forward.2} parent=5 // pred_fallthru
      _
    %p211 = scmp.le.s32.totalorder 1, %s12
    %p212 = scmp.lt.s32.totalorder %s12, 3
    %p213 = pnand %p211, %p212
    %p214 = pneg %p213
    // Predicated region
    $region41: #{block_forward.2} parent=5 // pred_check
      _
    $region42: #{block_forward.2} parent=5 // pred_check_branch
      %216 = sbr.rel (%p213) target = $region44
    $region43: #{block_forward.2} parent=5 // pred_region
      %s217 = ssub.s32 %s12, 1
      %p218 = scmp.lt.s32.totalorder %s17, 1
      %s219 = scalar_select %p218, %s17, 1
      %s220 = smul.addr %s219, 12
      %s221 = smul.addr %s220, 8
      %s222 = scalar_lea.vmem %s0, %s221
      %p223 = pneg %p38
      %p224 = pneg %p35
      %p225 = pneg %p59
      %p226 = pneg %p56
      %p227 = pneg %p80
      %p228 = pneg %p77
      %p229 = pneg %p101
      %p230 = pneg %p98
      %p231 = pneg %p122
      %p232 = pneg %p119
      %p233 = pneg %p143
      %p234 = pneg %p140
      %p235 = pneg %p169
      %p236 = pneg %p166
      %p237 = scmp.lt.s32.totalorder %s17, 1
      %s238 = scalar_select %p237, %s17, 1
      %s239 = smul.addr %s238, 12
      %s240 = smul.addr %s239, 8
      %s241 = scalar_lea.vmem %s6, %s240
      %p242 = scmp.lt.s32.totalorder %s17, 1
      %s243 = scalar_select %p242, %s17, 1
      %s244 = smul.addr %s243, 12
      %s245 = smul.addr %s244, 8
      %s246 = scalar_lea.vmem %s0, %s245
      %p247 = scmp.lt.s32.totalorder %s17, 1
      %s248 = scalar_select %p247, %s17, 1
      %s249 = smul.addr %s248, 12
      %s250 = smul.addr %s249, 8
      %s251 = scalar_lea.vmem %s6, %s250
      %v253 = vld [vmem:[%s1] sm:$0x7]
      %v254 = vld [vmem:[%s2] sm:$0x7]
      %v255 = vld [vmem:[%s5] sm:$0x7]
      %v256 = vld [vmem:[%s3] sm:$0xff]
      %v257 = vld [vmem:[%s3 + $0x8] sm:$0xff]
      %v258 = vld [vmem:[%s3 + $0x10] sm:$0xff]
      %v259 = vld [vmem:[%s3 + $0x18] sm:$0xff]
      %v260 = vld [vmem:[%s3 + $0x20] sm:$0xf]
      %v261 = vld [vmem:[%s3 + $0x24] sm:$0xff]
      %v262 = vld [vmem:[%s3 + $0x2c] sm:$0xff]
      %v263 = vld [vmem:[%s3 + $0x34] sm:$0xff]
      %v264 = vld [vmem:[%s3 + $0x3c] sm:$0xff]
      %v265 = vld [vmem:[%s3 + $0x44] sm:$0xf]
      %v266 = vld [vmem:[%s3 + $0x48] sm:$0xff]
      %v267 = vld [vmem:[%s3 + $0x50] sm:$0xff]
      %v268 = vld [vmem:[%s3 + $0x58] sm:$0xff]
      %v269 = vld [vmem:[%s3 + $0x60] sm:$0xff]
      %v270 = vld [vmem:[%s3 + $0x68] sm:$0xf]
      %v271 = vld [vmem:[%s3 + $0x6c] sm:$0xff]
      %v272 = vld [vmem:[%s3 + $0x74] sm:$0xff]
      %v273 = vld [vmem:[%s3 + $0x7c] sm:$0xff]
      %v274 = vld [vmem:[%s3 + $0x84] sm:$0xff]
      %v275 = vld [vmem:[%s3 + $0x8c] sm:$0xf]
      %v276 = vld [vmem:[%s3 + $0x90] sm:$0xff]
      %v277 = vld [vmem:[%s3 + $0x98] sm:$0xff]
      %v278 = vld [vmem:[%s3 + $0xa0] sm:$0xff]
      %v279 = vld [vmem:[%s3 + $0xa8] sm:$0xff]
      %v280 = vld [vmem:[%s3 + $0xb0] sm:$0xf]
      %v281 = vld [vmem:[%s3 + $0xb4] sm:$0xff]
      %v282 = vld [vmem:[%s3 + $0xbc] sm:$0xff]
      %v283 = vld [vmem:[%s3 + $0xc4] sm:$0xff]
      %v284 = vld [vmem:[%s3 + $0xcc] sm:$0xff]
      %v285 = vld [vmem:[%s3 + $0xd4] sm:$0xf]
      %v286 = vld [vmem:[%s3 + $0xd8] sm:$0xff]
      %v287 = vld [vmem:[%s3 + $0xe0] sm:$0xff]
      %v288 = vld [vmem:[%s3 + $0xe8] sm:$0xff]
      %v289 = vld [vmem:[%s3 + $0xf0] sm:$0xff]
      %v290 = vld [vmem:[%s3 + $0xf8] sm:$0xf]
      %v291 = vld [vmem:[%s3 + $0xfc] sm:$0xff]
      %v292 = vld [vmem:[%s3 + $0x104] sm:$0xff]
      %v293 = vld [vmem:[%s3 + $0x10c] sm:$0xff]
      %v294 = vld [vmem:[%s3 + $0x114] sm:$0xff]
      %v295 = vld [vmem:[%s3 + $0x11c] sm:$0xf]
      %v296 = vld [vmem:[%s3 + $0x120] sm:$0xff]
      %v297 = vld [vmem:[%s3 + $0x128] sm:$0xff]
      %v298 = vld [vmem:[%s3 + $0x130] sm:$0xff]
      %v299 = vld [vmem:[%s3 + $0x138] sm:$0xff]
      %v300 = vld [vmem:[%s3 + $0x140] sm:$0xf]
      %v301 = vld [vmem:[%s3 + $0x144] sm:$0xff]
      %v302 = vld [vmem:[%s3 + $0x14c] sm:$0xff]
      %v303 = vld [vmem:[%s3 + $0x154] sm:$0xff]
      %v304 = vld [vmem:[%s3 + $0x15c] sm:$0xff]
      %v305 = vld [vmem:[%s3 + $0x164] sm:$0xf]
      %v306 = vld [vmem:[%s3 + $0x168] sm:$0xff]
      %v307 = vld [vmem:[%s3 + $0x170] sm:$0xff]
      %v308 = vld [vmem:[%s3 + $0x178] sm:$0xff]
      %v309 = vld [vmem:[%s3 + $0x180] sm:$0xff]
      %v310 = vld [vmem:[%s3 + $0x188] sm:$0xf]
      %v311 = vld [vmem:[%s3 + $0x18c] sm:$0xff]
      %v312 = vld [vmem:[%s3 + $0x194] sm:$0xff]
      %v313 = vld [vmem:[%s3 + $0x19c] sm:$0xff]
      %v314 = vld [vmem:[%s3 + $0x1a4] sm:$0xff]
      %v315 = vld [vmem:[%s3 + $0x1ac] sm:$0xf]
      %v316 = vld [vmem:[%s3 + $0x1b0] sm:$0xff]
      %v317 = vld [vmem:[%s3 + $0x1b8] sm:$0xff]
      %v318 = vld [vmem:[%s3 + $0x1c0] sm:$0xff]
      %v319 = vld [vmem:[%s3 + $0x1c8] sm:$0xff]
      %v320 = vld [vmem:[%s3 + $0x1d0] sm:$0xf]
      %v321 = vld [vmem:[%s3 + $0x1d4] sm:$0xff]
      %v322 = vld [vmem:[%s3 + $0x1dc] sm:$0xff]
      %v323 = vld [vmem:[%s3 + $0x1e4] sm:$0xff]
      %v324 = vld [vmem:[%s3 + $0x1ec] sm:$0xff]
      %v325 = vld [vmem:[%s3 + $0x1f4] sm:$0xf]
      %v326 = vld [vmem:[%s3 + $0x1f8] sm:$0xff]
      %v327 = vld [vmem:[%s3 + $0x200] sm:$0xff]
      %v328 = vld [vmem:[%s3 + $0x208] sm:$0xff]
      %v329 = vld [vmem:[%s3 + $0x210] sm:$0xff]
      %v330 = vld [vmem:[%s3 + $0x218] sm:$0xf]
      %v331 = vld [vmem:[%s3 + $0x21c] sm:$0xff]
      %v332 = vld [vmem:[%s3 + $0x224] sm:$0xff]
      %v333 = vld [vmem:[%s3 + $0x22c] sm:$0xff]
      %v334 = vld [vmem:[%s3 + $0x234] sm:$0xff]
      %v335 = vld [vmem:[%s3 + $0x23c] sm:$0xf]
      %v336 = vld [vmem:[%s3 + $0x240] sm:$0xff]
      %v337 = vld [vmem:[%s3 + $0x248] sm:$0xff]
      %v338 = vld [vmem:[%s3 + $0x250] sm:$0xff]
      %v339 = vld [vmem:[%s3 + $0x258] sm:$0xff]
      %v340 = vld [vmem:[%s3 + $0x260] sm:$0xf]
      %v341 = vld [vmem:[%s3 + $0x264] sm:$0xff]
      %v342 = vld [vmem:[%s3 + $0x26c] sm:$0xff]
      %v343 = vld [vmem:[%s3 + $0x274] sm:$0xff]
      %v344 = vld [vmem:[%s3 + $0x27c] sm:$0xff]
      %v345 = vld [vmem:[%s3 + $0x284] sm:$0xf]
      %v346 = vld [vmem:[%s3 + $0x288] sm:$0xff]
      %v347 = vld [vmem:[%s3 + $0x290] sm:$0xff]
      %v348 = vld [vmem:[%s3 + $0x298] sm:$0xff]
      %v349 = vld [vmem:[%s3 + $0x2a0] sm:$0xff]
      %v350 = vld [vmem:[%s3 + $0x2a8] sm:$0xf]
      %v351 = vld [vmem:[%s3 + $0x2ac] sm:$0xff]
      %v352 = vld [vmem:[%s3 + $0x2b4] sm:$0xff]
      %v353 = vld [vmem:[%s3 + $0x2bc] sm:$0xff]
      %v354 = vld [vmem:[%s3 + $0x2c4] sm:$0xff]
      %v355 = vld [vmem:[%s3 + $0x2cc] sm:$0xf]
      %v356 = vld [vmem:[%s3 + $0x2d0] sm:$0xff]
      %v357 = vld [vmem:[%s3 + $0x2d8] sm:$0xff]
      %v358 = vld [vmem:[%s3 + $0x2e0] sm:$0xff]
      %v359 = vld [vmem:[%s3 + $0x2e8] sm:$0xff]
      %v360 = vld [vmem:[%s3 + $0x2f0] sm:$0xf]
      %v361 = vld [vmem:[%s3 + $0x2f4] sm:$0xff]
      %v362 = vld [vmem:[%s3 + $0x2fc] sm:$0xff]
      %v363 = vld [vmem:[%s3 + $0x304] sm:$0xff]
      %v364 = vld [vmem:[%s3 + $0x30c] sm:$0xff]
      %v365 = vld [vmem:[%s3 + $0x314] sm:$0xf]
      %v366 = vld [vmem:[%s3 + $0x318] sm:$0xff]
      %v367 = vld [vmem:[%s3 + $0x320] sm:$0xff]
      %v368 = vld [vmem:[%s3 + $0x328] sm:$0xff]
      %v369 = vld [vmem:[%s3 + $0x330] sm:$0xff]
      %v370 = vld [vmem:[%s3 + $0x338] sm:$0xf]
      %v371 = vld [vmem:[%s3 + $0x33c] sm:$0xff]
      %v372 = vld [vmem:[%s3 + $0x344] sm:$0xff]
      %v373 = vld [vmem:[%s3 + $0x34c] sm:$0xff]
      %v374 = vld [vmem:[%s3 + $0x354] sm:$0xff]
      %v375 = vld [vmem:[%s3 + $0x35c] sm:$0xf]
      %v376 = vld [vmem:[%s3 + $0x360] sm:$0xff]
      %v377 = vld [vmem:[%s3 + $0x368] sm:$0xff]
      %v378 = vld [vmem:[%s3 + $0x370] sm:$0xff]
      %v379 = vld [vmem:[%s3 + $0x378] sm:$0xff]
      %v380 = vld [vmem:[%s3 + $0x380] sm:$0xf]
      %v381 = vld [vmem:[%s3 + $0x384] sm:$0xff]
      %v382 = vld [vmem:[%s3 + $0x38c] sm:$0xff]
      %v383 = vld [vmem:[%s3 + $0x394] sm:$0xff]
      %v384 = vld [vmem:[%s3 + $0x39c] sm:$0xff]
      %v385 = vld [vmem:[%s3 + $0x3a4] sm:$0xf]
      %v386 = vld [vmem:[%s3 + $0x3a8] sm:$0xff]
      %v387 = vld [vmem:[%s3 + $0x3b0] sm:$0xff]
      %v388 = vld [vmem:[%s3 + $0x3b8] sm:$0xff]
      %v389 = vld [vmem:[%s3 + $0x3c0] sm:$0xff]
      %v390 = vld [vmem:[%s3 + $0x3c8] sm:$0xf]
      %v391 = vld [vmem:[%s3 + $0x3cc] sm:$0xff]
      %v392 = vld [vmem:[%s3 + $0x3d4] sm:$0xff]
      %v393 = vld [vmem:[%s3 + $0x3dc] sm:$0xff]
      %v394 = vld [vmem:[%s3 + $0x3e4] sm:$0xff]
      %v395 = vld [vmem:[%s3 + $0x3ec] sm:$0xf]
      %v396 = vld [vmem:[%s3 + $0x3f0] sm:$0xff]
      %v397 = vld [vmem:[%s3 + $0x3f8] sm:$0xff]
      %v398 = vld [vmem:[%s3 + $0x400] sm:$0xff]
      %v399 = vld [vmem:[%s3 + $0x408] sm:$0xff]
      %v400 = vld [vmem:[%s3 + $0x410] sm:$0xf]
      %v401 = vld [vmem:[%s3 + $0x414] sm:$0xff]
      %v402 = vld [vmem:[%s3 + $0x41c] sm:$0xff]
      %v403 = vld [vmem:[%s3 + $0x424] sm:$0xff]
      %v404 = vld [vmem:[%s3 + $0x42c] sm:$0xff]
      %v405 = vld [vmem:[%s3 + $0x434] sm:$0xf]
      %v406 = vld [vmem:[%s3 + $0x438] sm:$0xff]
      %v407 = vld [vmem:[%s3 + $0x440] sm:$0xff]
      %v408 = vld [vmem:[%s3 + $0x448] sm:$0xff]
      %v409 = vld [vmem:[%s3 + $0x450] sm:$0xff]
      %v410 = vld [vmem:[%s3 + $0x458] sm:$0xf]
      %v411 = vld [vmem:[%s3 + $0x45c] sm:$0xff]
      %v412 = vld [vmem:[%s3 + $0x464] sm:$0xff]
      %v413 = vld [vmem:[%s3 + $0x46c] sm:$0xff]
      %v414 = vld [vmem:[%s3 + $0x474] sm:$0xff]
      %v415 = vld [vmem:[%s3 + $0x47c] sm:$0xf]
      %v416 = vld [vmem:[%s3 + $0x480] sm:$0xff]
      %v417 = vld [vmem:[%s3 + $0x488] sm:$0xff]
      %v418 = vld [vmem:[%s3 + $0x490] sm:$0xff]
      %v419 = vld [vmem:[%s3 + $0x498] sm:$0xff]
      %v420 = vld [vmem:[%s3 + $0x4a0] sm:$0xf]
      %v421 = vld [vmem:[%s3 + $0x4a4] sm:$0xff]
      %v422 = vld [vmem:[%s3 + $0x4ac] sm:$0xff]
      %v423 = vld [vmem:[%s3 + $0x4b4] sm:$0xff]
      %v424 = vld [vmem:[%s3 + $0x4bc] sm:$0xff]
      %v425 = vld [vmem:[%s3 + $0x4c4] sm:$0xf]
      %v426 = vld [vmem:[%s3 + $0x4c8] sm:$0xff]
      %v427 = vld [vmem:[%s3 + $0x4d0] sm:$0xff]
      %v428 = vld [vmem:[%s3 + $0x4d8] sm:$0xff]
      %v429 = vld [vmem:[%s3 + $0x4e0] sm:$0xff]
      %v430 = vld [vmem:[%s3 + $0x4e8] sm:$0xf]
      %v431 = vld [vmem:[%s3 + $0x4ec] sm:$0xff]
      %v432 = vld [vmem:[%s3 + $0x4f4] sm:$0xff]
      %v433 = vld [vmem:[%s3 + $0x4fc] sm:$0xff]
      %v434 = vld [vmem:[%s3 + $0x504] sm:$0xff]
      %v435 = vld [vmem:[%s3 + $0x50c] sm:$0xf]
      %v436 = vld [vmem:[%s3 + $0x510] sm:$0xff]
      %v437 = vld [vmem:[%s3 + $0x518] sm:$0xff]
      %v438 = vld [vmem:[%s3 + $0x520] sm:$0xff]
      %v439 = vld [vmem:[%s3 + $0x528] sm:$0xff]
      %v440 = vld [vmem:[%s3 + $0x530] sm:$0xf]
      %v441 = vld [vmem:[%s3 + $0x534] sm:$0xff]
      %v442 = vld [vmem:[%s3 + $0x53c] sm:$0xff]
      %v443 = vld [vmem:[%s3 + $0x544] sm:$0xff]
      %v444 = vld [vmem:[%s3 + $0x54c] sm:$0xff]
      %v445 = vld [vmem:[%s3 + $0x554] sm:$0xf]
      %v446 = vld [vmem:[%s3 + $0x558] sm:$0xff]
      %v447 = vld [vmem:[%s3 + $0x560] sm:$0xff]
      %v448 = vld [vmem:[%s3 + $0x568] sm:$0xff]
      %v449 = vld [vmem:[%s3 + $0x570] sm:$0xff]
      %v450 = vld [vmem:[%s3 + $0x578] sm:$0xf]
      %v451 = vld [vmem:[%s3 + $0x57c] sm:$0xff]
      %v452 = vld [vmem:[%s3 + $0x584] sm:$0xff]
      %v453 = vld [vmem:[%s3 + $0x58c] sm:$0xff]
      %v454 = vld [vmem:[%s3 + $0x594] sm:$0xff]
      %v455 = vld [vmem:[%s3 + $0x59c] sm:$0xf]
      %v456 = vld [vmem:[%s3 + $0x5a0] sm:$0xff]
      %v457 = vld [vmem:[%s3 + $0x5a8] sm:$0xff]
      %v458 = vld [vmem:[%s3 + $0x5b0] sm:$0xff]
      %v459 = vld [vmem:[%s3 + $0x5b8] sm:$0xff]
      %v460 = vld [vmem:[%s3 + $0x5c0] sm:$0xf]
      %v461 = vld [vmem:[%s3 + $0x5c4] sm:$0xff]
      %v462 = vld [vmem:[%s3 + $0x5cc] sm:$0xff]
      %v463 = vld [vmem:[%s3 + $0x5d4] sm:$0xff]
      %v464 = vld [vmem:[%s3 + $0x5dc] sm:$0xff]
      %v465 = vld [vmem:[%s3 + $0x5e4] sm:$0xf]
      %v466 = vld [vmem:[%s3 + $0x5e8] sm:$0xff]
      %v467 = vld [vmem:[%s3 + $0x5f0] sm:$0xff]
      %v468 = vld [vmem:[%s3 + $0x5f8] sm:$0xff]
      %v469 = vld [vmem:[%s3 + $0x600] sm:$0xff]
      %v470 = vld [vmem:[%s3 + $0x608] sm:$0xf]
      %v471 = vld [vmem:[%s3 + $0x60c] sm:$0xff]
      %v472 = vld [vmem:[%s3 + $0x614] sm:$0xff]
      %v473 = vld [vmem:[%s3 + $0x61c] sm:$0xff]
      %v474 = vld [vmem:[%s3 + $0x624] sm:$0xff]
      %v475 = vld [vmem:[%s3 + $0x62c] sm:$0xf]
      %v476 = vld [vmem:[%s3 + $0x630] sm:$0xff]
      %v477 = vld [vmem:[%s3 + $0x638] sm:$0xff]
      %v478 = vld [vmem:[%s3 + $0x640] sm:$0xff]
      %v479 = vld [vmem:[%s3 + $0x648] sm:$0xff]
      %v480 = vld [vmem:[%s3 + $0x650] sm:$0xf]
      %v481 = vld [vmem:[%s3 + $0x654] sm:$0xff]
      %v482 = vld [vmem:[%s3 + $0x65c] sm:$0xff]
      %v483 = vld [vmem:[%s3 + $0x664] sm:$0xff]
      %v484 = vld [vmem:[%s3 + $0x66c] sm:$0xff]
      %v485 = vld [vmem:[%s3 + $0x674] sm:$0xf]
      %v486 = vld [vmem:[%s3 + $0x678] sm:$0xff]
      %v487 = vld [vmem:[%s3 + $0x680] sm:$0xff]
      %v488 = vld [vmem:[%s3 + $0x688] sm:$0xff]
      %v489 = vld [vmem:[%s3 + $0x690] sm:$0xff]
      %v490 = vld [vmem:[%s3 + $0x698] sm:$0xf]
      %v491 = vld [vmem:[%s3 + $0x69c] sm:$0xff]
      %v492 = vld [vmem:[%s3 + $0x6a4] sm:$0xff]
      %v493 = vld [vmem:[%s3 + $0x6ac] sm:$0xff]
      %v494 = vld [vmem:[%s3 + $0x6b4] sm:$0xff]
      %v495 = vld [vmem:[%s3 + $0x6bc] sm:$0xf]
      %v496 = vld [vmem:[%s4] sm:$0xff]
      %v497 = vld [vmem:[%s4 + $0x8] sm:$0xf]
      %v498 = vld [vmem:[%s4 + $0xc] sm:$0xff]
      %v499 = vld [vmem:[%s4 + $0x14] sm:$0xf]
      %v500 = vld [vmem:[%s4 + $0x18] sm:$0xff]
      %v501 = vld [vmem:[%s4 + $0x20] sm:$0xf]
      %v502 = vld [vmem:[%s4 + $0x24] sm:$0xff]
      %v503 = vld [vmem:[%s4 + $0x2c] sm:$0xf]
      %v504 = vld [vmem:[%s4 + $0x30] sm:$0xff]
      %v505 = vld [vmem:[%s4 + $0x38] sm:$0xf]
      %v506 = vld [vmem:[%s4 + $0x3c] sm:$0xff]
      %v507 = vld [vmem:[%s4 + $0x44] sm:$0xf]
      %v508 = vld [vmem:[%s4 + $0x48] sm:$0xff]
      %v509 = vld [vmem:[%s4 + $0x50] sm:$0xf]
      %v510 = vld [vmem:[%s4 + $0x54] sm:$0xff]
      %v511 = vld [vmem:[%s4 + $0x5c] sm:$0xf]
      %v512 = vld [vmem:[%s4 + $0x60] sm:$0xff]
      %v513 = vld [vmem:[%s4 + $0x68] sm:$0xf]
      %v514 = vld [vmem:[%s4 + $0x6c] sm:$0xff]
      %v515 = vld [vmem:[%s4 + $0x74] sm:$0xf]
      %v516 = vld [vmem:[%s4 + $0x78] sm:$0xff]
      %v517 = vld [vmem:[%s4 + $0x80] sm:$0xf]
      %v518 = vld [vmem:[%s4 + $0x84] sm:$0xff]
      %v519 = vld [vmem:[%s4 + $0x8c] sm:$0xf]
      %v520 = vld [vmem:[%s4 + $0x90] sm:$0xff]
      %v521 = vld [vmem:[%s4 + $0x98] sm:$0xf]
      %v522 = vld [vmem:[%s4 + $0x9c] sm:$0xff]
      %v523 = vld [vmem:[%s4 + $0xa4] sm:$0xf]
      %v524 = vld [vmem:[%s4 + $0xa8] sm:$0xff]
      %v525 = vld [vmem:[%s4 + $0xb0] sm:$0xf]
      %v526 = vld [vmem:[%s4 + $0xb4] sm:$0xff]
      %v527 = vld [vmem:[%s4 + $0xbc] sm:$0xf]
      %v528 = vld [vmem:[%s4 + $0xc0] sm:$0xff]
      %v529 = vld [vmem:[%s4 + $0xc8] sm:$0xf]
      %v530 = vld [vmem:[%s4 + $0xcc] sm:$0xff]
      %v531 = vld [vmem:[%s4 + $0xd4] sm:$0xf]
      %v532 = vld [vmem:[%s4 + $0xd8] sm:$0xff]
      %v533 = vld [vmem:[%s4 + $0xe0] sm:$0xf]
      %v534 = vld [vmem:[%s4 + $0xe4] sm:$0xff]
      %v535 = vld [vmem:[%s4 + $0xec] sm:$0xf]
      %v536 = vld [vmem:[%s4 + $0xf0] sm:$0xff]
      %v537 = vld [vmem:[%s4 + $0xf8] sm:$0xf]
      %v538 = vld [vmem:[%s4 + $0xfc] sm:$0xff]
      %v539 = vld [vmem:[%s4 + $0x104] sm:$0xf]
      %v540 = vld [vmem:[%s4 + $0x108] sm:$0xff]
      %v541 = vld [vmem:[%s4 + $0x110] sm:$0xf]
      %v542 = vld [vmem:[%s4 + $0x114] sm:$0xff]
      %v543 = vld [vmem:[%s4 + $0x11c] sm:$0xf]
      %v544 = vld [vmem:[%s4 + $0x120] sm:$0xff]
      %v545 = vld [vmem:[%s4 + $0x128] sm:$0xf]
      %v546 = vld [vmem:[%s4 + $0x12c] sm:$0xff]
      %v547 = vld [vmem:[%s4 + $0x134] sm:$0xf]
      %v548 = vld [vmem:[%s4 + $0x138] sm:$0xff]
      %v549 = vld [vmem:[%s4 + $0x140] sm:$0xf]
      %v550 = vld [vmem:[%s4 + $0x144] sm:$0xff]
      %v551 = vld [vmem:[%s4 + $0x14c] sm:$0xf]
      %v552 = vld [vmem:[%s4 + $0x150] sm:$0xff]
      %v553 = vld [vmem:[%s4 + $0x158] sm:$0xf]
      %v554 = vld [vmem:[%s4 + $0x15c] sm:$0xff]
      %v555 = vld [vmem:[%s4 + $0x164] sm:$0xf]
      %v556 = vld [vmem:[%s4 + $0x168] sm:$0xff]
      %v557 = vld [vmem:[%s4 + $0x170] sm:$0xf]
      %v558 = vld [vmem:[%s4 + $0x174] sm:$0xff]
      %v559 = vld [vmem:[%s4 + $0x17c] sm:$0xf]
      %v560 = vld [vmem:[%s4 + $0x180] sm:$0xff]
      %v561 = vld [vmem:[%s4 + $0x188] sm:$0xf]
      %v562 = vld [vmem:[%s4 + $0x18c] sm:$0xff]
      %v563 = vld [vmem:[%s4 + $0x194] sm:$0xf]
      %v564 = vld [vmem:[%s4 + $0x198] sm:$0xff]
      %v565 = vld [vmem:[%s4 + $0x1a0] sm:$0xf]
      %v566 = vld [vmem:[%s4 + $0x1a4] sm:$0xff]
      %v567 = vld [vmem:[%s4 + $0x1ac] sm:$0xf]
      %v568 = vld [vmem:[%s4 + $0x1b0] sm:$0xff]
      %v569 = vld [vmem:[%s4 + $0x1b8] sm:$0xf]
      %v570 = vld [vmem:[%s4 + $0x1bc] sm:$0xff]
      %v571 = vld [vmem:[%s4 + $0x1c4] sm:$0xf]
      %v572 = vld [vmem:[%s4 + $0x1c8] sm:$0xff]
      %v573 = vld [vmem:[%s4 + $0x1d0] sm:$0xf]
      %v574 = vld [vmem:[%s4 + $0x1d4] sm:$0xff]
      %v575 = vld [vmem:[%s4 + $0x1dc] sm:$0xf]
      %v576 = vld [vmem:[%s4 + $0x1e0] sm:$0xff]
      %v577 = vld [vmem:[%s4 + $0x1e8] sm:$0xf]
      %v578 = vld [vmem:[%s4 + $0x1ec] sm:$0xff]
      %v579 = vld [vmem:[%s4 + $0x1f4] sm:$0xf]
      %v580 = vld [vmem:[%s4 + $0x1f8] sm:$0xff]
      %v581 = vld [vmem:[%s4 + $0x200] sm:$0xf]
      %v582 = vld [vmem:[%s4 + $0x204] sm:$0xff]
      %v583 = vld [vmem:[%s4 + $0x20c] sm:$0xf]
      %v584 = vld [vmem:[%s4 + $0x210] sm:$0xff]
      %v585 = vld [vmem:[%s4 + $0x218] sm:$0xf]
      %v586 = vld [vmem:[%s4 + $0x21c] sm:$0xff]
      %v587 = vld [vmem:[%s4 + $0x224] sm:$0xf]
      %v588 = vld [vmem:[%s4 + $0x228] sm:$0xff]
      %v589 = vld [vmem:[%s4 + $0x230] sm:$0xf]
      %v590 = vld [vmem:[%s4 + $0x234] sm:$0xff]
      %v591 = vld [vmem:[%s4 + $0x23c] sm:$0xf]
      %v592 = vlaneseq
      %v593 = vshrl.u32 %v592, 7
      %v594 = vadd.s32 %v593, 8
      %v595 = vadd.s32 %v593, 16
      %v596 = vadd.s32 %v593, 24
      %v597 = vlaneseq
      %v598 = vand.u32 %v597, 127
      %vm599 = vcmp.le.s32.totalorder %v598, %v593
      %vm600 = vcmp.le.s32.totalorder %v598, %v594
      %vm601 = vcmp.le.s32.totalorder %v598, %v595
      %vm602 = vcmp.le.s32.totalorder %v598, %v596
      %v603 = vld [vmem:[%s246] sm:$0xff]
      %v604 = vld [vmem:[%s246 + $0x8] sm:$0xff]
      %v605 = vld [vmem:[%s246 + $0x10] sm:$0xff]
      %v606 = vld [vmem:[%s246 + $0x18] sm:$0xff]
      %v607 = vld [vmem:[%s246 + $0x20] sm:$0xff]
      %v608 = vld [vmem:[%s246 + $0x28] sm:$0xff]
      %v609 = vld [vmem:[%s246 + $0x30] sm:$0xff]
      %v610 = vld [vmem:[%s246 + $0x38] sm:$0xff]
      %v611 = vld [vmem:[%s246 + $0x40] sm:$0xff]
      %v612 = vld [vmem:[%s246 + $0x48] sm:$0xff]
      %v613 = vld [vmem:[%s246 + $0x50] sm:$0xff]
      %v614 = vld [vmem:[%s246 + $0x58] sm:$0xff]
      %v615 = vadd.f32 %v603, %v604
      %v616 = vadd.f32 %v615, %v605
      %617 = vadd.xlane.f32.xlu0 %v616
      %v618 = vpop.xlane.xlu0 %617
      %v619 = vadd.f32 %v606, %v607
      %v620 = vadd.f32 %v619, %v608
      %621 = vadd.xlane.f32.xlu0 %v620
      %v622 = vpop.xlane.xlu0 %621
      %v623 = vadd.f32 %v609, %v610
      %v624 = vadd.f32 %v623, %v611
      %625 = vadd.xlane.f32.xlu0 %v624
      %v626 = vpop.xlane.xlu0 %625
      %v627 = vadd.f32 %v612, %v613
      %v628 = vadd.f32 %v627, %v614
      %629 = vadd.xlane.f32.xlu0 %v628
      %v630 = vpop.xlane.xlu0 %629
      %v631 = vrcp.pop 384.0
      %v632 = vmul.f32 384.0, %v631
      %v633 = vsub.f32 1.0, %v632
      %v634 = vmul.f32 %v631, %v633
      %v635 = vadd.f32 %v631, %v634
      %vm636 = vweird.f32 %v631
      %v637 = vsel %vm636, %v631, %v635
      %v638 = vmul.f32 %v618, %v637
      %v639 = vmul.f32 %v622, %v637
      %v640 = vmul.f32 %v626, %v637
      %v641 = vmul.f32 %v630, %v637
      %v642 = vsub.f32 %v603, %v638
      %v643 = vsub.f32 %v604, %v638
      %v644 = vsub.f32 %v605, %v638
      %v645 = vsub.f32 %v606, %v639
      %v646 = vsub.f32 %v607, %v639
      %v647 = vsub.f32 %v608, %v639
      %v648 = vsub.f32 %v609, %v640
      %v649 = vsub.f32 %v610, %v640
      %v650 = vsub.f32 %v611, %v640
      %v651 = vsub.f32 %v612, %v641
      %v652 = vsub.f32 %v613, %v641
      %v653 = vsub.f32 %v614, %v641
      %v654 = vmul.f32 %v642, %v642
      %v655 = vmul.f32 %v643, %v643
      %v656 = vmul.f32 %v644, %v644
      %v657 = vmul.f32 %v645, %v645
      %v658 = vmul.f32 %v646, %v646
      %v659 = vmul.f32 %v647, %v647
      %v660 = vmul.f32 %v648, %v648
      %v661 = vmul.f32 %v649, %v649
      %v662 = vmul.f32 %v650, %v650
      %v663 = vmul.f32 %v651, %v651
      %v664 = vmul.f32 %v652, %v652
      %v665 = vmul.f32 %v653, %v653
      %v666 = vadd.f32 %v654, %v655
      %v667 = vadd.f32 %v666, %v656
      %668 = vadd.xlane.f32.xlu0 %v667
      %v669 = vpop.xlane.xlu0 %668
      %v670 = vadd.f32 %v657, %v658
      %v671 = vadd.f32 %v670, %v659
      %672 = vadd.xlane.f32.xlu0 %v671
      %v673 = vpop.xlane.xlu0 %672
      %v674 = vadd.f32 %v660, %v661
      %v675 = vadd.f32 %v674, %v662
      %676 = vadd.xlane.f32.xlu0 %v675
      %v677 = vpop.xlane.xlu0 %676
      %v678 = vadd.f32 %v663, %v664
      %v679 = vadd.f32 %v678, %v665
      %680 = vadd.xlane.f32.xlu0 %v679
      %v681 = vpop.xlane.xlu0 %680
      %v682 = vmul.f32 %v669, %v637
      %v683 = vmul.f32 %v673, %v637
      %v684 = vmul.f32 %v677, %v637
      %v685 = vmul.f32 %v681, %v637
      %v686 = vadd.f32 %v682, 1e-05
      %v687 = vadd.f32 %v683, 1e-05
      %v688 = vadd.f32 %v684, 1e-05
      %v689 = vadd.f32 %v685, 1e-05
      %v690 = vrsqrt.pop %v686
      %v691 = vmul.f32 %v690, %v686
      %v692 = vmul.f32 %v691, %v690
      %v693 = vmul.f32 0.5, %v692
      %v694 = vsub.f32 1.5, %v693
      %v695 = vmul.f32 %v690, %v694
      %vm696 = vweird.f32 %v686
      %vm697 = vweird.f32 %v690
      %vm698 = vmor %vm696, %vm697
      %v699 = vsel %vm698, %v690, %v695
      %v700 = vrsqrt.pop %v687
      %v701 = vmul.f32 %v700, %v687
      %v702 = vmul.f32 %v701, %v700
      %v703 = vmul.f32 0.5, %v702
      %v704 = vsub.f32 1.5, %v703
      %v705 = vmul.f32 %v700, %v704
      %vm706 = vweird.f32 %v687
      %vm707 = vweird.f32 %v700
      %vm708 = vmor %vm706, %vm707
      %v709 = vsel %vm708, %v700, %v705
      %v710 = vrsqrt.pop %v688
      %v711 = vmul.f32 %v710, %v688
      %v712 = vmul.f32 %v711, %v710
      %v713 = vmul.f32 0.5, %v712
      %v714 = vsub.f32 1.5, %v713
      %v715 = vmul.f32 %v710, %v714
      %vm716 = vweird.f32 %v688
      %vm717 = vweird.f32 %v710
      %vm718 = vmor %vm716, %vm717
      %v719 = vsel %vm718, %v710, %v715
      %v720 = vrsqrt.pop %v689
      %v721 = vmul.f32 %v720, %v689
      %v722 = vmul.f32 %v721, %v720
      %v723 = vmul.f32 0.5, %v722
      %v724 = vsub.f32 1.5, %v723
      %v725 = vmul.f32 %v720, %v724
      %vm726 = vweird.f32 %v689
      %vm727 = vweird.f32 %v720
      %vm728 = vmor %vm726, %vm727
      %v729 = vsel %vm728, %v720, %v725
      %v730 = vmul.f32 %v642, %v699
      %v731 = vmul.f32 %v643, %v699
      %v732 = vmul.f32 %v644, %v699
      %v733 = vmul.f32 %v645, %v709
      %v734 = vmul.f32 %v646, %v709
      %v735 = vmul.f32 %v647, %v709
      %v736 = vmul.f32 %v648, %v719
      %v737 = vmul.f32 %v649, %v719
      %v738 = vmul.f32 %v650, %v719
      %v739 = vmul.f32 %v651, %v729
      %v740 = vmul.f32 %v652, %v729
      %v741 = vmul.f32 %v653, %v729
      %v743 = vperm.slane %v253, 0
      %v744 = vperm.slane %v253, 1
      %v745 = vperm.slane %v253, 2
      %v749 = vmul.f32 %v730, %v743
      %v750 = vmul.f32 %v731, %v744
      %v751 = vmul.f32 %v732, %v745
      %v752 = vmul.f32 %v733, %v743
      %v753 = vmul.f32 %v734, %v744
      %v754 = vmul.f32 %v735, %v745
      %v755 = vmul.f32 %v736, %v743
      %v756 = vmul.f32 %v737, %v744
      %v757 = vmul.f32 %v738, %v745
      %v758 = vmul.f32 %v739, %v743
      %v759 = vmul.f32 %v740, %v744
      %v760 = vmul.f32 %v741, %v745
      %v762 = vperm.slane %v254, 0
      %v763 = vperm.slane %v254, 1
      %v764 = vperm.slane %v254, 2
      %v768 = vadd.f32 %v749, %v762
      %v769 = vadd.f32 %v750, %v763
      %v770 = vadd.f32 %v751, %v764
      %v771 = vadd.f32 %v752, %v762
      %v772 = vadd.f32 %v753, %v763
      %v773 = vadd.f32 %v754, %v764
      %v774 = vadd.f32 %v755, %v762
      %v775 = vadd.f32 %v756, %v763
      %v776 = vadd.f32 %v757, %v764
      %v777 = vadd.f32 %v758, %v762
      %v778 = vadd.f32 %v759, %v763
      %v779 = vadd.f32 %v760, %v764
      %v780 = vpack.c.bf16 %v771, %v768
      %v781 = vpack.c.bf16 %v772, %v769
      %v782 = vpack.c.bf16 %v773, %v770
      %v783 = vpack.c.bf16 %v777, %v774
      %v784 = vpack.c.bf16 %v778, %v775
      %v785 = vpack.c.bf16 %v779, %v776
      %v1026 = vunpack.c.l.b16 %v256
      %v1027 = vunpack.c.h.b16 %v256
      %v1028 = vunpack.c.l.b16 %v257
      %v1029 = vunpack.c.h.b16 %v257
      %v1030 = vunpack.c.l.b16 %v258
      %v1031 = vunpack.c.h.b16 %v258
      %v1032 = vunpack.c.l.b16 %v259
      %v1033 = vunpack.c.h.b16 %v259
      %v1034 = vunpack.c.l.b16 %v260
      %v1035 = vunpack.c.l.b16 %v261
      %v1036 = vunpack.c.h.b16 %v261
      %v1037 = vunpack.c.l.b16 %v262
      %v1038 = vunpack.c.h.b16 %v262
      %v1039 = vunpack.c.l.b16 %v263
      %v1040 = vunpack.c.h.b16 %v263
      %v1041 = vunpack.c.l.b16 %v264
      %v1042 = vunpack.c.h.b16 %v264
      %v1043 = vunpack.c.l.b16 %v265
      %v1044 = vunpack.c.l.b16 %v266
      %v1045 = vunpack.c.h.b16 %v266
      %v1046 = vunpack.c.l.b16 %v267
      %v1047 = vunpack.c.h.b16 %v267
      %v1048 = vunpack.c.l.b16 %v268
      %v1049 = vunpack.c.h.b16 %v268
      %v1050 = vunpack.c.l.b16 %v269
      %v1051 = vunpack.c.h.b16 %v269
      %v1052 = vunpack.c.l.b16 %v270
      %v1053 = vunpack.c.l.b16 %v271
      %v1054 = vunpack.c.h.b16 %v271
      %v1055 = vunpack.c.l.b16 %v272
      %v1056 = vunpack.c.h.b16 %v272
      %v1057 = vunpack.c.l.b16 %v273
      %v1058 = vunpack.c.h.b16 %v273
      %v1059 = vunpack.c.l.b16 %v274
      %v1060 = vunpack.c.h.b16 %v274
      %v1061 = vunpack.c.l.b16 %v275
      %v1062 = vunpack.c.l.b16 %v276
      %v1063 = vunpack.c.h.b16 %v276
      %v1064 = vunpack.c.l.b16 %v277
      %v1065 = vunpack.c.h.b16 %v277
      %v1066 = vunpack.c.l.b16 %v278
      %v1067 = vunpack.c.h.b16 %v278
      %v1068 = vunpack.c.l.b16 %v279
      %v1069 = vunpack.c.h.b16 %v279
      %v1070 = vunpack.c.l.b16 %v280
      %v1071 = vunpack.c.l.b16 %v281
      %v1072 = vunpack.c.h.b16 %v281
      %v1073 = vunpack.c.l.b16 %v282
      %v1074 = vunpack.c.h.b16 %v282
      %v1075 = vunpack.c.l.b16 %v283
      %v1076 = vunpack.c.h.b16 %v283
      %v1077 = vunpack.c.l.b16 %v284
      %v1078 = vunpack.c.h.b16 %v284
      %v1079 = vunpack.c.l.b16 %v285
      %v1080 = vunpack.c.l.b16 %v286
      %v1081 = vunpack.c.h.b16 %v286
      %v1082 = vunpack.c.l.b16 %v287
      %v1083 = vunpack.c.h.b16 %v287
      %v1084 = vunpack.c.l.b16 %v288
      %v1085 = vunpack.c.h.b16 %v288
      %v1086 = vunpack.c.l.b16 %v289
      %v1087 = vunpack.c.h.b16 %v289
      %v1088 = vunpack.c.l.b16 %v290
      %v1089 = vunpack.c.l.b16 %v291
      %v1090 = vunpack.c.h.b16 %v291
      %v1091 = vunpack.c.l.b16 %v292
      %v1092 = vunpack.c.h.b16 %v292
      %v1093 = vunpack.c.l.b16 %v293
      %v1094 = vunpack.c.h.b16 %v293
      %v1095 = vunpack.c.l.b16 %v294
      %v1096 = vunpack.c.h.b16 %v294
      %v1097 = vunpack.c.l.b16 %v295
      %v1098 = vunpack.c.l.b16 %v296
      %v1099 = vunpack.c.h.b16 %v296
      %v1100 = vunpack.c.l.b16 %v297
      %v1101 = vunpack.c.h.b16 %v297
      %v1102 = vunpack.c.l.b16 %v298
      %v1103 = vunpack.c.h.b16 %v298
      %v1104 = vunpack.c.l.b16 %v299
      %v1105 = vunpack.c.h.b16 %v299
      %v1106 = vunpack.c.l.b16 %v300
      %v1107 = vunpack.c.l.b16 %v301
      %v1108 = vunpack.c.h.b16 %v301
      %v1109 = vunpack.c.l.b16 %v302
      %v1110 = vunpack.c.h.b16 %v302
      %v1111 = vunpack.c.l.b16 %v303
      %v1112 = vunpack.c.h.b16 %v303
      %v1113 = vunpack.c.l.b16 %v304
      %v1114 = vunpack.c.h.b16 %v304
      %v1115 = vunpack.c.l.b16 %v305
      %v1116 = vunpack.c.l.b16 %v306
      %v1117 = vunpack.c.h.b16 %v306
      %v1118 = vunpack.c.l.b16 %v307
      %v1119 = vunpack.c.h.b16 %v307
      %v1120 = vunpack.c.l.b16 %v308
      %v1121 = vunpack.c.h.b16 %v308
      %v1122 = vunpack.c.l.b16 %v309
      %v1123 = vunpack.c.h.b16 %v309
      %v1124 = vunpack.c.l.b16 %v310
      %v1125 = vunpack.c.l.b16 %v311
      %v1126 = vunpack.c.h.b16 %v311
      %v1127 = vunpack.c.l.b16 %v312
      %v1128 = vunpack.c.h.b16 %v312
      %v1129 = vunpack.c.l.b16 %v313
      %v1130 = vunpack.c.h.b16 %v313
      %v1131 = vunpack.c.l.b16 %v314
      %v1132 = vunpack.c.h.b16 %v314
      %v1133 = vunpack.c.l.b16 %v315
      %v1134 = vunpack.c.l.b16 %v316
      %v1135 = vunpack.c.h.b16 %v316
      %v1136 = vunpack.c.l.b16 %v317
      %v1137 = vunpack.c.h.b16 %v317
      %v1138 = vunpack.c.l.b16 %v318
      %v1139 = vunpack.c.h.b16 %v318
      %v1140 = vunpack.c.l.b16 %v319
      %v1141 = vunpack.c.h.b16 %v319
      %v1142 = vunpack.c.l.b16 %v320
      %v1143 = vunpack.c.l.b16 %v321
      %v1144 = vunpack.c.h.b16 %v321
      %v1145 = vunpack.c.l.b16 %v322
      %v1146 = vunpack.c.h.b16 %v322
      %v1147 = vunpack.c.l.b16 %v323
      %v1148 = vunpack.c.h.b16 %v323
      %v1149 = vunpack.c.l.b16 %v324
      %v1150 = vunpack.c.h.b16 %v324
      %v1151 = vunpack.c.l.b16 %v325
      %v1152 = vunpack.c.l.b16 %v326
      %v1153 = vunpack.c.h.b16 %v326
      %v1154 = vunpack.c.l.b16 %v327
      %v1155 = vunpack.c.h.b16 %v327
      %v1156 = vunpack.c.l.b16 %v328
      %v1157 = vunpack.c.h.b16 %v328
      %v1158 = vunpack.c.l.b16 %v329
      %v1159 = vunpack.c.h.b16 %v329
      %v1160 = vunpack.c.l.b16 %v330
      %v1161 = vunpack.c.l.b16 %v331
      %v1162 = vunpack.c.h.b16 %v331
      %v1163 = vunpack.c.l.b16 %v332
      %v1164 = vunpack.c.h.b16 %v332
      %v1165 = vunpack.c.l.b16 %v333
      %v1166 = vunpack.c.h.b16 %v333
      %v1167 = vunpack.c.l.b16 %v334
      %v1168 = vunpack.c.h.b16 %v334
      %v1169 = vunpack.c.l.b16 %v335
      %v1170 = vunpack.c.l.b16 %v336
      %v1171 = vunpack.c.h.b16 %v336
      %v1172 = vunpack.c.l.b16 %v337
      %v1173 = vunpack.c.h.b16 %v337
      %v1174 = vunpack.c.l.b16 %v338
      %v1175 = vunpack.c.h.b16 %v338
      %v1176 = vunpack.c.l.b16 %v339
      %v1177 = vunpack.c.h.b16 %v339
      %v1178 = vunpack.c.l.b16 %v340
      %v1179 = vunpack.c.l.b16 %v341
      %v1180 = vunpack.c.h.b16 %v341
      %v1181 = vunpack.c.l.b16 %v342
      %v1182 = vunpack.c.h.b16 %v342
      %v1183 = vunpack.c.l.b16 %v343
      %v1184 = vunpack.c.h.b16 %v343
      %v1185 = vunpack.c.l.b16 %v344
      %v1186 = vunpack.c.h.b16 %v344
      %v1187 = vunpack.c.l.b16 %v345
      %v1188 = vunpack.c.l.b16 %v346
      %v1189 = vunpack.c.h.b16 %v346
      %v1190 = vunpack.c.l.b16 %v347
      %v1191 = vunpack.c.h.b16 %v347
      %v1192 = vunpack.c.l.b16 %v348
      %v1193 = vunpack.c.h.b16 %v348
      %v1194 = vunpack.c.l.b16 %v349
      %v1195 = vunpack.c.h.b16 %v349
      %v1196 = vunpack.c.l.b16 %v350
      %v1197 = vunpack.c.l.b16 %v351
      %v1198 = vunpack.c.h.b16 %v351
      %v1199 = vunpack.c.l.b16 %v352
      %v1200 = vunpack.c.h.b16 %v352
      %v1201 = vunpack.c.l.b16 %v353
      %v1202 = vunpack.c.h.b16 %v353
      %v1203 = vunpack.c.l.b16 %v354
      %v1204 = vunpack.c.h.b16 %v354
      %v1205 = vunpack.c.l.b16 %v355
      %v1206 = vunpack.c.l.b16 %v356
      %v1207 = vunpack.c.h.b16 %v356
      %v1208 = vunpack.c.l.b16 %v357
      %v1209 = vunpack.c.h.b16 %v357
      %v1210 = vunpack.c.l.b16 %v358
      %v1211 = vunpack.c.h.b16 %v358
      %v1212 = vunpack.c.l.b16 %v359
      %v1213 = vunpack.c.h.b16 %v359
      %v1214 = vunpack.c.l.b16 %v360
      %v1215 = vunpack.c.l.b16 %v361
      %v1216 = vunpack.c.h.b16 %v361
      %v1217 = vunpack.c.l.b16 %v362
      %v1218 = vunpack.c.h.b16 %v362
      %v1219 = vunpack.c.l.b16 %v363
      %v1220 = vunpack.c.h.b16 %v363
      %v1221 = vunpack.c.l.b16 %v364
      %v1222 = vunpack.c.h.b16 %v364
      %v1223 = vunpack.c.l.b16 %v365
      %v1224 = vunpack.c.l.b16 %v366
      %v1225 = vunpack.c.h.b16 %v366
      %v1226 = vunpack.c.l.b16 %v367
      %v1227 = vunpack.c.h.b16 %v367
      %v1228 = vunpack.c.l.b16 %v368
      %v1229 = vunpack.c.h.b16 %v368
      %v1230 = vunpack.c.l.b16 %v369
      %v1231 = vunpack.c.h.b16 %v369
      %v1232 = vunpack.c.l.b16 %v370
      %v1233 = vunpack.c.l.b16 %v371
      %v1234 = vunpack.c.h.b16 %v371
      %v1235 = vunpack.c.l.b16 %v372
      %v1236 = vunpack.c.h.b16 %v372
      %v1237 = vunpack.c.l.b16 %v373
      %v1238 = vunpack.c.h.b16 %v373
      %v1239 = vunpack.c.l.b16 %v374
      %v1240 = vunpack.c.h.b16 %v374
      %v1241 = vunpack.c.l.b16 %v375
      %v1242 = vunpack.c.l.b16 %v376
      %v1243 = vunpack.c.h.b16 %v376
      %v1244 = vunpack.c.l.b16 %v377
      %v1245 = vunpack.c.h.b16 %v377
      %v1246 = vunpack.c.l.b16 %v378
      %v1247 = vunpack.c.h.b16 %v378
      %v1248 = vunpack.c.l.b16 %v379
      %v1249 = vunpack.c.h.b16 %v379
      %v1250 = vunpack.c.l.b16 %v380
      %v1251 = vunpack.c.l.b16 %v381
      %v1252 = vunpack.c.h.b16 %v381
      %v1253 = vunpack.c.l.b16 %v382
      %v1254 = vunpack.c.h.b16 %v382
      %v1255 = vunpack.c.l.b16 %v383
      %v1256 = vunpack.c.h.b16 %v383
      %v1257 = vunpack.c.l.b16 %v384
      %v1258 = vunpack.c.h.b16 %v384
      %v1259 = vunpack.c.l.b16 %v385
      %v1260 = vunpack.c.l.b16 %v386
      %v1261 = vunpack.c.h.b16 %v386
      %v1262 = vunpack.c.l.b16 %v387
      %v1263 = vunpack.c.h.b16 %v387
      %v1264 = vunpack.c.l.b16 %v388
      %v1265 = vunpack.c.h.b16 %v388
      %v1266 = vunpack.c.l.b16 %v389
      %v1267 = vunpack.c.h.b16 %v389
      %v1268 = vunpack.c.l.b16 %v390
      %v1269 = vunpack.c.l.b16 %v391
      %v1270 = vunpack.c.h.b16 %v391
      %v1271 = vunpack.c.l.b16 %v392
      %v1272 = vunpack.c.h.b16 %v392
      %v1273 = vunpack.c.l.b16 %v393
      %v1274 = vunpack.c.h.b16 %v393
      %v1275 = vunpack.c.l.b16 %v394
      %v1276 = vunpack.c.h.b16 %v394
      %v1277 = vunpack.c.l.b16 %v395
      %v1278 = vunpack.c.l.b16 %v396
      %v1279 = vunpack.c.h.b16 %v396
      %v1280 = vunpack.c.l.b16 %v397
      %v1281 = vunpack.c.h.b16 %v397
      %v1282 = vunpack.c.l.b16 %v398
      %v1283 = vunpack.c.h.b16 %v398
      %v1284 = vunpack.c.l.b16 %v399
      %v1285 = vunpack.c.h.b16 %v399
      %v1286 = vunpack.c.l.b16 %v400
      %v1287 = vunpack.c.l.b16 %v401
      %v1288 = vunpack.c.h.b16 %v401
      %v1289 = vunpack.c.l.b16 %v402
      %v1290 = vunpack.c.h.b16 %v402
      %v1291 = vunpack.c.l.b16 %v403
      %v1292 = vunpack.c.h.b16 %v403
      %v1293 = vunpack.c.l.b16 %v404
      %v1294 = vunpack.c.h.b16 %v404
      %v1295 = vunpack.c.l.b16 %v405
      %v1296 = vunpack.c.l.b16 %v406
      %v1297 = vunpack.c.h.b16 %v406
      %v1298 = vunpack.c.l.b16 %v407
      %v1299 = vunpack.c.h.b16 %v407
      %v1300 = vunpack.c.l.b16 %v408
      %v1301 = vunpack.c.h.b16 %v408
      %v1302 = vunpack.c.l.b16 %v409
      %v1303 = vunpack.c.h.b16 %v409
      %v1304 = vunpack.c.l.b16 %v410
      %v1305 = vunpack.c.l.b16 %v411
      %v1306 = vunpack.c.h.b16 %v411
      %v1307 = vunpack.c.l.b16 %v412
      %v1308 = vunpack.c.h.b16 %v412
      %v1309 = vunpack.c.l.b16 %v413
      %v1310 = vunpack.c.h.b16 %v413
      %v1311 = vunpack.c.l.b16 %v414
      %v1312 = vunpack.c.h.b16 %v414
      %v1313 = vunpack.c.l.b16 %v415
      %v1314 = vunpack.c.l.b16 %v416
      %v1315 = vunpack.c.h.b16 %v416
      %v1316 = vunpack.c.l.b16 %v417
      %v1317 = vunpack.c.h.b16 %v417
      %v1318 = vunpack.c.l.b16 %v418
      %v1319 = vunpack.c.h.b16 %v418
      %v1320 = vunpack.c.l.b16 %v419
      %v1321 = vunpack.c.h.b16 %v419
      %v1322 = vunpack.c.l.b16 %v420
      %v1323 = vunpack.c.l.b16 %v421
      %v1324 = vunpack.c.h.b16 %v421
      %v1325 = vunpack.c.l.b16 %v422
      %v1326 = vunpack.c.h.b16 %v422
      %v1327 = vunpack.c.l.b16 %v423
      %v1328 = vunpack.c.h.b16 %v423
      %v1329 = vunpack.c.l.b16 %v424
      %v1330 = vunpack.c.h.b16 %v424
      %v1331 = vunpack.c.l.b16 %v425
      %v1332 = vunpack.c.l.b16 %v426
      %v1333 = vunpack.c.h.b16 %v426
      %v1334 = vunpack.c.l.b16 %v427
      %v1335 = vunpack.c.h.b16 %v427
      %v1336 = vunpack.c.l.b16 %v428
      %v1337 = vunpack.c.h.b16 %v428
      %v1338 = vunpack.c.l.b16 %v429
      %v1339 = vunpack.c.h.b16 %v429
      %v1340 = vunpack.c.l.b16 %v430
      %v1341 = vunpack.c.l.b16 %v431
      %v1342 = vunpack.c.h.b16 %v431
      %v1343 = vunpack.c.l.b16 %v432
      %v1344 = vunpack.c.h.b16 %v432
      %v1345 = vunpack.c.l.b16 %v433
      %v1346 = vunpack.c.h.b16 %v433
      %v1347 = vunpack.c.l.b16 %v434
      %v1348 = vunpack.c.h.b16 %v434
      %v1349 = vunpack.c.l.b16 %v435
      %v1350 = vunpack.c.l.b16 %v436
      %v1351 = vunpack.c.h.b16 %v436
      %v1352 = vunpack.c.l.b16 %v437
      %v1353 = vunpack.c.h.b16 %v437
      %v1354 = vunpack.c.l.b16 %v438
      %v1355 = vunpack.c.h.b16 %v438
      %v1356 = vunpack.c.l.b16 %v439
      %v1357 = vunpack.c.h.b16 %v439
      %v1358 = vunpack.c.l.b16 %v440
      %v1359 = vunpack.c.l.b16 %v441
      %v1360 = vunpack.c.h.b16 %v441
      %v1361 = vunpack.c.l.b16 %v442
      %v1362 = vunpack.c.h.b16 %v442
      %v1363 = vunpack.c.l.b16 %v443
      %v1364 = vunpack.c.h.b16 %v443
      %v1365 = vunpack.c.l.b16 %v444
      %v1366 = vunpack.c.h.b16 %v444
      %v1367 = vunpack.c.l.b16 %v445
      %v1368 = vunpack.c.l.b16 %v446
      %v1369 = vunpack.c.h.b16 %v446
      %v1370 = vunpack.c.l.b16 %v447
      %v1371 = vunpack.c.h.b16 %v447
      %v1372 = vunpack.c.l.b16 %v448
      %v1373 = vunpack.c.h.b16 %v448
      %v1374 = vunpack.c.l.b16 %v449
      %v1375 = vunpack.c.h.b16 %v449
      %v1376 = vunpack.c.l.b16 %v450
      %v1377 = vunpack.c.l.b16 %v451
      %v1378 = vunpack.c.h.b16 %v451
      %v1379 = vunpack.c.l.b16 %v452
      %v1380 = vunpack.c.h.b16 %v452
      %v1381 = vunpack.c.l.b16 %v453
      %v1382 = vunpack.c.h.b16 %v453
      %v1383 = vunpack.c.l.b16 %v454
      %v1384 = vunpack.c.h.b16 %v454
      %v1385 = vunpack.c.l.b16 %v455
      %v1386 = vunpack.c.l.b16 %v456
      %v1387 = vunpack.c.h.b16 %v456
      %v1388 = vunpack.c.l.b16 %v457
      %v1389 = vunpack.c.h.b16 %v457
      %v1390 = vunpack.c.l.b16 %v458
      %v1391 = vunpack.c.h.b16 %v458
      %v1392 = vunpack.c.l.b16 %v459
      %v1393 = vunpack.c.h.b16 %v459
      %v1394 = vunpack.c.l.b16 %v460
      %v1395 = vunpack.c.l.b16 %v461
      %v1396 = vunpack.c.h.b16 %v461
      %v1397 = vunpack.c.l.b16 %v462
      %v1398 = vunpack.c.h.b16 %v462
      %v1399 = vunpack.c.l.b16 %v463
      %v1400 = vunpack.c.h.b16 %v463
      %v1401 = vunpack.c.l.b16 %v464
      %v1402 = vunpack.c.h.b16 %v464
      %v1403 = vunpack.c.l.b16 %v465
      %v1404 = vunpack.c.l.b16 %v466
      %v1405 = vunpack.c.h.b16 %v466
      %v1406 = vunpack.c.l.b16 %v467
      %v1407 = vunpack.c.h.b16 %v467
      %v1408 = vunpack.c.l.b16 %v468
      %v1409 = vunpack.c.h.b16 %v468
      %v1410 = vunpack.c.l.b16 %v469
      %v1411 = vunpack.c.h.b16 %v469
      %v1412 = vunpack.c.l.b16 %v470
      %v1413 = vunpack.c.l.b16 %v471
      %v1414 = vunpack.c.h.b16 %v471
      %v1415 = vunpack.c.l.b16 %v472
      %v1416 = vunpack.c.h.b16 %v472
      %v1417 = vunpack.c.l.b16 %v473
      %v1418 = vunpack.c.h.b16 %v473
      %v1419 = vunpack.c.l.b16 %v474
      %v1420 = vunpack.c.h.b16 %v474
      %v1421 = vunpack.c.l.b16 %v475
      %v1422 = vunpack.c.l.b16 %v476
      %v1423 = vunpack.c.h.b16 %v476
      %v1424 = vunpack.c.l.b16 %v477
      %v1425 = vunpack.c.h.b16 %v477
      %v1426 = vunpack.c.l.b16 %v478
      %v1427 = vunpack.c.h.b16 %v478
      %v1428 = vunpack.c.l.b16 %v479
      %v1429 = vunpack.c.h.b16 %v479
      %v1430 = vunpack.c.l.b16 %v480
      %v1431 = vunpack.c.l.b16 %v481
      %v1432 = vunpack.c.h.b16 %v481
      %v1433 = vunpack.c.l.b16 %v482
      %v1434 = vunpack.c.h.b16 %v482
      %v1435 = vunpack.c.l.b16 %v483
      %v1436 = vunpack.c.h.b16 %v483
      %v1437 = vunpack.c.l.b16 %v484
      %v1438 = vunpack.c.h.b16 %v484
      %v1439 = vunpack.c.l.b16 %v485
      %v1440 = vunpack.c.l.b16 %v486
      %v1441 = vunpack.c.h.b16 %v486
      %v1442 = vunpack.c.l.b16 %v487
      %v1443 = vunpack.c.h.b16 %v487
      %v1444 = vunpack.c.l.b16 %v488
      %v1445 = vunpack.c.h.b16 %v488
      %v1446 = vunpack.c.l.b16 %v489
      %v1447 = vunpack.c.h.b16 %v489
      %v1448 = vunpack.c.l.b16 %v490
      %v1449 = vunpack.c.l.b16 %v491
      %v1450 = vunpack.c.h.b16 %v491
      %v1451 = vunpack.c.l.b16 %v492
      %v1452 = vunpack.c.h.b16 %v492
      %v1453 = vunpack.c.l.b16 %v493
      %v1454 = vunpack.c.h.b16 %v493
      %v1455 = vunpack.c.l.b16 %v494
      %v1456 = vunpack.c.h.b16 %v494
      %v1457 = vunpack.c.l.b16 %v495
      %v1458 = vpack.c.b16 %v1035, %v1026
      %v1459 = vpack.c.b16 %v1036, %v1027
      %v1460 = vpack.c.b16 %v1037, %v1028
      %v1461 = vpack.c.b16 %v1038, %v1029
      %v1462 = vpack.c.b16 %v1039, %v1030
      %v1463 = vpack.c.b16 %v1040, %v1031
      %v1464 = vpack.c.b16 %v1041, %v1032
      %v1465 = vpack.c.b16 %v1042, %v1033
      %v1466 = vpack.c.b16 %v1043, %v1034
      %v1467 = vpack.c.b16 %v1053, %v1044
      %v1468 = vpack.c.b16 %v1054, %v1045
      %v1469 = vpack.c.b16 %v1055, %v1046
      %v1470 = vpack.c.b16 %v1056, %v1047
      %v1471 = vpack.c.b16 %v1057, %v1048
      %v1472 = vpack.c.b16 %v1058, %v1049
      %v1473 = vpack.c.b16 %v1059, %v1050
      %v1474 = vpack.c.b16 %v1060, %v1051
      %v1475 = vpack.c.b16 %v1061, %v1052
      %v1476 = vpack.c.b16 %v1071, %v1062
      %v1477 = vpack.c.b16 %v1072, %v1063
      %v1478 = vpack.c.b16 %v1073, %v1064
      %v1479 = vpack.c.b16 %v1074, %v1065
      %v1480 = vpack.c.b16 %v1075, %v1066
      %v1481 = vpack.c.b16 %v1076, %v1067
      %v1482 = vpack.c.b16 %v1077, %v1068
      %v1483 = vpack.c.b16 %v1078, %v1069
      %v1484 = vpack.c.b16 %v1079, %v1070
      %v1485 = vpack.c.b16 %v1089, %v1080
      %v1486 = vpack.c.b16 %v1090, %v1081
      %v1487 = vpack.c.b16 %v1091, %v1082
      %v1488 = vpack.c.b16 %v1092, %v1083
      %v1489 = vpack.c.b16 %v1093, %v1084
      %v1490 = vpack.c.b16 %v1094, %v1085
      %v1491 = vpack.c.b16 %v1095, %v1086
      %v1492 = vpack.c.b16 %v1096, %v1087
      %v1493 = vpack.c.b16 %v1097, %v1088
      %v1494 = vpack.c.b16 %v1107, %v1098
      %v1495 = vpack.c.b16 %v1108, %v1099
      %v1496 = vpack.c.b16 %v1109, %v1100
      %v1497 = vpack.c.b16 %v1110, %v1101
      %v1498 = vpack.c.b16 %v1111, %v1102
      %v1499 = vpack.c.b16 %v1112, %v1103
      %v1500 = vpack.c.b16 %v1113, %v1104
      %v1501 = vpack.c.b16 %v1114, %v1105
      %v1502 = vpack.c.b16 %v1115, %v1106
      %v1503 = vpack.c.b16 %v1125, %v1116
      %v1504 = vpack.c.b16 %v1126, %v1117
      %v1505 = vpack.c.b16 %v1127, %v1118
      %v1506 = vpack.c.b16 %v1128, %v1119
      %v1507 = vpack.c.b16 %v1129, %v1120
      %v1508 = vpack.c.b16 %v1130, %v1121
      %v1509 = vpack.c.b16 %v1131, %v1122
      %v1510 = vpack.c.b16 %v1132, %v1123
      %v1511 = vpack.c.b16 %v1133, %v1124
      %v1512 = vpack.c.b16 %v1143, %v1134
      %v1513 = vpack.c.b16 %v1144, %v1135
      %v1514 = vpack.c.b16 %v1145, %v1136
      %v1515 = vpack.c.b16 %v1146, %v1137
      %v1516 = vpack.c.b16 %v1147, %v1138
      %v1517 = vpack.c.b16 %v1148, %v1139
      %v1518 = vpack.c.b16 %v1149, %v1140
      %v1519 = vpack.c.b16 %v1150, %v1141
      %v1520 = vpack.c.b16 %v1151, %v1142
      %v1521 = vpack.c.b16 %v1161, %v1152
      %v1522 = vpack.c.b16 %v1162, %v1153
      %v1523 = vpack.c.b16 %v1163, %v1154
      %v1524 = vpack.c.b16 %v1164, %v1155
      %v1525 = vpack.c.b16 %v1165, %v1156
      %v1526 = vpack.c.b16 %v1166, %v1157
      %v1527 = vpack.c.b16 %v1167, %v1158
      %v1528 = vpack.c.b16 %v1168, %v1159
      %v1529 = vpack.c.b16 %v1169, %v1160
      %v1530 = vpack.c.b16 %v1179, %v1170
      %v1531 = vpack.c.b16 %v1180, %v1171
      %v1532 = vpack.c.b16 %v1181, %v1172
      %v1533 = vpack.c.b16 %v1182, %v1173
      %v1534 = vpack.c.b16 %v1183, %v1174
      %v1535 = vpack.c.b16 %v1184, %v1175
      %v1536 = vpack.c.b16 %v1185, %v1176
      %v1537 = vpack.c.b16 %v1186, %v1177
      %v1538 = vpack.c.b16 %v1187, %v1178
      %v1539 = vpack.c.b16 %v1197, %v1188
      %v1540 = vpack.c.b16 %v1198, %v1189
      %v1541 = vpack.c.b16 %v1199, %v1190
      %v1542 = vpack.c.b16 %v1200, %v1191
      %v1543 = vpack.c.b16 %v1201, %v1192
      %v1544 = vpack.c.b16 %v1202, %v1193
      %v1545 = vpack.c.b16 %v1203, %v1194
      %v1546 = vpack.c.b16 %v1204, %v1195
      %v1547 = vpack.c.b16 %v1205, %v1196
      %v1548 = vpack.c.b16 %v1215, %v1206
      %v1549 = vpack.c.b16 %v1216, %v1207
      %v1550 = vpack.c.b16 %v1217, %v1208
      %v1551 = vpack.c.b16 %v1218, %v1209
      %v1552 = vpack.c.b16 %v1219, %v1210
      %v1553 = vpack.c.b16 %v1220, %v1211
      %v1554 = vpack.c.b16 %v1221, %v1212
      %v1555 = vpack.c.b16 %v1222, %v1213
      %v1556 = vpack.c.b16 %v1223, %v1214
      %v1557 = vpack.c.b16 %v1233, %v1224
      %v1558 = vpack.c.b16 %v1234, %v1225
      %v1559 = vpack.c.b16 %v1235, %v1226
      %v1560 = vpack.c.b16 %v1236, %v1227
      %v1561 = vpack.c.b16 %v1237, %v1228
      %v1562 = vpack.c.b16 %v1238, %v1229
      %v1563 = vpack.c.b16 %v1239, %v1230
      %v1564 = vpack.c.b16 %v1240, %v1231
      %v1565 = vpack.c.b16 %v1241, %v1232
      %v1566 = vpack.c.b16 %v1251, %v1242
      %v1567 = vpack.c.b16 %v1252, %v1243
      %v1568 = vpack.c.b16 %v1253, %v1244
      %v1569 = vpack.c.b16 %v1254, %v1245
      %v1570 = vpack.c.b16 %v1255, %v1246
      %v1571 = vpack.c.b16 %v1256, %v1247
      %v1572 = vpack.c.b16 %v1257, %v1248
      %v1573 = vpack.c.b16 %v1258, %v1249
      %v1574 = vpack.c.b16 %v1259, %v1250
      %v1575 = vpack.c.b16 %v1269, %v1260
      %v1576 = vpack.c.b16 %v1270, %v1261
      %v1577 = vpack.c.b16 %v1271, %v1262
      %v1578 = vpack.c.b16 %v1272, %v1263
      %v1579 = vpack.c.b16 %v1273, %v1264
      %v1580 = vpack.c.b16 %v1274, %v1265
      %v1581 = vpack.c.b16 %v1275, %v1266
      %v1582 = vpack.c.b16 %v1276, %v1267
      %v1583 = vpack.c.b16 %v1277, %v1268
      %v1584 = vpack.c.b16 %v1287, %v1278
      %v1585 = vpack.c.b16 %v1288, %v1279
      %v1586 = vpack.c.b16 %v1289, %v1280
      %v1587 = vpack.c.b16 %v1290, %v1281
      %v1588 = vpack.c.b16 %v1291, %v1282
      %v1589 = vpack.c.b16 %v1292, %v1283
      %v1590 = vpack.c.b16 %v1293, %v1284
      %v1591 = vpack.c.b16 %v1294, %v1285
      %v1592 = vpack.c.b16 %v1295, %v1286
      %v1593 = vpack.c.b16 %v1305, %v1296
      %v1594 = vpack.c.b16 %v1306, %v1297
      %v1595 = vpack.c.b16 %v1307, %v1298
      %v1596 = vpack.c.b16 %v1308, %v1299
      %v1597 = vpack.c.b16 %v1309, %v1300
      %v1598 = vpack.c.b16 %v1310, %v1301
      %v1599 = vpack.c.b16 %v1311, %v1302
      %v1600 = vpack.c.b16 %v1312, %v1303
      %v1601 = vpack.c.b16 %v1313, %v1304
      %v1602 = vpack.c.b16 %v1323, %v1314
      %v1603 = vpack.c.b16 %v1324, %v1315
      %v1604 = vpack.c.b16 %v1325, %v1316
      %v1605 = vpack.c.b16 %v1326, %v1317
      %v1606 = vpack.c.b16 %v1327, %v1318
      %v1607 = vpack.c.b16 %v1328, %v1319
      %v1608 = vpack.c.b16 %v1329, %v1320
      %v1609 = vpack.c.b16 %v1330, %v1321
      %v1610 = vpack.c.b16 %v1331, %v1322
      %v1611 = vpack.c.b16 %v1341, %v1332
      %v1612 = vpack.c.b16 %v1342, %v1333
      %v1613 = vpack.c.b16 %v1343, %v1334
      %v1614 = vpack.c.b16 %v1344, %v1335
      %v1615 = vpack.c.b16 %v1345, %v1336
      %v1616 = vpack.c.b16 %v1346, %v1337
      %v1617 = vpack.c.b16 %v1347, %v1338
      %v1618 = vpack.c.b16 %v1348, %v1339
      %v1619 = vpack.c.b16 %v1349, %v1340
      %v1620 = vpack.c.b16 %v1359, %v1350
      %v1621 = vpack.c.b16 %v1360, %v1351
      %v1622 = vpack.c.b16 %v1361, %v1352
      %v1623 = vpack.c.b16 %v1362, %v1353
      %v1624 = vpack.c.b16 %v1363, %v1354
      %v1625 = vpack.c.b16 %v1364, %v1355
      %v1626 = vpack.c.b16 %v1365, %v1356
      %v1627 = vpack.c.b16 %v1366, %v1357
      %v1628 = vpack.c.b16 %v1367, %v1358
      %v1629 = vpack.c.b16 %v1377, %v1368
      %v1630 = vpack.c.b16 %v1378, %v1369
      %v1631 = vpack.c.b16 %v1379, %v1370
      %v1632 = vpack.c.b16 %v1380, %v1371
      %v1633 = vpack.c.b16 %v1381, %v1372
      %v1634 = vpack.c.b16 %v1382, %v1373
      %v1635 = vpack.c.b16 %v1383, %v1374
      %v1636 = vpack.c.b16 %v1384, %v1375
      %v1637 = vpack.c.b16 %v1385, %v1376
      %v1638 = vpack.c.b16 %v1395, %v1386
      %v1639 = vpack.c.b16 %v1396, %v1387
      %v1640 = vpack.c.b16 %v1397, %v1388
      %v1641 = vpack.c.b16 %v1398, %v1389
      %v1642 = vpack.c.b16 %v1399, %v1390
      %v1643 = vpack.c.b16 %v1400, %v1391
      %v1644 = vpack.c.b16 %v1401, %v1392
      %v1645 = vpack.c.b16 %v1402, %v1393
      %v1646 = vpack.c.b16 %v1403, %v1394
      %v1647 = vpack.c.b16 %v1413, %v1404
      %v1648 = vpack.c.b16 %v1414, %v1405
      %v1649 = vpack.c.b16 %v1415, %v1406
      %v1650 = vpack.c.b16 %v1416, %v1407
      %v1651 = vpack.c.b16 %v1417, %v1408
      %v1652 = vpack.c.b16 %v1418, %v1409
      %v1653 = vpack.c.b16 %v1419, %v1410
      %v1654 = vpack.c.b16 %v1420, %v1411
      %v1655 = vpack.c.b16 %v1421, %v1412
      %v1656 = vpack.c.b16 %v1431, %v1422
      %v1657 = vpack.c.b16 %v1432, %v1423
      %v1658 = vpack.c.b16 %v1433, %v1424
      %v1659 = vpack.c.b16 %v1434, %v1425
      %v1660 = vpack.c.b16 %v1435, %v1426
      %v1661 = vpack.c.b16 %v1436, %v1427
      %v1662 = vpack.c.b16 %v1437, %v1428
      %v1663 = vpack.c.b16 %v1438, %v1429
      %v1664 = vpack.c.b16 %v1439, %v1430
      %v1665 = vpack.c.b16 %v1449, %v1440
      %v1666 = vpack.c.b16 %v1450, %v1441
      %v1667 = vpack.c.b16 %v1451, %v1442
      %v1668 = vpack.c.b16 %v1452, %v1443
      %v1669 = vpack.c.b16 %v1453, %v1444
      %v1670 = vpack.c.b16 %v1454, %v1445
      %v1671 = vpack.c.b16 %v1455, %v1446
      %v1672 = vpack.c.b16 %v1456, %v1447
      %v1673 = vpack.c.b16 %v1457, %v1448
      %1890 = vmatpush.bf16.msra.mxu0 %v1521
      %1891 = vmatpush.bf16.msra.mxu0 %v1512
      %1892 = vmatpush.bf16.msra.mxu0 %v1503
      %1893 = vmatpush.bf16.msra.mxu0 %v1494
      %1894 = vmatpush.bf16.msra.mxu0 %v1485
      %1895 = vmatpush.bf16.msra.mxu0 %v1476
      %1896 = vmatpush.bf16.msra.mxu0 %v1467
      %1897 = vmatpush.bf16.msra.mxu0 %v1458
      %1898 = vmatmul.bf16.gmra.mxu0 %v780
      %v1899 = vpop.f32.mrf.mxu0
      %v1900 = vadd.f32 0.0, %v1899
      %v1901 = vpop.f32.mrf.mxu0
      %v1902 = vadd.f32 0.0, %v1901
      %1903 = vmatmul.bf16.gmra.mxu0 %v783
      %v1904 = vpop.f32.mrf.mxu0
      %v1905 = vadd.f32 0.0, %v1904
      %v1906 = vpop.f32.mrf.mxu0
      %v1907 = vadd.f32 0.0, %v1906
      %1908 = vdwg.mxu0
      %1909 = vmatpush.bf16.msra.mxu0 %v1593
      %1910 = vmatpush.bf16.msra.mxu0 %v1584
      %1911 = vmatpush.bf16.msra.mxu0 %v1575
      %1912 = vmatpush.bf16.msra.mxu0 %v1566
      %1913 = vmatpush.bf16.msra.mxu0 %v1557
      %1914 = vmatpush.bf16.msra.mxu0 %v1548
      %1915 = vmatpush.bf16.msra.mxu0 %v1539
      %1916 = vmatpush.bf16.msra.mxu0 %v1530
      %1917 = vmatmul.bf16.gmra.mxu0 %v781
      %v1918 = vpop.f32.mrf.mxu0
      %v1919 = vadd.f32 %v1900, %v1918
      %v1920 = vpop.f32.mrf.mxu0
      %v1921 = vadd.f32 %v1902, %v1920
      %1922 = vmatmul.bf16.gmra.mxu0 %v784
      %v1923 = vpop.f32.mrf.mxu0
      %v1924 = vadd.f32 %v1905, %v1923
      %v1925 = vpop.f32.mrf.mxu0
      %v1926 = vadd.f32 %v1907, %v1925
      %1927 = vdwg.mxu0
      %1928 = vmatpush.bf16.msra.mxu0 %v1665
      %1929 = vmatpush.bf16.msra.mxu0 %v1656
      %1930 = vmatpush.bf16.msra.mxu0 %v1647
      %1931 = vmatpush.bf16.msra.mxu0 %v1638
      %1932 = vmatpush.bf16.msra.mxu0 %v1629
      %1933 = vmatpush.bf16.msra.mxu0 %v1620
      %1934 = vmatpush.bf16.msra.mxu0 %v1611
      %1935 = vmatpush.bf16.msra.mxu0 %v1602
      %1936 = vmatmul.bf16.gmra.mxu0 %v782
      %v1937 = vpop.f32.mrf.mxu0
      %v1938 = vadd.f32 %v1919, %v1937
      %v1939 = vpop.f32.mrf.mxu0
      %v1940 = vadd.f32 %v1921, %v1939
      %1941 = vmatmul.bf16.gmra.mxu0 %v785
      %v1942 = vpop.f32.mrf.mxu0
      %v1943 = vadd.f32 %v1924, %v1942
      %v1944 = vpop.f32.mrf.mxu0
      %v1945 = vadd.f32 %v1926, %v1944
      %1946 = vdwg.mxu0
      %1947 = vmatpush.bf16.msra.mxu0 %v1522
      %1948 = vmatpush.bf16.msra.mxu0 %v1513
      %1949 = vmatpush.bf16.msra.mxu0 %v1504
      %1950 = vmatpush.bf16.msra.mxu0 %v1495
      %1951 = vmatpush.bf16.msra.mxu0 %v1486
      %1952 = vmatpush.bf16.msra.mxu0 %v1477
      %1953 = vmatpush.bf16.msra.mxu0 %v1468
      %1954 = vmatpush.bf16.msra.mxu0 %v1459
      %1955 = vmatmul.bf16.gmra.mxu0 %v780
      %v1956 = vpop.f32.mrf.mxu0
      %v1957 = vadd.f32 0.0, %v1956
      %v1958 = vpop.f32.mrf.mxu0
      %v1959 = vadd.f32 0.0, %v1958
      %1960 = vmatmul.bf16.gmra.mxu0 %v783
      %v1961 = vpop.f32.mrf.mxu0
      %v1962 = vadd.f32 0.0, %v1961
      %v1963 = vpop.f32.mrf.mxu0
      %v1964 = vadd.f32 0.0, %v1963
      %1965 = vdwg.mxu0
      %1966 = vmatpush.bf16.msra.mxu0 %v1594
      %1967 = vmatpush.bf16.msra.mxu0 %v1585
      %1968 = vmatpush.bf16.msra.mxu0 %v1576
      %1969 = vmatpush.bf16.msra.mxu0 %v1567
      %1970 = vmatpush.bf16.msra.mxu0 %v1558
      %1971 = vmatpush.bf16.msra.mxu0 %v1549
      %1972 = vmatpush.bf16.msra.mxu0 %v1540
      %1973 = vmatpush.bf16.msra.mxu0 %v1531
      %1974 = vmatmul.bf16.gmra.mxu0 %v781
      %v1975 = vpop.f32.mrf.mxu0
      %v1976 = vadd.f32 %v1957, %v1975
      %v1977 = vpop.f32.mrf.mxu0
      %v1978 = vadd.f32 %v1959, %v1977
      %1979 = vmatmul.bf16.gmra.mxu0 %v784
      %v1980 = vpop.f32.mrf.mxu0
      %v1981 = vadd.f32 %v1962, %v1980
      %v1982 = vpop.f32.mrf.mxu0
      %v1983 = vadd.f32 %v1964, %v1982
      %1984 = vdwg.mxu0
      %1985 = vmatpush.bf16.msra.mxu0 %v1666
      %1986 = vmatpush.bf16.msra.mxu0 %v1657
      %1987 = vmatpush.bf16.msra.mxu0 %v1648
      %1988 = vmatpush.bf16.msra.mxu0 %v1639
      %1989 = vmatpush.bf16.msra.mxu0 %v1630
      %1990 = vmatpush.bf16.msra.mxu0 %v1621
      %1991 = vmatpush.bf16.msra.mxu0 %v1612
      %1992 = vmatpush.bf16.msra.mxu0 %v1603
      %1993 = vmatmul.bf16.gmra.mxu0 %v782
      %v1994 = vpop.f32.mrf.mxu0
      %v1995 = vadd.f32 %v1976, %v1994
      %v1996 = vpop.f32.mrf.mxu0
      %v1997 = vadd.f32 %v1978, %v1996
      %1998 = vmatmul.bf16.gmra.mxu0 %v785
      %v1999 = vpop.f32.mrf.mxu0
      %v2000 = vadd.f32 %v1981, %v1999
      %v2001 = vpop.f32.mrf.mxu0
      %v2002 = vadd.f32 %v1983, %v2001
      %2003 = vdwg.mxu0
      %2004 = vmatpush.bf16.msra.mxu0 %v1523
      %2005 = vmatpush.bf16.msra.mxu0 %v1514
      %2006 = vmatpush.bf16.msra.mxu0 %v1505
      %2007 = vmatpush.bf16.msra.mxu0 %v1496
      %2008 = vmatpush.bf16.msra.mxu0 %v1487
      %2009 = vmatpush.bf16.msra.mxu0 %v1478
      %2010 = vmatpush.bf16.msra.mxu0 %v1469
      %2011 = vmatpush.bf16.msra.mxu0 %v1460
      %2012 = vmatmul.bf16.gmra.mxu0 %v780
      %v2013 = vpop.f32.mrf.mxu0
      %v2014 = vadd.f32 0.0, %v2013
      %v2015 = vpop.f32.mrf.mxu0
      %v2016 = vadd.f32 0.0, %v2015
      %2017 = vmatmul.bf16.gmra.mxu0 %v783
      %v2018 = vpop.f32.mrf.mxu0
      %v2019 = vadd.f32 0.0, %v2018
      %v2020 = vpop.f32.mrf.mxu0
      %v2021 = vadd.f32 0.0, %v2020
      %2022 = vdwg.mxu0
      %2023 = vmatpush.bf16.msra.mxu0 %v1595
      %2024 = vmatpush.bf16.msra.mxu0 %v1586
      %2025 = vmatpush.bf16.msra.mxu0 %v1577
      %2026 = vmatpush.bf16.msra.mxu0 %v1568
      %2027 = vmatpush.bf16.msra.mxu0 %v1559
      %2028 = vmatpush.bf16.msra.mxu0 %v1550
      %2029 = vmatpush.bf16.msra.mxu0 %v1541
      %2030 = vmatpush.bf16.msra.mxu0 %v1532
      %2031 = vmatmul.bf16.gmra.mxu0 %v781
      %v2032 = vpop.f32.mrf.mxu0
      %v2033 = vadd.f32 %v2014, %v2032
      %v2034 = vpop.f32.mrf.mxu0
      %v2035 = vadd.f32 %v2016, %v2034
      %2036 = vmatmul.bf16.gmra.mxu0 %v784
      %v2037 = vpop.f32.mrf.mxu0
      %v2038 = vadd.f32 %v2019, %v2037
      %v2039 = vpop.f32.mrf.mxu0
      %v2040 = vadd.f32 %v2021, %v2039
      %2041 = vdwg.mxu0
      %2042 = vmatpush.bf16.msra.mxu0 %v1667
      %2043 = vmatpush.bf16.msra.mxu0 %v1658
      %2044 = vmatpush.bf16.msra.mxu0 %v1649
      %2045 = vmatpush.bf16.msra.mxu0 %v1640
      %2046 = vmatpush.bf16.msra.mxu0 %v1631
      %2047 = vmatpush.bf16.msra.mxu0 %v1622
      %2048 = vmatpush.bf16.msra.mxu0 %v1613
      %2049 = vmatpush.bf16.msra.mxu0 %v1604
      %2050 = vmatmul.bf16.gmra.mxu0 %v782
      %v2051 = vpop.f32.mrf.mxu0
      %v2052 = vadd.f32 %v2033, %v2051
      %v2053 = vpop.f32.mrf.mxu0
      %v2054 = vadd.f32 %v2035, %v2053
      %2055 = vmatmul.bf16.gmra.mxu0 %v785
      %v2056 = vpop.f32.mrf.mxu0
      %v2057 = vadd.f32 %v2038, %v2056
      %v2058 = vpop.f32.mrf.mxu0
      %v2059 = vadd.f32 %v2040, %v2058
      %2060 = vdwg.mxu0
      %2061 = vmatpush.bf16.msra.mxu0 %v1524
      %2062 = vmatpush.bf16.msra.mxu0 %v1515
      %2063 = vmatpush.bf16.msra.mxu0 %v1506
      %2064 = vmatpush.bf16.msra.mxu0 %v1497
      %2065 = vmatpush.bf16.msra.mxu0 %v1488
      %2066 = vmatpush.bf16.msra.mxu0 %v1479
      %2067 = vmatpush.bf16.msra.mxu0 %v1470
      %2068 = vmatpush.bf16.msra.mxu0 %v1461
      %2069 = vmatmul.bf16.gmra.mxu0 %v780
      %v2070 = vpop.f32.mrf.mxu0
      %v2071 = vadd.f32 0.0, %v2070
      %v2072 = vpop.f32.mrf.mxu0
      %v2073 = vadd.f32 0.0, %v2072
      %2074 = vmatmul.bf16.gmra.mxu0 %v783
      %v2075 = vpop.f32.mrf.mxu0
      %v2076 = vadd.f32 0.0, %v2075
      %v2077 = vpop.f32.mrf.mxu0
      %v2078 = vadd.f32 0.0, %v2077
      %2079 = vdwg.mxu0
      %2080 = vmatpush.bf16.msra.mxu0 %v1596
      %2081 = vmatpush.bf16.msra.mxu0 %v1587
      %2082 = vmatpush.bf16.msra.mxu0 %v1578
      %2083 = vmatpush.bf16.msra.mxu0 %v1569
      %2084 = vmatpush.bf16.msra.mxu0 %v1560
      %2085 = vmatpush.bf16.msra.mxu0 %v1551
      %2086 = vmatpush.bf16.msra.mxu0 %v1542
      %2087 = vmatpush.bf16.msra.mxu0 %v1533
      %2088 = vmatmul.bf16.gmra.mxu0 %v781
      %v2089 = vpop.f32.mrf.mxu0
      %v2090 = vadd.f32 %v2071, %v2089
      %v2091 = vpop.f32.mrf.mxu0
      %v2092 = vadd.f32 %v2073, %v2091
      %2093 = vmatmul.bf16.gmra.mxu0 %v784
      %v2094 = vpop.f32.mrf.mxu0
      %v2095 = vadd.f32 %v2076, %v2094
      %v2096 = vpop.f32.mrf.mxu0
      %v2097 = vadd.f32 %v2078, %v2096
      %2098 = vdwg.mxu0
      %2099 = vmatpush.bf16.msra.mxu0 %v1668
      %2100 = vmatpush.bf16.msra.mxu0 %v1659
      %2101 = vmatpush.bf16.msra.mxu0 %v1650
      %2102 = vmatpush.bf16.msra.mxu0 %v1641
      %2103 = vmatpush.bf16.msra.mxu0 %v1632
      %2104 = vmatpush.bf16.msra.mxu0 %v1623
      %2105 = vmatpush.bf16.msra.mxu0 %v1614
      %2106 = vmatpush.bf16.msra.mxu0 %v1605
      %2107 = vmatmul.bf16.gmra.mxu0 %v782
      %v2108 = vpop.f32.mrf.mxu0
      %v2109 = vadd.f32 %v2090, %v2108
      %v2110 = vpop.f32.mrf.mxu0
      %v2111 = vadd.f32 %v2092, %v2110
      %2112 = vmatmul.bf16.gmra.mxu0 %v785
      %v2113 = vpop.f32.mrf.mxu0
      %v2114 = vadd.f32 %v2095, %v2113
      %v2115 = vpop.f32.mrf.mxu0
      %v2116 = vadd.f32 %v2097, %v2115
      %2117 = vdwg.mxu0
      %2118 = vmatpush.bf16.msra.mxu0 %v1525
      %2119 = vmatpush.bf16.msra.mxu0 %v1516
      %2120 = vmatpush.bf16.msra.mxu0 %v1507
      %2121 = vmatpush.bf16.msra.mxu0 %v1498
      %2122 = vmatpush.bf16.msra.mxu0 %v1489
      %2123 = vmatpush.bf16.msra.mxu0 %v1480
      %2124 = vmatpush.bf16.msra.mxu0 %v1471
      %2125 = vmatpush.bf16.msra.mxu0 %v1462
      %2126 = vmatmul.bf16.gmra.mxu0 %v780
      %v2127 = vpop.f32.mrf.mxu0
      %v2128 = vadd.f32 0.0, %v2127
      %v2129 = vpop.f32.mrf.mxu0
      %v2130 = vadd.f32 0.0, %v2129
      %2131 = vmatmul.bf16.gmra.mxu0 %v783
      %v2132 = vpop.f32.mrf.mxu0
      %v2133 = vadd.f32 0.0, %v2132
      %v2134 = vpop.f32.mrf.mxu0
      %v2135 = vadd.f32 0.0, %v2134
      %2136 = vdwg.mxu0
      %2137 = vmatpush.bf16.msra.mxu0 %v1597
      %2138 = vmatpush.bf16.msra.mxu0 %v1588
      %2139 = vmatpush.bf16.msra.mxu0 %v1579
      %2140 = vmatpush.bf16.msra.mxu0 %v1570
      %2141 = vmatpush.bf16.msra.mxu0 %v1561
      %2142 = vmatpush.bf16.msra.mxu0 %v1552
      %2143 = vmatpush.bf16.msra.mxu0 %v1543
      %2144 = vmatpush.bf16.msra.mxu0 %v1534
      %2145 = vmatmul.bf16.gmra.mxu0 %v781
      %v2146 = vpop.f32.mrf.mxu0
      %v2147 = vadd.f32 %v2128, %v2146
      %v2148 = vpop.f32.mrf.mxu0
      %v2149 = vadd.f32 %v2130, %v2148
      %2150 = vmatmul.bf16.gmra.mxu0 %v784
      %v2151 = vpop.f32.mrf.mxu0
      %v2152 = vadd.f32 %v2133, %v2151
      %v2153 = vpop.f32.mrf.mxu0
      %v2154 = vadd.f32 %v2135, %v2153
      %2155 = vdwg.mxu0
      %2156 = vmatpush.bf16.msra.mxu0 %v1669
      %2157 = vmatpush.bf16.msra.mxu0 %v1660
      %2158 = vmatpush.bf16.msra.mxu0 %v1651
      %2159 = vmatpush.bf16.msra.mxu0 %v1642
      %2160 = vmatpush.bf16.msra.mxu0 %v1633
      %2161 = vmatpush.bf16.msra.mxu0 %v1624
      %2162 = vmatpush.bf16.msra.mxu0 %v1615
      %2163 = vmatpush.bf16.msra.mxu0 %v1606
      %2164 = vmatmul.bf16.gmra.mxu0 %v782
      %v2165 = vpop.f32.mrf.mxu0
      %v2166 = vadd.f32 %v2147, %v2165
      %v2167 = vpop.f32.mrf.mxu0
      %v2168 = vadd.f32 %v2149, %v2167
      %2169 = vmatmul.bf16.gmra.mxu0 %v785
      %v2170 = vpop.f32.mrf.mxu0
      %v2171 = vadd.f32 %v2152, %v2170
      %v2172 = vpop.f32.mrf.mxu0
      %v2173 = vadd.f32 %v2154, %v2172
      %2174 = vdwg.mxu0
      %2175 = vmatpush.bf16.msra.mxu0 %v1526
      %2176 = vmatpush.bf16.msra.mxu0 %v1517
      %2177 = vmatpush.bf16.msra.mxu0 %v1508
      %2178 = vmatpush.bf16.msra.mxu0 %v1499
      %2179 = vmatpush.bf16.msra.mxu0 %v1490
      %2180 = vmatpush.bf16.msra.mxu0 %v1481
      %2181 = vmatpush.bf16.msra.mxu0 %v1472
      %2182 = vmatpush.bf16.msra.mxu0 %v1463
      %2183 = vmatmul.bf16.gmra.mxu0 %v780
      %v2184 = vpop.f32.mrf.mxu0
      %v2185 = vadd.f32 0.0, %v2184
      %v2186 = vpop.f32.mrf.mxu0
      %v2187 = vadd.f32 0.0, %v2186
      %2188 = vmatmul.bf16.gmra.mxu0 %v783
      %v2189 = vpop.f32.mrf.mxu0
      %v2190 = vadd.f32 0.0, %v2189
      %v2191 = vpop.f32.mrf.mxu0
      %v2192 = vadd.f32 0.0, %v2191
      %2193 = vdwg.mxu0
      %2194 = vmatpush.bf16.msra.mxu0 %v1598
      %2195 = vmatpush.bf16.msra.mxu0 %v1589
      %2196 = vmatpush.bf16.msra.mxu0 %v1580
      %2197 = vmatpush.bf16.msra.mxu0 %v1571
      %2198 = vmatpush.bf16.msra.mxu0 %v1562
      %2199 = vmatpush.bf16.msra.mxu0 %v1553
      %2200 = vmatpush.bf16.msra.mxu0 %v1544
      %2201 = vmatpush.bf16.msra.mxu0 %v1535
      %2202 = vmatmul.bf16.gmra.mxu0 %v781
      %v2203 = vpop.f32.mrf.mxu0
      %v2204 = vadd.f32 %v2185, %v2203
      %v2205 = vpop.f32.mrf.mxu0
      %v2206 = vadd.f32 %v2187, %v2205
      %2207 = vmatmul.bf16.gmra.mxu0 %v784
      %v2208 = vpop.f32.mrf.mxu0
      %v2209 = vadd.f32 %v2190, %v2208
      %v2210 = vpop.f32.mrf.mxu0
      %v2211 = vadd.f32 %v2192, %v2210
      %2212 = vdwg.mxu0
      %2213 = vmatpush.bf16.msra.mxu0 %v1670
      %2214 = vmatpush.bf16.msra.mxu0 %v1661
      %2215 = vmatpush.bf16.msra.mxu0 %v1652
      %2216 = vmatpush.bf16.msra.mxu0 %v1643
      %2217 = vmatpush.bf16.msra.mxu0 %v1634
      %2218 = vmatpush.bf16.msra.mxu0 %v1625
      %2219 = vmatpush.bf16.msra.mxu0 %v1616
      %2220 = vmatpush.bf16.msra.mxu0 %v1607
      %2221 = vmatmul.bf16.gmra.mxu0 %v782
      %v2222 = vpop.f32.mrf.mxu0
      %v2223 = vadd.f32 %v2204, %v2222
      %v2224 = vpop.f32.mrf.mxu0
      %v2225 = vadd.f32 %v2206, %v2224
      %2226 = vmatmul.bf16.gmra.mxu0 %v785
      %v2227 = vpop.f32.mrf.mxu0
      %v2228 = vadd.f32 %v2209, %v2227
      %v2229 = vpop.f32.mrf.mxu0
      %v2230 = vadd.f32 %v2211, %v2229
      %2231 = vdwg.mxu0
      %2232 = vmatpush.bf16.msra.mxu0 %v1527
      %2233 = vmatpush.bf16.msra.mxu0 %v1518
      %2234 = vmatpush.bf16.msra.mxu0 %v1509
      %2235 = vmatpush.bf16.msra.mxu0 %v1500
      %2236 = vmatpush.bf16.msra.mxu0 %v1491
      %2237 = vmatpush.bf16.msra.mxu0 %v1482
      %2238 = vmatpush.bf16.msra.mxu0 %v1473
      %2239 = vmatpush.bf16.msra.mxu0 %v1464
      %2240 = vmatmul.bf16.gmra.mxu0 %v780
      %v2241 = vpop.f32.mrf.mxu0
      %v2242 = vadd.f32 0.0, %v2241
      %v2243 = vpop.f32.mrf.mxu0
      %v2244 = vadd.f32 0.0, %v2243
      %2245 = vmatmul.bf16.gmra.mxu0 %v783
      %v2246 = vpop.f32.mrf.mxu0
      %v2247 = vadd.f32 0.0, %v2246
      %v2248 = vpop.f32.mrf.mxu0
      %v2249 = vadd.f32 0.0, %v2248
      %2250 = vdwg.mxu0
      %2251 = vmatpush.bf16.msra.mxu0 %v1599
      %2252 = vmatpush.bf16.msra.mxu0 %v1590
      %2253 = vmatpush.bf16.msra.mxu0 %v1581
      %2254 = vmatpush.bf16.msra.mxu0 %v1572
      %2255 = vmatpush.bf16.msra.mxu0 %v1563
      %2256 = vmatpush.bf16.msra.mxu0 %v1554
      %2257 = vmatpush.bf16.msra.mxu0 %v1545
      %2258 = vmatpush.bf16.msra.mxu0 %v1536
      %2259 = vmatmul.bf16.gmra.mxu0 %v781
      %v2260 = vpop.f32.mrf.mxu0
      %v2261 = vadd.f32 %v2242, %v2260
      %v2262 = vpop.f32.mrf.mxu0
      %v2263 = vadd.f32 %v2244, %v2262
      %2264 = vmatmul.bf16.gmra.mxu0 %v784
      %v2265 = vpop.f32.mrf.mxu0
      %v2266 = vadd.f32 %v2247, %v2265
      %v2267 = vpop.f32.mrf.mxu0
      %v2268 = vadd.f32 %v2249, %v2267
      %2269 = vdwg.mxu0
      %2270 = vmatpush.bf16.msra.mxu0 %v1671
      %2271 = vmatpush.bf16.msra.mxu0 %v1662
      %2272 = vmatpush.bf16.msra.mxu0 %v1653
      %2273 = vmatpush.bf16.msra.mxu0 %v1644
      %2274 = vmatpush.bf16.msra.mxu0 %v1635
      %2275 = vmatpush.bf16.msra.mxu0 %v1626
      %2276 = vmatpush.bf16.msra.mxu0 %v1617
      %2277 = vmatpush.bf16.msra.mxu0 %v1608
      %2278 = vmatmul.bf16.gmra.mxu0 %v782
      %v2279 = vpop.f32.mrf.mxu0
      %v2280 = vadd.f32 %v2261, %v2279
      %v2281 = vpop.f32.mrf.mxu0
      %v2282 = vadd.f32 %v2263, %v2281
      %2283 = vmatmul.bf16.gmra.mxu0 %v785
      %v2284 = vpop.f32.mrf.mxu0
      %v2285 = vadd.f32 %v2266, %v2284
      %v2286 = vpop.f32.mrf.mxu0
      %v2287 = vadd.f32 %v2268, %v2286
      %2288 = vdwg.mxu0
      %2289 = vmatpush.bf16.msra.mxu0 %v1528
      %2290 = vmatpush.bf16.msra.mxu0 %v1519
      %2291 = vmatpush.bf16.msra.mxu0 %v1510
      %2292 = vmatpush.bf16.msra.mxu0 %v1501
      %2293 = vmatpush.bf16.msra.mxu0 %v1492
      %2294 = vmatpush.bf16.msra.mxu0 %v1483
      %2295 = vmatpush.bf16.msra.mxu0 %v1474
      %2296 = vmatpush.bf16.msra.mxu0 %v1465
      %2297 = vmatmul.bf16.gmra.mxu0 %v780
      %v2298 = vpop.f32.mrf.mxu0
      %v2299 = vadd.f32 0.0, %v2298
      %v2300 = vpop.f32.mrf.mxu0
      %v2301 = vadd.f32 0.0, %v2300
      %2302 = vmatmul.bf16.gmra.mxu0 %v783
      %v2303 = vpop.f32.mrf.mxu0
      %v2304 = vadd.f32 0.0, %v2303
      %v2305 = vpop.f32.mrf.mxu0
      %v2306 = vadd.f32 0.0, %v2305
      %2307 = vdwg.mxu0
      %2308 = vmatpush.bf16.msra.mxu0 %v1600
      %2309 = vmatpush.bf16.msra.mxu0 %v1591
      %2310 = vmatpush.bf16.msra.mxu0 %v1582
      %2311 = vmatpush.bf16.msra.mxu0 %v1573
      %2312 = vmatpush.bf16.msra.mxu0 %v1564
      %2313 = vmatpush.bf16.msra.mxu0 %v1555
      %2314 = vmatpush.bf16.msra.mxu0 %v1546
      %2315 = vmatpush.bf16.msra.mxu0 %v1537
      %2316 = vmatmul.bf16.gmra.mxu0 %v781
      %v2317 = vpop.f32.mrf.mxu0
      %v2318 = vadd.f32 %v2299, %v2317
      %v2319 = vpop.f32.mrf.mxu0
      %v2320 = vadd.f32 %v2301, %v2319
      %2321 = vmatmul.bf16.gmra.mxu0 %v784
      %v2322 = vpop.f32.mrf.mxu0
      %v2323 = vadd.f32 %v2304, %v2322
      %v2324 = vpop.f32.mrf.mxu0
      %v2325 = vadd.f32 %v2306, %v2324
      %2326 = vdwg.mxu0
      %2327 = vmatpush.bf16.msra.mxu0 %v1672
      %2328 = vmatpush.bf16.msra.mxu0 %v1663
      %2329 = vmatpush.bf16.msra.mxu0 %v1654
      %2330 = vmatpush.bf16.msra.mxu0 %v1645
      %2331 = vmatpush.bf16.msra.mxu0 %v1636
      %2332 = vmatpush.bf16.msra.mxu0 %v1627
      %2333 = vmatpush.bf16.msra.mxu0 %v1618
      %2334 = vmatpush.bf16.msra.mxu0 %v1609
      %2335 = vmatmul.bf16.gmra.mxu0 %v782
      %v2336 = vpop.f32.mrf.mxu0
      %v2337 = vadd.f32 %v2318, %v2336
      %v2338 = vpop.f32.mrf.mxu0
      %v2339 = vadd.f32 %v2320, %v2338
      %2340 = vmatmul.bf16.gmra.mxu0 %v785
      %v2341 = vpop.f32.mrf.mxu0
      %v2342 = vadd.f32 %v2323, %v2341
      %v2343 = vpop.f32.mrf.mxu0
      %v2344 = vadd.f32 %v2325, %v2343
      %2345 = vdwg.mxu0
      %2346 = vmatpush.bf16.msra.mxu0 %v1529
      %2347 = vmatpush.bf16.msra.mxu0 %v1520
      %2348 = vmatpush.bf16.msra.mxu0 %v1511
      %2349 = vmatpush.bf16.msra.mxu0 %v1502
      %2350 = vmatpush.bf16.msra.mxu0 %v1493
      %2351 = vmatpush.bf16.msra.mxu0 %v1484
      %2352 = vmatpush.bf16.msra.mxu0 %v1475
      %2353 = vmatpush.bf16.msra.mxu0 %v1466
      %2354 = vmatmul.bf16.gmra.mxu0 %v780
      %v2355 = vpop.f32.mrf.mxu0
      %v2356 = vadd.f32 0.0, %v2355
      %v2357 = vpop.f32.mrf.mxu0
      %v2358 = vadd.f32 0.0, %v2357
      %2359 = vmatmul.bf16.gmra.mxu0 %v783
      %v2360 = vpop.f32.mrf.mxu0
      %v2361 = vadd.f32 0.0, %v2360
      %v2362 = vpop.f32.mrf.mxu0
      %v2363 = vadd.f32 0.0, %v2362
      %2364 = vdwg.mxu0
      %2365 = vmatpush.bf16.msra.mxu0 %v1601
      %2366 = vmatpush.bf16.msra.mxu0 %v1592
      %2367 = vmatpush.bf16.msra.mxu0 %v1583
      %2368 = vmatpush.bf16.msra.mxu0 %v1574
      %2369 = vmatpush.bf16.msra.mxu0 %v1565
      %2370 = vmatpush.bf16.msra.mxu0 %v1556
      %2371 = vmatpush.bf16.msra.mxu0 %v1547
      %2372 = vmatpush.bf16.msra.mxu0 %v1538
      %2373 = vmatmul.bf16.gmra.mxu0 %v781
      %v2374 = vpop.f32.mrf.mxu0
      %v2375 = vadd.f32 %v2356, %v2374
      %v2376 = vpop.f32.mrf.mxu0
      %v2377 = vadd.f32 %v2358, %v2376
      %2378 = vmatmul.bf16.gmra.mxu0 %v784
      %v2379 = vpop.f32.mrf.mxu0
      %v2380 = vadd.f32 %v2361, %v2379
      %v2381 = vpop.f32.mrf.mxu0
      %v2382 = vadd.f32 %v2363, %v2381
      %2383 = vdwg.mxu0
      %2384 = vmatpush.bf16.msra.mxu0 %v1673
      %2385 = vmatpush.bf16.msra.mxu0 %v1664
      %2386 = vmatpush.bf16.msra.mxu0 %v1655
      %2387 = vmatpush.bf16.msra.mxu0 %v1646
      %2388 = vmatpush.bf16.msra.mxu0 %v1637
      %2389 = vmatpush.bf16.msra.mxu0 %v1628
      %2390 = vmatpush.bf16.msra.mxu0 %v1619
      %2391 = vmatpush.bf16.msra.mxu0 %v1610
      %2392 = vmatmul.bf16.gmra.mxu0 %v782
      %v2393 = vpop.f32.mrf.mxu0
      %v2394 = vadd.f32 %v2375, %v2393
      %v2395 = vpop.f32.mrf.mxu0
      %v2396 = vadd.f32 %v2377, %v2395
      %2397 = vmatmul.bf16.gmra.mxu0 %v785
      %v2398 = vpop.f32.mrf.mxu0
      %v2399 = vadd.f32 %v2380, %v2398
      %v2400 = vpop.f32.mrf.mxu0
      %v2401 = vadd.f32 %v2382, %v2400
      %2402 = vdwg.mxu0
      %v2403 = vpack.c.bf16 %v1995, %v1938
      %v2404 = vpack.c.bf16 %v2109, %v2052
      %v2405 = vpack.c.bf16 %v2223, %v2166
      %v2406 = vpack.c.bf16 %v2337, %v2280
      %v2407 = vpack.c.bf16 %v2394, %v2394
      %v2408 = vpack.c.bf16 %v1997, %v1940
      %v2409 = vpack.c.bf16 %v2111, %v2054
      %v2410 = vpack.c.bf16 %v2225, %v2168
      %v2411 = vpack.c.bf16 %v2339, %v2282
      %v2412 = vpack.c.bf16 %v2396, %v2396
      %v2413 = vpack.c.bf16 %v2000, %v1943
      %v2414 = vpack.c.bf16 %v2114, %v2057
      %v2415 = vpack.c.bf16 %v2228, %v2171
      %v2416 = vpack.c.bf16 %v2342, %v2285
      %v2417 = vpack.c.bf16 %v2399, %v2399
      %v2418 = vpack.c.bf16 %v2002, %v1945
      %v2419 = vpack.c.bf16 %v2116, %v2059
      %v2420 = vpack.c.bf16 %v2230, %v2173
      %v2421 = vpack.c.bf16 %v2344, %v2287
      %v2422 = vpack.c.bf16 %v2401, %v2401
      %v2427 = vunpack.c.l.b16 %v2403
      %v2428 = vunpack.c.l.b16 %v2408
      %v2429 = vunpack.c.l.b16 %v2413
      %v2430 = vunpack.c.l.b16 %v2418
      %v2431 = vpack.c.b16 %v2428, %v2427
      %v2432 = vpack.c.b16 %v2430, %v2429
      %v2437 = vunpack.c.h.b16 %v2404
      %v2438 = vunpack.c.h.b16 %v2409
      %v2439 = vunpack.c.h.b16 %v2414
      %v2440 = vunpack.c.h.b16 %v2419
      %v2441 = vpack.c.b16 %v2438, %v2437
      %v2442 = vpack.c.b16 %v2440, %v2439
      %vm2443 = vcmask 523264
      %v2445 = vsel %vm2443, %v2431, 0
      %v2448 = vsel %vm2443, %v2432, 0
      %v2451 = vsel %vm2443, %v2441, 0
      %v2454 = vsel %vm2443, %v2442, 0
      %2456 = vmatpush.bf16.xpose.msra.mxu0 0
      %2457 = vmatpush.bf16.xpose.msra.mxu0 0
      %2458 = vmatpush.bf16.xpose.msra.mxu0 0
      %2459 = vmatpush.bf16.xpose.msra.mxu0 0
      %2460 = vmatpush.bf16.xpose.msra.mxu0 0
      %2461 = vmatpush.bf16.xpose.msra.mxu0 0
      %2462 = vmatpush.bf16.xpose.msra.mxu0 %v2454
      %2463 = vmatpush.bf16.xpose.msra.mxu0 %v2451
      %2464 = vmatmul.bf16.gmra.mxu0 %v2445
      %v2465 = vpop.f32.mrf.mxu0
      %v2466 = vadd.f32 0.0, %v2465
      %v2467 = vpop.f32.mrf.mxu0
      %v2468 = vadd.f32 0.0, %v2467
      %2469 = vmatmul.bf16.gmra.mxu0 %v2448
      %v2470 = vpop.f32.mrf.mxu0
      %v2471 = vadd.f32 0.0, %v2470
      %v2472 = vpop.f32.mrf.mxu0
      %v2473 = vadd.f32 0.0, %v2472
      %2474 = vdwg.mxu0
      %v2475 = vsel %vm599, %v2466, -inf
      %v2476 = vsel %vm600, %v2468, -inf
      %v2477 = vsel %vm601, %v2471, -inf
      %v2478 = vsel %vm602, %v2473, -inf
      %vm2479 = vcmask 261120
      %v2480 = vsel %vm2479, %v2475, -inf
      %2481 = vmax.xlane.f32.xlu0 %v2480
      %v2482 = vpop.xlane.xlu0 %2481
      %v2483 = vsel %vm2479, %v2476, -inf
      %2484 = vmax.xlane.f32.xlu0 %v2483
      %v2485 = vpop.xlane.xlu0 %2484
      %v2486 = vsel %vm2479, %v2477, -inf
      %2487 = vmax.xlane.f32.xlu0 %v2486
      %v2488 = vpop.xlane.xlu0 %2487
      %v2489 = vsel %vm2479, %v2478, -inf
      %2490 = vmax.xlane.f32.xlu0 %v2489
      %v2491 = vpop.xlane.xlu0 %2490
      %v2492 = vsub.f32 %v2475, %v2482
      %v2493 = vsub.f32 %v2476, %v2485
      %v2494 = vsub.f32 %v2477, %v2488
      %v2495 = vsub.f32 %v2478, %v2491
      %v2496 = vmul.f32 %v2492, 1.442695
      %v2497 = vpow.pop %v2496
      %v2498 = vmul.f32 %v2493, 1.442695
      %v2499 = vpow.pop %v2498
      %v2500 = vmul.f32 %v2494, 1.442695
      %v2501 = vpow.pop %v2500
      %v2502 = vmul.f32 %v2495, 1.442695
      %v2503 = vpow.pop %v2502
      %v2504 = vsel %vm2479, %v2497, 0.0
      %2505 = vadd.xlane.f32.xlu0 %v2504
      %v2506 = vpop.xlane.xlu0 %2505
      %v2507 = vsel %vm2479, %v2499, 0.0
      %2508 = vadd.xlane.f32.xlu0 %v2507
      %v2509 = vpop.xlane.xlu0 %2508
      %v2510 = vsel %vm2479, %v2501, 0.0
      %2511 = vadd.xlane.f32.xlu0 %v2510
      %v2512 = vpop.xlane.xlu0 %2511
      %v2513 = vsel %vm2479, %v2503, 0.0
      %2514 = vadd.xlane.f32.xlu0 %v2513
      %v2515 = vpop.xlane.xlu0 %2514
      %v2516 = vrcp.pop %v2506
      %v2517 = vrcp.pop %v2509
      %v2518 = vrcp.pop %v2512
      %v2519 = vrcp.pop %v2515
      %v2520 = vmul.f32 %v2497, %v2516
      %v2521 = vmul.f32 %v2499, %v2517
      %v2522 = vmul.f32 %v2501, %v2518
      %v2523 = vmul.f32 %v2503, %v2519
      %v2524 = vpack.c.bf16 %v2521, %v2520
      %v2525 = vpack.c.bf16 %v2523, %v2522
      %v2530 = vunpack.c.l.b16 %v2406
      %v2531 = vunpack.c.l.b16 %v2411
      %v2532 = vunpack.c.l.b16 %v2416
      %v2533 = vunpack.c.l.b16 %v2421
      %v2534 = vpack.c.b16 %v2531, %v2530
      %v2535 = vpack.c.b16 %v2533, %v2532
      %v2539 = vsel %vm2479, %v2524, 0
      %v2542 = vsel %vm2479, %v2525, 0
      %2544 = vmatpush.bf16.msra.mxu0 0
      %2545 = vmatpush.bf16.msra.mxu0 0
      %2546 = vmatpush.bf16.msra.mxu0 0
      %2547 = vmatpush.bf16.msra.mxu0 0
      %2548 = vmatpush.bf16.msra.mxu0 0
      %2549 = vmatpush.bf16.msra.mxu0 0
      %2550 = vmatpush.bf16.msra.mxu0 %v2535
      %2551 = vmatpush.bf16.msra.mxu0 %v2534
      %2552 = vmatmul.bf16.gmra.mxu0 %v2539
      %v2553 = vpop.f32.mrf.mxu0
      %v2554 = vadd.f32 0.0, %v2553
      %v2555 = vpop.f32.mrf.mxu0
      %v2556 = vadd.f32 0.0, %v2555
      %2557 = vmatmul.bf16.gmra.mxu0 %v2542
      %v2558 = vpop.f32.mrf.mxu0
      %v2559 = vadd.f32 0.0, %v2558
      %v2560 = vpop.f32.mrf.mxu0
      %v2561 = vadd.f32 0.0, %v2560
      %2562 = vdwg.mxu0
      %2563 = vrot.lane.b32.xlu0 %v2431, 64
      %v2564 = vpop.permute.xlu0 %2563
      %2565 = vrot.lane.b32.xlu0 %v2432, 64
      %v2566 = vpop.permute.xlu0 %2565
      %2567 = vrot.lane.b32.xlu0 %v2441, 64
      %v2568 = vpop.permute.xlu0 %2567
      %2569 = vrot.lane.b32.xlu0 %v2442, 64
      %v2570 = vpop.permute.xlu0 %2569
      %v2572 = vsel %vm2443, %v2564, 0
      %v2575 = vsel %vm2443, %v2566, 0
      %v2578 = vsel %vm2443, %v2568, 0
      %v2581 = vsel %vm2443, %v2570, 0
      %2583 = vmatpush.bf16.xpose.msra.mxu0 0
      %2584 = vmatpush.bf16.xpose.msra.mxu0 0
      %2585 = vmatpush.bf16.xpose.msra.mxu0 0
      %2586 = vmatpush.bf16.xpose.msra.mxu0 0
      %2587 = vmatpush.bf16.xpose.msra.mxu0 0
      %2588 = vmatpush.bf16.xpose.msra.mxu0 0
      %2589 = vmatpush.bf16.xpose.msra.mxu0 %v2581
      %2590 = vmatpush.bf16.xpose.msra.mxu0 %v2578
      %2591 = vmatmul.bf16.gmra.mxu0 %v2572
      %v2592 = vpop.f32.mrf.mxu0
      %v2593 = vadd.f32 0.0, %v2592
      %v2594 = vpop.f32.mrf.mxu0
      %v2595 = vadd.f32 0.0, %v2594
      %2596 = vmatmul.bf16.gmra.mxu0 %v2575
      %v2597 = vpop.f32.mrf.mxu0
      %v2598 = vadd.f32 0.0, %v2597
      %v2599 = vpop.f32.mrf.mxu0
      %v2600 = vadd.f32 0.0, %v2599
      %2601 = vdwg.mxu0
      %v2602 = vsel %vm599, %v2593, -inf
      %v2603 = vsel %vm600, %v2595, -inf
      %v2604 = vsel %vm601, %v2598, -inf
      %v2605 = vsel %vm602, %v2600, -inf
      %v2606 = vsel %vm2479, %v2602, -inf
      %2607 = vmax.xlane.f32.xlu0 %v2606
      %v2608 = vpop.xlane.xlu0 %2607
      %v2609 = vsel %vm2479, %v2603, -inf
      %2610 = vmax.xlane.f32.xlu0 %v2609
      %v2611 = vpop.xlane.xlu0 %2610
      %v2612 = vsel %vm2479, %v2604, -inf
      %2613 = vmax.xlane.f32.xlu0 %v2612
      %v2614 = vpop.xlane.xlu0 %2613
      %v2615 = vsel %vm2479, %v2605, -inf
      %2616 = vmax.xlane.f32.xlu0 %v2615
      %v2617 = vpop.xlane.xlu0 %2616
      %v2618 = vsub.f32 %v2602, %v2608
      %v2619 = vsub.f32 %v2603, %v2611
      %v2620 = vsub.f32 %v2604, %v2614
      %v2621 = vsub.f32 %v2605, %v2617
      %v2622 = vmul.f32 %v2618, 1.442695
      %v2623 = vpow.pop %v2622
      %v2624 = vmul.f32 %v2619, 1.442695
      %v2625 = vpow.pop %v2624
      %v2626 = vmul.f32 %v2620, 1.442695
      %v2627 = vpow.pop %v2626
      %v2628 = vmul.f32 %v2621, 1.442695
      %v2629 = vpow.pop %v2628
      %v2630 = vsel %vm2479, %v2623, 0.0
      %2631 = vadd.xlane.f32.xlu0 %v2630
      %v2632 = vpop.xlane.xlu0 %2631
      %v2633 = vsel %vm2479, %v2625, 0.0
      %2634 = vadd.xlane.f32.xlu0 %v2633
      %v2635 = vpop.xlane.xlu0 %2634
      %v2636 = vsel %vm2479, %v2627, 0.0
      %2637 = vadd.xlane.f32.xlu0 %v2636
      %v2638 = vpop.xlane.xlu0 %2637
      %v2639 = vsel %vm2479, %v2629, 0.0
      %2640 = vadd.xlane.f32.xlu0 %v2639
      %v2641 = vpop.xlane.xlu0 %2640
      %v2642 = vrcp.pop %v2632
      %v2643 = vrcp.pop %v2635
      %v2644 = vrcp.pop %v2638
      %v2645 = vrcp.pop %v2641
      %v2646 = vmul.f32 %v2623, %v2642
      %v2647 = vmul.f32 %v2625, %v2643
      %v2648 = vmul.f32 %v2627, %v2644
      %v2649 = vmul.f32 %v2629, %v2645
      %v2650 = vpack.c.bf16 %v2647, %v2646
      %v2651 = vpack.c.bf16 %v2649, %v2648
      %2652 = vrot.lane.b32.xlu0 %v2534, 64
      %v2653 = vpop.permute.xlu0 %2652
      %2654 = vrot.lane.b32.xlu0 %v2535, 64
      %v2655 = vpop.permute.xlu0 %2654
      %v2659 = vsel %vm2479, %v2650, 0
      %v2662 = vsel %vm2479, %v2651, 0
      %2664 = vmatpush.bf16.msra.mxu0 0
      %2665 = vmatpush.bf16.msra.mxu0 0
      %2666 = vmatpush.bf16.msra.mxu0 0
      %2667 = vmatpush.bf16.msra.mxu0 0
      %2668 = vmatpush.bf16.msra.mxu0 0
      %2669 = vmatpush.bf16.msra.mxu0 0
      %2670 = vmatpush.bf16.msra.mxu0 %v2655
      %2671 = vmatpush.bf16.msra.mxu0 %v2653
      %2672 = vmatmul.bf16.gmra.mxu0 %v2659
      %v2673 = vpop.f32.mrf.mxu0
      %v2674 = vadd.f32 0.0, %v2673
      %v2675 = vpop.f32.mrf.mxu0
      %v2676 = vadd.f32 0.0, %v2675
      %2677 = vmatmul.bf16.gmra.mxu0 %v2662
      %v2678 = vpop.f32.mrf.mxu0
      %v2679 = vadd.f32 0.0, %v2678
      %v2680 = vpop.f32.mrf.mxu0
      %v2681 = vadd.f32 0.0, %v2680
      %2682 = vdwg.mxu0
      %v2683 = vunpack.c.h.b16 %v2403
      %v2684 = vunpack.c.h.b16 %v2408
      %v2685 = vunpack.c.h.b16 %v2413
      %v2686 = vunpack.c.h.b16 %v2418
      %v2687 = vpack.c.b16 %v2684, %v2683
      %v2688 = vpack.c.b16 %v2686, %v2685
      %v2693 = vunpack.c.l.b16 %v2405
      %v2694 = vunpack.c.l.b16 %v2410
      %v2695 = vunpack.c.l.b16 %v2415
      %v2696 = vunpack.c.l.b16 %v2420
      %v2697 = vpack.c.b16 %v2694, %v2693
      %v2698 = vpack.c.b16 %v2696, %v2695
      %v2700 = vsel %vm2443, %v2687, 0
      %v2703 = vsel %vm2443, %v2688, 0
      %v2706 = vsel %vm2443, %v2697, 0
      %v2709 = vsel %vm2443, %v2698, 0
      %2711 = vmatpush.bf16.xpose.msra.mxu0 0
      %2712 = vmatpush.bf16.xpose.msra.mxu0 0
      %2713 = vmatpush.bf16.xpose.msra.mxu0 0
      %2714 = vmatpush.bf16.xpose.msra.mxu0 0
      %2715 = vmatpush.bf16.xpose.msra.mxu0 0
      %2716 = vmatpush.bf16.xpose.msra.mxu0 0
      %2717 = vmatpush.bf16.xpose.msra.mxu0 %v2709
      %2718 = vmatpush.bf16.xpose.msra.mxu0 %v2706
      %2719 = vmatmul.bf16.gmra.mxu0 %v2700
      %v2720 = vpop.f32.mrf.mxu0
      %v2721 = vadd.f32 0.0, %v2720
      %v2722 = vpop.f32.mrf.mxu0
      %v2723 = vadd.f32 0.0, %v2722
      %2724 = vmatmul.bf16.gmra.mxu0 %v2703
      %v2725 = vpop.f32.mrf.mxu0
      %v2726 = vadd.f32 0.0, %v2725
      %v2727 = vpop.f32.mrf.mxu0
      %v2728 = vadd.f32 0.0, %v2727
      %2729 = vdwg.mxu0
      %v2730 = vsel %vm599, %v2721, -inf
      %v2731 = vsel %vm600, %v2723, -inf
      %v2732 = vsel %vm601, %v2726, -inf
      %v2733 = vsel %vm602, %v2728, -inf
      %v2734 = vsel %vm2479, %v2730, -inf
      %2735 = vmax.xlane.f32.xlu0 %v2734
      %v2736 = vpop.xlane.xlu0 %2735
      %v2737 = vsel %vm2479, %v2731, -inf
      %2738 = vmax.xlane.f32.xlu0 %v2737
      %v2739 = vpop.xlane.xlu0 %2738
      %v2740 = vsel %vm2479, %v2732, -inf
      %2741 = vmax.xlane.f32.xlu0 %v2740
      %v2742 = vpop.xlane.xlu0 %2741
      %v2743 = vsel %vm2479, %v2733, -inf
      %2744 = vmax.xlane.f32.xlu0 %v2743
      %v2745 = vpop.xlane.xlu0 %2744
      %v2746 = vsub.f32 %v2730, %v2736
      %v2747 = vsub.f32 %v2731, %v2739
      %v2748 = vsub.f32 %v2732, %v2742
      %v2749 = vsub.f32 %v2733, %v2745
      %v2750 = vmul.f32 %v2746, 1.442695
      %v2751 = vpow.pop %v2750
      %v2752 = vmul.f32 %v2747, 1.442695
      %v2753 = vpow.pop %v2752
      %v2754 = vmul.f32 %v2748, 1.442695
      %v2755 = vpow.pop %v2754
      %v2756 = vmul.f32 %v2749, 1.442695
      %v2757 = vpow.pop %v2756
      %v2758 = vsel %vm2479, %v2751, 0.0
      %2759 = vadd.xlane.f32.xlu0 %v2758
      %v2760 = vpop.xlane.xlu0 %2759
      %v2761 = vsel %vm2479, %v2753, 0.0
      %2762 = vadd.xlane.f32.xlu0 %v2761
      %v2763 = vpop.xlane.xlu0 %2762
      %v2764 = vsel %vm2479, %v2755, 0.0
      %2765 = vadd.xlane.f32.xlu0 %v2764
      %v2766 = vpop.xlane.xlu0 %2765
      %v2767 = vsel %vm2479, %v2757, 0.0
      %2768 = vadd.xlane.f32.xlu0 %v2767
      %v2769 = vpop.xlane.xlu0 %2768
      %v2770 = vrcp.pop %v2760
      %v2771 = vrcp.pop %v2763
      %v2772 = vrcp.pop %v2766
      %v2773 = vrcp.pop %v2769
      %v2774 = vmul.f32 %v2751, %v2770
      %v2775 = vmul.f32 %v2753, %v2771
      %v2776 = vmul.f32 %v2755, %v2772
      %v2777 = vmul.f32 %v2757, %v2773
      %v2778 = vpack.c.bf16 %v2775, %v2774
      %v2779 = vpack.c.bf16 %v2777, %v2776
      %v2780 = vunpack.c.h.b16 %v2406
      %v2781 = vunpack.c.h.b16 %v2411
      %v2782 = vunpack.c.h.b16 %v2416
      %v2783 = vunpack.c.h.b16 %v2421
      %v2784 = vpack.c.b16 %v2781, %v2780
      %v2785 = vpack.c.b16 %v2783, %v2782
      %v2789 = vsel %vm2479, %v2778, 0
      %v2792 = vsel %vm2479, %v2779, 0
      %2794 = vmatpush.bf16.msra.mxu0 0
      %2795 = vmatpush.bf16.msra.mxu0 0
      %2796 = vmatpush.bf16.msra.mxu0 0
      %2797 = vmatpush.bf16.msra.mxu0 0
      %2798 = vmatpush.bf16.msra.mxu0 0
      %2799 = vmatpush.bf16.msra.mxu0 0
      %2800 = vmatpush.bf16.msra.mxu0 %v2785
      %2801 = vmatpush.bf16.msra.mxu0 %v2784
      %2802 = vmatmul.bf16.gmra.mxu0 %v2789
      %v2803 = vpop.f32.mrf.mxu0
      %v2804 = vadd.f32 0.0, %v2803
      %v2805 = vpop.f32.mrf.mxu0
      %v2806 = vadd.f32 0.0, %v2805
      %2807 = vmatmul.bf16.gmra.mxu0 %v2792
      %v2808 = vpop.f32.mrf.mxu0
      %v2809 = vadd.f32 0.0, %v2808
      %v2810 = vpop.f32.mrf.mxu0
      %v2811 = vadd.f32 0.0, %v2810
      %2812 = vdwg.mxu0
      %2813 = vrot.lane.b32.xlu0 %v2687, 64
      %v2814 = vpop.permute.xlu0 %2813
      %2815 = vrot.lane.b32.xlu0 %v2688, 64
      %v2816 = vpop.permute.xlu0 %2815
      %2817 = vrot.lane.b32.xlu0 %v2697, 64
      %v2818 = vpop.permute.xlu0 %2817
      %2819 = vrot.lane.b32.xlu0 %v2698, 64
      %v2820 = vpop.permute.xlu0 %2819
      %v2822 = vsel %vm2443, %v2814, 0
      %v2825 = vsel %vm2443, %v2816, 0
      %v2828 = vsel %vm2443, %v2818, 0
      %v2831 = vsel %vm2443, %v2820, 0
      %2833 = vmatpush.bf16.xpose.msra.mxu0 0
      %2834 = vmatpush.bf16.xpose.msra.mxu0 0
      %2835 = vmatpush.bf16.xpose.msra.mxu0 0
      %2836 = vmatpush.bf16.xpose.msra.mxu0 0
      %2837 = vmatpush.bf16.xpose.msra.mxu0 0
      %2838 = vmatpush.bf16.xpose.msra.mxu0 0
      %2839 = vmatpush.bf16.xpose.msra.mxu0 %v2831
      %2840 = vmatpush.bf16.xpose.msra.mxu0 %v2828
      %2841 = vmatmul.bf16.gmra.mxu0 %v2822
      %v2842 = vpop.f32.mrf.mxu0
      %v2843 = vadd.f32 0.0, %v2842
      %v2844 = vpop.f32.mrf.mxu0
      %v2845 = vadd.f32 0.0, %v2844
      %2846 = vmatmul.bf16.gmra.mxu0 %v2825
      %v2847 = vpop.f32.mrf.mxu0
      %v2848 = vadd.f32 0.0, %v2847
      %v2849 = vpop.f32.mrf.mxu0
      %v2850 = vadd.f32 0.0, %v2849
      %2851 = vdwg.mxu0
      %v2852 = vsel %vm599, %v2843, -inf
      %v2853 = vsel %vm600, %v2845, -inf
      %v2854 = vsel %vm601, %v2848, -inf
      %v2855 = vsel %vm602, %v2850, -inf
      %v2856 = vsel %vm2479, %v2852, -inf
      %2857 = vmax.xlane.f32.xlu0 %v2856
      %v2858 = vpop.xlane.xlu0 %2857
      %v2859 = vsel %vm2479, %v2853, -inf
      %2860 = vmax.xlane.f32.xlu0 %v2859
      %v2861 = vpop.xlane.xlu0 %2860
      %v2862 = vsel %vm2479, %v2854, -inf
      %2863 = vmax.xlane.f32.xlu0 %v2862
      %v2864 = vpop.xlane.xlu0 %2863
      %v2865 = vsel %vm2479, %v2855, -inf
      %2866 = vmax.xlane.f32.xlu0 %v2865
      %v2867 = vpop.xlane.xlu0 %2866
      %v2868 = vsub.f32 %v2852, %v2858
      %v2869 = vsub.f32 %v2853, %v2861
      %v2870 = vsub.f32 %v2854, %v2864
      %v2871 = vsub.f32 %v2855, %v2867
      %v2872 = vmul.f32 %v2868, 1.442695
      %v2873 = vpow.pop %v2872
      %v2874 = vmul.f32 %v2869, 1.442695
      %v2875 = vpow.pop %v2874
      %v2876 = vmul.f32 %v2870, 1.442695
      %v2877 = vpow.pop %v2876
      %v2878 = vmul.f32 %v2871, 1.442695
      %v2879 = vpow.pop %v2878
      %v2880 = vsel %vm2479, %v2873, 0.0
      %2881 = vadd.xlane.f32.xlu0 %v2880
      %v2882 = vpop.xlane.xlu0 %2881
      %v2883 = vsel %vm2479, %v2875, 0.0
      %2884 = vadd.xlane.f32.xlu0 %v2883
      %v2885 = vpop.xlane.xlu0 %2884
      %v2886 = vsel %vm2479, %v2877, 0.0
      %2887 = vadd.xlane.f32.xlu0 %v2886
      %v2888 = vpop.xlane.xlu0 %2887
      %v2889 = vsel %vm2479, %v2879, 0.0
      %2890 = vadd.xlane.f32.xlu0 %v2889
      %v2891 = vpop.xlane.xlu0 %2890
      %v2892 = vrcp.pop %v2882
      %v2893 = vrcp.pop %v2885
      %v2894 = vrcp.pop %v2888
      %v2895 = vrcp.pop %v2891
      %v2896 = vmul.f32 %v2873, %v2892
      %v2897 = vmul.f32 %v2875, %v2893
      %v2898 = vmul.f32 %v2877, %v2894
      %v2899 = vmul.f32 %v2879, %v2895
      %v2900 = vpack.c.bf16 %v2897, %v2896
      %v2901 = vpack.c.bf16 %v2899, %v2898
      %2902 = vrot.lane.b32.xlu0 %v2784, 64
      %v2903 = vpop.permute.xlu0 %2902
      %2904 = vrot.lane.b32.xlu0 %v2785, 64
      %v2905 = vpop.permute.xlu0 %2904
      %v2909 = vsel %vm2479, %v2900, 0
      %v2912 = vsel %vm2479, %v2901, 0
      %2914 = vmatpush.bf16.msra.mxu0 0
      %2915 = vmatpush.bf16.msra.mxu0 0
      %2916 = vmatpush.bf16.msra.mxu0 0
      %2917 = vmatpush.bf16.msra.mxu0 0
      %2918 = vmatpush.bf16.msra.mxu0 0
      %2919 = vmatpush.bf16.msra.mxu0 0
      %2920 = vmatpush.bf16.msra.mxu0 %v2905
      %2921 = vmatpush.bf16.msra.mxu0 %v2903
      %2922 = vmatmul.bf16.gmra.mxu0 %v2909
      %v2923 = vpop.f32.mrf.mxu0
      %v2924 = vadd.f32 0.0, %v2923
      %v2925 = vpop.f32.mrf.mxu0
      %v2926 = vadd.f32 0.0, %v2925
      %2927 = vmatmul.bf16.gmra.mxu0 %v2912
      %v2928 = vpop.f32.mrf.mxu0
      %v2929 = vadd.f32 0.0, %v2928
      %v2930 = vpop.f32.mrf.mxu0
      %v2931 = vadd.f32 0.0, %v2930
      %2932 = vdwg.mxu0
      %v2933 = vunpack.c.l.b16 %v2404
      %v2934 = vunpack.c.l.b16 %v2409
      %v2935 = vunpack.c.l.b16 %v2414
      %v2936 = vunpack.c.l.b16 %v2419
      %v2937 = vpack.c.b16 %v2934, %v2933
      %v2938 = vpack.c.b16 %v2936, %v2935
      %v2939 = vunpack.c.h.b16 %v2405
      %v2940 = vunpack.c.h.b16 %v2410
      %v2941 = vunpack.c.h.b16 %v2415
      %v2942 = vunpack.c.h.b16 %v2420
      %v2943 = vpack.c.b16 %v2940, %v2939
      %v2944 = vpack.c.b16 %v2942, %v2941
      %v2946 = vsel %vm2443, %v2937, 0
      %v2949 = vsel %vm2443, %v2938, 0
      %v2952 = vsel %vm2443, %v2943, 0
      %v2955 = vsel %vm2443, %v2944, 0
      %2957 = vmatpush.bf16.xpose.msra.mxu0 0
      %2958 = vmatpush.bf16.xpose.msra.mxu0 0
      %2959 = vmatpush.bf16.xpose.msra.mxu0 0
      %2960 = vmatpush.bf16.xpose.msra.mxu0 0
      %2961 = vmatpush.bf16.xpose.msra.mxu0 0
      %2962 = vmatpush.bf16.xpose.msra.mxu0 0
      %2963 = vmatpush.bf16.xpose.msra.mxu0 %v2955
      %2964 = vmatpush.bf16.xpose.msra.mxu0 %v2952
      %2965 = vmatmul.bf16.gmra.mxu0 %v2946
      %v2966 = vpop.f32.mrf.mxu0
      %v2967 = vadd.f32 0.0, %v2966
      %v2968 = vpop.f32.mrf.mxu0
      %v2969 = vadd.f32 0.0, %v2968
      %2970 = vmatmul.bf16.gmra.mxu0 %v2949
      %v2971 = vpop.f32.mrf.mxu0
      %v2972 = vadd.f32 0.0, %v2971
      %v2973 = vpop.f32.mrf.mxu0
      %v2974 = vadd.f32 0.0, %v2973
      %2975 = vdwg.mxu0
      %v2976 = vsel %vm599, %v2967, -inf
      %v2977 = vsel %vm600, %v2969, -inf
      %v2978 = vsel %vm601, %v2972, -inf
      %v2979 = vsel %vm602, %v2974, -inf
      %v2980 = vsel %vm2479, %v2976, -inf
      %2981 = vmax.xlane.f32.xlu0 %v2980
      %v2982 = vpop.xlane.xlu0 %2981
      %v2983 = vsel %vm2479, %v2977, -inf
      %2984 = vmax.xlane.f32.xlu0 %v2983
      %v2985 = vpop.xlane.xlu0 %2984
      %v2986 = vsel %vm2479, %v2978, -inf
      %2987 = vmax.xlane.f32.xlu0 %v2986
      %v2988 = vpop.xlane.xlu0 %2987
      %v2989 = vsel %vm2479, %v2979, -inf
      %2990 = vmax.xlane.f32.xlu0 %v2989
      %v2991 = vpop.xlane.xlu0 %2990
      %v2992 = vsub.f32 %v2976, %v2982
      %v2993 = vsub.f32 %v2977, %v2985
      %v2994 = vsub.f32 %v2978, %v2988
      %v2995 = vsub.f32 %v2979, %v2991
      %v2996 = vmul.f32 %v2992, 1.442695
      %v2997 = vpow.pop %v2996
      %v2998 = vmul.f32 %v2993, 1.442695
      %v2999 = vpow.pop %v2998
      %v3000 = vmul.f32 %v2994, 1.442695
      %v3001 = vpow.pop %v3000
      %v3002 = vmul.f32 %v2995, 1.442695
      %v3003 = vpow.pop %v3002
      %v3004 = vsel %vm2479, %v2997, 0.0
      %3005 = vadd.xlane.f32.xlu0 %v3004
      %v3006 = vpop.xlane.xlu0 %3005
      %v3007 = vsel %vm2479, %v2999, 0.0
      %3008 = vadd.xlane.f32.xlu0 %v3007
      %v3009 = vpop.xlane.xlu0 %3008
      %v3010 = vsel %vm2479, %v3001, 0.0
      %3011 = vadd.xlane.f32.xlu0 %v3010
      %v3012 = vpop.xlane.xlu0 %3011
      %v3013 = vsel %vm2479, %v3003, 0.0
      %3014 = vadd.xlane.f32.xlu0 %v3013
      %v3015 = vpop.xlane.xlu0 %3014
      %v3016 = vrcp.pop %v3006
      %v3017 = vrcp.pop %v3009
      %v3018 = vrcp.pop %v3012
      %v3019 = vrcp.pop %v3015
      %v3020 = vmul.f32 %v2997, %v3016
      %v3021 = vmul.f32 %v2999, %v3017
      %v3022 = vmul.f32 %v3001, %v3018
      %v3023 = vmul.f32 %v3003, %v3019
      %v3024 = vpack.c.bf16 %v3021, %v3020
      %v3025 = vpack.c.bf16 %v3023, %v3022
      %v3030 = vunpack.c.l.b16 %v2407
      %v3031 = vunpack.c.l.b16 %v2412
      %v3032 = vunpack.c.l.b16 %v2417
      %v3033 = vunpack.c.l.b16 %v2422
      %v3034 = vpack.c.b16 %v3031, %v3030
      %v3035 = vpack.c.b16 %v3033, %v3032
      %v3039 = vsel %vm2479, %v3024, 0
      %v3042 = vsel %vm2479, %v3025, 0
      %3044 = vmatpush.bf16.msra.mxu0 0
      %3045 = vmatpush.bf16.msra.mxu0 0
      %3046 = vmatpush.bf16.msra.mxu0 0
      %3047 = vmatpush.bf16.msra.mxu0 0
      %3048 = vmatpush.bf16.msra.mxu0 0
      %3049 = vmatpush.bf16.msra.mxu0 0
      %3050 = vmatpush.bf16.msra.mxu0 %v3035
      %3051 = vmatpush.bf16.msra.mxu0 %v3034
      %3052 = vmatmul.bf16.gmra.mxu0 %v3039
      %v3053 = vpop.f32.mrf.mxu0
      %v3054 = vadd.f32 0.0, %v3053
      %v3055 = vpop.f32.mrf.mxu0
      %v3056 = vadd.f32 0.0, %v3055
      %3057 = vmatmul.bf16.gmra.mxu0 %v3042
      %v3058 = vpop.f32.mrf.mxu0
      %v3059 = vadd.f32 0.0, %v3058
      %v3060 = vpop.f32.mrf.mxu0
      %v3061 = vadd.f32 0.0, %v3060
      %3062 = vdwg.mxu0
      %3063 = vrot.lane.b32.xlu0 %v2937, 64
      %v3064 = vpop.permute.xlu0 %3063
      %3065 = vrot.lane.b32.xlu0 %v2938, 64
      %v3066 = vpop.permute.xlu0 %3065
      %3067 = vrot.lane.b32.xlu0 %v2943, 64
      %v3068 = vpop.permute.xlu0 %3067
      %3069 = vrot.lane.b32.xlu0 %v2944, 64
      %v3070 = vpop.permute.xlu0 %3069
      %v3072 = vsel %vm2443, %v3064, 0
      %v3075 = vsel %vm2443, %v3066, 0
      %v3078 = vsel %vm2443, %v3068, 0
      %v3081 = vsel %vm2443, %v3070, 0
      %3083 = vmatpush.bf16.xpose.msra.mxu0 0
      %3084 = vmatpush.bf16.xpose.msra.mxu0 0
      %3085 = vmatpush.bf16.xpose.msra.mxu0 0
      %3086 = vmatpush.bf16.xpose.msra.mxu0 0
      %3087 = vmatpush.bf16.xpose.msra.mxu0 0
      %3088 = vmatpush.bf16.xpose.msra.mxu0 0
      %3089 = vmatpush.bf16.xpose.msra.mxu0 %v3081
      %3090 = vmatpush.bf16.xpose.msra.mxu0 %v3078
      %3091 = vmatmul.bf16.gmra.mxu0 %v3072
      %v3092 = vpop.f32.mrf.mxu0
      %v3093 = vadd.f32 0.0, %v3092
      %v3094 = vpop.f32.mrf.mxu0
      %v3095 = vadd.f32 0.0, %v3094
      %3096 = vmatmul.bf16.gmra.mxu0 %v3075
      %v3097 = vpop.f32.mrf.mxu0
      %v3098 = vadd.f32 0.0, %v3097
      %v3099 = vpop.f32.mrf.mxu0
      %v3100 = vadd.f32 0.0, %v3099
      %3101 = vdwg.mxu0
      %v3102 = vsel %vm599, %v3093, -inf
      %v3103 = vsel %vm600, %v3095, -inf
      %v3104 = vsel %vm601, %v3098, -inf
      %v3105 = vsel %vm602, %v3100, -inf
      %v3106 = vsel %vm2479, %v3102, -inf
      %3107 = vmax.xlane.f32.xlu0 %v3106
      %v3108 = vpop.xlane.xlu0 %3107
      %v3109 = vsel %vm2479, %v3103, -inf
      %3110 = vmax.xlane.f32.xlu0 %v3109
      %v3111 = vpop.xlane.xlu0 %3110
      %v3112 = vsel %vm2479, %v3104, -inf
      %3113 = vmax.xlane.f32.xlu0 %v3112
      %v3114 = vpop.xlane.xlu0 %3113
      %v3115 = vsel %vm2479, %v3105, -inf
      %3116 = vmax.xlane.f32.xlu0 %v3115
      %v3117 = vpop.xlane.xlu0 %3116
      %v3118 = vsub.f32 %v3102, %v3108
      %v3119 = vsub.f32 %v3103, %v3111
      %v3120 = vsub.f32 %v3104, %v3114
      %v3121 = vsub.f32 %v3105, %v3117
      %v3122 = vmul.f32 %v3118, 1.442695
      %v3123 = vpow.pop %v3122
      %v3124 = vmul.f32 %v3119, 1.442695
      %v3125 = vpow.pop %v3124
      %v3126 = vmul.f32 %v3120, 1.442695
      %v3127 = vpow.pop %v3126
      %v3128 = vmul.f32 %v3121, 1.442695
      %v3129 = vpow.pop %v3128
      %v3130 = vsel %vm2479, %v3123, 0.0
      %3131 = vadd.xlane.f32.xlu0 %v3130
      %v3132 = vpop.xlane.xlu0 %3131
      %v3133 = vsel %vm2479, %v3125, 0.0
      %3134 = vadd.xlane.f32.xlu0 %v3133
      %v3135 = vpop.xlane.xlu0 %3134
      %v3136 = vsel %vm2479, %v3127, 0.0
      %3137 = vadd.xlane.f32.xlu0 %v3136
      %v3138 = vpop.xlane.xlu0 %3137
      %v3139 = vsel %vm2479, %v3129, 0.0
      %3140 = vadd.xlane.f32.xlu0 %v3139
      %v3141 = vpop.xlane.xlu0 %3140
      %v3142 = vrcp.pop %v3132
      %v3143 = vrcp.pop %v3135
      %v3144 = vrcp.pop %v3138
      %v3145 = vrcp.pop %v3141
      %v3146 = vmul.f32 %v3123, %v3142
      %v3147 = vmul.f32 %v3125, %v3143
      %v3148 = vmul.f32 %v3127, %v3144
      %v3149 = vmul.f32 %v3129, %v3145
      %v3150 = vpack.c.bf16 %v3147, %v3146
      %v3151 = vpack.c.bf16 %v3149, %v3148
      %3152 = vrot.lane.b32.xlu0 %v3034, 64
      %v3153 = vpop.permute.xlu0 %3152
      %3154 = vrot.lane.b32.xlu0 %v3035, 64
      %v3155 = vpop.permute.xlu0 %3154
      %v3159 = vsel %vm2479, %v3150, 0
      %v3162 = vsel %vm2479, %v3151, 0
      %3164 = vmatpush.bf16.msra.mxu0 0
      %3165 = vmatpush.bf16.msra.mxu0 0
      %3166 = vmatpush.bf16.msra.mxu0 0
      %3167 = vmatpush.bf16.msra.mxu0 0
      %3168 = vmatpush.bf16.msra.mxu0 0
      %3169 = vmatpush.bf16.msra.mxu0 0
      %3170 = vmatpush.bf16.msra.mxu0 %v3155
      %3171 = vmatpush.bf16.msra.mxu0 %v3153
      %3172 = vmatmul.bf16.gmra.mxu0 %v3159
      %v3173 = vpop.f32.mrf.mxu0
      %v3174 = vadd.f32 0.0, %v3173
      %v3175 = vpop.f32.mrf.mxu0
      %v3176 = vadd.f32 0.0, %v3175
      %3177 = vmatmul.bf16.gmra.mxu0 %v3162
      %v3178 = vpop.f32.mrf.mxu0
      %v3179 = vadd.f32 0.0, %v3178
      %v3180 = vpop.f32.mrf.mxu0
      %v3181 = vadd.f32 0.0, %v3180
      %3182 = vdwg.mxu0
      %3187 = vrot.lane.b32.xlu0 %v2674, 64
      %v3188 = vpop.permute.xlu0 %3187
      %3189 = vrot.lane.b32.xlu0 %v2676, 64
      %v3190 = vpop.permute.xlu0 %3189
      %3191 = vrot.lane.b32.xlu0 %v2679, 64
      %v3192 = vpop.permute.xlu0 %3191
      %3193 = vrot.lane.b32.xlu0 %v2681, 64
      %v3194 = vpop.permute.xlu0 %3193
      %3203 = vrot.lane.b32.xlu0 %v2924, 64
      %v3204 = vpop.permute.xlu0 %3203
      %3205 = vrot.lane.b32.xlu0 %v2926, 64
      %v3206 = vpop.permute.xlu0 %3205
      %3207 = vrot.lane.b32.xlu0 %v2929, 64
      %v3208 = vpop.permute.xlu0 %3207
      %3209 = vrot.lane.b32.xlu0 %v2931, 64
      %v3210 = vpop.permute.xlu0 %3209
      %3219 = vrot.lane.b32.xlu0 %v3174, 64
      %v3220 = vpop.permute.xlu0 %3219
      %3221 = vrot.lane.b32.xlu0 %v3176, 64
      %v3222 = vpop.permute.xlu0 %3221
      %3223 = vrot.lane.b32.xlu0 %v3179, 64
      %v3224 = vpop.permute.xlu0 %3223
      %3225 = vrot.lane.b32.xlu0 %v3181, 64
      %v3226 = vpop.permute.xlu0 %3225
      %v3231 = vsel %vm2443, %v2554, %v3188
      %v3232 = vsel %vm2443, %v2556, %v3190
      %v3233 = vsel %vm2443, %v2559, %v3192
      %v3234 = vsel %vm2443, %v2561, %v3194
      %v3235 = vsel %vm2443, %v2804, %v3204
      %v3236 = vsel %vm2443, %v2806, %v3206
      %v3237 = vsel %vm2443, %v2809, %v3208
      %v3238 = vsel %vm2443, %v2811, %v3210
      %v3239 = vsel %vm2443, %v3054, %v3220
      %v3240 = vsel %vm2443, %v3056, %v3222
      %v3241 = vsel %vm2443, %v3059, %v3224
      %v3242 = vsel %vm2443, %v3061, %v3226
      %v3243 = vpack.c.bf16 %v3232, %v3231
      %v3244 = vpack.c.bf16 %v3236, %v3235
      %v3245 = vpack.c.bf16 %v3240, %v3239
      %v3246 = vpack.c.bf16 %v3234, %v3233
      %v3247 = vpack.c.bf16 %v3238, %v3237
      %v3248 = vpack.c.bf16 %v3242, %v3241
      %v3345 = vunpack.c.l.b16 %v496
      %v3346 = vunpack.c.h.b16 %v496
      %v3347 = vunpack.c.l.b16 %v497
      %v3348 = vunpack.c.l.b16 %v498
      %v3349 = vunpack.c.h.b16 %v498
      %v3350 = vunpack.c.l.b16 %v499
      %v3351 = vunpack.c.l.b16 %v500
      %v3352 = vunpack.c.h.b16 %v500
      %v3353 = vunpack.c.l.b16 %v501
      %v3354 = vunpack.c.l.b16 %v502
      %v3355 = vunpack.c.h.b16 %v502
      %v3356 = vunpack.c.l.b16 %v503
      %v3357 = vunpack.c.l.b16 %v504
      %v3358 = vunpack.c.h.b16 %v504
      %v3359 = vunpack.c.l.b16 %v505
      %v3360 = vunpack.c.l.b16 %v506
      %v3361 = vunpack.c.h.b16 %v506
      %v3362 = vunpack.c.l.b16 %v507
      %v3363 = vunpack.c.l.b16 %v508
      %v3364 = vunpack.c.h.b16 %v508
      %v3365 = vunpack.c.l.b16 %v509
      %v3366 = vunpack.c.l.b16 %v510
      %v3367 = vunpack.c.h.b16 %v510
      %v3368 = vunpack.c.l.b16 %v511
      %v3369 = vunpack.c.l.b16 %v512
      %v3370 = vunpack.c.h.b16 %v512
      %v3371 = vunpack.c.l.b16 %v513
      %v3372 = vunpack.c.l.b16 %v514
      %v3373 = vunpack.c.h.b16 %v514
      %v3374 = vunpack.c.l.b16 %v515
      %v3375 = vunpack.c.l.b16 %v516
      %v3376 = vunpack.c.h.b16 %v516
      %v3377 = vunpack.c.l.b16 %v517
      %v3378 = vunpack.c.l.b16 %v518
      %v3379 = vunpack.c.h.b16 %v518
      %v3380 = vunpack.c.l.b16 %v519
      %v3381 = vunpack.c.l.b16 %v520
      %v3382 = vunpack.c.h.b16 %v520
      %v3383 = vunpack.c.l.b16 %v521
      %v3384 = vunpack.c.l.b16 %v522
      %v3385 = vunpack.c.h.b16 %v522
      %v3386 = vunpack.c.l.b16 %v523
      %v3387 = vunpack.c.l.b16 %v524
      %v3388 = vunpack.c.h.b16 %v524
      %v3389 = vunpack.c.l.b16 %v525
      %v3390 = vunpack.c.l.b16 %v526
      %v3391 = vunpack.c.h.b16 %v526
      %v3392 = vunpack.c.l.b16 %v527
      %v3393 = vunpack.c.l.b16 %v528
      %v3394 = vunpack.c.h.b16 %v528
      %v3395 = vunpack.c.l.b16 %v529
      %v3396 = vunpack.c.l.b16 %v530
      %v3397 = vunpack.c.h.b16 %v530
      %v3398 = vunpack.c.l.b16 %v531
      %v3399 = vunpack.c.l.b16 %v532
      %v3400 = vunpack.c.h.b16 %v532
      %v3401 = vunpack.c.l.b16 %v533
      %v3402 = vunpack.c.l.b16 %v534
      %v3403 = vunpack.c.h.b16 %v534
      %v3404 = vunpack.c.l.b16 %v535
      %v3405 = vunpack.c.l.b16 %v536
      %v3406 = vunpack.c.h.b16 %v536
      %v3407 = vunpack.c.l.b16 %v537
      %v3408 = vunpack.c.l.b16 %v538
      %v3409 = vunpack.c.h.b16 %v538
      %v3410 = vunpack.c.l.b16 %v539
      %v3411 = vunpack.c.l.b16 %v540
      %v3412 = vunpack.c.h.b16 %v540
      %v3413 = vunpack.c.l.b16 %v541
      %v3414 = vunpack.c.l.b16 %v542
      %v3415 = vunpack.c.h.b16 %v542
      %v3416 = vunpack.c.l.b16 %v543
      %v3417 = vunpack.c.l.b16 %v544
      %v3418 = vunpack.c.h.b16 %v544
      %v3419 = vunpack.c.l.b16 %v545
      %v3420 = vunpack.c.l.b16 %v546
      %v3421 = vunpack.c.h.b16 %v546
      %v3422 = vunpack.c.l.b16 %v547
      %v3423 = vunpack.c.l.b16 %v548
      %v3424 = vunpack.c.h.b16 %v548
      %v3425 = vunpack.c.l.b16 %v549
      %v3426 = vunpack.c.l.b16 %v550
      %v3427 = vunpack.c.h.b16 %v550
      %v3428 = vunpack.c.l.b16 %v551
      %v3429 = vunpack.c.l.b16 %v552
      %v3430 = vunpack.c.h.b16 %v552
      %v3431 = vunpack.c.l.b16 %v553
      %v3432 = vunpack.c.l.b16 %v554
      %v3433 = vunpack.c.h.b16 %v554
      %v3434 = vunpack.c.l.b16 %v555
      %v3435 = vunpack.c.l.b16 %v556
      %v3436 = vunpack.c.h.b16 %v556
      %v3437 = vunpack.c.l.b16 %v557
      %v3438 = vunpack.c.l.b16 %v558
      %v3439 = vunpack.c.h.b16 %v558
      %v3440 = vunpack.c.l.b16 %v559
      %v3441 = vunpack.c.l.b16 %v560
      %v3442 = vunpack.c.h.b16 %v560
      %v3443 = vunpack.c.l.b16 %v561
      %v3444 = vunpack.c.l.b16 %v562
      %v3445 = vunpack.c.h.b16 %v562
      %v3446 = vunpack.c.l.b16 %v563
      %v3447 = vunpack.c.l.b16 %v564
      %v3448 = vunpack.c.h.b16 %v564
      %v3449 = vunpack.c.l.b16 %v565
      %v3450 = vunpack.c.l.b16 %v566
      %v3451 = vunpack.c.h.b16 %v566
      %v3452 = vunpack.c.l.b16 %v567
      %v3453 = vunpack.c.l.b16 %v568
      %v3454 = vunpack.c.h.b16 %v568
      %v3455 = vunpack.c.l.b16 %v569
      %v3456 = vunpack.c.l.b16 %v570
      %v3457 = vunpack.c.h.b16 %v570
      %v3458 = vunpack.c.l.b16 %v571
      %v3459 = vunpack.c.l.b16 %v572
      %v3460 = vunpack.c.h.b16 %v572
      %v3461 = vunpack.c.l.b16 %v573
      %v3462 = vunpack.c.l.b16 %v574
      %v3463 = vunpack.c.h.b16 %v574
      %v3464 = vunpack.c.l.b16 %v575
      %v3465 = vunpack.c.l.b16 %v576
      %v3466 = vunpack.c.h.b16 %v576
      %v3467 = vunpack.c.l.b16 %v577
      %v3468 = vunpack.c.l.b16 %v578
      %v3469 = vunpack.c.h.b16 %v578
      %v3470 = vunpack.c.l.b16 %v579
      %v3471 = vunpack.c.l.b16 %v580
      %v3472 = vunpack.c.h.b16 %v580
      %v3473 = vunpack.c.l.b16 %v581
      %v3474 = vunpack.c.l.b16 %v582
      %v3475 = vunpack.c.h.b16 %v582
      %v3476 = vunpack.c.l.b16 %v583
      %v3477 = vunpack.c.l.b16 %v584
      %v3478 = vunpack.c.h.b16 %v584
      %v3479 = vunpack.c.l.b16 %v585
      %v3480 = vunpack.c.l.b16 %v586
      %v3481 = vunpack.c.h.b16 %v586
      %v3482 = vunpack.c.l.b16 %v587
      %v3483 = vunpack.c.l.b16 %v588
      %v3484 = vunpack.c.h.b16 %v588
      %v3485 = vunpack.c.l.b16 %v589
      %v3486 = vunpack.c.l.b16 %v590
      %v3487 = vunpack.c.h.b16 %v590
      %v3488 = vunpack.c.l.b16 %v591
      %v3489 = vpack.c.b16 %v3348, %v3345
      %v3490 = vpack.c.b16 %v3349, %v3346
      %v3491 = vpack.c.b16 %v3350, %v3347
      %v3492 = vpack.c.b16 %v3354, %v3351
      %v3493 = vpack.c.b16 %v3355, %v3352
      %v3494 = vpack.c.b16 %v3356, %v3353
      %v3495 = vpack.c.b16 %v3360, %v3357
      %v3496 = vpack.c.b16 %v3361, %v3358
      %v3497 = vpack.c.b16 %v3362, %v3359
      %v3498 = vpack.c.b16 %v3366, %v3363
      %v3499 = vpack.c.b16 %v3367, %v3364
      %v3500 = vpack.c.b16 %v3368, %v3365
      %v3501 = vpack.c.b16 %v3372, %v3369
      %v3502 = vpack.c.b16 %v3373, %v3370
      %v3503 = vpack.c.b16 %v3374, %v3371
      %v3504 = vpack.c.b16 %v3378, %v3375
      %v3505 = vpack.c.b16 %v3379, %v3376
      %v3506 = vpack.c.b16 %v3380, %v3377
      %v3507 = vpack.c.b16 %v3384, %v3381
      %v3508 = vpack.c.b16 %v3385, %v3382
      %v3509 = vpack.c.b16 %v3386, %v3383
      %v3510 = vpack.c.b16 %v3390, %v3387
      %v3511 = vpack.c.b16 %v3391, %v3388
      %v3512 = vpack.c.b16 %v3392, %v3389
      %v3513 = vpack.c.b16 %v3396, %v3393
      %v3514 = vpack.c.b16 %v3397, %v3394
      %v3515 = vpack.c.b16 %v3398, %v3395
      %v3516 = vpack.c.b16 %v3402, %v3399
      %v3517 = vpack.c.b16 %v3403, %v3400
      %v3518 = vpack.c.b16 %v3404, %v3401
      %v3519 = vpack.c.b16 %v3408, %v3405
      %v3520 = vpack.c.b16 %v3409, %v3406
      %v3521 = vpack.c.b16 %v3410, %v3407
      %v3522 = vpack.c.b16 %v3414, %v3411
      %v3523 = vpack.c.b16 %v3415, %v3412
      %v3524 = vpack.c.b16 %v3416, %v3413
      %v3525 = vpack.c.b16 %v3420, %v3417
      %v3526 = vpack.c.b16 %v3421, %v3418
      %v3527 = vpack.c.b16 %v3422, %v3419
      %v3528 = vpack.c.b16 %v3426, %v3423
      %v3529 = vpack.c.b16 %v3427, %v3424
      %v3530 = vpack.c.b16 %v3428, %v3425
      %v3531 = vpack.c.b16 %v3432, %v3429
      %v3532 = vpack.c.b16 %v3433, %v3430
      %v3533 = vpack.c.b16 %v3434, %v3431
      %v3534 = vpack.c.b16 %v3438, %v3435
      %v3535 = vpack.c.b16 %v3439, %v3436
      %v3536 = vpack.c.b16 %v3440, %v3437
      %v3537 = vpack.c.b16 %v3444, %v3441
      %v3538 = vpack.c.b16 %v3445, %v3442
      %v3539 = vpack.c.b16 %v3446, %v3443
      %v3540 = vpack.c.b16 %v3450, %v3447
      %v3541 = vpack.c.b16 %v3451, %v3448
      %v3542 = vpack.c.b16 %v3452, %v3449
      %v3543 = vpack.c.b16 %v3456, %v3453
      %v3544 = vpack.c.b16 %v3457, %v3454
      %v3545 = vpack.c.b16 %v3458, %v3455
      %v3546 = vpack.c.b16 %v3462, %v3459
      %v3547 = vpack.c.b16 %v3463, %v3460
      %v3548 = vpack.c.b16 %v3464, %v3461
      %v3549 = vpack.c.b16 %v3468, %v3465
      %v3550 = vpack.c.b16 %v3469, %v3466
      %v3551 = vpack.c.b16 %v3470, %v3467
      %v3552 = vpack.c.b16 %v3474, %v3471
      %v3553 = vpack.c.b16 %v3475, %v3472
      %v3554 = vpack.c.b16 %v3476, %v3473
      %v3555 = vpack.c.b16 %v3480, %v3477
      %v3556 = vpack.c.b16 %v3481, %v3478
      %v3557 = vpack.c.b16 %v3482, %v3479
      %v3558 = vpack.c.b16 %v3486, %v3483
      %v3559 = vpack.c.b16 %v3487, %v3484
      %v3560 = vpack.c.b16 %v3488, %v3485
      %3633 = vmatpush.bf16.msra.mxu0 %v3510
      %3634 = vmatpush.bf16.msra.mxu0 %v3507
      %3635 = vmatpush.bf16.msra.mxu0 %v3504
      %3636 = vmatpush.bf16.msra.mxu0 %v3501
      %3637 = vmatpush.bf16.msra.mxu0 %v3498
      %3638 = vmatpush.bf16.msra.mxu0 %v3495
      %3639 = vmatpush.bf16.msra.mxu0 %v3492
      %3640 = vmatpush.bf16.msra.mxu0 %v3489
      %3641 = vmatmul.bf16.gmra.mxu0 %v3243
      %v3642 = vpop.f32.mrf.mxu0
      %v3643 = vadd.f32 0.0, %v3642
      %v3644 = vpop.f32.mrf.mxu0
      %v3645 = vadd.f32 0.0, %v3644
      %3646 = vmatmul.bf16.gmra.mxu0 %v3246
      %v3647 = vpop.f32.mrf.mxu0
      %v3648 = vadd.f32 0.0, %v3647
      %v3649 = vpop.f32.mrf.mxu0
      %v3650 = vadd.f32 0.0, %v3649
      %3651 = vdwg.mxu0
      %3652 = vmatpush.bf16.msra.mxu0 %v3534
      %3653 = vmatpush.bf16.msra.mxu0 %v3531
      %3654 = vmatpush.bf16.msra.mxu0 %v3528
      %3655 = vmatpush.bf16.msra.mxu0 %v3525
      %3656 = vmatpush.bf16.msra.mxu0 %v3522
      %3657 = vmatpush.bf16.msra.mxu0 %v3519
      %3658 = vmatpush.bf16.msra.mxu0 %v3516
      %3659 = vmatpush.bf16.msra.mxu0 %v3513
      %3660 = vmatmul.bf16.gmra.mxu0 %v3244
      %v3661 = vpop.f32.mrf.mxu0
      %v3662 = vadd.f32 %v3643, %v3661
      %v3663 = vpop.f32.mrf.mxu0
      %v3664 = vadd.f32 %v3645, %v3663
      %3665 = vmatmul.bf16.gmra.mxu0 %v3247
      %v3666 = vpop.f32.mrf.mxu0
      %v3667 = vadd.f32 %v3648, %v3666
      %v3668 = vpop.f32.mrf.mxu0
      %v3669 = vadd.f32 %v3650, %v3668
      %3670 = vdwg.mxu0
      %3671 = vmatpush.bf16.msra.mxu0 %v3558
      %3672 = vmatpush.bf16.msra.mxu0 %v3555
      %3673 = vmatpush.bf16.msra.mxu0 %v3552
      %3674 = vmatpush.bf16.msra.mxu0 %v3549
      %3675 = vmatpush.bf16.msra.mxu0 %v3546
      %3676 = vmatpush.bf16.msra.mxu0 %v3543
      %3677 = vmatpush.bf16.msra.mxu0 %v3540
      %3678 = vmatpush.bf16.msra.mxu0 %v3537
      %3679 = vmatmul.bf16.gmra.mxu0 %v3245
      %v3680 = vpop.f32.mrf.mxu0
      %v3681 = vadd.f32 %v3662, %v3680
      %v3682 = vpop.f32.mrf.mxu0
      %v3683 = vadd.f32 %v3664, %v3682
      %3684 = vmatmul.bf16.gmra.mxu0 %v3248
      %v3685 = vpop.f32.mrf.mxu0
      %v3686 = vadd.f32 %v3667, %v3685
      %v3687 = vpop.f32.mrf.mxu0
      %v3688 = vadd.f32 %v3669, %v3687
      %3689 = vdwg.mxu0
      %3690 = vmatpush.bf16.msra.mxu0 %v3511
      %3691 = vmatpush.bf16.msra.mxu0 %v3508
      %3692 = vmatpush.bf16.msra.mxu0 %v3505
      %3693 = vmatpush.bf16.msra.mxu0 %v3502
      %3694 = vmatpush.bf16.msra.mxu0 %v3499
      %3695 = vmatpush.bf16.msra.mxu0 %v3496
      %3696 = vmatpush.bf16.msra.mxu0 %v3493
      %3697 = vmatpush.bf16.msra.mxu0 %v3490
      %3698 = vmatmul.bf16.gmra.mxu0 %v3243
      %v3699 = vpop.f32.mrf.mxu0
      %v3700 = vadd.f32 0.0, %v3699
      %v3701 = vpop.f32.mrf.mxu0
      %v3702 = vadd.f32 0.0, %v3701
      %3703 = vmatmul.bf16.gmra.mxu0 %v3246
      %v3704 = vpop.f32.mrf.mxu0
      %v3705 = vadd.f32 0.0, %v3704
      %v3706 = vpop.f32.mrf.mxu0
      %v3707 = vadd.f32 0.0, %v3706
      %3708 = vdwg.mxu0
      %3709 = vmatpush.bf16.msra.mxu0 %v3535
      %3710 = vmatpush.bf16.msra.mxu0 %v3532
      %3711 = vmatpush.bf16.msra.mxu0 %v3529
      %3712 = vmatpush.bf16.msra.mxu0 %v3526
      %3713 = vmatpush.bf16.msra.mxu0 %v3523
      %3714 = vmatpush.bf16.msra.mxu0 %v3520
      %3715 = vmatpush.bf16.msra.mxu0 %v3517
      %3716 = vmatpush.bf16.msra.mxu0 %v3514
      %3717 = vmatmul.bf16.gmra.mxu0 %v3244
      %v3718 = vpop.f32.mrf.mxu0
      %v3719 = vadd.f32 %v3700, %v3718
      %v3720 = vpop.f32.mrf.mxu0
      %v3721 = vadd.f32 %v3702, %v3720
      %3722 = vmatmul.bf16.gmra.mxu0 %v3247
      %v3723 = vpop.f32.mrf.mxu0
      %v3724 = vadd.f32 %v3705, %v3723
      %v3725 = vpop.f32.mrf.mxu0
      %v3726 = vadd.f32 %v3707, %v3725
      %3727 = vdwg.mxu0
      %3728 = vmatpush.bf16.msra.mxu0 %v3559
      %3729 = vmatpush.bf16.msra.mxu0 %v3556
      %3730 = vmatpush.bf16.msra.mxu0 %v3553
      %3731 = vmatpush.bf16.msra.mxu0 %v3550
      %3732 = vmatpush.bf16.msra.mxu0 %v3547
      %3733 = vmatpush.bf16.msra.mxu0 %v3544
      %3734 = vmatpush.bf16.msra.mxu0 %v3541
      %3735 = vmatpush.bf16.msra.mxu0 %v3538
      %3736 = vmatmul.bf16.gmra.mxu0 %v3245
      %v3737 = vpop.f32.mrf.mxu0
      %v3738 = vadd.f32 %v3719, %v3737
      %v3739 = vpop.f32.mrf.mxu0
      %v3740 = vadd.f32 %v3721, %v3739
      %3741 = vmatmul.bf16.gmra.mxu0 %v3248
      %v3742 = vpop.f32.mrf.mxu0
      %v3743 = vadd.f32 %v3724, %v3742
      %v3744 = vpop.f32.mrf.mxu0
      %v3745 = vadd.f32 %v3726, %v3744
      %3746 = vdwg.mxu0
      %3747 = vmatpush.bf16.msra.mxu0 %v3512
      %3748 = vmatpush.bf16.msra.mxu0 %v3509
      %3749 = vmatpush.bf16.msra.mxu0 %v3506
      %3750 = vmatpush.bf16.msra.mxu0 %v3503
      %3751 = vmatpush.bf16.msra.mxu0 %v3500
      %3752 = vmatpush.bf16.msra.mxu0 %v3497
      %3753 = vmatpush.bf16.msra.mxu0 %v3494
      %3754 = vmatpush.bf16.msra.mxu0 %v3491
      %3755 = vmatmul.bf16.gmra.mxu0 %v3243
      %v3756 = vpop.f32.mrf.mxu0
      %v3757 = vadd.f32 0.0, %v3756
      %v3758 = vpop.f32.mrf.mxu0
      %v3759 = vadd.f32 0.0, %v3758
      %3760 = vmatmul.bf16.gmra.mxu0 %v3246
      %v3761 = vpop.f32.mrf.mxu0
      %v3762 = vadd.f32 0.0, %v3761
      %v3763 = vpop.f32.mrf.mxu0
      %v3764 = vadd.f32 0.0, %v3763
      %3765 = vdwg.mxu0
      %3766 = vmatpush.bf16.msra.mxu0 %v3536
      %3767 = vmatpush.bf16.msra.mxu0 %v3533
      %3768 = vmatpush.bf16.msra.mxu0 %v3530
      %3769 = vmatpush.bf16.msra.mxu0 %v3527
      %3770 = vmatpush.bf16.msra.mxu0 %v3524
      %3771 = vmatpush.bf16.msra.mxu0 %v3521
      %3772 = vmatpush.bf16.msra.mxu0 %v3518
      %3773 = vmatpush.bf16.msra.mxu0 %v3515
      %3774 = vmatmul.bf16.gmra.mxu0 %v3244
      %v3775 = vpop.f32.mrf.mxu0
      %v3776 = vadd.f32 %v3757, %v3775
      %v3777 = vpop.f32.mrf.mxu0
      %v3778 = vadd.f32 %v3759, %v3777
      %3779 = vmatmul.bf16.gmra.mxu0 %v3247
      %v3780 = vpop.f32.mrf.mxu0
      %v3781 = vadd.f32 %v3762, %v3780
      %v3782 = vpop.f32.mrf.mxu0
      %v3783 = vadd.f32 %v3764, %v3782
      %3784 = vdwg.mxu0
      %3785 = vmatpush.bf16.msra.mxu0 %v3560
      %3786 = vmatpush.bf16.msra.mxu0 %v3557
      %3787 = vmatpush.bf16.msra.mxu0 %v3554
      %3788 = vmatpush.bf16.msra.mxu0 %v3551
      %3789 = vmatpush.bf16.msra.mxu0 %v3548
      %3790 = vmatpush.bf16.msra.mxu0 %v3545
      %3791 = vmatpush.bf16.msra.mxu0 %v3542
      %3792 = vmatpush.bf16.msra.mxu0 %v3539
      %3793 = vmatmul.bf16.gmra.mxu0 %v3245
      %v3794 = vpop.f32.mrf.mxu0
      %v3795 = vadd.f32 %v3776, %v3794
      %v3796 = vpop.f32.mrf.mxu0
      %v3797 = vadd.f32 %v3778, %v3796
      %3798 = vmatmul.bf16.gmra.mxu0 %v3248
      %v3799 = vpop.f32.mrf.mxu0
      %v3800 = vadd.f32 %v3781, %v3799
      %v3801 = vpop.f32.mrf.mxu0
      %v3802 = vadd.f32 %v3783, %v3801
      %3803 = vdwg.mxu0
      %v3804 = vadd.f32 %v603, %v3681
      %v3805 = vadd.f32 %v604, %v3738
      %v3806 = vadd.f32 %v605, %v3795
      %v3807 = vadd.f32 %v606, %v3683
      %v3808 = vadd.f32 %v607, %v3740
      %v3809 = vadd.f32 %v608, %v3797
      %v3810 = vadd.f32 %v609, %v3686
      %v3811 = vadd.f32 %v610, %v3743
      %v3812 = vadd.f32 %v611, %v3800
      %v3813 = vadd.f32 %v612, %v3688
      %v3814 = vadd.f32 %v613, %v3745
      %v3815 = vadd.f32 %v614, %v3802
      %v3817 = vperm.slane %v255, 0
      %v3818 = vperm.slane %v255, 1
      %v3819 = vperm.slane %v255, 2
      %v3823 = vadd.f32 %v3804, %v3817
      %v3824 = vadd.f32 %v3805, %v3818
      %v3825 = vadd.f32 %v3806, %v3819
      %v3826 = vadd.f32 %v3807, %v3817
      %v3827 = vadd.f32 %v3808, %v3818
      %v3828 = vadd.f32 %v3809, %v3819
      %v3829 = vadd.f32 %v3810, %v3817
      %v3830 = vadd.f32 %v3811, %v3818
      %v3831 = vadd.f32 %v3812, %v3819
      %v3832 = vadd.f32 %v3813, %v3817
      %v3833 = vadd.f32 %v3814, %v3818
      %v3834 = vadd.f32 %v3815, %v3819
      %3835 = vst [vmem:[%s251] sm:$0xff] %v3823
      %3836 = vst [vmem:[%s251 + $0x8] sm:$0xff] %v3824
      %3837 = vst [vmem:[%s251 + $0x10] sm:$0xff] %v3825
      %3838 = vst [vmem:[%s251 + $0x18] sm:$0xff] %v3826
      %3839 = vst [vmem:[%s251 + $0x20] sm:$0xff] %v3827
      %3840 = vst [vmem:[%s251 + $0x28] sm:$0xff] %v3828
      %3841 = vst [vmem:[%s251 + $0x30] sm:$0xff] %v3829
      %3842 = vst [vmem:[%s251 + $0x38] sm:$0xff] %v3830
      %3843 = vst [vmem:[%s251 + $0x40] sm:$0xff] %v3831
      %3844 = vst [vmem:[%s251 + $0x48] sm:$0xff] %v3832
      %3845 = vst [vmem:[%s251 + $0x50] sm:$0xff] %v3833
      %3846 = vst [vmem:[%s251 + $0x58] sm:$0xff] %v3834
      %p3847 = scmp.lt.s32.totalorder %s17, 1
      %s3848 = scalar_select %p3847, %s17, 1
      %s3849 = smul.addr %s3848, 12
      %s3850 = smul.addr %s3849, 8
      %s3851 = scalar_lea.vmem %s6, %s3850
      // Predicated region
      $region45: #{block_forward.2} parent=43 // pred_check
        %p3852 = pneg %p166
      $region46: #{block_forward.2} parent=43 // pred_check_branch
        %3854 = sbr.rel (%p3852) target = $region48
      $region47: #{block_forward.2} parent=43 // pred_region
        _
      $region48: #{block_forward.2} parent=43 // pred_fallthru
        _
    $region44: #{block_forward.2} parent=5 // pred_fallthru
      _
    %p3855 = scmp.le.s32.totalorder 2, %s12
    // Predicated region
    $region49: #{block_forward.2} parent=5 // pred_check
      %p3856 = pneg %p3855
    $region50: #{block_forward.2} parent=5 // pred_check_branch
      %3858 = sbr.rel (%p3856) target = $region52
    $region51: #{block_forward.2} parent=5 // pred_region
      %s3859 = ssub.s32 %s12, 2
      // Predicated region
      $region53: #{block_forward.2} parent=51 // pred_check
        %p3860 = pneg %p172
      $region54: #{block_forward.2} parent=51 // pred_check_branch
        %3862 = sbr.rel (%p3860) target = $region56
      $region55: #{block_forward.2} parent=51 // pred_region
        %p3863 = scmp.lt.s32.totalorder %s18, 1
        %s3864 = scalar_select %p3863, %s18, 1
        %s3865 = smul.addr %s3864, 12
        %s3866 = smul.addr %s3865, 8
        %s3867 = scalar_lea.vmem %s6, %s3866
      $region56: #{block_forward.2} parent=51 // pred_fallthru
        _
    $region52: #{block_forward.2} parent=5 // pred_fallthru
      _
  $region6: #{block_forward.2} parent=0 // loop_footer
    %s16 = sadd.s32 1, %s12
  $region7: #{block_forward.2} parent=0 // loop_footer_branch
    %11 = sbr.rel target = $region3
  $region8: #{block_forward.2} parent=0 // loop_exit
    _

// kernel: block_forward.3
$region0: #{block_forward.3}
  #allocation0 [shape = 'u32[]', space=smem, size = 0x4, offset = 0x4, fixed_abs, tag = 'smem constant byte address 0x4 - core index']
  #allocation1 [shape = 'u32[72,128]{1,0:T(1,128)}', space=vmem, size = 0x9000, scoped, tag = 'internal scratch']
  %s0 = inlined_call_operand.vmem [shape: f32[64,384], index: 0, kind: input, shape index: {}]
  %s1 = inlined_call_operand.vmem [shape: f32[1,384], index: 1, kind: input, shape index: {}]
  %s2 = inlined_call_operand.vmem [shape: f32[1,384], index: 2, kind: input, shape index: {}]
  %s3 = inlined_call_operand.vmem [shape: bf16[384,1536], index: 3, kind: input, shape index: {}]
  %s4 = inlined_call_operand.vmem [shape: f32[1,1536], index: 4, kind: input, shape index: {}]
  %s5 = inlined_call_operand.vmem [shape: bf16[1536,384], index: 5, kind: input, shape index: {}]
  %s6 = inlined_call_operand.vmem [shape: f32[1,384], index: 6, kind: input, shape index: {}]
  %s7 = inlined_call_operand.hbm [shape: f32[64,384], index: 7, kind: output, shape index: {}]
  %s8 = sld [smem:[#allocation0]]
  $region38: #{block_forward.3} parent=0
    _
  %s10 = ssub.s32 1, %s8
  %s11 = scalar_select 0, %s10, %s8
  $region1: #{block_forward.3} parent=0
    #allocation2 [shape = 'u8[98304]{0}', space=vmem, size = 0x18000, scoped, tag = 'output window, operand 0, single buffered']
    #allocation3 [shape = 's32[1]{0}', space=sflag, size = 0x4, scoped, tag = 'scoped memory for block_forward.3']
    %12 = vsyncpa [#allocation3], 0
    // Predicated region
    $region2: #{block_forward.3} parent=1 // pred_check
      _
    $region3: #{block_forward.3} parent=1 // pred_check_branch
      %14 = sbr.rel (0) target = $region5
    $region4: #{block_forward.3} parent=1 // pred_region
      _
    $region5: #{block_forward.3} parent=1 // pred_fallthru
      _
    // Predicated region
    $region6: #{block_forward.3} parent=1 // pred_check
      _
    $region7: #{block_forward.3} parent=1 // pred_check_branch
      %16 = sbr.rel (0) target = $region9
    $region8: #{block_forward.3} parent=1 // pred_region
      _
    $region9: #{block_forward.3} parent=1 // pred_fallthru
      _
    // Predicated region
    $region10: #{block_forward.3} parent=1 // pred_check
      _
    $region11: #{block_forward.3} parent=1 // pred_check_branch
      %18 = sbr.rel (0) target = $region13
    $region12: #{block_forward.3} parent=1 // pred_region
      _
    $region13: #{block_forward.3} parent=1 // pred_fallthru
      _
    // Predicated region
    $region14: #{block_forward.3} parent=1 // pred_check
      _
    $region15: #{block_forward.3} parent=1 // pred_check_branch
      %20 = sbr.rel (0) target = $region17
    $region16: #{block_forward.3} parent=1 // pred_region
      _
    $region17: #{block_forward.3} parent=1 // pred_fallthru
      _
    // Predicated region
    $region18: #{block_forward.3} parent=1 // pred_check
      _
    $region19: #{block_forward.3} parent=1 // pred_check_branch
      %22 = sbr.rel (0) target = $region21
    $region20: #{block_forward.3} parent=1 // pred_region
      _
    $region21: #{block_forward.3} parent=1 // pred_fallthru
      _
    // Predicated region
    $region22: #{block_forward.3} parent=1 // pred_check
      _
    $region23: #{block_forward.3} parent=1 // pred_check_branch
      %24 = sbr.rel (0) target = $region25
    $region24: #{block_forward.3} parent=1 // pred_region
      _
    $region25: #{block_forward.3} parent=1 // pred_fallthru
      _
    // Predicated region
    $region26: #{block_forward.3} parent=1 // pred_check
      _
    $region27: #{block_forward.3} parent=1 // pred_check_branch
      %26 = sbr.rel (0) target = $region29
    $region28: #{block_forward.3} parent=1 // pred_region
      _
    $region29: #{block_forward.3} parent=1 // pred_fallthru
      _
    %v27 = vld [vmem:[%s0] sm:$0xff]
    %v28 = vld [vmem:[%s0 + $0x8] sm:$0xff]
    %v29 = vld [vmem:[%s0 + $0x10] sm:$0xff]
    %v30 = vld [vmem:[%s0 + $0x18] sm:$0xff]
    %v31 = vld [vmem:[%s0 + $0x20] sm:$0xff]
    %v32 = vld [vmem:[%s0 + $0x28] sm:$0xff]
    %v33 = vld [vmem:[%s0 + $0x30] sm:$0xff]
    %v34 = vld [vmem:[%s0 + $0x38] sm:$0xff]
    %v35 = vld [vmem:[%s0 + $0x40] sm:$0xff]
    %v36 = vld [vmem:[%s0 + $0x48] sm:$0xff]
    %v37 = vld [vmem:[%s0 + $0x50] sm:$0xff]
    %v38 = vld [vmem:[%s0 + $0x58] sm:$0xff]
    %v39 = vld [vmem:[%s0 + $0x60] sm:$0xff]
    %v40 = vld [vmem:[%s0 + $0x68] sm:$0xff]
    %v41 = vld [vmem:[%s0 + $0x70] sm:$0xff]
    %v42 = vld [vmem:[%s0 + $0x78] sm:$0xff]
    %v43 = vld [vmem:[%s0 + $0x80] sm:$0xff]
    %v44 = vld [vmem:[%s0 + $0x88] sm:$0xff]
    %v45 = vld [vmem:[%s0 + $0x90] sm:$0xff]
    %v46 = vld [vmem:[%s0 + $0x98] sm:$0xff]
    %v47 = vld [vmem:[%s0 + $0xa0] sm:$0xff]
    %v48 = vld [vmem:[%s0 + $0xa8] sm:$0xff]
    %v49 = vld [vmem:[%s0 + $0xb0] sm:$0xff]
    %v50 = vld [vmem:[%s0 + $0xb8] sm:$0xff]
    %v51 = vld [vmem:[%s1] sm:$0x7]
    %v52 = vld [vmem:[%s2] sm:$0x7]
    %v53 = vadd.f32 %v27, %v28
    %v54 = vadd.f32 %v53, %v29
    %55 = vadd.xlane.f32.xlu0 %v54
    %v56 = vpop.xlane.xlu0 %55
    %v57 = vadd.f32 %v30, %v31
    %v58 = vadd.f32 %v57, %v32
    %59 = vadd.xlane.f32.xlu0 %v58
    %v60 = vpop.xlane.xlu0 %59
    %v61 = vadd.f32 %v33, %v34
    %v62 = vadd.f32 %v61, %v35
    %63 = vadd.xlane.f32.xlu0 %v62
    %v64 = vpop.xlane.xlu0 %63
    %v65 = vadd.f32 %v36, %v37
    %v66 = vadd.f32 %v65, %v38
    %67 = vadd.xlane.f32.xlu0 %v66
    %v68 = vpop.xlane.xlu0 %67
    %v69 = vadd.f32 %v39, %v40
    %v70 = vadd.f32 %v69, %v41
    %71 = vadd.xlane.f32.xlu0 %v70
    %v72 = vpop.xlane.xlu0 %71
    %v73 = vadd.f32 %v42, %v43
    %v74 = vadd.f32 %v73, %v44
    %75 = vadd.xlane.f32.xlu0 %v74
    %v76 = vpop.xlane.xlu0 %75
    %v77 = vadd.f32 %v45, %v46
    %v78 = vadd.f32 %v77, %v47
    %79 = vadd.xlane.f32.xlu0 %v78
    %v80 = vpop.xlane.xlu0 %79
    %v81 = vadd.f32 %v48, %v49
    %v82 = vadd.f32 %v81, %v50
    %83 = vadd.xlane.f32.xlu0 %v82
    %v84 = vpop.xlane.xlu0 %83
    %v85 = vrcp.pop 384.0
    %v86 = vmul.f32 384.0, %v85
    %v87 = vsub.f32 1.0, %v86
    %v88 = vmul.f32 %v85, %v87
    %v89 = vadd.f32 %v85, %v88
    %vm90 = vweird.f32 %v85
    %v91 = vsel %vm90, %v85, %v89
    %v92 = vmul.f32 %v56, %v91
    %v93 = vmul.f32 %v60, %v91
    %v94 = vmul.f32 %v64, %v91
    %v95 = vmul.f32 %v68, %v91
    %v96 = vmul.f32 %v72, %v91
    %v97 = vmul.f32 %v76, %v91
    %v98 = vmul.f32 %v80, %v91
    %v99 = vmul.f32 %v84, %v91
    %v100 = vsub.f32 %v27, %v92
    %v101 = vsub.f32 %v28, %v92
    %v102 = vsub.f32 %v29, %v92
    %v103 = vsub.f32 %v30, %v93
    %v104 = vsub.f32 %v31, %v93
    %v105 = vsub.f32 %v32, %v93
    %v106 = vsub.f32 %v33, %v94
    %v107 = vsub.f32 %v34, %v94
    %v108 = vsub.f32 %v35, %v94
    %v109 = vsub.f32 %v36, %v95
    %v110 = vsub.f32 %v37, %v95
    %v111 = vsub.f32 %v38, %v95
    %v112 = vsub.f32 %v39, %v96
    %v113 = vsub.f32 %v40, %v96
    %v114 = vsub.f32 %v41, %v96
    %v115 = vsub.f32 %v42, %v97
    %v116 = vsub.f32 %v43, %v97
    %v117 = vsub.f32 %v44, %v97
    %v118 = vsub.f32 %v45, %v98
    %v119 = vsub.f32 %v46, %v98
    %v120 = vsub.f32 %v47, %v98
    %v121 = vsub.f32 %v48, %v99
    %v122 = vsub.f32 %v49, %v99
    %v123 = vsub.f32 %v50, %v99
    %v124 = vmul.f32 %v100, %v100
    %v125 = vmul.f32 %v101, %v101
    %v126 = vmul.f32 %v102, %v102
    %v127 = vmul.f32 %v103, %v103
    %v128 = vmul.f32 %v104, %v104
    %v129 = vmul.f32 %v105, %v105
    %v130 = vmul.f32 %v106, %v106
    %v131 = vmul.f32 %v107, %v107
    %v132 = vmul.f32 %v108, %v108
    %v133 = vmul.f32 %v109, %v109
    %v134 = vmul.f32 %v110, %v110
    %v135 = vmul.f32 %v111, %v111
    %v136 = vmul.f32 %v112, %v112
    %v137 = vmul.f32 %v113, %v113
    %v138 = vmul.f32 %v114, %v114
    %v139 = vmul.f32 %v115, %v115
    %v140 = vmul.f32 %v116, %v116
    %v141 = vmul.f32 %v117, %v117
    %v142 = vmul.f32 %v118, %v118
    %v143 = vmul.f32 %v119, %v119
    %v144 = vmul.f32 %v120, %v120
    %v145 = vmul.f32 %v121, %v121
    %v146 = vmul.f32 %v122, %v122
    %v147 = vmul.f32 %v123, %v123
    %v148 = vadd.f32 %v124, %v125
    %v149 = vadd.f32 %v148, %v126
    %150 = vadd.xlane.f32.xlu0 %v149
    %v151 = vpop.xlane.xlu0 %150
    %v152 = vadd.f32 %v127, %v128
    %v153 = vadd.f32 %v152, %v129
    %154 = vadd.xlane.f32.xlu0 %v153
    %v155 = vpop.xlane.xlu0 %154
    %v156 = vadd.f32 %v130, %v131
    %v157 = vadd.f32 %v156, %v132
    %158 = vadd.xlane.f32.xlu0 %v157
    %v159 = vpop.xlane.xlu0 %158
    %v160 = vadd.f32 %v133, %v134
    %v161 = vadd.f32 %v160, %v135
    %162 = vadd.xlane.f32.xlu0 %v161
    %v163 = vpop.xlane.xlu0 %162
    %v164 = vadd.f32 %v136, %v137
    %v165 = vadd.f32 %v164, %v138
    %166 = vadd.xlane.f32.xlu0 %v165
    %v167 = vpop.xlane.xlu0 %166
    %v168 = vadd.f32 %v139, %v140
    %v169 = vadd.f32 %v168, %v141
    %170 = vadd.xlane.f32.xlu0 %v169
    %v171 = vpop.xlane.xlu0 %170
    %v172 = vadd.f32 %v142, %v143
    %v173 = vadd.f32 %v172, %v144
    %174 = vadd.xlane.f32.xlu0 %v173
    %v175 = vpop.xlane.xlu0 %174
    %v176 = vadd.f32 %v145, %v146
    %v177 = vadd.f32 %v176, %v147
    %178 = vadd.xlane.f32.xlu0 %v177
    %v179 = vpop.xlane.xlu0 %178
    %v180 = vmul.f32 %v151, %v91
    %v181 = vmul.f32 %v155, %v91
    %v182 = vmul.f32 %v159, %v91
    %v183 = vmul.f32 %v163, %v91
    %v184 = vmul.f32 %v167, %v91
    %v185 = vmul.f32 %v171, %v91
    %v186 = vmul.f32 %v175, %v91
    %v187 = vmul.f32 %v179, %v91
    %v188 = vadd.f32 %v180, 1e-05
    %v189 = vadd.f32 %v181, 1e-05
    %v190 = vadd.f32 %v182, 1e-05
    %v191 = vadd.f32 %v183, 1e-05
    %v192 = vadd.f32 %v184, 1e-05
    %v193 = vadd.f32 %v185, 1e-05
    %v194 = vadd.f32 %v186, 1e-05
    %v195 = vadd.f32 %v187, 1e-05
    %v196 = vrsqrt.pop %v188
    %v197 = vmul.f32 %v196, %v188
    %v198 = vmul.f32 %v197, %v196
    %v199 = vmul.f32 0.5, %v198
    %v200 = vsub.f32 1.5, %v199
    %v201 = vmul.f32 %v196, %v200
    %vm202 = vweird.f32 %v188
    %vm203 = vweird.f32 %v196
    %vm204 = vmor %vm202, %vm203
    %v205 = vsel %vm204, %v196, %v201
    %v206 = vrsqrt.pop %v189
    %v207 = vmul.f32 %v206, %v189
    %v208 = vmul.f32 %v207, %v206
    %v209 = vmul.f32 0.5, %v208
    %v210 = vsub.f32 1.5, %v209
    %v211 = vmul.f32 %v206, %v210
    %vm212 = vweird.f32 %v189
    %vm213 = vweird.f32 %v206
    %vm214 = vmor %vm212, %vm213
    %v215 = vsel %vm214, %v206, %v211
    %v216 = vrsqrt.pop %v190
    %v217 = vmul.f32 %v216, %v190
    %v218 = vmul.f32 %v217, %v216
    %v219 = vmul.f32 0.5, %v218
    %v220 = vsub.f32 1.5, %v219
    %v221 = vmul.f32 %v216, %v220
    %vm222 = vweird.f32 %v190
    %vm223 = vweird.f32 %v216
    %vm224 = vmor %vm222, %vm223
    %v225 = vsel %vm224, %v216, %v221
    %v226 = vrsqrt.pop %v191
    %v227 = vmul.f32 %v226, %v191
    %v228 = vmul.f32 %v227, %v226
    %v229 = vmul.f32 0.5, %v228
    %v230 = vsub.f32 1.5, %v229
    %v231 = vmul.f32 %v226, %v230
    %vm232 = vweird.f32 %v191
    %vm233 = vweird.f32 %v226
    %vm234 = vmor %vm232, %vm233
    %v235 = vsel %vm234, %v226, %v231
    %v236 = vrsqrt.pop %v192
    %v237 = vmul.f32 %v236, %v192
    %v238 = vmul.f32 %v237, %v236
    %v239 = vmul.f32 0.5, %v238
    %v240 = vsub.f32 1.5, %v239
    %v241 = vmul.f32 %v236, %v240
    %vm242 = vweird.f32 %v192
    %vm243 = vweird.f32 %v236
    %vm244 = vmor %vm242, %vm243
    %v245 = vsel %vm244, %v236, %v241
    %v246 = vrsqrt.pop %v193
    %v247 = vmul.f32 %v246, %v193
    %v248 = vmul.f32 %v247, %v246
    %v249 = vmul.f32 0.5, %v248
    %v250 = vsub.f32 1.5, %v249
    %v251 = vmul.f32 %v246, %v250
    %vm252 = vweird.f32 %v193
    %vm253 = vweird.f32 %v246
    %vm254 = vmor %vm252, %vm253
    %v255 = vsel %vm254, %v246, %v251
    %v256 = vrsqrt.pop %v194
    %v257 = vmul.f32 %v256, %v194
    %v258 = vmul.f32 %v257, %v256
    %v259 = vmul.f32 0.5, %v258
    %v260 = vsub.f32 1.5, %v259
    %v261 = vmul.f32 %v256, %v260
    %vm262 = vweird.f32 %v194
    %vm263 = vweird.f32 %v256
    %vm264 = vmor %vm262, %vm263
    %v265 = vsel %vm264, %v256, %v261
    %v266 = vrsqrt.pop %v195
    %v267 = vmul.f32 %v266, %v195
    %v268 = vmul.f32 %v267, %v266
    %v269 = vmul.f32 0.5, %v268
    %v270 = vsub.f32 1.5, %v269
    %v271 = vmul.f32 %v266, %v270
    %vm272 = vweird.f32 %v195
    %vm273 = vweird.f32 %v266
    %vm274 = vmor %vm272, %vm273
    %v275 = vsel %vm274, %v266, %v271
    %v276 = vmul.f32 %v100, %v205
    %v277 = vmul.f32 %v101, %v205
    %v278 = vmul.f32 %v102, %v205
    %v279 = vmul.f32 %v103, %v215
    %v280 = vmul.f32 %v104, %v215
    %v281 = vmul.f32 %v105, %v215
    %v282 = vmul.f32 %v106, %v225
    %v283 = vmul.f32 %v107, %v225
    %v284 = vmul.f32 %v108, %v225
    %v285 = vmul.f32 %v109, %v235
    %v286 = vmul.f32 %v110, %v235
    %v287 = vmul.f32 %v111, %v235
    %v288 = vmul.f32 %v112, %v245
    %v289 = vmul.f32 %v113, %v245
    %v290 = vmul.f32 %v114, %v245
    %v291 = vmul.f32 %v115, %v255
    %v292 = vmul.f32 %v116, %v255
    %v293 = vmul.f32 %v117, %v255
    %v294 = vmul.f32 %v118, %v265
    %v295 = vmul.f32 %v119, %v265
    %v296 = vmul.f32 %v120, %v265
    %v297 = vmul.f32 %v121, %v275
    %v298 = vmul.f32 %v122, %v275
    %v299 = vmul.f32 %v123, %v275
    %v301 = vperm.slane %v51, 0
    %v302 = vperm.slane %v51, 1
    %v303 = vperm.slane %v51, 2
    %v307 = vmul.f32 %v276, %v301
    %v308 = vmul.f32 %v277, %v302
    %v309 = vmul.f32 %v278, %v303
    %v310 = vmul.f32 %v279, %v301
    %v311 = vmul.f32 %v280, %v302
    %v312 = vmul.f32 %v281, %v303
    %v313 = vmul.f32 %v282, %v301
    %v314 = vmul.f32 %v283, %v302
    %v315 = vmul.f32 %v284, %v303
    %v316 = vmul.f32 %v285, %v301
    %v317 = vmul.f32 %v286, %v302
    %v318 = vmul.f32 %v287, %v303
    %v319 = vmul.f32 %v288, %v301
    %v320 = vmul.f32 %v289, %v302
    %v321 = vmul.f32 %v290, %v303
    %v322 = vmul.f32 %v291, %v301
    %v323 = vmul.f32 %v292, %v302
    %v324 = vmul.f32 %v293, %v303
    %v325 = vmul.f32 %v294, %v301
    %v326 = vmul.f32 %v295, %v302
    %v327 = vmul.f32 %v296, %v303
    %v328 = vmul.f32 %v297, %v301
    %v329 = vmul.f32 %v298, %v302
    %v330 = vmul.f32 %v299, %v303
    %v332 = vperm.slane %v52, 0
    %v333 = vperm.slane %v52, 1
    %v334 = vperm.slane %v52, 2
    %v338 = vadd.f32 %v307, %v332
    %v339 = vadd.f32 %v308, %v333
    %v340 = vadd.f32 %v309, %v334
    %v341 = vadd.f32 %v310, %v332
    %v342 = vadd.f32 %v311, %v333
    %v343 = vadd.f32 %v312, %v334
    %v344 = vadd.f32 %v313, %v332
    %v345 = vadd.f32 %v314, %v333
    %v346 = vadd.f32 %v315, %v334
    %v347 = vadd.f32 %v316, %v332
    %v348 = vadd.f32 %v317, %v333
    %v349 = vadd.f32 %v318, %v334
    %v350 = vadd.f32 %v319, %v332
    %v351 = vadd.f32 %v320, %v333
    %v352 = vadd.f32 %v321, %v334
    %v353 = vadd.f32 %v322, %v332
    %v354 = vadd.f32 %v323, %v333
    %v355 = vadd.f32 %v324, %v334
    %v356 = vadd.f32 %v325, %v332
    %v357 = vadd.f32 %v326, %v333
    %v358 = vadd.f32 %v327, %v334
    %v359 = vadd.f32 %v328, %v332
    %v360 = vadd.f32 %v329, %v333
    %v361 = vadd.f32 %v330, %v334
    %v362 = vpack.c.bf16 %v341, %v338
    %v363 = vpack.c.bf16 %v342, %v339
    %v364 = vpack.c.bf16 %v343, %v340
    %v365 = vpack.c.bf16 %v347, %v344
    %v366 = vpack.c.bf16 %v348, %v345
    %v367 = vpack.c.bf16 %v349, %v346
    %v368 = vpack.c.bf16 %v353, %v350
    %v369 = vpack.c.bf16 %v354, %v351
    %v370 = vpack.c.bf16 %v355, %v352
    %v371 = vpack.c.bf16 %v359, %v356
    %v372 = vpack.c.bf16 %v360, %v357
    %v373 = vpack.c.bf16 %v361, %v358
    %v374 = vld [vmem:[%s3] sm:$0xff]
    %v375 = vld [vmem:[%s3 + $0x8] sm:$0xff]
    %v376 = vld [vmem:[%s3 + $0x10] sm:$0xff]
    %v377 = vld [vmem:[%s3 + $0x18] sm:$0xff]
    %v378 = vld [vmem:[%s3 + $0x20] sm:$0xff]
    %v379 = vld [vmem:[%s3 + $0x28] sm:$0xff]
    %v380 = vld [vmem:[%s3 + $0x30] sm:$0xff]
    %v381 = vld [vmem:[%s3 + $0x38] sm:$0xff]
    %v382 = vld [vmem:[%s3 + $0x40] sm:$0xff]
    %v383 = vld [vmem:[%s3 + $0x48] sm:$0xff]
    %v384 = vld [vmem:[%s3 + $0x50] sm:$0xff]
    %v385 = vld [vmem:[%s3 + $0x58] sm:$0xff]
    %v386 = vld [vmem:[%s3 + $0x60] sm:$0xff]
    %v387 = vld [vmem:[%s3 + $0x68] sm:$0xff]
    %v388 = vld [vmem:[%s3 + $0x70] sm:$0xff]
    %v389 = vld [vmem:[%s3 + $0x78] sm:$0xff]
    %v390 = vld [vmem:[%s3 + $0x80] sm:$0xff]
    %v391 = vld [vmem:[%s3 + $0x88] sm:$0xff]
    %v392 = vld [vmem:[%s3 + $0x90] sm:$0xff]
    %v393 = vld [vmem:[%s3 + $0x98] sm:$0xff]
    %v394 = vld [vmem:[%s3 + $0xa0] sm:$0xff]
    %v395 = vld [vmem:[%s3 + $0xa8] sm:$0xff]
    %v396 = vld [vmem:[%s3 + $0xb0] sm:$0xff]
    %v397 = vld [vmem:[%s3 + $0xb8] sm:$0xff]
    %v398 = vld [vmem:[%s3 + $0xc0] sm:$0xff]
    %v399 = vld [vmem:[%s3 + $0xc8] sm:$0xff]
    %v400 = vld [vmem:[%s3 + $0xd0] sm:$0xff]
    %v401 = vld [vmem:[%s3 + $0xd8] sm:$0xff]
    %v402 = vld [vmem:[%s3 + $0xe0] sm:$0xff]
    %v403 = vld [vmem:[%s3 + $0xe8] sm:$0xff]
    %v404 = vld [vmem:[%s3 + $0xf0] sm:$0xff]
    %v405 = vld [vmem:[%s3 + $0xf8] sm:$0xff]
    %v406 = vld [vmem:[%s3 + $0x100] sm:$0xff]
    %v407 = vld [vmem:[%s3 + $0x108] sm:$0xff]
    %v408 = vld [vmem:[%s3 + $0x110] sm:$0xff]
    %v409 = vld [vmem:[%s3 + $0x118] sm:$0xff]
    %v410 = vld [vmem:[%s3 + $0x120] sm:$0xff]
    %v411 = vld [vmem:[%s3 + $0x128] sm:$0xff]
    %v412 = vld [vmem:[%s3 + $0x130] sm:$0xff]
    %v413 = vld [vmem:[%s3 + $0x138] sm:$0xff]
    %v414 = vld [vmem:[%s3 + $0x140] sm:$0xff]
    %v415 = vld [vmem:[%s3 + $0x148] sm:$0xff]
    %v416 = vld [vmem:[%s3 + $0x150] sm:$0xff]
    %v417 = vld [vmem:[%s3 + $0x158] sm:$0xff]
    %v418 = vld [vmem:[%s3 + $0x160] sm:$0xff]
    %v419 = vld [vmem:[%s3 + $0x168] sm:$0xff]
    %v420 = vld [vmem:[%s3 + $0x170] sm:$0xff]
    %v421 = vld [vmem:[%s3 + $0x178] sm:$0xff]
    %v422 = vld [vmem:[%s3 + $0x180] sm:$0xff]
    %v423 = vld [vmem:[%s3 + $0x188] sm:$0xff]
    %v424 = vld [vmem:[%s3 + $0x190] sm:$0xff]
    %v425 = vld [vmem:[%s3 + $0x198] sm:$0xff]
    %v426 = vld [vmem:[%s3 + $0x1a0] sm:$0xff]
    %v427 = vld [vmem:[%s3 + $0x1a8] sm:$0xff]
    %v428 = vld [vmem:[%s3 + $0x1b0] sm:$0xff]
    %v429 = vld [vmem:[%s3 + $0x1b8] sm:$0xff]
    %v430 = vld [vmem:[%s3 + $0x1c0] sm:$0xff]
    %v431 = vld [vmem:[%s3 + $0x1c8] sm:$0xff]
    %v432 = vld [vmem:[%s3 + $0x1d0] sm:$0xff]
    %v433 = vld [vmem:[%s3 + $0x1d8] sm:$0xff]
    %v434 = vld [vmem:[%s3 + $0x1e0] sm:$0xff]
    %v435 = vld [vmem:[%s3 + $0x1e8] sm:$0xff]
    %v436 = vld [vmem:[%s3 + $0x1f0] sm:$0xff]
    %v437 = vld [vmem:[%s3 + $0x1f8] sm:$0xff]
    %v438 = vld [vmem:[%s3 + $0x200] sm:$0xff]
    %v439 = vld [vmem:[%s3 + $0x208] sm:$0xff]
    %v440 = vld [vmem:[%s3 + $0x210] sm:$0xff]
    %v441 = vld [vmem:[%s3 + $0x218] sm:$0xff]
    %v442 = vld [vmem:[%s3 + $0x220] sm:$0xff]
    %v443 = vld [vmem:[%s3 + $0x228] sm:$0xff]
    %v444 = vld [vmem:[%s3 + $0x230] sm:$0xff]
    %v445 = vld [vmem:[%s3 + $0x238] sm:$0xff]
    %v446 = vld [vmem:[%s3 + $0x240] sm:$0xff]
    %v447 = vld [vmem:[%s3 + $0x248] sm:$0xff]
    %v448 = vld [vmem:[%s3 + $0x250] sm:$0xff]
    %v449 = vld [vmem:[%s3 + $0x258] sm:$0xff]
    %v450 = vld [vmem:[%s3 + $0x260] sm:$0xff]
    %v451 = vld [vmem:[%s3 + $0x268] sm:$0xff]
    %v452 = vld [vmem:[%s3 + $0x270] sm:$0xff]
    %v453 = vld [vmem:[%s3 + $0x278] sm:$0xff]
    %v454 = vld [vmem:[%s3 + $0x280] sm:$0xff]
    %v455 = vld [vmem:[%s3 + $0x288] sm:$0xff]
    %v456 = vld [vmem:[%s3 + $0x290] sm:$0xff]
    %v457 = vld [vmem:[%s3 + $0x298] sm:$0xff]
    %v458 = vld [vmem:[%s3 + $0x2a0] sm:$0xff]
    %v459 = vld [vmem:[%s3 + $0x2a8] sm:$0xff]
    %v460 = vld [vmem:[%s3 + $0x2b0] sm:$0xff]
    %v461 = vld [vmem:[%s3 + $0x2b8] sm:$0xff]
    %v462 = vld [vmem:[%s3 + $0x2c0] sm:$0xff]
    %v463 = vld [vmem:[%s3 + $0x2c8] sm:$0xff]
    %v464 = vld [vmem:[%s3 + $0x2d0] sm:$0xff]
    %v465 = vld [vmem:[%s3 + $0x2d8] sm:$0xff]
    %v466 = vld [vmem:[%s3 + $0x2e0] sm:$0xff]
    %v467 = vld [vmem:[%s3 + $0x2e8] sm:$0xff]
    %v468 = vld [vmem:[%s3 + $0x2f0] sm:$0xff]
    %v469 = vld [vmem:[%s3 + $0x2f8] sm:$0xff]
    %v470 = vld [vmem:[%s3 + $0x300] sm:$0xff]
    %v471 = vld [vmem:[%s3 + $0x308] sm:$0xff]
    %v472 = vld [vmem:[%s3 + $0x310] sm:$0xff]
    %v473 = vld [vmem:[%s3 + $0x318] sm:$0xff]
    %v474 = vld [vmem:[%s3 + $0x320] sm:$0xff]
    %v475 = vld [vmem:[%s3 + $0x328] sm:$0xff]
    %v476 = vld [vmem:[%s3 + $0x330] sm:$0xff]
    %v477 = vld [vmem:[%s3 + $0x338] sm:$0xff]
    %v478 = vld [vmem:[%s3 + $0x340] sm:$0xff]
    %v479 = vld [vmem:[%s3 + $0x348] sm:$0xff]
    %v480 = vld [vmem:[%s3 + $0x350] sm:$0xff]
    %v481 = vld [vmem:[%s3 + $0x358] sm:$0xff]
    %v482 = vld [vmem:[%s3 + $0x360] sm:$0xff]
    %v483 = vld [vmem:[%s3 + $0x368] sm:$0xff]
    %v484 = vld [vmem:[%s3 + $0x370] sm:$0xff]
    %v485 = vld [vmem:[%s3 + $0x378] sm:$0xff]
    %v486 = vld [vmem:[%s3 + $0x380] sm:$0xff]
    %v487 = vld [vmem:[%s3 + $0x388] sm:$0xff]
    %v488 = vld [vmem:[%s3 + $0x390] sm:$0xff]
    %v489 = vld [vmem:[%s3 + $0x398] sm:$0xff]
    %v490 = vld [vmem:[%s3 + $0x3a0] sm:$0xff]
    %v491 = vld [vmem:[%s3 + $0x3a8] sm:$0xff]
    %v492 = vld [vmem:[%s3 + $0x3b0] sm:$0xff]
    %v493 = vld [vmem:[%s3 + $0x3b8] sm:$0xff]
    %v494 = vld [vmem:[%s3 + $0x3c0] sm:$0xff]
    %v495 = vld [vmem:[%s3 + $0x3c8] sm:$0xff]
    %v496 = vld [vmem:[%s3 + $0x3d0] sm:$0xff]
    %v497 = vld [vmem:[%s3 + $0x3d8] sm:$0xff]
    %v498 = vld [vmem:[%s3 + $0x3e0] sm:$0xff]
    %v499 = vld [vmem:[%s3 + $0x3e8] sm:$0xff]
    %v500 = vld [vmem:[%s3 + $0x3f0] sm:$0xff]
    %v501 = vld [vmem:[%s3 + $0x3f8] sm:$0xff]
    %v502 = vld [vmem:[%s3 + $0x400] sm:$0xff]
    %v503 = vld [vmem:[%s3 + $0x408] sm:$0xff]
    %v504 = vld [vmem:[%s3 + $0x410] sm:$0xff]
    %v505 = vld [vmem:[%s3 + $0x418] sm:$0xff]
    %v506 = vld [vmem:[%s3 + $0x420] sm:$0xff]
    %v507 = vld [vmem:[%s3 + $0x428] sm:$0xff]
    %v508 = vld [vmem:[%s3 + $0x430] sm:$0xff]
    %v509 = vld [vmem:[%s3 + $0x438] sm:$0xff]
    %v510 = vld [vmem:[%s3 + $0x440] sm:$0xff]
    %v511 = vld [vmem:[%s3 + $0x448] sm:$0xff]
    %v512 = vld [vmem:[%s3 + $0x450] sm:$0xff]
    %v513 = vld [vmem:[%s3 + $0x458] sm:$0xff]
    %v514 = vld [vmem:[%s3 + $0x460] sm:$0xff]
    %v515 = vld [vmem:[%s3 + $0x468] sm:$0xff]
    %v516 = vld [vmem:[%s3 + $0x470] sm:$0xff]
    %v517 = vld [vmem:[%s3 + $0x478] sm:$0xff]
    %v518 = vld [vmem:[%s3 + $0x480] sm:$0xff]
    %v519 = vld [vmem:[%s3 + $0x488] sm:$0xff]
    %v520 = vld [vmem:[%s3 + $0x490] sm:$0xff]
    %v521 = vld [vmem:[%s3 + $0x498] sm:$0xff]
    %v522 = vld [vmem:[%s3 + $0x4a0] sm:$0xff]
    %v523 = vld [vmem:[%s3 + $0x4a8] sm:$0xff]
    %v524 = vld [vmem:[%s3 + $0x4b0] sm:$0xff]
    %v525 = vld [vmem:[%s3 + $0x4b8] sm:$0xff]
    %v526 = vld [vmem:[%s3 + $0x4c0] sm:$0xff]
    %v527 = vld [vmem:[%s3 + $0x4c8] sm:$0xff]
    %v528 = vld [vmem:[%s3 + $0x4d0] sm:$0xff]
    %v529 = vld [vmem:[%s3 + $0x4d8] sm:$0xff]
    %v530 = vld [vmem:[%s3 + $0x4e0] sm:$0xff]
    %v531 = vld [vmem:[%s3 + $0x4e8] sm:$0xff]
    %v532 = vld [vmem:[%s3 + $0x4f0] sm:$0xff]
    %v533 = vld [vmem:[%s3 + $0x4f8] sm:$0xff]
    %v534 = vld [vmem:[%s3 + $0x500] sm:$0xff]
    %v535 = vld [vmem:[%s3 + $0x508] sm:$0xff]
    %v536 = vld [vmem:[%s3 + $0x510] sm:$0xff]
    %v537 = vld [vmem:[%s3 + $0x518] sm:$0xff]
    %v538 = vld [vmem:[%s3 + $0x520] sm:$0xff]
    %v539 = vld [vmem:[%s3 + $0x528] sm:$0xff]
    %v540 = vld [vmem:[%s3 + $0x530] sm:$0xff]
    %v541 = vld [vmem:[%s3 + $0x538] sm:$0xff]
    %v542 = vld [vmem:[%s3 + $0x540] sm:$0xff]
    %v543 = vld [vmem:[%s3 + $0x548] sm:$0xff]
    %v544 = vld [vmem:[%s3 + $0x550] sm:$0xff]
    %v545 = vld [vmem:[%s3 + $0x558] sm:$0xff]
    %v546 = vld [vmem:[%s3 + $0x560] sm:$0xff]
    %v547 = vld [vmem:[%s3 + $0x568] sm:$0xff]
    %v548 = vld [vmem:[%s3 + $0x570] sm:$0xff]
    %v549 = vld [vmem:[%s3 + $0x578] sm:$0xff]
    %v550 = vld [vmem:[%s3 + $0x580] sm:$0xff]
    %v551 = vld [vmem:[%s3 + $0x588] sm:$0xff]
    %v552 = vld [vmem:[%s3 + $0x590] sm:$0xff]
    %v553 = vld [vmem:[%s3 + $0x598] sm:$0xff]
    %v554 = vld [vmem:[%s3 + $0x5a0] sm:$0xff]
    %v555 = vld [vmem:[%s3 + $0x5a8] sm:$0xff]
    %v556 = vld [vmem:[%s3 + $0x5b0] sm:$0xff]
    %v557 = vld [vmem:[%s3 + $0x5b8] sm:$0xff]
    %v558 = vld [vmem:[%s3 + $0x5c0] sm:$0xff]
    %v559 = vld [vmem:[%s3 + $0x5c8] sm:$0xff]
    %v560 = vld [vmem:[%s3 + $0x5d0] sm:$0xff]
    %v561 = vld [vmem:[%s3 + $0x5d8] sm:$0xff]
    %v562 = vld [vmem:[%s3 + $0x5e0] sm:$0xff]
    %v563 = vld [vmem:[%s3 + $0x5e8] sm:$0xff]
    %v564 = vld [vmem:[%s3 + $0x5f0] sm:$0xff]
    %v565 = vld [vmem:[%s3 + $0x5f8] sm:$0xff]
    %v566 = vld [vmem:[%s3 + $0x600] sm:$0xff]
    %v567 = vld [vmem:[%s3 + $0x608] sm:$0xff]
    %v568 = vld [vmem:[%s3 + $0x610] sm:$0xff]
    %v569 = vld [vmem:[%s3 + $0x618] sm:$0xff]
    %v570 = vld [vmem:[%s3 + $0x620] sm:$0xff]
    %v571 = vld [vmem:[%s3 + $0x628] sm:$0xff]
    %v572 = vld [vmem:[%s3 + $0x630] sm:$0xff]
    %v573 = vld [vmem:[%s3 + $0x638] sm:$0xff]
    %v574 = vld [vmem:[%s3 + $0x640] sm:$0xff]
    %v575 = vld [vmem:[%s3 + $0x648] sm:$0xff]
    %v576 = vld [vmem:[%s3 + $0x650] sm:$0xff]
    %v577 = vld [vmem:[%s3 + $0x658] sm:$0xff]
    %v578 = vld [vmem:[%s3 + $0x660] sm:$0xff]
    %v579 = vld [vmem:[%s3 + $0x668] sm:$0xff]
    %v580 = vld [vmem:[%s3 + $0x670] sm:$0xff]
    %v581 = vld [vmem:[%s3 + $0x678] sm:$0xff]
    %v582 = vld [vmem:[%s3 + $0x680] sm:$0xff]
    %v583 = vld [vmem:[%s3 + $0x688] sm:$0xff]
    %v584 = vld [vmem:[%s3 + $0x690] sm:$0xff]
    %v585 = vld [vmem:[%s3 + $0x698] sm:$0xff]
    %v586 = vld [vmem:[%s3 + $0x6a0] sm:$0xff]
    %v587 = vld [vmem:[%s3 + $0x6a8] sm:$0xff]
    %v588 = vld [vmem:[%s3 + $0x6b0] sm:$0xff]
    %v589 = vld [vmem:[%s3 + $0x6b8] sm:$0xff]
    %v590 = vld [vmem:[%s3 + $0x6c0] sm:$0xff]
    %v591 = vld [vmem:[%s3 + $0x6c8] sm:$0xff]
    %v592 = vld [vmem:[%s3 + $0x6d0] sm:$0xff]
    %v593 = vld [vmem:[%s3 + $0x6d8] sm:$0xff]
    %v594 = vld [vmem:[%s3 + $0x6e0] sm:$0xff]
    %v595 = vld [vmem:[%s3 + $0x6e8] sm:$0xff]
    %v596 = vld [vmem:[%s3 + $0x6f0] sm:$0xff]
    %v597 = vld [vmem:[%s3 + $0x6f8] sm:$0xff]
    %v598 = vld [vmem:[%s3 + $0x700] sm:$0xff]
    %v599 = vld [vmem:[%s3 + $0x708] sm:$0xff]
    %v600 = vld [vmem:[%s3 + $0x710] sm:$0xff]
    %v601 = vld [vmem:[%s3 + $0x718] sm:$0xff]
    %v602 = vld [vmem:[%s3 + $0x720] sm:$0xff]
    %v603 = vld [vmem:[%s3 + $0x728] sm:$0xff]
    %v604 = vld [vmem:[%s3 + $0x730] sm:$0xff]
    %v605 = vld [vmem:[%s3 + $0x738] sm:$0xff]
    %v606 = vld [vmem:[%s3 + $0x740] sm:$0xff]
    %v607 = vld [vmem:[%s3 + $0x748] sm:$0xff]
    %v608 = vld [vmem:[%s3 + $0x750] sm:$0xff]
    %v609 = vld [vmem:[%s3 + $0x758] sm:$0xff]
    %v610 = vld [vmem:[%s3 + $0x760] sm:$0xff]
    %v611 = vld [vmem:[%s3 + $0x768] sm:$0xff]
    %v612 = vld [vmem:[%s3 + $0x770] sm:$0xff]
    %v613 = vld [vmem:[%s3 + $0x778] sm:$0xff]
    %v614 = vld [vmem:[%s3 + $0x780] sm:$0xff]
    %v615 = vld [vmem:[%s3 + $0x788] sm:$0xff]
    %v616 = vld [vmem:[%s3 + $0x790] sm:$0xff]
    %v617 = vld [vmem:[%s3 + $0x798] sm:$0xff]
    %v618 = vld [vmem:[%s3 + $0x7a0] sm:$0xff]
    %v619 = vld [vmem:[%s3 + $0x7a8] sm:$0xff]
    %v620 = vld [vmem:[%s3 + $0x7b0] sm:$0xff]
    %v621 = vld [vmem:[%s3 + $0x7b8] sm:$0xff]
    %v622 = vld [vmem:[%s3 + $0x7c0] sm:$0xff]
    %v623 = vld [vmem:[%s3 + $0x7c8] sm:$0xff]
    %v624 = vld [vmem:[%s3 + $0x7d0] sm:$0xff]
    %v625 = vld [vmem:[%s3 + $0x7d8] sm:$0xff]
    %v626 = vld [vmem:[%s3 + $0x7e0] sm:$0xff]
    %v627 = vld [vmem:[%s3 + $0x7e8] sm:$0xff]
    %v628 = vld [vmem:[%s3 + $0x7f0] sm:$0xff]
    %v629 = vld [vmem:[%s3 + $0x7f8] sm:$0xff]
    %v630 = vld [vmem:[%s3 + $0x800] sm:$0xff]
    %v631 = vld [vmem:[%s3 + $0x808] sm:$0xff]
    %v632 = vld [vmem:[%s3 + $0x810] sm:$0xff]
    %v633 = vld [vmem:[%s3 + $0x818] sm:$0xff]
    %v634 = vld [vmem:[%s3 + $0x820] sm:$0xff]
    %v635 = vld [vmem:[%s3 + $0x828] sm:$0xff]
    %v636 = vld [vmem:[%s3 + $0x830] sm:$0xff]
    %v637 = vld [vmem:[%s3 + $0x838] sm:$0xff]
    %v638 = vld [vmem:[%s3 + $0x840] sm:$0xff]
    %v639 = vld [vmem:[%s3 + $0x848] sm:$0xff]
    %v640 = vld [vmem:[%s3 + $0x850] sm:$0xff]
    %v641 = vld [vmem:[%s3 + $0x858] sm:$0xff]
    %v642 = vld [vmem:[%s3 + $0x860] sm:$0xff]
    %v643 = vld [vmem:[%s3 + $0x868] sm:$0xff]
    %v644 = vld [vmem:[%s3 + $0x870] sm:$0xff]
    %v645 = vld [vmem:[%s3 + $0x878] sm:$0xff]
    %v646 = vld [vmem:[%s3 + $0x880] sm:$0xff]
    %v647 = vld [vmem:[%s3 + $0x888] sm:$0xff]
    %v648 = vld [vmem:[%s3 + $0x890] sm:$0xff]
    %v649 = vld [vmem:[%s3 + $0x898] sm:$0xff]
    %v650 = vld [vmem:[%s3 + $0x8a0] sm:$0xff]
    %v651 = vld [vmem:[%s3 + $0x8a8] sm:$0xff]
    %v652 = vld [vmem:[%s3 + $0x8b0] sm:$0xff]
    %v653 = vld [vmem:[%s3 + $0x8b8] sm:$0xff]
    %v654 = vld [vmem:[%s3 + $0x8c0] sm:$0xff]
    %v655 = vld [vmem:[%s3 + $0x8c8] sm:$0xff]
    %v656 = vld [vmem:[%s3 + $0x8d0] sm:$0xff]
    %v657 = vld [vmem:[%s3 + $0x8d8] sm:$0xff]
    %v658 = vld [vmem:[%s3 + $0x8e0] sm:$0xff]
    %v659 = vld [vmem:[%s3 + $0x8e8] sm:$0xff]
    %v660 = vld [vmem:[%s3 + $0x8f0] sm:$0xff]
    %v661 = vld [vmem:[%s3 + $0x8f8] sm:$0xff]
    %v662 = vld [vmem:[%s4] sm:$0xff]
    %v663 = vld [vmem:[%s4 + $0x8] sm:$0xf]
    %v666 = vperm.slane %v662, 0
    %v667 = vperm.slane %v662, 1
    %v668 = vperm.slane %v662, 2
    %v669 = vperm.slane %v662, 3
    %v670 = vperm.slane %v662, 4
    %v671 = vperm.slane %v662, 5
    %v672 = vperm.slane %v662, 6
    %v673 = vperm.slane %v662, 7
    %v674 = vperm.slane %v663, 0
    %v675 = vperm.slane %v663, 1
    %v676 = vperm.slane %v663, 2
    %v677 = vperm.slane %v663, 3
    %v978 = vunpack.c.l.b16 %v374
    %v979 = vunpack.c.h.b16 %v374
    %v980 = vunpack.c.l.b16 %v375
    %v981 = vunpack.c.h.b16 %v375
    %v982 = vunpack.c.l.b16 %v376
    %v983 = vunpack.c.h.b16 %v376
    %v984 = vunpack.c.l.b16 %v377
    %v985 = vunpack.c.h.b16 %v377
    %v986 = vunpack.c.l.b16 %v378
    %v987 = vunpack.c.h.b16 %v378
    %v988 = vunpack.c.l.b16 %v379
    %v989 = vunpack.c.h.b16 %v379
    %v990 = vunpack.c.l.b16 %v380
    %v991 = vunpack.c.h.b16 %v380
    %v992 = vunpack.c.l.b16 %v381
    %v993 = vunpack.c.h.b16 %v381
    %v994 = vunpack.c.l.b16 %v382
    %v995 = vunpack.c.h.b16 %v382
    %v996 = vunpack.c.l.b16 %v383
    %v997 = vunpack.c.h.b16 %v383
    %v998 = vunpack.c.l.b16 %v384
    %v999 = vunpack.c.h.b16 %v384
    %v1000 = vunpack.c.l.b16 %v385
    %v1001 = vunpack.c.h.b16 %v385
    %v1002 = vunpack.c.l.b16 %v386
    %v1003 = vunpack.c.h.b16 %v386
    %v1004 = vunpack.c.l.b16 %v387
    %v1005 = vunpack.c.h.b16 %v387
    %v1006 = vunpack.c.l.b16 %v388
    %v1007 = vunpack.c.h.b16 %v388
    %v1008 = vunpack.c.l.b16 %v389
    %v1009 = vunpack.c.h.b16 %v389
    %v1010 = vunpack.c.l.b16 %v390
    %v1011 = vunpack.c.h.b16 %v390
    %v1012 = vunpack.c.l.b16 %v391
    %v1013 = vunpack.c.h.b16 %v391
    %v1014 = vunpack.c.l.b16 %v392
    %v1015 = vunpack.c.h.b16 %v392
    %v1016 = vunpack.c.l.b16 %v393
    %v1017 = vunpack.c.h.b16 %v393
    %v1018 = vunpack.c.l.b16 %v394
    %v1019 = vunpack.c.h.b16 %v394
    %v1020 = vunpack.c.l.b16 %v395
    %v1021 = vunpack.c.h.b16 %v395
    %v1022 = vunpack.c.l.b16 %v396
    %v1023 = vunpack.c.h.b16 %v396
    %v1024 = vunpack.c.l.b16 %v397
    %v1025 = vunpack.c.h.b16 %v397
    %v1026 = vunpack.c.l.b16 %v398
    %v1027 = vunpack.c.h.b16 %v398
    %v1028 = vunpack.c.l.b16 %v399
    %v1029 = vunpack.c.h.b16 %v399
    %v1030 = vunpack.c.l.b16 %v400
    %v1031 = vunpack.c.h.b16 %v400
    %v1032 = vunpack.c.l.b16 %v401
    %v1033 = vunpack.c.h.b16 %v401
    %v1034 = vunpack.c.l.b16 %v402
    %v1035 = vunpack.c.h.b16 %v402
    %v1036 = vunpack.c.l.b16 %v403
    %v1037 = vunpack.c.h.b16 %v403
    %v1038 = vunpack.c.l.b16 %v404
    %v1039 = vunpack.c.h.b16 %v404
    %v1040 = vunpack.c.l.b16 %v405
    %v1041 = vunpack.c.h.b16 %v405
    %v1042 = vunpack.c.l.b16 %v406
    %v1043 = vunpack.c.h.b16 %v406
    %v1044 = vunpack.c.l.b16 %v407
    %v1045 = vunpack.c.h.b16 %v407
    %v1046 = vunpack.c.l.b16 %v408
    %v1047 = vunpack.c.h.b16 %v408
    %v1048 = vunpack.c.l.b16 %v409
    %v1049 = vunpack.c.h.b16 %v409
    %v1050 = vunpack.c.l.b16 %v410
    %v1051 = vunpack.c.h.b16 %v410
    %v1052 = vunpack.c.l.b16 %v411
    %v1053 = vunpack.c.h.b16 %v411
    %v1054 = vunpack.c.l.b16 %v412
    %v1055 = vunpack.c.h.b16 %v412
    %v1056 = vunpack.c.l.b16 %v413
    %v1057 = vunpack.c.h.b16 %v413
    %v1058 = vunpack.c.l.b16 %v414
    %v1059 = vunpack.c.h.b16 %v414
    %v1060 = vunpack.c.l.b16 %v415
    %v1061 = vunpack.c.h.b16 %v415
    %v1062 = vunpack.c.l.b16 %v416
    %v1063 = vunpack.c.h.b16 %v416
    %v1064 = vunpack.c.l.b16 %v417
    %v1065 = vunpack.c.h.b16 %v417
    %v1066 = vunpack.c.l.b16 %v418
    %v1067 = vunpack.c.h.b16 %v418
    %v1068 = vunpack.c.l.b16 %v419
    %v1069 = vunpack.c.h.b16 %v419
    %v1070 = vunpack.c.l.b16 %v420
    %v1071 = vunpack.c.h.b16 %v420
    %v1072 = vunpack.c.l.b16 %v421
    %v1073 = vunpack.c.h.b16 %v421
    %v1074 = vunpack.c.l.b16 %v422
    %v1075 = vunpack.c.h.b16 %v422
    %v1076 = vunpack.c.l.b16 %v423
    %v1077 = vunpack.c.h.b16 %v423
    %v1078 = vunpack.c.l.b16 %v424
    %v1079 = vunpack.c.h.b16 %v424
    %v1080 = vunpack.c.l.b16 %v425
    %v1081 = vunpack.c.h.b16 %v425
    %v1082 = vunpack.c.l.b16 %v426
    %v1083 = vunpack.c.h.b16 %v426
    %v1084 = vunpack.c.l.b16 %v427
    %v1085 = vunpack.c.h.b16 %v427
    %v1086 = vunpack.c.l.b16 %v428
    %v1087 = vunpack.c.h.b16 %v428
    %v1088 = vunpack.c.l.b16 %v429
    %v1089 = vunpack.c.h.b16 %v429
    %v1090 = vunpack.c.l.b16 %v430
    %v1091 = vunpack.c.h.b16 %v430
    %v1092 = vunpack.c.l.b16 %v431
    %v1093 = vunpack.c.h.b16 %v431
    %v1094 = vunpack.c.l.b16 %v432
    %v1095 = vunpack.c.h.b16 %v432
    %v1096 = vunpack.c.l.b16 %v433
    %v1097 = vunpack.c.h.b16 %v433
    %v1098 = vunpack.c.l.b16 %v434
    %v1099 = vunpack.c.h.b16 %v434
    %v1100 = vunpack.c.l.b16 %v435
    %v1101 = vunpack.c.h.b16 %v435
    %v1102 = vunpack.c.l.b16 %v436
    %v1103 = vunpack.c.h.b16 %v436
    %v1104 = vunpack.c.l.b16 %v437
    %v1105 = vunpack.c.h.b16 %v437
    %v1106 = vunpack.c.l.b16 %v438
    %v1107 = vunpack.c.h.b16 %v438
    %v1108 = vunpack.c.l.b16 %v439
    %v1109 = vunpack.c.h.b16 %v439
    %v1110 = vunpack.c.l.b16 %v440
    %v1111 = vunpack.c.h.b16 %v440
    %v1112 = vunpack.c.l.b16 %v441
    %v1113 = vunpack.c.h.b16 %v441
    %v1114 = vunpack.c.l.b16 %v442
    %v1115 = vunpack.c.h.b16 %v442
    %v1116 = vunpack.c.l.b16 %v443
    %v1117 = vunpack.c.h.b16 %v443
    %v1118 = vunpack.c.l.b16 %v444
    %v1119 = vunpack.c.h.b16 %v444
    %v1120 = vunpack.c.l.b16 %v445
    %v1121 = vunpack.c.h.b16 %v445
    %v1122 = vunpack.c.l.b16 %v446
    %v1123 = vunpack.c.h.b16 %v446
    %v1124 = vunpack.c.l.b16 %v447
    %v1125 = vunpack.c.h.b16 %v447
    %v1126 = vunpack.c.l.b16 %v448
    %v1127 = vunpack.c.h.b16 %v448
    %v1128 = vunpack.c.l.b16 %v449
    %v1129 = vunpack.c.h.b16 %v449
    %v1130 = vunpack.c.l.b16 %v450
    %v1131 = vunpack.c.h.b16 %v450
    %v1132 = vunpack.c.l.b16 %v451
    %v1133 = vunpack.c.h.b16 %v451
    %v1134 = vunpack.c.l.b16 %v452
    %v1135 = vunpack.c.h.b16 %v452
    %v1136 = vunpack.c.l.b16 %v453
    %v1137 = vunpack.c.h.b16 %v453
    %v1138 = vunpack.c.l.b16 %v454
    %v1139 = vunpack.c.h.b16 %v454
    %v1140 = vunpack.c.l.b16 %v455
    %v1141 = vunpack.c.h.b16 %v455
    %v1142 = vunpack.c.l.b16 %v456
    %v1143 = vunpack.c.h.b16 %v456
    %v1144 = vunpack.c.l.b16 %v457
    %v1145 = vunpack.c.h.b16 %v457
    %v1146 = vunpack.c.l.b16 %v458
    %v1147 = vunpack.c.h.b16 %v458
    %v1148 = vunpack.c.l.b16 %v459
    %v1149 = vunpack.c.h.b16 %v459
    %v1150 = vunpack.c.l.b16 %v460
    %v1151 = vunpack.c.h.b16 %v460
    %v1152 = vunpack.c.l.b16 %v461
    %v1153 = vunpack.c.h.b16 %v461
    %v1154 = vunpack.c.l.b16 %v462
    %v1155 = vunpack.c.h.b16 %v462
    %v1156 = vunpack.c.l.b16 %v463
    %v1157 = vunpack.c.h.b16 %v463
    %v1158 = vunpack.c.l.b16 %v464
    %v1159 = vunpack.c.h.b16 %v464
    %v1160 = vunpack.c.l.b16 %v465
    %v1161 = vunpack.c.h.b16 %v465
    %v1162 = vunpack.c.l.b16 %v466
    %v1163 = vunpack.c.h.b16 %v466
    %v1164 = vunpack.c.l.b16 %v467
    %v1165 = vunpack.c.h.b16 %v467
    %v1166 = vunpack.c.l.b16 %v468
    %v1167 = vunpack.c.h.b16 %v468
    %v1168 = vunpack.c.l.b16 %v469
    %v1169 = vunpack.c.h.b16 %v469
    %v1170 = vunpack.c.l.b16 %v470
    %v1171 = vunpack.c.h.b16 %v470
    %v1172 = vunpack.c.l.b16 %v471
    %v1173 = vunpack.c.h.b16 %v471
    %v1174 = vunpack.c.l.b16 %v472
    %v1175 = vunpack.c.h.b16 %v472
    %v1176 = vunpack.c.l.b16 %v473
    %v1177 = vunpack.c.h.b16 %v473
    %v1178 = vunpack.c.l.b16 %v474
    %v1179 = vunpack.c.h.b16 %v474
    %v1180 = vunpack.c.l.b16 %v475
    %v1181 = vunpack.c.h.b16 %v475
    %v1182 = vunpack.c.l.b16 %v476
    %v1183 = vunpack.c.h.b16 %v476
    %v1184 = vunpack.c.l.b16 %v477
    %v1185 = vunpack.c.h.b16 %v477
    %v1186 = vunpack.c.l.b16 %v478
    %v1187 = vunpack.c.h.b16 %v478
    %v1188 = vunpack.c.l.b16 %v479
    %v1189 = vunpack.c.h.b16 %v479
    %v1190 = vunpack.c.l.b16 %v480
    %v1191 = vunpack.c.h.b16 %v480
    %v1192 = vunpack.c.l.b16 %v481
    %v1193 = vunpack.c.h.b16 %v481
    %v1194 = vunpack.c.l.b16 %v482
    %v1195 = vunpack.c.h.b16 %v482
    %v1196 = vunpack.c.l.b16 %v483
    %v1197 = vunpack.c.h.b16 %v483
    %v1198 = vunpack.c.l.b16 %v484
    %v1199 = vunpack.c.h.b16 %v484
    %v1200 = vunpack.c.l.b16 %v485
    %v1201 = vunpack.c.h.b16 %v485
    %v1202 = vunpack.c.l.b16 %v486
    %v1203 = vunpack.c.h.b16 %v486
    %v1204 = vunpack.c.l.b16 %v487
    %v1205 = vunpack.c.h.b16 %v487
    %v1206 = vunpack.c.l.b16 %v488
    %v1207 = vunpack.c.h.b16 %v488
    %v1208 = vunpack.c.l.b16 %v489
    %v1209 = vunpack.c.h.b16 %v489
    %v1210 = vunpack.c.l.b16 %v490
    %v1211 = vunpack.c.h.b16 %v490
    %v1212 = vunpack.c.l.b16 %v491
    %v1213 = vunpack.c.h.b16 %v491
    %v1214 = vunpack.c.l.b16 %v492
    %v1215 = vunpack.c.h.b16 %v492
    %v1216 = vunpack.c.l.b16 %v493
    %v1217 = vunpack.c.h.b16 %v493
    %v1218 = vunpack.c.l.b16 %v494
    %v1219 = vunpack.c.h.b16 %v494
    %v1220 = vunpack.c.l.b16 %v495
    %v1221 = vunpack.c.h.b16 %v495
    %v1222 = vunpack.c.l.b16 %v496
    %v1223 = vunpack.c.h.b16 %v496
    %v1224 = vunpack.c.l.b16 %v497
    %v1225 = vunpack.c.h.b16 %v497
    %v1226 = vunpack.c.l.b16 %v498
    %v1227 = vunpack.c.h.b16 %v498
    %v1228 = vunpack.c.l.b16 %v499
    %v1229 = vunpack.c.h.b16 %v499
    %v1230 = vunpack.c.l.b16 %v500
    %v1231 = vunpack.c.h.b16 %v500
    %v1232 = vunpack.c.l.b16 %v501
    %v1233 = vunpack.c.h.b16 %v501
    %v1234 = vunpack.c.l.b16 %v502
    %v1235 = vunpack.c.h.b16 %v502
    %v1236 = vunpack.c.l.b16 %v503
    %v1237 = vunpack.c.h.b16 %v503
    %v1238 = vunpack.c.l.b16 %v504
    %v1239 = vunpack.c.h.b16 %v504
    %v1240 = vunpack.c.l.b16 %v505
    %v1241 = vunpack.c.h.b16 %v505
    %v1242 = vunpack.c.l.b16 %v506
    %v1243 = vunpack.c.h.b16 %v506
    %v1244 = vunpack.c.l.b16 %v507
    %v1245 = vunpack.c.h.b16 %v507
    %v1246 = vunpack.c.l.b16 %v508
    %v1247 = vunpack.c.h.b16 %v508
    %v1248 = vunpack.c.l.b16 %v509
    %v1249 = vunpack.c.h.b16 %v509
    %v1250 = vunpack.c.l.b16 %v510
    %v1251 = vunpack.c.h.b16 %v510
    %v1252 = vunpack.c.l.b16 %v511
    %v1253 = vunpack.c.h.b16 %v511
    %v1254 = vunpack.c.l.b16 %v512
    %v1255 = vunpack.c.h.b16 %v512
    %v1256 = vunpack.c.l.b16 %v513
    %v1257 = vunpack.c.h.b16 %v513
    %v1258 = vunpack.c.l.b16 %v514
    %v1259 = vunpack.c.h.b16 %v514
    %v1260 = vunpack.c.l.b16 %v515
    %v1261 = vunpack.c.h.b16 %v515
    %v1262 = vunpack.c.l.b16 %v516
    %v1263 = vunpack.c.h.b16 %v516
    %v1264 = vunpack.c.l.b16 %v517
    %v1265 = vunpack.c.h.b16 %v517
    %v1266 = vunpack.c.l.b16 %v518
    %v1267 = vunpack.c.h.b16 %v518
    %v1268 = vunpack.c.l.b16 %v519
    %v1269 = vunpack.c.h.b16 %v519
    %v1270 = vunpack.c.l.b16 %v520
    %v1271 = vunpack.c.h.b16 %v520
    %v1272 = vunpack.c.l.b16 %v521
    %v1273 = vunpack.c.h.b16 %v521
    %v1274 = vunpack.c.l.b16 %v522
    %v1275 = vunpack.c.h.b16 %v522
    %v1276 = vunpack.c.l.b16 %v523
    %v1277 = vunpack.c.h.b16 %v523
    %v1278 = vunpack.c.l.b16 %v524
    %v1279 = vunpack.c.h.b16 %v524
    %v1280 = vunpack.c.l.b16 %v525
    %v1281 = vunpack.c.h.b16 %v525
    %v1282 = vunpack.c.l.b16 %v526
    %v1283 = vunpack.c.h.b16 %v526
    %v1284 = vunpack.c.l.b16 %v527
    %v1285 = vunpack.c.h.b16 %v527
    %v1286 = vunpack.c.l.b16 %v528
    %v1287 = vunpack.c.h.b16 %v528
    %v1288 = vunpack.c.l.b16 %v529
    %v1289 = vunpack.c.h.b16 %v529
    %v1290 = vunpack.c.l.b16 %v530
    %v1291 = vunpack.c.h.b16 %v530
    %v1292 = vunpack.c.l.b16 %v531
    %v1293 = vunpack.c.h.b16 %v531
    %v1294 = vunpack.c.l.b16 %v532
    %v1295 = vunpack.c.h.b16 %v532
    %v1296 = vunpack.c.l.b16 %v533
    %v1297 = vunpack.c.h.b16 %v533
    %v1298 = vunpack.c.l.b16 %v534
    %v1299 = vunpack.c.h.b16 %v534
    %v1300 = vunpack.c.l.b16 %v535
    %v1301 = vunpack.c.h.b16 %v535
    %v1302 = vunpack.c.l.b16 %v536
    %v1303 = vunpack.c.h.b16 %v536
    %v1304 = vunpack.c.l.b16 %v537
    %v1305 = vunpack.c.h.b16 %v537
    %v1306 = vunpack.c.l.b16 %v538
    %v1307 = vunpack.c.h.b16 %v538
    %v1308 = vunpack.c.l.b16 %v539
    %v1309 = vunpack.c.h.b16 %v539
    %v1310 = vunpack.c.l.b16 %v540
    %v1311 = vunpack.c.h.b16 %v540
    %v1312 = vunpack.c.l.b16 %v541
    %v1313 = vunpack.c.h.b16 %v541
    %v1314 = vunpack.c.l.b16 %v542
    %v1315 = vunpack.c.h.b16 %v542
    %v1316 = vunpack.c.l.b16 %v543
    %v1317 = vunpack.c.h.b16 %v543
    %v1318 = vunpack.c.l.b16 %v544
    %v1319 = vunpack.c.h.b16 %v544
    %v1320 = vunpack.c.l.b16 %v545
    %v1321 = vunpack.c.h.b16 %v545
    %v1322 = vunpack.c.l.b16 %v546
    %v1323 = vunpack.c.h.b16 %v546
    %v1324 = vunpack.c.l.b16 %v547
    %v1325 = vunpack.c.h.b16 %v547
    %v1326 = vunpack.c.l.b16 %v548
    %v1327 = vunpack.c.h.b16 %v548
    %v1328 = vunpack.c.l.b16 %v549
    %v1329 = vunpack.c.h.b16 %v549
    %v1330 = vunpack.c.l.b16 %v550
    %v1331 = vunpack.c.h.b16 %v550
    %v1332 = vunpack.c.l.b16 %v551
    %v1333 = vunpack.c.h.b16 %v551
    %v1334 = vunpack.c.l.b16 %v552
    %v1335 = vunpack.c.h.b16 %v552
    %v1336 = vunpack.c.l.b16 %v553
    %v1337 = vunpack.c.h.b16 %v553
    %v1338 = vunpack.c.l.b16 %v554
    %v1339 = vunpack.c.h.b16 %v554
    %v1340 = vunpack.c.l.b16 %v555
    %v1341 = vunpack.c.h.b16 %v555
    %v1342 = vunpack.c.l.b16 %v556
    %v1343 = vunpack.c.h.b16 %v556
    %v1344 = vunpack.c.l.b16 %v557
    %v1345 = vunpack.c.h.b16 %v557
    %v1346 = vunpack.c.l.b16 %v558
    %v1347 = vunpack.c.h.b16 %v558
    %v1348 = vunpack.c.l.b16 %v559
    %v1349 = vunpack.c.h.b16 %v559
    %v1350 = vunpack.c.l.b16 %v560
    %v1351 = vunpack.c.h.b16 %v560
    %v1352 = vunpack.c.l.b16 %v561
    %v1353 = vunpack.c.h.b16 %v561
    %v1354 = vunpack.c.l.b16 %v562
    %v1355 = vunpack.c.h.b16 %v562
    %v1356 = vunpack.c.l.b16 %v563
    %v1357 = vunpack.c.h.b16 %v563
    %v1358 = vunpack.c.l.b16 %v564
    %v1359 = vunpack.c.h.b16 %v564
    %v1360 = vunpack.c.l.b16 %v565
    %v1361 = vunpack.c.h.b16 %v565
    %v1362 = vunpack.c.l.b16 %v566
    %v1363 = vunpack.c.h.b16 %v566
    %v1364 = vunpack.c.l.b16 %v567
    %v1365 = vunpack.c.h.b16 %v567
    %v1366 = vunpack.c.l.b16 %v568
    %v1367 = vunpack.c.h.b16 %v568
    %v1368 = vunpack.c.l.b16 %v569
    %v1369 = vunpack.c.h.b16 %v569
    %v1370 = vunpack.c.l.b16 %v570
    %v1371 = vunpack.c.h.b16 %v570
    %v1372 = vunpack.c.l.b16 %v571
    %v1373 = vunpack.c.h.b16 %v571
    %v1374 = vunpack.c.l.b16 %v572
    %v1375 = vunpack.c.h.b16 %v572
    %v1376 = vunpack.c.l.b16 %v573
    %v1377 = vunpack.c.h.b16 %v573
    %v1378 = vunpack.c.l.b16 %v574
    %v1379 = vunpack.c.h.b16 %v574
    %v1380 = vunpack.c.l.b16 %v575
    %v1381 = vunpack.c.h.b16 %v575
    %v1382 = vunpack.c.l.b16 %v576
    %v1383 = vunpack.c.h.b16 %v576
    %v1384 = vunpack.c.l.b16 %v577
    %v1385 = vunpack.c.h.b16 %v577
    %v1386 = vunpack.c.l.b16 %v578
    %v1387 = vunpack.c.h.b16 %v578
    %v1388 = vunpack.c.l.b16 %v579
    %v1389 = vunpack.c.h.b16 %v579
    %v1390 = vunpack.c.l.b16 %v580
    %v1391 = vunpack.c.h.b16 %v580
    %v1392 = vunpack.c.l.b16 %v581
    %v1393 = vunpack.c.h.b16 %v581
    %v1394 = vunpack.c.l.b16 %v582
    %v1395 = vunpack.c.h.b16 %v582
    %v1396 = vunpack.c.l.b16 %v583
    %v1397 = vunpack.c.h.b16 %v583
    %v1398 = vunpack.c.l.b16 %v584
    %v1399 = vunpack.c.h.b16 %v584
    %v1400 = vunpack.c.l.b16 %v585
    %v1401 = vunpack.c.h.b16 %v585
    %v1402 = vunpack.c.l.b16 %v586
    %v1403 = vunpack.c.h.b16 %v586
    %v1404 = vunpack.c.l.b16 %v587
    %v1405 = vunpack.c.h.b16 %v587
    %v1406 = vunpack.c.l.b16 %v588
    %v1407 = vunpack.c.h.b16 %v588
    %v1408 = vunpack.c.l.b16 %v589
    %v1409 = vunpack.c.h.b16 %v589
    %v1410 = vunpack.c.l.b16 %v590
    %v1411 = vunpack.c.h.b16 %v590
    %v1412 = vunpack.c.l.b16 %v591
    %v1413 = vunpack.c.h.b16 %v591
    %v1414 = vunpack.c.l.b16 %v592
    %v1415 = vunpack.c.h.b16 %v592
    %v1416 = vunpack.c.l.b16 %v593
    %v1417 = vunpack.c.h.b16 %v593
    %v1418 = vunpack.c.l.b16 %v594
    %v1419 = vunpack.c.h.b16 %v594
    %v1420 = vunpack.c.l.b16 %v595
    %v1421 = vunpack.c.h.b16 %v595
    %v1422 = vunpack.c.l.b16 %v596
    %v1423 = vunpack.c.h.b16 %v596
    %v1424 = vunpack.c.l.b16 %v597
    %v1425 = vunpack.c.h.b16 %v597
    %v1426 = vunpack.c.l.b16 %v598
    %v1427 = vunpack.c.h.b16 %v598
    %v1428 = vunpack.c.l.b16 %v599
    %v1429 = vunpack.c.h.b16 %v599
    %v1430 = vunpack.c.l.b16 %v600
    %v1431 = vunpack.c.h.b16 %v600
    %v1432 = vunpack.c.l.b16 %v601
    %v1433 = vunpack.c.h.b16 %v601
    %v1434 = vunpack.c.l.b16 %v602
    %v1435 = vunpack.c.h.b16 %v602
    %v1436 = vunpack.c.l.b16 %v603
    %v1437 = vunpack.c.h.b16 %v603
    %v1438 = vunpack.c.l.b16 %v604
    %v1439 = vunpack.c.h.b16 %v604
    %v1440 = vunpack.c.l.b16 %v605
    %v1441 = vunpack.c.h.b16 %v605
    %v1442 = vunpack.c.l.b16 %v606
    %v1443 = vunpack.c.h.b16 %v606
    %v1444 = vunpack.c.l.b16 %v607
    %v1445 = vunpack.c.h.b16 %v607
    %v1446 = vunpack.c.l.b16 %v608
    %v1447 = vunpack.c.h.b16 %v608
    %v1448 = vunpack.c.l.b16 %v609
    %v1449 = vunpack.c.h.b16 %v609
    %v1450 = vunpack.c.l.b16 %v610
    %v1451 = vunpack.c.h.b16 %v610
    %v1452 = vunpack.c.l.b16 %v611
    %v1453 = vunpack.c.h.b16 %v611
    %v1454 = vunpack.c.l.b16 %v612
    %v1455 = vunpack.c.h.b16 %v612
    %v1456 = vunpack.c.l.b16 %v613
    %v1457 = vunpack.c.h.b16 %v613
    %v1458 = vunpack.c.l.b16 %v614
    %v1459 = vunpack.c.h.b16 %v614
    %v1460 = vunpack.c.l.b16 %v615
    %v1461 = vunpack.c.h.b16 %v615
    %v1462 = vunpack.c.l.b16 %v616
    %v1463 = vunpack.c.h.b16 %v616
    %v1464 = vunpack.c.l.b16 %v617
    %v1465 = vunpack.c.h.b16 %v617
    %v1466 = vunpack.c.l.b16 %v618
    %v1467 = vunpack.c.h.b16 %v618
    %v1468 = vunpack.c.l.b16 %v619
    %v1469 = vunpack.c.h.b16 %v619
    %v1470 = vunpack.c.l.b16 %v620
    %v1471 = vunpack.c.h.b16 %v620
    %v1472 = vunpack.c.l.b16 %v621
    %v1473 = vunpack.c.h.b16 %v621
    %v1474 = vunpack.c.l.b16 %v622
    %v1475 = vunpack.c.h.b16 %v622
    %v1476 = vunpack.c.l.b16 %v623
    %v1477 = vunpack.c.h.b16 %v623
    %v1478 = vunpack.c.l.b16 %v624
    %v1479 = vunpack.c.h.b16 %v624
    %v1480 = vunpack.c.l.b16 %v625
    %v1481 = vunpack.c.h.b16 %v625
    %v1482 = vunpack.c.l.b16 %v626
    %v1483 = vunpack.c.h.b16 %v626
    %v1484 = vunpack.c.l.b16 %v627
    %v1485 = vunpack.c.h.b16 %v627
    %v1486 = vunpack.c.l.b16 %v628
    %v1487 = vunpack.c.h.b16 %v628
    %v1488 = vunpack.c.l.b16 %v629
    %v1489 = vunpack.c.h.b16 %v629
    %v1490 = vunpack.c.l.b16 %v630
    %v1491 = vunpack.c.h.b16 %v630
    %v1492 = vunpack.c.l.b16 %v631
    %v1493 = vunpack.c.h.b16 %v631
    %v1494 = vunpack.c.l.b16 %v632
    %v1495 = vunpack.c.h.b16 %v632
    %v1496 = vunpack.c.l.b16 %v633
    %v1497 = vunpack.c.h.b16 %v633
    %v1498 = vunpack.c.l.b16 %v634
    %v1499 = vunpack.c.h.b16 %v634
    %v1500 = vunpack.c.l.b16 %v635
    %v1501 = vunpack.c.h.b16 %v635
    %v1502 = vunpack.c.l.b16 %v636
    %v1503 = vunpack.c.h.b16 %v636
    %v1504 = vunpack.c.l.b16 %v637
    %v1505 = vunpack.c.h.b16 %v637
    %v1506 = vunpack.c.l.b16 %v638
    %v1507 = vunpack.c.h.b16 %v638
    %v1508 = vunpack.c.l.b16 %v639
    %v1509 = vunpack.c.h.b16 %v639
    %v1510 = vunpack.c.l.b16 %v640
    %v1511 = vunpack.c.h.b16 %v640
    %v1512 = vunpack.c.l.b16 %v641
    %v1513 = vunpack.c.h.b16 %v641
    %v1514 = vunpack.c.l.b16 %v642
    %v1515 = vunpack.c.h.b16 %v642
    %v1516 = vunpack.c.l.b16 %v643
    %v1517 = vunpack.c.h.b16 %v643
    %v1518 = vunpack.c.l.b16 %v644
    %v1519 = vunpack.c.h.b16 %v644
    %v1520 = vunpack.c.l.b16 %v645
    %v1521 = vunpack.c.h.b16 %v645
    %v1522 = vunpack.c.l.b16 %v646
    %v1523 = vunpack.c.h.b16 %v646
    %v1524 = vunpack.c.l.b16 %v647
    %v1525 = vunpack.c.h.b16 %v647
    %v1526 = vunpack.c.l.b16 %v648
    %v1527 = vunpack.c.h.b16 %v648
    %v1528 = vunpack.c.l.b16 %v649
    %v1529 = vunpack.c.h.b16 %v649
    %v1530 = vunpack.c.l.b16 %v650
    %v1531 = vunpack.c.h.b16 %v650
    %v1532 = vunpack.c.l.b16 %v651
    %v1533 = vunpack.c.h.b16 %v651
    %v1534 = vunpack.c.l.b16 %v652
    %v1535 = vunpack.c.h.b16 %v652
    %v1536 = vunpack.c.l.b16 %v653
    %v1537 = vunpack.c.h.b16 %v653
    %v1538 = vunpack.c.l.b16 %v654
    %v1539 = vunpack.c.h.b16 %v654
    %v1540 = vunpack.c.l.b16 %v655
    %v1541 = vunpack.c.h.b16 %v655
    %v1542 = vunpack.c.l.b16 %v656
    %v1543 = vunpack.c.h.b16 %v656
    %v1544 = vunpack.c.l.b16 %v657
    %v1545 = vunpack.c.h.b16 %v657
    %v1546 = vunpack.c.l.b16 %v658
    %v1547 = vunpack.c.h.b16 %v658
    %v1548 = vunpack.c.l.b16 %v659
    %v1549 = vunpack.c.h.b16 %v659
    %v1550 = vunpack.c.l.b16 %v660
    %v1551 = vunpack.c.h.b16 %v660
    %v1552 = vunpack.c.l.b16 %v661
    %v1553 = vunpack.c.h.b16 %v661
    %v1554 = vpack.c.b16 %v990, %v978
    %v1555 = vpack.c.b16 %v991, %v979
    %v1556 = vpack.c.b16 %v992, %v980
    %v1557 = vpack.c.b16 %v993, %v981
    %v1558 = vpack.c.b16 %v994, %v982
    %v1559 = vpack.c.b16 %v995, %v983
    %v1560 = vpack.c.b16 %v996, %v984
    %v1561 = vpack.c.b16 %v997, %v985
    %v1562 = vpack.c.b16 %v998, %v986
    %v1563 = vpack.c.b16 %v999, %v987
    %v1564 = vpack.c.b16 %v1000, %v988
    %v1565 = vpack.c.b16 %v1001, %v989
    %v1566 = vpack.c.b16 %v1014, %v1002
    %v1567 = vpack.c.b16 %v1015, %v1003
    %v1568 = vpack.c.b16 %v1016, %v1004
    %v1569 = vpack.c.b16 %v1017, %v1005
    %v1570 = vpack.c.b16 %v1018, %v1006
    %v1571 = vpack.c.b16 %v1019, %v1007
    %v1572 = vpack.c.b16 %v1020, %v1008
    %v1573 = vpack.c.b16 %v1021, %v1009
    %v1574 = vpack.c.b16 %v1022, %v1010
    %v1575 = vpack.c.b16 %v1023, %v1011
    %v1576 = vpack.c.b16 %v1024, %v1012
    %v1577 = vpack.c.b16 %v1025, %v1013
    %v1578 = vpack.c.b16 %v1038, %v1026
    %v1579 = vpack.c.b16 %v1039, %v1027
    %v1580 = vpack.c.b16 %v1040, %v1028
    %v1581 = vpack.c.b16 %v1041, %v1029
    %v1582 = vpack.c.b16 %v1042, %v1030
    %v1583 = vpack.c.b16 %v1043, %v1031
    %v1584 = vpack.c.b16 %v1044, %v1032
    %v1585 = vpack.c.b16 %v1045, %v1033
    %v1586 = vpack.c.b16 %v1046, %v1034
    %v1587 = vpack.c.b16 %v1047, %v1035
    %v1588 = vpack.c.b16 %v1048, %v1036
    %v1589 = vpack.c.b16 %v1049, %v1037
    %v1590 = vpack.c.b16 %v1062, %v1050
    %v1591 = vpack.c.b16 %v1063, %v1051
    %v1592 = vpack.c.b16 %v1064, %v1052
    %v1593 = vpack.c.b16 %v1065, %v1053
    %v1594 = vpack.c.b16 %v1066, %v1054
    %v1595 = vpack.c.b16 %v1067, %v1055
    %v1596 = vpack.c.b16 %v1068, %v1056
    %v1597 = vpack.c.b16 %v1069, %v1057
    %v1598 = vpack.c.b16 %v1070, %v1058
    %v1599 = vpack.c.b16 %v1071, %v1059
    %v1600 = vpack.c.b16 %v1072, %v1060
    %v1601 = vpack.c.b16 %v1073, %v1061
    %v1602 = vpack.c.b16 %v1086, %v1074
    %v1603 = vpack.c.b16 %v1087, %v1075
    %v1604 = vpack.c.b16 %v1088, %v1076
    %v1605 = vpack.c.b16 %v1089, %v1077
    %v1606 = vpack.c.b16 %v1090, %v1078
    %v1607 = vpack.c.b16 %v1091, %v1079
    %v1608 = vpack.c.b16 %v1092, %v1080
    %v1609 = vpack.c.b16 %v1093, %v1081
    %v1610 = vpack.c.b16 %v1094, %v1082
    %v1611 = vpack.c.b16 %v1095, %v1083
    %v1612 = vpack.c.b16 %v1096, %v1084
    %v1613 = vpack.c.b16 %v1097, %v1085
    %v1614 = vpack.c.b16 %v1110, %v1098
    %v1615 = vpack.c.b16 %v1111, %v1099
    %v1616 = vpack.c.b16 %v1112, %v1100
    %v1617 = vpack.c.b16 %v1113, %v1101
    %v1618 = vpack.c.b16 %v1114, %v1102
    %v1619 = vpack.c.b16 %v1115, %v1103
    %v1620 = vpack.c.b16 %v1116, %v1104
    %v1621 = vpack.c.b16 %v1117, %v1105
    %v1622 = vpack.c.b16 %v1118, %v1106
    %v1623 = vpack.c.b16 %v1119, %v1107
    %v1624 = vpack.c.b16 %v1120, %v1108
    %v1625 = vpack.c.b16 %v1121, %v1109
    %v1626 = vpack.c.b16 %v1134, %v1122
    %v1627 = vpack.c.b16 %v1135, %v1123
    %v1628 = vpack.c.b16 %v1136, %v1124
    %v1629 = vpack.c.b16 %v1137, %v1125
    %v1630 = vpack.c.b16 %v1138, %v1126
    %v1631 = vpack.c.b16 %v1139, %v1127
    %v1632 = vpack.c.b16 %v1140, %v1128
    %v1633 = vpack.c.b16 %v1141, %v1129
    %v1634 = vpack.c.b16 %v1142, %v1130
    %v1635 = vpack.c.b16 %v1143, %v1131
    %v1636 = vpack.c.b16 %v1144, %v1132
    %v1637 = vpack.c.b16 %v1145, %v1133
    %v1638 = vpack.c.b16 %v1158, %v1146
    %v1639 = vpack.c.b16 %v1159, %v1147
    %v1640 = vpack.c.b16 %v1160, %v1148
    %v1641 = vpack.c.b16 %v1161, %v1149
    %v1642 = vpack.c.b16 %v1162, %v1150
    %v1643 = vpack.c.b16 %v1163, %v1151
    %v1644 = vpack.c.b16 %v1164, %v1152
    %v1645 = vpack.c.b16 %v1165, %v1153
    %v1646 = vpack.c.b16 %v1166, %v1154
    %v1647 = vpack.c.b16 %v1167, %v1155
    %v1648 = vpack.c.b16 %v1168, %v1156
    %v1649 = vpack.c.b16 %v1169, %v1157
    %v1650 = vpack.c.b16 %v1182, %v1170
    %v1651 = vpack.c.b16 %v1183, %v1171
    %v1652 = vpack.c.b16 %v1184, %v1172
    %v1653 = vpack.c.b16 %v1185, %v1173
    %v1654 = vpack.c.b16 %v1186, %v1174
    %v1655 = vpack.c.b16 %v1187, %v1175
    %v1656 = vpack.c.b16 %v1188, %v1176
    %v1657 = vpack.c.b16 %v1189, %v1177
    %v1658 = vpack.c.b16 %v1190, %v1178
    %v1659 = vpack.c.b16 %v1191, %v1179
    %v1660 = vpack.c.b16 %v1192, %v1180
    %v1661 = vpack.c.b16 %v1193, %v1181
    %v1662 = vpack.c.b16 %v1206, %v1194
    %v1663 = vpack.c.b16 %v1207, %v1195
    %v1664 = vpack.c.b16 %v1208, %v1196
    %v1665 = vpack.c.b16 %v1209, %v1197
    %v1666 = vpack.c.b16 %v1210, %v1198
    %v1667 = vpack.c.b16 %v1211, %v1199
    %v1668 = vpack.c.b16 %v1212, %v1200
    %v1669 = vpack.c.b16 %v1213, %v1201
    %v1670 = vpack.c.b16 %v1214, %v1202
    %v1671 = vpack.c.b16 %v1215, %v1203
    %v1672 = vpack.c.b16 %v1216, %v1204
    %v1673 = vpack.c.b16 %v1217, %v1205
    %v1674 = vpack.c.b16 %v1230, %v1218
    %v1675 = vpack.c.b16 %v1231, %v1219
    %v1676 = vpack.c.b16 %v1232, %v1220
    %v1677 = vpack.c.b16 %v1233, %v1221
    %v1678 = vpack.c.b16 %v1234, %v1222
    %v1679 = vpack.c.b16 %v1235, %v1223
    %v1680 = vpack.c.b16 %v1236, %v1224
    %v1681 = vpack.c.b16 %v1237, %v1225
    %v1682 = vpack.c.b16 %v1238, %v1226
    %v1683 = vpack.c.b16 %v1239, %v1227
    %v1684 = vpack.c.b16 %v1240, %v1228
    %v1685 = vpack.c.b16 %v1241, %v1229
    %v1686 = vpack.c.b16 %v1254, %v1242
    %v1687 = vpack.c.b16 %v1255, %v1243
    %v1688 = vpack.c.b16 %v1256, %v1244
    %v1689 = vpack.c.b16 %v1257, %v1245
    %v1690 = vpack.c.b16 %v1258, %v1246
    %v1691 = vpack.c.b16 %v1259, %v1247
    %v1692 = vpack.c.b16 %v1260, %v1248
    %v1693 = vpack.c.b16 %v1261, %v1249
    %v1694 = vpack.c.b16 %v1262, %v1250
    %v1695 = vpack.c.b16 %v1263, %v1251
    %v1696 = vpack.c.b16 %v1264, %v1252
    %v1697 = vpack.c.b16 %v1265, %v1253
    %v1698 = vpack.c.b16 %v1278, %v1266
    %v1699 = vpack.c.b16 %v1279, %v1267
    %v1700 = vpack.c.b16 %v1280, %v1268
    %v1701 = vpack.c.b16 %v1281, %v1269
    %v1702 = vpack.c.b16 %v1282, %v1270
    %v1703 = vpack.c.b16 %v1283, %v1271
    %v1704 = vpack.c.b16 %v1284, %v1272
    %v1705 = vpack.c.b16 %v1285, %v1273
    %v1706 = vpack.c.b16 %v1286, %v1274
    %v1707 = vpack.c.b16 %v1287, %v1275
    %v1708 = vpack.c.b16 %v1288, %v1276
    %v1709 = vpack.c.b16 %v1289, %v1277
    %v1710 = vpack.c.b16 %v1302, %v1290
    %v1711 = vpack.c.b16 %v1303, %v1291
    %v1712 = vpack.c.b16 %v1304, %v1292
    %v1713 = vpack.c.b16 %v1305, %v1293
    %v1714 = vpack.c.b16 %v1306, %v1294
    %v1715 = vpack.c.b16 %v1307, %v1295
    %v1716 = vpack.c.b16 %v1308, %v1296
    %v1717 = vpack.c.b16 %v1309, %v1297
    %v1718 = vpack.c.b16 %v1310, %v1298
    %v1719 = vpack.c.b16 %v1311, %v1299
    %v1720 = vpack.c.b16 %v1312, %v1300
    %v1721 = vpack.c.b16 %v1313, %v1301
    %v1722 = vpack.c.b16 %v1326, %v1314
    %v1723 = vpack.c.b16 %v1327, %v1315
    %v1724 = vpack.c.b16 %v1328, %v1316
    %v1725 = vpack.c.b16 %v1329, %v1317
    %v1726 = vpack.c.b16 %v1330, %v1318
    %v1727 = vpack.c.b16 %v1331, %v1319
    %v1728 = vpack.c.b16 %v1332, %v1320
    %v1729 = vpack.c.b16 %v1333, %v1321
    %v1730 = vpack.c.b16 %v1334, %v1322
    %v1731 = vpack.c.b16 %v1335, %v1323
    %v1732 = vpack.c.b16 %v1336, %v1324
    %v1733 = vpack.c.b16 %v1337, %v1325
    %v1734 = vpack.c.b16 %v1350, %v1338
    %v1735 = vpack.c.b16 %v1351, %v1339
    %v1736 = vpack.c.b16 %v1352, %v1340
    %v1737 = vpack.c.b16 %v1353, %v1341
    %v1738 = vpack.c.b16 %v1354, %v1342
    %v1739 = vpack.c.b16 %v1355, %v1343
    %v1740 = vpack.c.b16 %v1356, %v1344
    %v1741 = vpack.c.b16 %v1357, %v1345
    %v1742 = vpack.c.b16 %v1358, %v1346
    %v1743 = vpack.c.b16 %v1359, %v1347
    %v1744 = vpack.c.b16 %v1360, %v1348
    %v1745 = vpack.c.b16 %v1361, %v1349
    %v1746 = vpack.c.b16 %v1374, %v1362
    %v1747 = vpack.c.b16 %v1375, %v1363
    %v1748 = vpack.c.b16 %v1376, %v1364
    %v1749 = vpack.c.b16 %v1377, %v1365
    %v1750 = vpack.c.b16 %v1378, %v1366
    %v1751 = vpack.c.b16 %v1379, %v1367
    %v1752 = vpack.c.b16 %v1380, %v1368
    %v1753 = vpack.c.b16 %v1381, %v1369
    %v1754 = vpack.c.b16 %v1382, %v1370
    %v1755 = vpack.c.b16 %v1383, %v1371
    %v1756 = vpack.c.b16 %v1384, %v1372
    %v1757 = vpack.c.b16 %v1385, %v1373
    %v1758 = vpack.c.b16 %v1398, %v1386
    %v1759 = vpack.c.b16 %v1399, %v1387
    %v1760 = vpack.c.b16 %v1400, %v1388
    %v1761 = vpack.c.b16 %v1401, %v1389
    %v1762 = vpack.c.b16 %v1402, %v1390
    %v1763 = vpack.c.b16 %v1403, %v1391
    %v1764 = vpack.c.b16 %v1404, %v1392
    %v1765 = vpack.c.b16 %v1405, %v1393
    %v1766 = vpack.c.b16 %v1406, %v1394
    %v1767 = vpack.c.b16 %v1407, %v1395
    %v1768 = vpack.c.b16 %v1408, %v1396
    %v1769 = vpack.c.b16 %v1409, %v1397
    %v1770 = vpack.c.b16 %v1422, %v1410
    %v1771 = vpack.c.b16 %v1423, %v1411
    %v1772 = vpack.c.b16 %v1424, %v1412
    %v1773 = vpack.c.b16 %v1425, %v1413
    %v1774 = vpack.c.b16 %v1426, %v1414
    %v1775 = vpack.c.b16 %v1427, %v1415
    %v1776 = vpack.c.b16 %v1428, %v1416
    %v1777 = vpack.c.b16 %v1429, %v1417
    %v1778 = vpack.c.b16 %v1430, %v1418
    %v1779 = vpack.c.b16 %v1431, %v1419
    %v1780 = vpack.c.b16 %v1432, %v1420
    %v1781 = vpack.c.b16 %v1433, %v1421
    %v1782 = vpack.c.b16 %v1446, %v1434
    %v1783 = vpack.c.b16 %v1447, %v1435
    %v1784 = vpack.c.b16 %v1448, %v1436
    %v1785 = vpack.c.b16 %v1449, %v1437
    %v1786 = vpack.c.b16 %v1450, %v1438
    %v1787 = vpack.c.b16 %v1451, %v1439
    %v1788 = vpack.c.b16 %v1452, %v1440
    %v1789 = vpack.c.b16 %v1453, %v1441
    %v1790 = vpack.c.b16 %v1454, %v1442
    %v1791 = vpack.c.b16 %v1455, %v1443
    %v1792 = vpack.c.b16 %v1456, %v1444
    %v1793 = vpack.c.b16 %v1457, %v1445
    %v1794 = vpack.c.b16 %v1470, %v1458
    %v1795 = vpack.c.b16 %v1471, %v1459
    %v1796 = vpack.c.b16 %v1472, %v1460
    %v1797 = vpack.c.b16 %v1473, %v1461
    %v1798 = vpack.c.b16 %v1474, %v1462
    %v1799 = vpack.c.b16 %v1475, %v1463
    %v1800 = vpack.c.b16 %v1476, %v1464
    %v1801 = vpack.c.b16 %v1477, %v1465
    %v1802 = vpack.c.b16 %v1478, %v1466
    %v1803 = vpack.c.b16 %v1479, %v1467
    %v1804 = vpack.c.b16 %v1480, %v1468
    %v1805 = vpack.c.b16 %v1481, %v1469
    %v1806 = vpack.c.b16 %v1494, %v1482
    %v1807 = vpack.c.b16 %v1495, %v1483
    %v1808 = vpack.c.b16 %v1496, %v1484
    %v1809 = vpack.c.b16 %v1497, %v1485
    %v1810 = vpack.c.b16 %v1498, %v1486
    %v1811 = vpack.c.b16 %v1499, %v1487
    %v1812 = vpack.c.b16 %v1500, %v1488
    %v1813 = vpack.c.b16 %v1501, %v1489
    %v1814 = vpack.c.b16 %v1502, %v1490
    %v1815 = vpack.c.b16 %v1503, %v1491
    %v1816 = vpack.c.b16 %v1504, %v1492
    %v1817 = vpack.c.b16 %v1505, %v1493
    %v1818 = vpack.c.b16 %v1518, %v1506
    %v1819 = vpack.c.b16 %v1519, %v1507
    %v1820 = vpack.c.b16 %v1520, %v1508
    %v1821 = vpack.c.b16 %v1521, %v1509
    %v1822 = vpack.c.b16 %v1522, %v1510
    %v1823 = vpack.c.b16 %v1523, %v1511
    %v1824 = vpack.c.b16 %v1524, %v1512
    %v1825 = vpack.c.b16 %v1525, %v1513
    %v1826 = vpack.c.b16 %v1526, %v1514
    %v1827 = vpack.c.b16 %v1527, %v1515
    %v1828 = vpack.c.b16 %v1528, %v1516
    %v1829 = vpack.c.b16 %v1529, %v1517
    %v1830 = vpack.c.b16 %v1542, %v1530
    %v1831 = vpack.c.b16 %v1543, %v1531
    %v1832 = vpack.c.b16 %v1544, %v1532
    %v1833 = vpack.c.b16 %v1545, %v1533
    %v1834 = vpack.c.b16 %v1546, %v1534
    %v1835 = vpack.c.b16 %v1547, %v1535
    %v1836 = vpack.c.b16 %v1548, %v1536
    %v1837 = vpack.c.b16 %v1549, %v1537
    %v1838 = vpack.c.b16 %v1550, %v1538
    %v1839 = vpack.c.b16 %v1551, %v1539
    %v1840 = vpack.c.b16 %v1552, %v1540
    %v1841 = vpack.c.b16 %v1553, %v1541
    %2130 = vmatpush.bf16.msra.mxu0 %v1638
    %2131 = vmatpush.bf16.msra.mxu0 %v1626
    %2132 = vmatpush.bf16.msra.mxu0 %v1614
    %2133 = vmatpush.bf16.msra.mxu0 %v1602
    %2134 = vmatpush.bf16.msra.mxu0 %v1590
    %2135 = vmatpush.bf16.msra.mxu0 %v1578
    %2136 = vmatpush.bf16.msra.mxu0 %v1566
    %2137 = vmatpush.bf16.msra.mxu0 %v1554
    %2138 = vmatmul.bf16.gmra.mxu0 %v362
    %v2139 = vpop.f32.mrf.mxu0
    %v2140 = vadd.f32 %v666, %v2139
    %v2141 = vpop.f32.mrf.mxu0
    %v2142 = vadd.f32 %v666, %v2141
    %2143 = vmatmul.bf16.gmra.mxu0 %v365
    %v2144 = vpop.f32.mrf.mxu0
    %v2145 = vadd.f32 %v666, %v2144
    %v2146 = vpop.f32.mrf.mxu0
    %v2147 = vadd.f32 %v666, %v2146
    %2148 = vmatmul.bf16.gmra.mxu0 %v368
    %v2149 = vpop.f32.mrf.mxu0
    %v2150 = vadd.f32 %v666, %v2149
    %v2151 = vpop.f32.mrf.mxu0
    %v2152 = vadd.f32 %v666, %v2151
    %2153 = vmatmul.bf16.gmra.mxu0 %v371
    %v2154 = vpop.f32.mrf.mxu0
    %v2155 = vadd.f32 %v666, %v2154
    %v2156 = vpop.f32.mrf.mxu0
    %v2157 = vadd.f32 %v666, %v2156
    %2158 = vdwg.mxu0
    %2159 = vmatpush.bf16.msra.mxu0 %v1734
    %2160 = vmatpush.bf16.msra.mxu0 %v1722
    %2161 = vmatpush.bf16.msra.mxu0 %v1710
    %2162 = vmatpush.bf16.msra.mxu0 %v1698
    %2163 = vmatpush.bf16.msra.mxu0 %v1686
    %2164 = vmatpush.bf16.msra.mxu0 %v1674
    %2165 = vmatpush.bf16.msra.mxu0 %v1662
    %2166 = vmatpush.bf16.msra.mxu0 %v1650
    %2167 = vmatmul.bf16.gmra.mxu0 %v363
    %v2168 = vpop.f32.mrf.mxu0
    %v2169 = vadd.f32 %v2140, %v2168
    %v2170 = vpop.f32.mrf.mxu0
    %v2171 = vadd.f32 %v2142, %v2170
    %2172 = vmatmul.bf16.gmra.mxu0 %v366
    %v2173 = vpop.f32.mrf.mxu0
    %v2174 = vadd.f32 %v2145, %v2173
    %v2175 = vpop.f32.mrf.mxu0
    %v2176 = vadd.f32 %v2147, %v2175
    %2177 = vmatmul.bf16.gmra.mxu0 %v369
    %v2178 = vpop.f32.mrf.mxu0
    %v2179 = vadd.f32 %v2150, %v2178
    %v2180 = vpop.f32.mrf.mxu0
    %v2181 = vadd.f32 %v2152, %v2180
    %2182 = vmatmul.bf16.gmra.mxu0 %v372
    %v2183 = vpop.f32.mrf.mxu0
    %v2184 = vadd.f32 %v2155, %v2183
    %v2185 = vpop.f32.mrf.mxu0
    %v2186 = vadd.f32 %v2157, %v2185
    %2187 = vdwg.mxu0
    %2188 = vmatpush.bf16.msra.mxu0 %v1830
    %2189 = vmatpush.bf16.msra.mxu0 %v1818
    %2190 = vmatpush.bf16.msra.mxu0 %v1806
    %2191 = vmatpush.bf16.msra.mxu0 %v1794
    %2192 = vmatpush.bf16.msra.mxu0 %v1782
    %2193 = vmatpush.bf16.msra.mxu0 %v1770
    %2194 = vmatpush.bf16.msra.mxu0 %v1758
    %2195 = vmatpush.bf16.msra.mxu0 %v1746
    %2196 = vmatmul.bf16.gmra.mxu0 %v364
    %v2197 = vpop.f32.mrf.mxu0
    %v2198 = vadd.f32 %v2169, %v2197
    %v2199 = vpop.f32.mrf.mxu0
    %v2200 = vadd.f32 %v2171, %v2199
    %2201 = vmatmul.bf16.gmra.mxu0 %v367
    %v2202 = vpop.f32.mrf.mxu0
    %v2203 = vadd.f32 %v2174, %v2202
    %v2204 = vpop.f32.mrf.mxu0
    %v2205 = vadd.f32 %v2176, %v2204
    %2206 = vmatmul.bf16.gmra.mxu0 %v370
    %v2207 = vpop.f32.mrf.mxu0
    %v2208 = vadd.f32 %v2179, %v2207
    %v2209 = vpop.f32.mrf.mxu0
    %v2210 = vadd.f32 %v2181, %v2209
    %2211 = vmatmul.bf16.gmra.mxu0 %v373
    %v2212 = vpop.f32.mrf.mxu0
    %v2213 = vadd.f32 %v2184, %v2212
    %v2214 = vpop.f32.mrf.mxu0
    %v2215 = vadd.f32 %v2186, %v2214
    %2216 = vdwg.mxu0
    %2217 = vmatpush.bf16.msra.mxu0 %v1639
    %2218 = vmatpush.bf16.msra.mxu0 %v1627
    %2219 = vmatpush.bf16.msra.mxu0 %v1615
    %2220 = vmatpush.bf16.msra.mxu0 %v1603
    %2221 = vmatpush.bf16.msra.mxu0 %v1591
    %2222 = vmatpush.bf16.msra.mxu0 %v1579
    %2223 = vmatpush.bf16.msra.mxu0 %v1567
    %2224 = vmatpush.bf16.msra.mxu0 %v1555
    %2225 = vmatmul.bf16.gmra.mxu0 %v362
    %v2226 = vpop.f32.mrf.mxu0
    %v2227 = vadd.f32 %v667, %v2226
    %v2228 = vpop.f32.mrf.mxu0
    %v2229 = vadd.f32 %v667, %v2228
    %2230 = vmatmul.bf16.gmra.mxu0 %v365
    %v2231 = vpop.f32.mrf.mxu0
    %v2232 = vadd.f32 %v667, %v2231
    %v2233 = vpop.f32.mrf.mxu0
    %v2234 = vadd.f32 %v667, %v2233
    %2235 = vmatmul.bf16.gmra.mxu0 %v368
    %v2236 = vpop.f32.mrf.mxu0
    %v2237 = vadd.f32 %v667, %v2236
    %v2238 = vpop.f32.mrf.mxu0
    %v2239 = vadd.f32 %v667, %v2238
    %2240 = vmatmul.bf16.gmra.mxu0 %v371
    %v2241 = vpop.f32.mrf.mxu0
    %v2242 = vadd.f32 %v667, %v2241
    %v2243 = vpop.f32.mrf.mxu0
    %v2244 = vadd.f32 %v667, %v2243
    %2245 = vdwg.mxu0
    %2246 = vmatpush.bf16.msra.mxu0 %v1735
    %2247 = vmatpush.bf16.msra.mxu0 %v1723
    %2248 = vmatpush.bf16.msra.mxu0 %v1711
    %2249 = vmatpush.bf16.msra.mxu0 %v1699
    %2250 = vmatpush.bf16.msra.mxu0 %v1687
    %2251 = vmatpush.bf16.msra.mxu0 %v1675
    %2252 = vmatpush.bf16.msra.mxu0 %v1663
    %2253 = vmatpush.bf16.msra.mxu0 %v1651
    %2254 = vmatmul.bf16.gmra.mxu0 %v363
    %v2255 = vpop.f32.mrf.mxu0
    %v2256 = vadd.f32 %v2227, %v2255
    %v2257 = vpop.f32.mrf.mxu0
    %v2258 = vadd.f32 %v2229, %v2257
    %2259 = vmatmul.bf16.gmra.mxu0 %v366
    %v2260 = vpop.f32.mrf.mxu0
    %v2261 = vadd.f32 %v2232, %v2260
    %v2262 = vpop.f32.mrf.mxu0
    %v2263 = vadd.f32 %v2234, %v2262
    %2264 = vmatmul.bf16.gmra.mxu0 %v369
    %v2265 = vpop.f32.mrf.mxu0
    %v2266 = vadd.f32 %v2237, %v2265
    %v2267 = vpop.f32.mrf.mxu0
    %v2268 = vadd.f32 %v2239, %v2267
    %2269 = vmatmul.bf16.gmra.mxu0 %v372
    %v2270 = vpop.f32.mrf.mxu0
    %v2271 = vadd.f32 %v2242, %v2270
    %v2272 = vpop.f32.mrf.mxu0
    %v2273 = vadd.f32 %v2244, %v2272
    %2274 = vdwg.mxu0
    %2275 = vmatpush.bf16.msra.mxu0 %v1831
    %2276 = vmatpush.bf16.msra.mxu0 %v1819
    %2277 = vmatpush.bf16.msra.mxu0 %v1807
    %2278 = vmatpush.bf16.msra.mxu0 %v1795
    %2279 = vmatpush.bf16.msra.mxu0 %v1783
    %2280 = vmatpush.bf16.msra.mxu0 %v1771
    %2281 = vmatpush.bf16.msra.mxu0 %v1759
    %2282 = vmatpush.bf16.msra.mxu0 %v1747
    %2283 = vmatmul.bf16.gmra.mxu0 %v364
    %v2284 = vpop.f32.mrf.mxu0
    %v2285 = vadd.f32 %v2256, %v2284
    %v2286 = vpop.f32.mrf.mxu0
    %v2287 = vadd.f32 %v2258, %v2286
    %2288 = vmatmul.bf16.gmra.mxu0 %v367
    %v2289 = vpop.f32.mrf.mxu0
    %v2290 = vadd.f32 %v2261, %v2289
    %v2291 = vpop.f32.mrf.mxu0
    %v2292 = vadd.f32 %v2263, %v2291
    %2293 = vmatmul.bf16.gmra.mxu0 %v370
    %v2294 = vpop.f32.mrf.mxu0
    %v2295 = vadd.f32 %v2266, %v2294
    %v2296 = vpop.f32.mrf.mxu0
    %v2297 = vadd.f32 %v2268, %v2296
    %2298 = vmatmul.bf16.gmra.mxu0 %v373
    %v2299 = vpop.f32.mrf.mxu0
    %v2300 = vadd.f32 %v2271, %v2299
    %v2301 = vpop.f32.mrf.mxu0
    %v2302 = vadd.f32 %v2273, %v2301
    %2303 = vdwg.mxu0
    %2304 = vmatpush.bf16.msra.mxu0 %v1640
    %2305 = vmatpush.bf16.msra.mxu0 %v1628
    %2306 = vmatpush.bf16.msra.mxu0 %v1616
    %2307 = vmatpush.bf16.msra.mxu0 %v1604
    %2308 = vmatpush.bf16.msra.mxu0 %v1592
    %2309 = vmatpush.bf16.msra.mxu0 %v1580
    %2310 = vmatpush.bf16.msra.mxu0 %v1568
    %2311 = vmatpush.bf16.msra.mxu0 %v1556
    %2312 = vmatmul.bf16.gmra.mxu0 %v362
    %v2313 = vpop.f32.mrf.mxu0
    %v2314 = vadd.f32 %v668, %v2313
    %v2315 = vpop.f32.mrf.mxu0
    %v2316 = vadd.f32 %v668, %v2315
    %2317 = vmatmul.bf16.gmra.mxu0 %v365
    %v2318 = vpop.f32.mrf.mxu0
    %v2319 = vadd.f32 %v668, %v2318
    %v2320 = vpop.f32.mrf.mxu0
    %v2321 = vadd.f32 %v668, %v2320
    %2322 = vmatmul.bf16.gmra.mxu0 %v368
    %v2323 = vpop.f32.mrf.mxu0
    %v2324 = vadd.f32 %v668, %v2323
    %v2325 = vpop.f32.mrf.mxu0
    %v2326 = vadd.f32 %v668, %v2325
    %2327 = vmatmul.bf16.gmra.mxu0 %v371
    %v2328 = vpop.f32.mrf.mxu0
    %v2329 = vadd.f32 %v668, %v2328
    %v2330 = vpop.f32.mrf.mxu0
    %v2331 = vadd.f32 %v668, %v2330
    %2332 = vdwg.mxu0
    %2333 = vmatpush.bf16.msra.mxu0 %v1736
    %2334 = vmatpush.bf16.msra.mxu0 %v1724
    %2335 = vmatpush.bf16.msra.mxu0 %v1712
    %2336 = vmatpush.bf16.msra.mxu0 %v1700
    %2337 = vmatpush.bf16.msra.mxu0 %v1688
    %2338 = vmatpush.bf16.msra.mxu0 %v1676
    %2339 = vmatpush.bf16.msra.mxu0 %v1664
    %2340 = vmatpush.bf16.msra.mxu0 %v1652
    %2341 = vmatmul.bf16.gmra.mxu0 %v363
    %v2342 = vpop.f32.mrf.mxu0
    %v2343 = vadd.f32 %v2314, %v2342
    %v2344 = vpop.f32.mrf.mxu0
    %v2345 = vadd.f32 %v2316, %v2344
    %2346 = vmatmul.bf16.gmra.mxu0 %v366
    %v2347 = vpop.f32.mrf.mxu0
    %v2348 = vadd.f32 %v2319, %v2347
    %v2349 = vpop.f32.mrf.mxu0
    %v2350 = vadd.f32 %v2321, %v2349
    %2351 = vmatmul.bf16.gmra.mxu0 %v369
    %v2352 = vpop.f32.mrf.mxu0
    %v2353 = vadd.f32 %v2324, %v2352
    %v2354 = vpop.f32.mrf.mxu0
    %v2355 = vadd.f32 %v2326, %v2354
    %2356 = vmatmul.bf16.gmra.mxu0 %v372
    %v2357 = vpop.f32.mrf.mxu0
    %v2358 = vadd.f32 %v2329, %v2357
    %v2359 = vpop.f32.mrf.mxu0
    %v2360 = vadd.f32 %v2331, %v2359
    %2361 = vdwg.mxu0
    %2362 = vmatpush.bf16.msra.mxu0 %v1832
    %2363 = vmatpush.bf16.msra.mxu0 %v1820
    %2364 = vmatpush.bf16.msra.mxu0 %v1808
    %2365 = vmatpush.bf16.msra.mxu0 %v1796
    %2366 = vmatpush.bf16.msra.mxu0 %v1784
    %2367 = vmatpush.bf16.msra.mxu0 %v1772
    %2368 = vmatpush.bf16.msra.mxu0 %v1760
    %2369 = vmatpush.bf16.msra.mxu0 %v1748
    %2370 = vmatmul.bf16.gmra.mxu0 %v364
    %v2371 = vpop.f32.mrf.mxu0
    %v2372 = vadd.f32 %v2343, %v2371
    %v2373 = vpop.f32.mrf.mxu0
    %v2374 = vadd.f32 %v2345, %v2373
    %2375 = vmatmul.bf16.gmra.mxu0 %v367
    %v2376 = vpop.f32.mrf.mxu0
    %v2377 = vadd.f32 %v2348, %v2376
    %v2378 = vpop.f32.mrf.mxu0
    %v2379 = vadd.f32 %v2350, %v2378
    %2380 = vmatmul.bf16.gmra.mxu0 %v370
    %v2381 = vpop.f32.mrf.mxu0
    %v2382 = vadd.f32 %v2353, %v2381
    %v2383 = vpop.f32.mrf.mxu0
    %v2384 = vadd.f32 %v2355, %v2383
    %2385 = vmatmul.bf16.gmra.mxu0 %v373
    %v2386 = vpop.f32.mrf.mxu0
    %v2387 = vadd.f32 %v2358, %v2386
    %v2388 = vpop.f32.mrf.mxu0
    %v2389 = vadd.f32 %v2360, %v2388
    %2390 = vdwg.mxu0
    %2391 = vmatpush.bf16.msra.mxu0 %v1641
    %2392 = vmatpush.bf16.msra.mxu0 %v1629
    %2393 = vmatpush.bf16.msra.mxu0 %v1617
    %2394 = vmatpush.bf16.msra.mxu0 %v1605
    %2395 = vmatpush.bf16.msra.mxu0 %v1593
    %2396 = vmatpush.bf16.msra.mxu0 %v1581
    %2397 = vmatpush.bf16.msra.mxu0 %v1569
    %2398 = vmatpush.bf16.msra.mxu0 %v1557
    %2399 = vmatmul.bf16.gmra.mxu0 %v362
    %v2400 = vpop.f32.mrf.mxu0
    %v2401 = vadd.f32 %v669, %v2400
    %v2402 = vpop.f32.mrf.mxu0
    %v2403 = vadd.f32 %v669, %v2402
    %2404 = vmatmul.bf16.gmra.mxu0 %v365
    %v2405 = vpop.f32.mrf.mxu0
    %v2406 = vadd.f32 %v669, %v2405
    %v2407 = vpop.f32.mrf.mxu0
    %v2408 = vadd.f32 %v669, %v2407
    %2409 = vmatmul.bf16.gmra.mxu0 %v368
    %v2410 = vpop.f32.mrf.mxu0
    %v2411 = vadd.f32 %v669, %v2410
    %v2412 = vpop.f32.mrf.mxu0
    %v2413 = vadd.f32 %v669, %v2412
    %2414 = vmatmul.bf16.gmra.mxu0 %v371
    %v2415 = vpop.f32.mrf.mxu0
    %v2416 = vadd.f32 %v669, %v2415
    %v2417 = vpop.f32.mrf.mxu0
    %v2418 = vadd.f32 %v669, %v2417
    %2419 = vdwg.mxu0
    %2420 = vmatpush.bf16.msra.mxu0 %v1737
    %2421 = vmatpush.bf16.msra.mxu0 %v1725
    %2422 = vmatpush.bf16.msra.mxu0 %v1713
    %2423 = vmatpush.bf16.msra.mxu0 %v1701
    %2424 = vmatpush.bf16.msra.mxu0 %v1689
    %2425 = vmatpush.bf16.msra.mxu0 %v1677
    %2426 = vmatpush.bf16.msra.mxu0 %v1665
    %2427 = vmatpush.bf16.msra.mxu0 %v1653
    %2428 = vmatmul.bf16.gmra.mxu0 %v363
    %v2429 = vpop.f32.mrf.mxu0
    %v2430 = vadd.f32 %v2401, %v2429
    %v2431 = vpop.f32.mrf.mxu0
    %v2432 = vadd.f32 %v2403, %v2431
    %2433 = vmatmul.bf16.gmra.mxu0 %v366
    %v2434 = vpop.f32.mrf.mxu0
    %v2435 = vadd.f32 %v2406, %v2434
    %v2436 = vpop.f32.mrf.mxu0
    %v2437 = vadd.f32 %v2408, %v2436
    %2438 = vmatmul.bf16.gmra.mxu0 %v369
    %v2439 = vpop.f32.mrf.mxu0
    %v2440 = vadd.f32 %v2411, %v2439
    %v2441 = vpop.f32.mrf.mxu0
    %v2442 = vadd.f32 %v2413, %v2441
    %2443 = vmatmul.bf16.gmra.mxu0 %v372
    %v2444 = vpop.f32.mrf.mxu0
    %v2445 = vadd.f32 %v2416, %v2444
    %v2446 = vpop.f32.mrf.mxu0
    %v2447 = vadd.f32 %v2418, %v2446
    %2448 = vdwg.mxu0
    %2449 = vmatpush.bf16.msra.mxu0 %v1833
    %2450 = vmatpush.bf16.msra.mxu0 %v1821
    %2451 = vmatpush.bf16.msra.mxu0 %v1809
    %2452 = vmatpush.bf16.msra.mxu0 %v1797
    %2453 = vmatpush.bf16.msra.mxu0 %v1785
    %2454 = vmatpush.bf16.msra.mxu0 %v1773
    %2455 = vmatpush.bf16.msra.mxu0 %v1761
    %2456 = vmatpush.bf16.msra.mxu0 %v1749
    %2457 = vmatmul.bf16.gmra.mxu0 %v364
    %v2458 = vpop.f32.mrf.mxu0
    %v2459 = vadd.f32 %v2430, %v2458
    %v2460 = vpop.f32.mrf.mxu0
    %v2461 = vadd.f32 %v2432, %v2460
    %2462 = vmatmul.bf16.gmra.mxu0 %v367
    %v2463 = vpop.f32.mrf.mxu0
    %v2464 = vadd.f32 %v2435, %v2463
    %v2465 = vpop.f32.mrf.mxu0
    %v2466 = vadd.f32 %v2437, %v2465
    %2467 = vmatmul.bf16.gmra.mxu0 %v370
    %v2468 = vpop.f32.mrf.mxu0
    %v2469 = vadd.f32 %v2440, %v2468
    %v2470 = vpop.f32.mrf.mxu0
    %v2471 = vadd.f32 %v2442, %v2470
    %2472 = vmatmul.bf16.gmra.mxu0 %v373
    %v2473 = vpop.f32.mrf.mxu0
    %v2474 = vadd.f32 %v2445, %v2473
    %v2475 = vpop.f32.mrf.mxu0
    %v2476 = vadd.f32 %v2447, %v2475
    %2477 = vdwg.mxu0
    %2478 = vmatpush.bf16.msra.mxu0 %v1642
    %2479 = vmatpush.bf16.msra.mxu0 %v1630
    %2480 = vmatpush.bf16.msra.mxu0 %v1618
    %2481 = vmatpush.bf16.msra.mxu0 %v1606
    %2482 = vmatpush.bf16.msra.mxu0 %v1594
    %2483 = vmatpush.bf16.msra.mxu0 %v1582
    %2484 = vmatpush.bf16.msra.mxu0 %v1570
    %2485 = vmatpush.bf16.msra.mxu0 %v1558
    %2486 = vmatmul.bf16.gmra.mxu0 %v362
    %v2487 = vpop.f32.mrf.mxu0
    %v2488 = vadd.f32 %v670, %v2487
    %v2489 = vpop.f32.mrf.mxu0
    %v2490 = vadd.f32 %v670, %v2489
    %2491 = vmatmul.bf16.gmra.mxu0 %v365
    %v2492 = vpop.f32.mrf.mxu0
    %v2493 = vadd.f32 %v670, %v2492
    %v2494 = vpop.f32.mrf.mxu0
    %v2495 = vadd.f32 %v670, %v2494
    %2496 = vmatmul.bf16.gmra.mxu0 %v368
    %v2497 = vpop.f32.mrf.mxu0
    %v2498 = vadd.f32 %v670, %v2497
    %v2499 = vpop.f32.mrf.mxu0
    %v2500 = vadd.f32 %v670, %v2499
    %2501 = vmatmul.bf16.gmra.mxu0 %v371
    %v2502 = vpop.f32.mrf.mxu0
    %v2503 = vadd.f32 %v670, %v2502
    %v2504 = vpop.f32.mrf.mxu0
    %v2505 = vadd.f32 %v670, %v2504
    %2506 = vdwg.mxu0
    %2507 = vmatpush.bf16.msra.mxu0 %v1738
    %2508 = vmatpush.bf16.msra.mxu0 %v1726
    %2509 = vmatpush.bf16.msra.mxu0 %v1714
    %2510 = vmatpush.bf16.msra.mxu0 %v1702
    %2511 = vmatpush.bf16.msra.mxu0 %v1690
    %2512 = vmatpush.bf16.msra.mxu0 %v1678
    %2513 = vmatpush.bf16.msra.mxu0 %v1666
    %2514 = vmatpush.bf16.msra.mxu0 %v1654
    %2515 = vmatmul.bf16.gmra.mxu0 %v363
    %v2516 = vpop.f32.mrf.mxu0
    %v2517 = vadd.f32 %v2488, %v2516
    %v2518 = vpop.f32.mrf.mxu0
    %v2519 = vadd.f32 %v2490, %v2518
    %2520 = vmatmul.bf16.gmra.mxu0 %v366
    %v2521 = vpop.f32.mrf.mxu0
    %v2522 = vadd.f32 %v2493, %v2521
    %v2523 = vpop.f32.mrf.mxu0
    %v2524 = vadd.f32 %v2495, %v2523
    %2525 = vmatmul.bf16.gmra.mxu0 %v369
    %v2526 = vpop.f32.mrf.mxu0
    %v2527 = vadd.f32 %v2498, %v2526
    %v2528 = vpop.f32.mrf.mxu0
    %v2529 = vadd.f32 %v2500, %v2528
    %2530 = vmatmul.bf16.gmra.mxu0 %v372
    %v2531 = vpop.f32.mrf.mxu0
    %v2532 = vadd.f32 %v2503, %v2531
    %v2533 = vpop.f32.mrf.mxu0
    %v2534 = vadd.f32 %v2505, %v2533
    %2535 = vdwg.mxu0
    %2536 = vmatpush.bf16.msra.mxu0 %v1834
    %2537 = vmatpush.bf16.msra.mxu0 %v1822
    %2538 = vmatpush.bf16.msra.mxu0 %v1810
    %2539 = vmatpush.bf16.msra.mxu0 %v1798
    %2540 = vmatpush.bf16.msra.mxu0 %v1786
    %2541 = vmatpush.bf16.msra.mxu0 %v1774
    %2542 = vmatpush.bf16.msra.mxu0 %v1762
    %2543 = vmatpush.bf16.msra.mxu0 %v1750
    %2544 = vmatmul.bf16.gmra.mxu0 %v364
    %v2545 = vpop.f32.mrf.mxu0
    %v2546 = vadd.f32 %v2517, %v2545
    %v2547 = vpop.f32.mrf.mxu0
    %v2548 = vadd.f32 %v2519, %v2547
    %2549 = vmatmul.bf16.gmra.mxu0 %v367
    %v2550 = vpop.f32.mrf.mxu0
    %v2551 = vadd.f32 %v2522, %v2550
    %v2552 = vpop.f32.mrf.mxu0
    %v2553 = vadd.f32 %v2524, %v2552
    %2554 = vmatmul.bf16.gmra.mxu0 %v370
    %v2555 = vpop.f32.mrf.mxu0
    %v2556 = vadd.f32 %v2527, %v2555
    %v2557 = vpop.f32.mrf.mxu0
    %v2558 = vadd.f32 %v2529, %v2557
    %2559 = vmatmul.bf16.gmra.mxu0 %v373
    %v2560 = vpop.f32.mrf.mxu0
    %v2561 = vadd.f32 %v2532, %v2560
    %v2562 = vpop.f32.mrf.mxu0
    %v2563 = vadd.f32 %v2534, %v2562
    %2564 = vdwg.mxu0
    %2565 = vmatpush.bf16.msra.mxu0 %v1643
    %2566 = vmatpush.bf16.msra.mxu0 %v1631
    %2567 = vmatpush.bf16.msra.mxu0 %v1619
    %2568 = vmatpush.bf16.msra.mxu0 %v1607
    %2569 = vmatpush.bf16.msra.mxu0 %v1595
    %2570 = vmatpush.bf16.msra.mxu0 %v1583
    %2571 = vmatpush.bf16.msra.mxu0 %v1571
    %2572 = vmatpush.bf16.msra.mxu0 %v1559
    %2573 = vmatmul.bf16.gmra.mxu0 %v362
    %v2574 = vpop.f32.mrf.mxu0
    %v2575 = vadd.f32 %v671, %v2574
    %v2576 = vpop.f32.mrf.mxu0
    %v2577 = vadd.f32 %v671, %v2576
    %2578 = vmatmul.bf16.gmra.mxu0 %v365
    %v2579 = vpop.f32.mrf.mxu0
    %v2580 = vadd.f32 %v671, %v2579
    %v2581 = vpop.f32.mrf.mxu0
    %v2582 = vadd.f32 %v671, %v2581
    %2583 = vmatmul.bf16.gmra.mxu0 %v368
    %v2584 = vpop.f32.mrf.mxu0
    %v2585 = vadd.f32 %v671, %v2584
    %v2586 = vpop.f32.mrf.mxu0
    %v2587 = vadd.f32 %v671, %v2586
    %2588 = vmatmul.bf16.gmra.mxu0 %v371
    %v2589 = vpop.f32.mrf.mxu0
    %v2590 = vadd.f32 %v671, %v2589
    %v2591 = vpop.f32.mrf.mxu0
    %v2592 = vadd.f32 %v671, %v2591
    %2593 = vdwg.mxu0
    %2594 = vmatpush.bf16.msra.mxu0 %v1739
    %2595 = vmatpush.bf16.msra.mxu0 %v1727
    %2596 = vmatpush.bf16.msra.mxu0 %v1715
    %2597 = vmatpush.bf16.msra.mxu0 %v1703
    %2598 = vmatpush.bf16.msra.mxu0 %v1691
    %2599 = vmatpush.bf16.msra.mxu0 %v1679
    %2600 = vmatpush.bf16.msra.mxu0 %v1667
    %2601 = vmatpush.bf16.msra.mxu0 %v1655
    %2602 = vmatmul.bf16.gmra.mxu0 %v363
    %v2603 = vpop.f32.mrf.mxu0
    %v2604 = vadd.f32 %v2575, %v2603
    %v2605 = vpop.f32.mrf.mxu0
    %v2606 = vadd.f32 %v2577, %v2605
    %2607 = vmatmul.bf16.gmra.mxu0 %v366
    %v2608 = vpop.f32.mrf.mxu0
    %v2609 = vadd.f32 %v2580, %v2608
    %v2610 = vpop.f32.mrf.mxu0
    %v2611 = vadd.f32 %v2582, %v2610
    %2612 = vmatmul.bf16.gmra.mxu0 %v369
    %v2613 = vpop.f32.mrf.mxu0
    %v2614 = vadd.f32 %v2585, %v2613
    %v2615 = vpop.f32.mrf.mxu0
    %v2616 = vadd.f32 %v2587, %v2615
    %2617 = vmatmul.bf16.gmra.mxu0 %v372
    %v2618 = vpop.f32.mrf.mxu0
    %v2619 = vadd.f32 %v2590, %v2618
    %v2620 = vpop.f32.mrf.mxu0
    %v2621 = vadd.f32 %v2592, %v2620
    %2622 = vdwg.mxu0
    %2623 = vmatpush.bf16.msra.mxu0 %v1835
    %2624 = vmatpush.bf16.msra.mxu0 %v1823
    %2625 = vmatpush.bf16.msra.mxu0 %v1811
    %2626 = vmatpush.bf16.msra.mxu0 %v1799
    %2627 = vmatpush.bf16.msra.mxu0 %v1787
    %2628 = vmatpush.bf16.msra.mxu0 %v1775
    %2629 = vmatpush.bf16.msra.mxu0 %v1763
    %2630 = vmatpush.bf16.msra.mxu0 %v1751
    %2631 = vmatmul.bf16.gmra.mxu0 %v364
    %v2632 = vpop.f32.mrf.mxu0
    %v2633 = vadd.f32 %v2604, %v2632
    %v2634 = vpop.f32.mrf.mxu0
    %v2635 = vadd.f32 %v2606, %v2634
    %2636 = vmatmul.bf16.gmra.mxu0 %v367
    %v2637 = vpop.f32.mrf.mxu0
    %v2638 = vadd.f32 %v2609, %v2637
    %v2639 = vpop.f32.mrf.mxu0
    %v2640 = vadd.f32 %v2611, %v2639
    %2641 = vmatmul.bf16.gmra.mxu0 %v370
    %v2642 = vpop.f32.mrf.mxu0
    %v2643 = vadd.f32 %v2614, %v2642
    %v2644 = vpop.f32.mrf.mxu0
    %v2645 = vadd.f32 %v2616, %v2644
    %2646 = vmatmul.bf16.gmra.mxu0 %v373
    %v2647 = vpop.f32.mrf.mxu0
    %v2648 = vadd.f32 %v2619, %v2647
    %v2649 = vpop.f32.mrf.mxu0
    %v2650 = vadd.f32 %v2621, %v2649
    %2651 = vdwg.mxu0
    %2652 = vmatpush.bf16.msra.mxu0 %v1644
    %2653 = vmatpush.bf16.msra.mxu0 %v1632
    %2654 = vmatpush.bf16.msra.mxu0 %v1620
    %2655 = vmatpush.bf16.msra.mxu0 %v1608
    %2656 = vmatpush.bf16.msra.mxu0 %v1596
    %2657 = vmatpush.bf16.msra.mxu0 %v1584
    %2658 = vmatpush.bf16.msra.mxu0 %v1572
    %2659 = vmatpush.bf16.msra.mxu0 %v1560
    %2660 = vmatmul.bf16.gmra.mxu0 %v362
    %v2661 = vpop.f32.mrf.mxu0
    %v2662 = vadd.f32 %v672, %v2661
    %v2663 = vpop.f32.mrf.mxu0
    %v2664 = vadd.f32 %v672, %v2663
    %2665 = vmatmul.bf16.gmra.mxu0 %v365
    %v2666 = vpop.f32.mrf.mxu0
    %v2667 = vadd.f32 %v672, %v2666
    %v2668 = vpop.f32.mrf.mxu0
    %v2669 = vadd.f32 %v672, %v2668
    %2670 = vmatmul.bf16.gmra.mxu0 %v368
    %v2671 = vpop.f32.mrf.mxu0
    %v2672 = vadd.f32 %v672, %v2671
    %v2673 = vpop.f32.mrf.mxu0
    %v2674 = vadd.f32 %v672, %v2673
    %2675 = vmatmul.bf16.gmra.mxu0 %v371
    %v2676 = vpop.f32.mrf.mxu0
    %v2677 = vadd.f32 %v672, %v2676
    %v2678 = vpop.f32.mrf.mxu0
    %v2679 = vadd.f32 %v672, %v2678
    %2680 = vdwg.mxu0
    %2681 = vmatpush.bf16.msra.mxu0 %v1740
    %2682 = vmatpush.bf16.msra.mxu0 %v1728
    %2683 = vmatpush.bf16.msra.mxu0 %v1716
    %2684 = vmatpush.bf16.msra.mxu0 %v1704
    %2685 = vmatpush.bf16.msra.mxu0 %v1692
    %2686 = vmatpush.bf16.msra.mxu0 %v1680
    %2687 = vmatpush.bf16.msra.mxu0 %v1668
    %2688 = vmatpush.bf16.msra.mxu0 %v1656
    %2689 = vmatmul.bf16.gmra.mxu0 %v363
    %v2690 = vpop.f32.mrf.mxu0
    %v2691 = vadd.f32 %v2662, %v2690
    %v2692 = vpop.f32.mrf.mxu0
    %v2693 = vadd.f32 %v2664, %v2692
    %2694 = vmatmul.bf16.gmra.mxu0 %v366
    %v2695 = vpop.f32.mrf.mxu0
    %v2696 = vadd.f32 %v2667, %v2695
    %v2697 = vpop.f32.mrf.mxu0
    %v2698 = vadd.f32 %v2669, %v2697
    %2699 = vmatmul.bf16.gmra.mxu0 %v369
    %v2700 = vpop.f32.mrf.mxu0
    %v2701 = vadd.f32 %v2672, %v2700
    %v2702 = vpop.f32.mrf.mxu0
    %v2703 = vadd.f32 %v2674, %v2702
    %2704 = vmatmul.bf16.gmra.mxu0 %v372
    %v2705 = vpop.f32.mrf.mxu0
    %v2706 = vadd.f32 %v2677, %v2705
    %v2707 = vpop.f32.mrf.mxu0
    %v2708 = vadd.f32 %v2679, %v2707
    %2709 = vdwg.mxu0
    %2710 = vmatpush.bf16.msra.mxu0 %v1836
    %2711 = vmatpush.bf16.msra.mxu0 %v1824
    %2712 = vmatpush.bf16.msra.mxu0 %v1812
    %2713 = vmatpush.bf16.msra.mxu0 %v1800
    %2714 = vmatpush.bf16.msra.mxu0 %v1788
    %2715 = vmatpush.bf16.msra.mxu0 %v1776
    %2716 = vmatpush.bf16.msra.mxu0 %v1764
    %2717 = vmatpush.bf16.msra.mxu0 %v1752
    %2718 = vmatmul.bf16.gmra.mxu0 %v364
    %v2719 = vpop.f32.mrf.mxu0
    %v2720 = vadd.f32 %v2691, %v2719
    %v2721 = vpop.f32.mrf.mxu0
    %v2722 = vadd.f32 %v2693, %v2721
    %2723 = vmatmul.bf16.gmra.mxu0 %v367
    %v2724 = vpop.f32.mrf.mxu0
    %v2725 = vadd.f32 %v2696, %v2724
    %v2726 = vpop.f32.mrf.mxu0
    %v2727 = vadd.f32 %v2698, %v2726
    %2728 = vmatmul.bf16.gmra.mxu0 %v370
    %v2729 = vpop.f32.mrf.mxu0
    %v2730 = vadd.f32 %v2701, %v2729
    %v2731 = vpop.f32.mrf.mxu0
    %v2732 = vadd.f32 %v2703, %v2731
    %2733 = vmatmul.bf16.gmra.mxu0 %v373
    %v2734 = vpop.f32.mrf.mxu0
    %v2735 = vadd.f32 %v2706, %v2734
    %v2736 = vpop.f32.mrf.mxu0
    %v2737 = vadd.f32 %v2708, %v2736
    %2738 = vdwg.mxu0
    %2739 = vmatpush.bf16.msra.mxu0 %v1645
    %2740 = vmatpush.bf16.msra.mxu0 %v1633
    %2741 = vmatpush.bf16.msra.mxu0 %v1621
    %2742 = vmatpush.bf16.msra.mxu0 %v1609
    %2743 = vmatpush.bf16.msra.mxu0 %v1597
    %2744 = vmatpush.bf16.msra.mxu0 %v1585
    %2745 = vmatpush.bf16.msra.mxu0 %v1573
    %2746 = vmatpush.bf16.msra.mxu0 %v1561
    %2747 = vmatmul.bf16.gmra.mxu0 %v362
    %v2748 = vpop.f32.mrf.mxu0
    %v2749 = vadd.f32 %v673, %v2748
    %v2750 = vpop.f32.mrf.mxu0
    %v2751 = vadd.f32 %v673, %v2750
    %2752 = vmatmul.bf16.gmra.mxu0 %v365
    %v2753 = vpop.f32.mrf.mxu0
    %v2754 = vadd.f32 %v673, %v2753
    %v2755 = vpop.f32.mrf.mxu0
    %v2756 = vadd.f32 %v673, %v2755
    %2757 = vmatmul.bf16.gmra.mxu0 %v368
    %v2758 = vpop.f32.mrf.mxu0
    %v2759 = vadd.f32 %v673, %v2758
    %v2760 = vpop.f32.mrf.mxu0
    %v2761 = vadd.f32 %v673, %v2760
    %2762 = vmatmul.bf16.gmra.mxu0 %v371
    %v2763 = vpop.f32.mrf.mxu0
    %v2764 = vadd.f32 %v673, %v2763
    %v2765 = vpop.f32.mrf.mxu0
    %v2766 = vadd.f32 %v673, %v2765
    %2767 = vdwg.mxu0
    %2768 = vmatpush.bf16.msra.mxu0 %v1741
    %2769 = vmatpush.bf16.msra.mxu0 %v1729
    %2770 = vmatpush.bf16.msra.mxu0 %v1717
    %2771 = vmatpush.bf16.msra.mxu0 %v1705
    %2772 = vmatpush.bf16.msra.mxu0 %v1693
    %2773 = vmatpush.bf16.msra.mxu0 %v1681
    %2774 = vmatpush.bf16.msra.mxu0 %v1669
    %2775 = vmatpush.bf16.msra.mxu0 %v1657
    %2776 = vmatmul.bf16.gmra.mxu0 %v363
    %v2777 = vpop.f32.mrf.mxu0
    %v2778 = vadd.f32 %v2749, %v2777
    %v2779 = vpop.f32.mrf.mxu0
    %v2780 = vadd.f32 %v2751, %v2779
    %2781 = vmatmul.bf16.gmra.mxu0 %v366
    %v2782 = vpop.f32.mrf.mxu0
    %v2783 = vadd.f32 %v2754, %v2782
    %v2784 = vpop.f32.mrf.mxu0
    %v2785 = vadd.f32 %v2756, %v2784
    %2786 = vmatmul.bf16.gmra.mxu0 %v369
    %v2787 = vpop.f32.mrf.mxu0
    %v2788 = vadd.f32 %v2759, %v2787
    %v2789 = vpop.f32.mrf.mxu0
    %v2790 = vadd.f32 %v2761, %v2789
    %2791 = vmatmul.bf16.gmra.mxu0 %v372
    %v2792 = vpop.f32.mrf.mxu0
    %v2793 = vadd.f32 %v2764, %v2792
    %v2794 = vpop.f32.mrf.mxu0
    %v2795 = vadd.f32 %v2766, %v2794
    %2796 = vdwg.mxu0
    %2797 = vmatpush.bf16.msra.mxu0 %v1837
    %2798 = vmatpush.bf16.msra.mxu0 %v1825
    %2799 = vmatpush.bf16.msra.mxu0 %v1813
    %2800 = vmatpush.bf16.msra.mxu0 %v1801
    %2801 = vmatpush.bf16.msra.mxu0 %v1789
    %2802 = vmatpush.bf16.msra.mxu0 %v1777
    %2803 = vmatpush.bf16.msra.mxu0 %v1765
    %2804 = vmatpush.bf16.msra.mxu0 %v1753
    %2805 = vmatmul.bf16.gmra.mxu0 %v364
    %v2806 = vpop.f32.mrf.mxu0
    %v2807 = vadd.f32 %v2778, %v2806
    %v2808 = vpop.f32.mrf.mxu0
    %v2809 = vadd.f32 %v2780, %v2808
    %2810 = vmatmul.bf16.gmra.mxu0 %v367
    %v2811 = vpop.f32.mrf.mxu0
    %v2812 = vadd.f32 %v2783, %v2811
    %v2813 = vpop.f32.mrf.mxu0
    %v2814 = vadd.f32 %v2785, %v2813
    %2815 = vmatmul.bf16.gmra.mxu0 %v370
    %v2816 = vpop.f32.mrf.mxu0
    %v2817 = vadd.f32 %v2788, %v2816
    %v2818 = vpop.f32.mrf.mxu0
    %v2819 = vadd.f32 %v2790, %v2818
    %2820 = vmatmul.bf16.gmra.mxu0 %v373
    %v2821 = vpop.f32.mrf.mxu0
    %v2822 = vadd.f32 %v2793, %v2821
    %v2823 = vpop.f32.mrf.mxu0
    %v2824 = vadd.f32 %v2795, %v2823
    %2825 = vdwg.mxu0
    %2826 = vmatpush.bf16.msra.mxu0 %v1646
    %2827 = vmatpush.bf16.msra.mxu0 %v1634
    %2828 = vmatpush.bf16.msra.mxu0 %v1622
    %2829 = vmatpush.bf16.msra.mxu0 %v1610
    %2830 = vmatpush.bf16.msra.mxu0 %v1598
    %2831 = vmatpush.bf16.msra.mxu0 %v1586
    %2832 = vmatpush.bf16.msra.mxu0 %v1574
    %2833 = vmatpush.bf16.msra.mxu0 %v1562
    %2834 = vmatmul.bf16.gmra.mxu0 %v362
    %v2835 = vpop.f32.mrf.mxu0
    %v2836 = vadd.f32 %v674, %v2835
    %v2837 = vpop.f32.mrf.mxu0
    %v2838 = vadd.f32 %v674, %v2837
    %2839 = vmatmul.bf16.gmra.mxu0 %v365
    %v2840 = vpop.f32.mrf.mxu0
    %v2841 = vadd.f32 %v674, %v2840
    %v2842 = vpop.f32.mrf.mxu0
    %v2843 = vadd.f32 %v674, %v2842
    %2844 = vmatmul.bf16.gmra.mxu0 %v368
    %v2845 = vpop.f32.mrf.mxu0
    %v2846 = vadd.f32 %v674, %v2845
    %v2847 = vpop.f32.mrf.mxu0
    %v2848 = vadd.f32 %v674, %v2847
    %2849 = vmatmul.bf16.gmra.mxu0 %v371
    %v2850 = vpop.f32.mrf.mxu0
    %v2851 = vadd.f32 %v674, %v2850
    %v2852 = vpop.f32.mrf.mxu0
    %v2853 = vadd.f32 %v674, %v2852
    %2854 = vdwg.mxu0
    %2855 = vmatpush.bf16.msra.mxu0 %v1742
    %2856 = vmatpush.bf16.msra.mxu0 %v1730
    %2857 = vmatpush.bf16.msra.mxu0 %v1718
    %2858 = vmatpush.bf16.msra.mxu0 %v1706
    %2859 = vmatpush.bf16.msra.mxu0 %v1694
    %2860 = vmatpush.bf16.msra.mxu0 %v1682
    %2861 = vmatpush.bf16.msra.mxu0 %v1670
    %2862 = vmatpush.bf16.msra.mxu0 %v1658
    %2863 = vmatmul.bf16.gmra.mxu0 %v363
    %v2864 = vpop.f32.mrf.mxu0
    %v2865 = vadd.f32 %v2836, %v2864
    %v2866 = vpop.f32.mrf.mxu0
    %v2867 = vadd.f32 %v2838, %v2866
    %2868 = vmatmul.bf16.gmra.mxu0 %v366
    %v2869 = vpop.f32.mrf.mxu0
    %v2870 = vadd.f32 %v2841, %v2869
    %v2871 = vpop.f32.mrf.mxu0
    %v2872 = vadd.f32 %v2843, %v2871
    %2873 = vmatmul.bf16.gmra.mxu0 %v369
    %v2874 = vpop.f32.mrf.mxu0
    %v2875 = vadd.f32 %v2846, %v2874
    %v2876 = vpop.f32.mrf.mxu0
    %v2877 = vadd.f32 %v2848, %v2876
    %2878 = vmatmul.bf16.gmra.mxu0 %v372
    %v2879 = vpop.f32.mrf.mxu0
    %v2880 = vadd.f32 %v2851, %v2879
    %v2881 = vpop.f32.mrf.mxu0
    %v2882 = vadd.f32 %v2853, %v2881
    %2883 = vdwg.mxu0
    %2884 = vmatpush.bf16.msra.mxu0 %v1838
    %2885 = vmatpush.bf16.msra.mxu0 %v1826
    %2886 = vmatpush.bf16.msra.mxu0 %v1814
    %2887 = vmatpush.bf16.msra.mxu0 %v1802
    %2888 = vmatpush.bf16.msra.mxu0 %v1790
    %2889 = vmatpush.bf16.msra.mxu0 %v1778
    %2890 = vmatpush.bf16.msra.mxu0 %v1766
    %2891 = vmatpush.bf16.msra.mxu0 %v1754
    %2892 = vmatmul.bf16.gmra.mxu0 %v364
    %v2893 = vpop.f32.mrf.mxu0
    %v2894 = vadd.f32 %v2865, %v2893
    %v2895 = vpop.f32.mrf.mxu0
    %v2896 = vadd.f32 %v2867, %v2895
    %2897 = vmatmul.bf16.gmra.mxu0 %v367
    %v2898 = vpop.f32.mrf.mxu0
    %v2899 = vadd.f32 %v2870, %v2898
    %v2900 = vpop.f32.mrf.mxu0
    %v2901 = vadd.f32 %v2872, %v2900
    %2902 = vmatmul.bf16.gmra.mxu0 %v370
    %v2903 = vpop.f32.mrf.mxu0
    %v2904 = vadd.f32 %v2875, %v2903
    %v2905 = vpop.f32.mrf.mxu0
    %v2906 = vadd.f32 %v2877, %v2905
    %2907 = vmatmul.bf16.gmra.mxu0 %v373
    %v2908 = vpop.f32.mrf.mxu0
    %v2909 = vadd.f32 %v2880, %v2908
    %v2910 = vpop.f32.mrf.mxu0
    %v2911 = vadd.f32 %v2882, %v2910
    %2912 = vdwg.mxu0
    %2913 = vmatpush.bf16.msra.mxu0 %v1647
    %2914 = vmatpush.bf16.msra.mxu0 %v1635
    %2915 = vmatpush.bf16.msra.mxu0 %v1623
    %2916 = vmatpush.bf16.msra.mxu0 %v1611
    %2917 = vmatpush.bf16.msra.mxu0 %v1599
    %2918 = vmatpush.bf16.msra.mxu0 %v1587
    %2919 = vmatpush.bf16.msra.mxu0 %v1575
    %2920 = vmatpush.bf16.msra.mxu0 %v1563
    %2921 = vmatmul.bf16.gmra.mxu0 %v362
    %v2922 = vpop.f32.mrf.mxu0
    %v2923 = vadd.f32 %v675, %v2922
    %v2924 = vpop.f32.mrf.mxu0
    %v2925 = vadd.f32 %v675, %v2924
    %2926 = vmatmul.bf16.gmra.mxu0 %v365
    %v2927 = vpop.f32.mrf.mxu0
    %v2928 = vadd.f32 %v675, %v2927
    %v2929 = vpop.f32.mrf.mxu0
    %v2930 = vadd.f32 %v675, %v2929
    %2931 = vmatmul.bf16.gmra.mxu0 %v368
    %v2932 = vpop.f32.mrf.mxu0
    %v2933 = vadd.f32 %v675, %v2932
    %v2934 = vpop.f32.mrf.mxu0
    %v2935 = vadd.f32 %v675, %v2934
    %2936 = vmatmul.bf16.gmra.mxu0 %v371
    %v2937 = vpop.f32.mrf.mxu0
    %v2938 = vadd.f32 %v675, %v2937
    %v2939 = vpop.f32.mrf.mxu0
    %v2940 = vadd.f32 %v675, %v2939
    %2941 = vdwg.mxu0
    %2942 = vmatpush.bf16.msra.mxu0 %v1743
    %2943 = vmatpush.bf16.msra.mxu0 %v1731
    %2944 = vmatpush.bf16.msra.mxu0 %v1719
    %2945 = vmatpush.bf16.msra.mxu0 %v1707
    %2946 = vmatpush.bf16.msra.mxu0 %v1695
    %2947 = vmatpush.bf16.msra.mxu0 %v1683
    %2948 = vmatpush.bf16.msra.mxu0 %v1671
    %2949 = vmatpush.bf16.msra.mxu0 %v1659
    %2950 = vmatmul.bf16.gmra.mxu0 %v363
    %v2951 = vpop.f32.mrf.mxu0
    %v2952 = vadd.f32 %v2923, %v2951
    %v2953 = vpop.f32.mrf.mxu0
    %v2954 = vadd.f32 %v2925, %v2953
    %2955 = vmatmul.bf16.gmra.mxu0 %v366
    %v2956 = vpop.f32.mrf.mxu0
    %v2957 = vadd.f32 %v2928, %v2956
    %v2958 = vpop.f32.mrf.mxu0
    %v2959 = vadd.f32 %v2930, %v2958
    %2960 = vmatmul.bf16.gmra.mxu0 %v369
    %v2961 = vpop.f32.mrf.mxu0
    %v2962 = vadd.f32 %v2933, %v2961
    %v2963 = vpop.f32.mrf.mxu0
    %v2964 = vadd.f32 %v2935, %v2963
    %2965 = vmatmul.bf16.gmra.mxu0 %v372
    %v2966 = vpop.f32.mrf.mxu0
    %v2967 = vadd.f32 %v2938, %v2966
    %v2968 = vpop.f32.mrf.mxu0
    %v2969 = vadd.f32 %v2940, %v2968
    %2970 = vdwg.mxu0
    %2971 = vmatpush.bf16.msra.mxu0 %v1839
    %2972 = vmatpush.bf16.msra.mxu0 %v1827
    %2973 = vmatpush.bf16.msra.mxu0 %v1815
    %2974 = vmatpush.bf16.msra.mxu0 %v1803
    %2975 = vmatpush.bf16.msra.mxu0 %v1791
    %2976 = vmatpush.bf16.msra.mxu0 %v1779
    %2977 = vmatpush.bf16.msra.mxu0 %v1767
    %2978 = vmatpush.bf16.msra.mxu0 %v1755
    %2979 = vmatmul.bf16.gmra.mxu0 %v364
    %v2980 = vpop.f32.mrf.mxu0
    %v2981 = vadd.f32 %v2952, %v2980
    %v2982 = vpop.f32.mrf.mxu0
    %v2983 = vadd.f32 %v2954, %v2982
    %2984 = vmatmul.bf16.gmra.mxu0 %v367
    %v2985 = vpop.f32.mrf.mxu0
    %v2986 = vadd.f32 %v2957, %v2985
    %v2987 = vpop.f32.mrf.mxu0
    %v2988 = vadd.f32 %v2959, %v2987
    %2989 = vmatmul.bf16.gmra.mxu0 %v370
    %v2990 = vpop.f32.mrf.mxu0
    %v2991 = vadd.f32 %v2962, %v2990
    %v2992 = vpop.f32.mrf.mxu0
    %v2993 = vadd.f32 %v2964, %v2992
    %2994 = vmatmul.bf16.gmra.mxu0 %v373
    %v2995 = vpop.f32.mrf.mxu0
    %v2996 = vadd.f32 %v2967, %v2995
    %v2997 = vpop.f32.mrf.mxu0
    %v2998 = vadd.f32 %v2969, %v2997
    %2999 = vdwg.mxu0
    %3000 = vmatpush.bf16.msra.mxu0 %v1648
    %3001 = vmatpush.bf16.msra.mxu0 %v1636
    %3002 = vmatpush.bf16.msra.mxu0 %v1624
    %3003 = vmatpush.bf16.msra.mxu0 %v1612
    %3004 = vmatpush.bf16.msra.mxu0 %v1600
    %3005 = vmatpush.bf16.msra.mxu0 %v1588
    %3006 = vmatpush.bf16.msra.mxu0 %v1576
    %3007 = vmatpush.bf16.msra.mxu0 %v1564
    %3008 = vmatmul.bf16.gmra.mxu0 %v362
    %v3009 = vpop.f32.mrf.mxu0
    %v3010 = vadd.f32 %v676, %v3009
    %v3011 = vpop.f32.mrf.mxu0
    %v3012 = vadd.f32 %v676, %v3011
    %3013 = vmatmul.bf16.gmra.mxu0 %v365
    %v3014 = vpop.f32.mrf.mxu0
    %v3015 = vadd.f32 %v676, %v3014
    %v3016 = vpop.f32.mrf.mxu0
    %v3017 = vadd.f32 %v676, %v3016
    %3018 = vmatmul.bf16.gmra.mxu0 %v368
    %v3019 = vpop.f32.mrf.mxu0
    %v3020 = vadd.f32 %v676, %v3019
    %v3021 = vpop.f32.mrf.mxu0
    %v3022 = vadd.f32 %v676, %v3021
    %3023 = vmatmul.bf16.gmra.mxu0 %v371
    %v3024 = vpop.f32.mrf.mxu0
    %v3025 = vadd.f32 %v676, %v3024
    %v3026 = vpop.f32.mrf.mxu0
    %v3027 = vadd.f32 %v676, %v3026
    %3028 = vdwg.mxu0
    %3029 = vmatpush.bf16.msra.mxu0 %v1744
    %3030 = vmatpush.bf16.msra.mxu0 %v1732
    %3031 = vmatpush.bf16.msra.mxu0 %v1720
    %3032 = vmatpush.bf16.msra.mxu0 %v1708
    %3033 = vmatpush.bf16.msra.mxu0 %v1696
    %3034 = vmatpush.bf16.msra.mxu0 %v1684
    %3035 = vmatpush.bf16.msra.mxu0 %v1672
    %3036 = vmatpush.bf16.msra.mxu0 %v1660
    %3037 = vmatmul.bf16.gmra.mxu0 %v363
    %v3038 = vpop.f32.mrf.mxu0
    %v3039 = vadd.f32 %v3010, %v3038
    %v3040 = vpop.f32.mrf.mxu0
    %v3041 = vadd.f32 %v3012, %v3040
    %3042 = vmatmul.bf16.gmra.mxu0 %v366
    %v3043 = vpop.f32.mrf.mxu0
    %v3044 = vadd.f32 %v3015, %v3043
    %v3045 = vpop.f32.mrf.mxu0
    %v3046 = vadd.f32 %v3017, %v3045
    %3047 = vmatmul.bf16.gmra.mxu0 %v369
    %v3048 = vpop.f32.mrf.mxu0
    %v3049 = vadd.f32 %v3020, %v3048
    %v3050 = vpop.f32.mrf.mxu0
    %v3051 = vadd.f32 %v3022, %v3050
    %3052 = vmatmul.bf16.gmra.mxu0 %v372
    %v3053 = vpop.f32.mrf.mxu0
    %v3054 = vadd.f32 %v3025, %v3053
    %v3055 = vpop.f32.mrf.mxu0
    %v3056 = vadd.f32 %v3027, %v3055
    %3057 = vdwg.mxu0
    %3058 = vmatpush.bf16.msra.mxu0 %v1840
    %3059 = vmatpush.bf16.msra.mxu0 %v1828
    %3060 = vmatpush.bf16.msra.mxu0 %v1816
    %3061 = vmatpush.bf16.msra.mxu0 %v1804
    %3062 = vmatpush.bf16.msra.mxu0 %v1792
    %3063 = vmatpush.bf16.msra.mxu0 %v1780
    %3064 = vmatpush.bf16.msra.mxu0 %v1768
    %3065 = vmatpush.bf16.msra.mxu0 %v1756
    %3066 = vmatmul.bf16.gmra.mxu0 %v364
    %v3067 = vpop.f32.mrf.mxu0
    %v3068 = vadd.f32 %v3039, %v3067
    %v3069 = vpop.f32.mrf.mxu0
    %v3070 = vadd.f32 %v3041, %v3069
    %3071 = vmatmul.bf16.gmra.mxu0 %v367
    %v3072 = vpop.f32.mrf.mxu0
    %v3073 = vadd.f32 %v3044, %v3072
    %v3074 = vpop.f32.mrf.mxu0
    %v3075 = vadd.f32 %v3046, %v3074
    %3076 = vmatmul.bf16.gmra.mxu0 %v370
    %v3077 = vpop.f32.mrf.mxu0
    %v3078 = vadd.f32 %v3049, %v3077
    %v3079 = vpop.f32.mrf.mxu0
    %v3080 = vadd.f32 %v3051, %v3079
    %3081 = vmatmul.bf16.gmra.mxu0 %v373
    %v3082 = vpop.f32.mrf.mxu0
    %v3083 = vadd.f32 %v3054, %v3082
    %v3084 = vpop.f32.mrf.mxu0
    %v3085 = vadd.f32 %v3056, %v3084
    %3086 = vdwg.mxu0
    %3087 = vmatpush.bf16.msra.mxu0 %v1649
    %3088 = vmatpush.bf16.msra.mxu0 %v1637
    %3089 = vmatpush.bf16.msra.mxu0 %v1625
    %3090 = vmatpush.bf16.msra.mxu0 %v1613
    %3091 = vmatpush.bf16.msra.mxu0 %v1601
    %3092 = vmatpush.bf16.msra.mxu0 %v1589
    %3093 = vmatpush.bf16.msra.mxu0 %v1577
    %3094 = vmatpush.bf16.msra.mxu0 %v1565
    %3095 = vmatmul.bf16.gmra.mxu0 %v362
    %v3096 = vpop.f32.mrf.mxu0
    %v3097 = vadd.f32 %v677, %v3096
    %v3098 = vpop.f32.mrf.mxu0
    %v3099 = vadd.f32 %v677, %v3098
    %3100 = vmatmul.bf16.gmra.mxu0 %v365
    %v3101 = vpop.f32.mrf.mxu0
    %v3102 = vadd.f32 %v677, %v3101
    %v3103 = vpop.f32.mrf.mxu0
    %v3104 = vadd.f32 %v677, %v3103
    %3105 = vmatmul.bf16.gmra.mxu0 %v368
    %v3106 = vpop.f32.mrf.mxu0
    %v3107 = vadd.f32 %v677, %v3106
    %v3108 = vpop.f32.mrf.mxu0
    %v3109 = vadd.f32 %v677, %v3108
    %3110 = vmatmul.bf16.gmra.mxu0 %v371
    %v3111 = vpop.f32.mrf.mxu0
    %v3112 = vadd.f32 %v677, %v3111
    %v3113 = vpop.f32.mrf.mxu0
    %v3114 = vadd.f32 %v677, %v3113
    %3115 = vdwg.mxu0
    %3116 = vmatpush.bf16.msra.mxu0 %v1745
    %3117 = vmatpush.bf16.msra.mxu0 %v1733
    %3118 = vmatpush.bf16.msra.mxu0 %v1721
    %3119 = vmatpush.bf16.msra.mxu0 %v1709
    %3120 = vmatpush.bf16.msra.mxu0 %v1697
    %3121 = vmatpush.bf16.msra.mxu0 %v1685
    %3122 = vmatpush.bf16.msra.mxu0 %v1673
    %3123 = vmatpush.bf16.msra.mxu0 %v1661
    %3124 = vmatmul.bf16.gmra.mxu0 %v363
    %v3125 = vpop.f32.mrf.mxu0
    %v3126 = vadd.f32 %v3097, %v3125
    %v3127 = vpop.f32.mrf.mxu0
    %v3128 = vadd.f32 %v3099, %v3127
    %3129 = vmatmul.bf16.gmra.mxu0 %v366
    %v3130 = vpop.f32.mrf.mxu0
    %v3131 = vadd.f32 %v3102, %v3130
    %v3132 = vpop.f32.mrf.mxu0
    %v3133 = vadd.f32 %v3104, %v3132
    %3134 = vmatmul.bf16.gmra.mxu0 %v369
    %v3135 = vpop.f32.mrf.mxu0
    %v3136 = vadd.f32 %v3107, %v3135
    %v3137 = vpop.f32.mrf.mxu0
    %v3138 = vadd.f32 %v3109, %v3137
    %3139 = vmatmul.bf16.gmra.mxu0 %v372
    %v3140 = vpop.f32.mrf.mxu0
    %v3141 = vadd.f32 %v3112, %v3140
    %v3142 = vpop.f32.mrf.mxu0
    %v3143 = vadd.f32 %v3114, %v3142
    %3144 = vdwg.mxu0
    %3145 = vmatpush.bf16.msra.mxu0 %v1841
    %3146 = vmatpush.bf16.msra.mxu0 %v1829
    %3147 = vmatpush.bf16.msra.mxu0 %v1817
    %3148 = vmatpush.bf16.msra.mxu0 %v1805
    %3149 = vmatpush.bf16.msra.mxu0 %v1793
    %3150 = vmatpush.bf16.msra.mxu0 %v1781
    %3151 = vmatpush.bf16.msra.mxu0 %v1769
    %3152 = vmatpush.bf16.msra.mxu0 %v1757
    %3153 = vmatmul.bf16.gmra.mxu0 %v364
    %v3154 = vpop.f32.mrf.mxu0
    %v3155 = vadd.f32 %v3126, %v3154
    %v3156 = vpop.f32.mrf.mxu0
    %v3157 = vadd.f32 %v3128, %v3156
    %3158 = vmatmul.bf16.gmra.mxu0 %v367
    %v3159 = vpop.f32.mrf.mxu0
    %v3160 = vadd.f32 %v3131, %v3159
    %v3161 = vpop.f32.mrf.mxu0
    %v3162 = vadd.f32 %v3133, %v3161
    %3163 = vmatmul.bf16.gmra.mxu0 %v370
    %v3164 = vpop.f32.mrf.mxu0
    %v3165 = vadd.f32 %v3136, %v3164
    %v3166 = vpop.f32.mrf.mxu0
    %v3167 = vadd.f32 %v3138, %v3166
    %3168 = vmatmul.bf16.gmra.mxu0 %v373
    %v3169 = vpop.f32.mrf.mxu0
    %v3170 = vadd.f32 %v3141, %v3169
    %v3171 = vpop.f32.mrf.mxu0
    %v3172 = vadd.f32 %v3143, %v3171
    %3173 = vdwg.mxu0
    %v3174 = vmax.f32 %v2198, 0.0
    %v3175 = vmax.f32 %v2285, 0.0
    %v3176 = vmax.f32 %v2372, 0.0
    %v3177 = vmax.f32 %v2459, 0.0
    %v3178 = vmax.f32 %v2546, 0.0
    %v3179 = vmax.f32 %v2633, 0.0
    %v3180 = vmax.f32 %v2720, 0.0
    %v3181 = vmax.f32 %v2807, 0.0
    %v3182 = vmax.f32 %v2894, 0.0
    %v3183 = vmax.f32 %v2981, 0.0
    %v3184 = vmax.f32 %v3068, 0.0
    %v3185 = vmax.f32 %v3155, 0.0
    %v3186 = vmax.f32 %v2200, 0.0
    %v3187 = vmax.f32 %v2287, 0.0
    %v3188 = vmax.f32 %v2374, 0.0
    %v3189 = vmax.f32 %v2461, 0.0
    %v3190 = vmax.f32 %v2548, 0.0
    %v3191 = vmax.f32 %v2635, 0.0
    %v3192 = vmax.f32 %v2722, 0.0
    %v3193 = vmax.f32 %v2809, 0.0
    %v3194 = vmax.f32 %v2896, 0.0
    %v3195 = vmax.f32 %v2983, 0.0
    %v3196 = vmax.f32 %v3070, 0.0
    %v3197 = vmax.f32 %v3157, 0.0
    %v3198 = vmax.f32 %v2203, 0.0
    %v3199 = vmax.f32 %v2290, 0.0
    %v3200 = vmax.f32 %v2377, 0.0
    %v3201 = vmax.f32 %v2464, 0.0
    %v3202 = vmax.f32 %v2551, 0.0
    %v3203 = vmax.f32 %v2638, 0.0
    %v3204 = vmax.f32 %v2725, 0.0
    %v3205 = vmax.f32 %v2812, 0.0
    %v3206 = vmax.f32 %v2899, 0.0
    %v3207 = vmax.f32 %v2986, 0.0
    %v3208 = vmax.f32 %v3073, 0.0
    %v3209 = vmax.f32 %v3160, 0.0
    %v3210 = vmax.f32 %v2205, 0.0
    %v3211 = vmax.f32 %v2292, 0.0
    %v3212 = vmax.f32 %v2379, 0.0
    %v3213 = vmax.f32 %v2466, 0.0
    %v3214 = vmax.f32 %v2553, 0.0
    %v3215 = vmax.f32 %v2640, 0.0
    %v3216 = vmax.f32 %v2727, 0.0
    %v3217 = vmax.f32 %v2814, 0.0
    %v3218 = vmax.f32 %v2901, 0.0
    %v3219 = vmax.f32 %v2988, 0.0
    %v3220 = vmax.f32 %v3075, 0.0
    %v3221 = vmax.f32 %v3162, 0.0
    %v3222 = vmax.f32 %v2208, 0.0
    %v3223 = vmax.f32 %v2295, 0.0
    %v3224 = vmax.f32 %v2382, 0.0
    %v3225 = vmax.f32 %v2469, 0.0
    %v3226 = vmax.f32 %v2556, 0.0
    %v3227 = vmax.f32 %v2643, 0.0
    %v3228 = vmax.f32 %v2730, 0.0
    %v3229 = vmax.f32 %v2817, 0.0
    %v3230 = vmax.f32 %v2904, 0.0
    %v3231 = vmax.f32 %v2991, 0.0
    %v3232 = vmax.f32 %v3078, 0.0
    %v3233 = vmax.f32 %v3165, 0.0
    %v3234 = vmax.f32 %v2210, 0.0
    %v3235 = vmax.f32 %v2297, 0.0
    %v3236 = vmax.f32 %v2384, 0.0
    %v3237 = vmax.f32 %v2471, 0.0
    %v3238 = vmax.f32 %v2558, 0.0
    %v3239 = vmax.f32 %v2645, 0.0
    %v3240 = vmax.f32 %v2732, 0.0
    %v3241 = vmax.f32 %v2819, 0.0
    %v3242 = vmax.f32 %v2906, 0.0
    %v3243 = vmax.f32 %v2993, 0.0
    %v3244 = vmax.f32 %v3080, 0.0
    %v3245 = vmax.f32 %v3167, 0.0
    %v3246 = vmax.f32 %v2213, 0.0
    %v3247 = vmax.f32 %v2300, 0.0
    %v3248 = vmax.f32 %v2387, 0.0
    %v3249 = vmax.f32 %v2474, 0.0
    %v3250 = vmax.f32 %v2561, 0.0
    %v3251 = vmax.f32 %v2648, 0.0
    %v3252 = vmax.f32 %v2735, 0.0
    %v3253 = vmax.f32 %v2822, 0.0
    %v3254 = vmax.f32 %v2909, 0.0
    %v3255 = vmax.f32 %v2996, 0.0
    %v3256 = vmax.f32 %v3083, 0.0
    %v3257 = vmax.f32 %v3170, 0.0
    %v3258 = vmax.f32 %v2215, 0.0
    %v3259 = vmax.f32 %v2302, 0.0
    %v3260 = vmax.f32 %v2389, 0.0
    %v3261 = vmax.f32 %v2476, 0.0
    %v3262 = vmax.f32 %v2563, 0.0
    %v3263 = vmax.f32 %v2650, 0.0
    %v3264 = vmax.f32 %v2737, 0.0
    %v3265 = vmax.f32 %v2824, 0.0
    %v3266 = vmax.f32 %v2911, 0.0
    %v3267 = vmax.f32 %v2998, 0.0
    %v3268 = vmax.f32 %v3085, 0.0
    %v3269 = vmax.f32 %v3172, 0.0
    %v3270 = vpack.c.bf16 %v3186, %v3174
    %v3271 = vpack.c.bf16 %v3187, %v3175
    %v3272 = vpack.c.bf16 %v3188, %v3176
    %v3273 = vpack.c.bf16 %v3189, %v3177
    %v3274 = vpack.c.bf16 %v3190, %v3178
    %v3275 = vpack.c.bf16 %v3191, %v3179
    %v3276 = vpack.c.bf16 %v3192, %v3180
    %v3277 = vpack.c.bf16 %v3193, %v3181
    %v3278 = vpack.c.bf16 %v3194, %v3182
    %v3279 = vpack.c.bf16 %v3195, %v3183
    %v3280 = vpack.c.bf16 %v3196, %v3184
    %v3281 = vpack.c.bf16 %v3197, %v3185
    %v3282 = vpack.c.bf16 %v3210, %v3198
    %v3283 = vpack.c.bf16 %v3211, %v3199
    %v3284 = vpack.c.bf16 %v3212, %v3200
    %v3285 = vpack.c.bf16 %v3213, %v3201
    %v3286 = vpack.c.bf16 %v3214, %v3202
    %v3287 = vpack.c.bf16 %v3215, %v3203
    %v3288 = vpack.c.bf16 %v3216, %v3204
    %v3289 = vpack.c.bf16 %v3217, %v3205
    %v3290 = vpack.c.bf16 %v3218, %v3206
    %v3291 = vpack.c.bf16 %v3219, %v3207
    %v3292 = vpack.c.bf16 %v3220, %v3208
    %v3293 = vpack.c.bf16 %v3221, %v3209
    %v3294 = vpack.c.bf16 %v3234, %v3222
    %v3295 = vpack.c.bf16 %v3235, %v3223
    %v3296 = vpack.c.bf16 %v3236, %v3224
    %v3297 = vpack.c.bf16 %v3237, %v3225
    %v3298 = vpack.c.bf16 %v3238, %v3226
    %v3299 = vpack.c.bf16 %v3239, %v3227
    %v3300 = vpack.c.bf16 %v3240, %v3228
    %v3301 = vpack.c.bf16 %v3241, %v3229
    %v3302 = vpack.c.bf16 %v3242, %v3230
    %v3303 = vpack.c.bf16 %v3243, %v3231
    %v3304 = vpack.c.bf16 %v3244, %v3232
    %v3305 = vpack.c.bf16 %v3245, %v3233
    %v3306 = vpack.c.bf16 %v3258, %v3246
    %v3307 = vpack.c.bf16 %v3259, %v3247
    %v3308 = vpack.c.bf16 %v3260, %v3248
    %v3309 = vpack.c.bf16 %v3261, %v3249
    %v3310 = vpack.c.bf16 %v3262, %v3250
    %v3311 = vpack.c.bf16 %v3263, %v3251
    %v3312 = vpack.c.bf16 %v3264, %v3252
    %v3313 = vpack.c.bf16 %v3265, %v3253
    %v3314 = vpack.c.bf16 %v3266, %v3254
    %v3315 = vpack.c.bf16 %v3267, %v3255
    %v3316 = vpack.c.bf16 %v3268, %v3256
    %v3317 = vpack.c.bf16 %v3269, %v3257
    %v3318 = vld [vmem:[%s5] sm:$0xff]
    %v3319 = vld [vmem:[%s5 + $0x8] sm:$0xf]
    %v3320 = vld [vmem:[%s5 + $0xc] sm:$0xff]
    %v3321 = vld [vmem:[%s5 + $0x14] sm:$0xf]
    %v3322 = vld [vmem:[%s5 + $0x18] sm:$0xff]
    %v3323 = vld [vmem:[%s5 + $0x20] sm:$0xf]
    %v3324 = vld [vmem:[%s5 + $0x24] sm:$0xff]
    %v3325 = vld [vmem:[%s5 + $0x2c] sm:$0xf]
    %v3326 = vld [vmem:[%s5 + $0x30] sm:$0xff]
    %v3327 = vld [vmem:[%s5 + $0x38] sm:$0xf]
    %v3328 = vld [vmem:[%s5 + $0x3c] sm:$0xff]
    %v3329 = vld [vmem:[%s5 + $0x44] sm:$0xf]
    %v3330 = vld [vmem:[%s5 + $0x48] sm:$0xff]
    %v3331 = vld [vmem:[%s5 + $0x50] sm:$0xf]
    %v3332 = vld [vmem:[%s5 + $0x54] sm:$0xff]
    %v3333 = vld [vmem:[%s5 + $0x5c] sm:$0xf]
    %v3334 = vld [vmem:[%s5 + $0x60] sm:$0xff]
    %v3335 = vld [vmem:[%s5 + $0x68] sm:$0xf]
    %v3336 = vld [vmem:[%s5 + $0x6c] sm:$0xff]
    %v3337 = vld [vmem:[%s5 + $0x74] sm:$0xf]
    %v3338 = vld [vmem:[%s5 + $0x78] sm:$0xff]
    %v3339 = vld [vmem:[%s5 + $0x80] sm:$0xf]
    %v3340 = vld [vmem:[%s5 + $0x84] sm:$0xff]
    %v3341 = vld [vmem:[%s5 + $0x8c] sm:$0xf]
    %v3342 = vld [vmem:[%s5 + $0x90] sm:$0xff]
    %v3343 = vld [vmem:[%s5 + $0x98] sm:$0xf]
    %v3344 = vld [vmem:[%s5 + $0x9c] sm:$0xff]
    %v3345 = vld [vmem:[%s5 + $0xa4] sm:$0xf]
    %v3346 = vld [vmem:[%s5 + $0xa8] sm:$0xff]
    %v3347 = vld [vmem:[%s5 + $0xb0] sm:$0xf]
    %v3348 = vld [vmem:[%s5 + $0xb4] sm:$0xff]
    %v3349 = vld [vmem:[%s5 + $0xbc] sm:$0xf]
    %v3350 = vld [vmem:[%s5 + $0xc0] sm:$0xff]
    %v3351 = vld [vmem:[%s5 + $0xc8] sm:$0xf]
    %v3352 = vld [vmem:[%s5 + $0xcc] sm:$0xff]
    %v3353 = vld [vmem:[%s5 + $0xd4] sm:$0xf]
    %v3354 = vld [vmem:[%s5 + $0xd8] sm:$0xff]
    %v3355 = vld [vmem:[%s5 + $0xe0] sm:$0xf]
    %v3356 = vld [vmem:[%s5 + $0xe4] sm:$0xff]
    %v3357 = vld [vmem:[%s5 + $0xec] sm:$0xf]
    %v3358 = vld [vmem:[%s5 + $0xf0] sm:$0xff]
    %v3359 = vld [vmem:[%s5 + $0xf8] sm:$0xf]
    %v3360 = vld [vmem:[%s5 + $0xfc] sm:$0xff]
    %v3361 = vld [vmem:[%s5 + $0x104] sm:$0xf]
    %v3362 = vld [vmem:[%s5 + $0x108] sm:$0xff]
    %v3363 = vld [vmem:[%s5 + $0x110] sm:$0xf]
    %v3364 = vld [vmem:[%s5 + $0x114] sm:$0xff]
    %v3365 = vld [vmem:[%s5 + $0x11c] sm:$0xf]
    %v3366 = vld [vmem:[%s5 + $0x120] sm:$0xff]
    %v3367 = vld [vmem:[%s5 + $0x128] sm:$0xf]
    %v3368 = vld [vmem:[%s5 + $0x12c] sm:$0xff]
    %v3369 = vld [vmem:[%s5 + $0x134] sm:$0xf]
    %v3370 = vld [vmem:[%s5 + $0x138] sm:$0xff]
    %v3371 = vld [vmem:[%s5 + $0x140] sm:$0xf]
    %v3372 = vld [vmem:[%s5 + $0x144] sm:$0xff]
    %v3373 = vld [vmem:[%s5 + $0x14c] sm:$0xf]
    %v3374 = vld [vmem:[%s5 + $0x150] sm:$0xff]
    %v3375 = vld [vmem:[%s5 + $0x158] sm:$0xf]
    %v3376 = vld [vmem:[%s5 + $0x15c] sm:$0xff]
    %v3377 = vld [vmem:[%s5 + $0x164] sm:$0xf]
    %v3378 = vld [vmem:[%s5 + $0x168] sm:$0xff]
    %v3379 = vld [vmem:[%s5 + $0x170] sm:$0xf]
    %v3380 = vld [vmem:[%s5 + $0x174] sm:$0xff]
    %v3381 = vld [vmem:[%s5 + $0x17c] sm:$0xf]
    %v3382 = vld [vmem:[%s5 + $0x180] sm:$0xff]
    %v3383 = vld [vmem:[%s5 + $0x188] sm:$0xf]
    %v3384 = vld [vmem:[%s5 + $0x18c] sm:$0xff]
    %v3385 = vld [vmem:[%s5 + $0x194] sm:$0xf]
    %v3386 = vld [vmem:[%s5 + $0x198] sm:$0xff]
    %v3387 = vld [vmem:[%s5 + $0x1a0] sm:$0xf]
    %v3388 = vld [vmem:[%s5 + $0x1a4] sm:$0xff]
    %v3389 = vld [vmem:[%s5 + $0x1ac] sm:$0xf]
    %v3390 = vld [vmem:[%s5 + $0x1b0] sm:$0xff]
    %v3391 = vld [vmem:[%s5 + $0x1b8] sm:$0xf]
    %v3392 = vld [vmem:[%s5 + $0x1bc] sm:$0xff]
    %v3393 = vld [vmem:[%s5 + $0x1c4] sm:$0xf]
    %v3394 = vld [vmem:[%s5 + $0x1c8] sm:$0xff]
    %v3395 = vld [vmem:[%s5 + $0x1d0] sm:$0xf]
    %v3396 = vld [vmem:[%s5 + $0x1d4] sm:$0xff]
    %v3397 = vld [vmem:[%s5 + $0x1dc] sm:$0xf]
    %v3398 = vld [vmem:[%s5 + $0x1e0] sm:$0xff]
    %v3399 = vld [vmem:[%s5 + $0x1e8] sm:$0xf]
    %v3400 = vld [vmem:[%s5 + $0x1ec] sm:$0xff]
    %v3401 = vld [vmem:[%s5 + $0x1f4] sm:$0xf]
    %v3402 = vld [vmem:[%s5 + $0x1f8] sm:$0xff]
    %v3403 = vld [vmem:[%s5 + $0x200] sm:$0xf]
    %v3404 = vld [vmem:[%s5 + $0x204] sm:$0xff]
    %v3405 = vld [vmem:[%s5 + $0x20c] sm:$0xf]
    %v3406 = vld [vmem:[%s5 + $0x210] sm:$0xff]
    %v3407 = vld [vmem:[%s5 + $0x218] sm:$0xf]
    %v3408 = vld [vmem:[%s5 + $0x21c] sm:$0xff]
    %v3409 = vld [vmem:[%s5 + $0x224] sm:$0xf]
    %v3410 = vld [vmem:[%s5 + $0x228] sm:$0xff]
    %v3411 = vld [vmem:[%s5 + $0x230] sm:$0xf]
    %v3412 = vld [vmem:[%s5 + $0x234] sm:$0xff]
    %v3413 = vld [vmem:[%s5 + $0x23c] sm:$0xf]
    %v3414 = vld [vmem:[%s5 + $0x240] sm:$0xff]
    %v3415 = vld [vmem:[%s5 + $0x248] sm:$0xf]
    %v3416 = vld [vmem:[%s5 + $0x24c] sm:$0xff]
    %v3417 = vld [vmem:[%s5 + $0x254] sm:$0xf]
    %v3418 = vld [vmem:[%s5 + $0x258] sm:$0xff]
    %v3419 = vld [vmem:[%s5 + $0x260] sm:$0xf]
    %v3420 = vld [vmem:[%s5 + $0x264] sm:$0xff]
    %v3421 = vld [vmem:[%s5 + $0x26c] sm:$0xf]
    %v3422 = vld [vmem:[%s5 + $0x270] sm:$0xff]
    %v3423 = vld [vmem:[%s5 + $0x278] sm:$0xf]
    %v3424 = vld [vmem:[%s5 + $0x27c] sm:$0xff]
    %v3425 = vld [vmem:[%s5 + $0x284] sm:$0xf]
    %v3426 = vld [vmem:[%s5 + $0x288] sm:$0xff]
    %v3427 = vld [vmem:[%s5 + $0x290] sm:$0xf]
    %v3428 = vld [vmem:[%s5 + $0x294] sm:$0xff]
    %v3429 = vld [vmem:[%s5 + $0x29c] sm:$0xf]
    %v3430 = vld [vmem:[%s5 + $0x2a0] sm:$0xff]
    %v3431 = vld [vmem:[%s5 + $0x2a8] sm:$0xf]
    %v3432 = vld [vmem:[%s5 + $0x2ac] sm:$0xff]
    %v3433 = vld [vmem:[%s5 + $0x2b4] sm:$0xf]
    %v3434 = vld [vmem:[%s5 + $0x2b8] sm:$0xff]
    %v3435 = vld [vmem:[%s5 + $0x2c0] sm:$0xf]
    %v3436 = vld [vmem:[%s5 + $0x2c4] sm:$0xff]
    %v3437 = vld [vmem:[%s5 + $0x2cc] sm:$0xf]
    %v3438 = vld [vmem:[%s5 + $0x2d0] sm:$0xff]
    %v3439 = vld [vmem:[%s5 + $0x2d8] sm:$0xf]
    %v3440 = vld [vmem:[%s5 + $0x2dc] sm:$0xff]
    %v3441 = vld [vmem:[%s5 + $0x2e4] sm:$0xf]
    %v3442 = vld [vmem:[%s5 + $0x2e8] sm:$0xff]
    %v3443 = vld [vmem:[%s5 + $0x2f0] sm:$0xf]
    %v3444 = vld [vmem:[%s5 + $0x2f4] sm:$0xff]
    %v3445 = vld [vmem:[%s5 + $0x2fc] sm:$0xf]
    %v3446 = vld [vmem:[%s5 + $0x300] sm:$0xff]
    %v3447 = vld [vmem:[%s5 + $0x308] sm:$0xf]
    %v3448 = vld [vmem:[%s5 + $0x30c] sm:$0xff]
    %v3449 = vld [vmem:[%s5 + $0x314] sm:$0xf]
    %v3450 = vld [vmem:[%s5 + $0x318] sm:$0xff]
    %v3451 = vld [vmem:[%s5 + $0x320] sm:$0xf]
    %v3452 = vld [vmem:[%s5 + $0x324] sm:$0xff]
    %v3453 = vld [vmem:[%s5 + $0x32c] sm:$0xf]
    %v3454 = vld [vmem:[%s5 + $0x330] sm:$0xff]
    %v3455 = vld [vmem:[%s5 + $0x338] sm:$0xf]
    %v3456 = vld [vmem:[%s5 + $0x33c] sm:$0xff]
    %v3457 = vld [vmem:[%s5 + $0x344] sm:$0xf]
    %v3458 = vld [vmem:[%s5 + $0x348] sm:$0xff]
    %v3459 = vld [vmem:[%s5 + $0x350] sm:$0xf]
    %v3460 = vld [vmem:[%s5 + $0x354] sm:$0xff]
    %v3461 = vld [vmem:[%s5 + $0x35c] sm:$0xf]
    %v3462 = vld [vmem:[%s5 + $0x360] sm:$0xff]
    %v3463 = vld [vmem:[%s5 + $0x368] sm:$0xf]
    %v3464 = vld [vmem:[%s5 + $0x36c] sm:$0xff]
    %v3465 = vld [vmem:[%s5 + $0x374] sm:$0xf]
    %v3466 = vld [vmem:[%s5 + $0x378] sm:$0xff]
    %v3467 = vld [vmem:[%s5 + $0x380] sm:$0xf]
    %v3468 = vld [vmem:[%s5 + $0x384] sm:$0xff]
    %v3469 = vld [vmem:[%s5 + $0x38c] sm:$0xf]
    %v3470 = vld [vmem:[%s5 + $0x390] sm:$0xff]
    %v3471 = vld [vmem:[%s5 + $0x398] sm:$0xf]
    %v3472 = vld [vmem:[%s5 + $0x39c] sm:$0xff]
    %v3473 = vld [vmem:[%s5 + $0x3a4] sm:$0xf]
    %v3474 = vld [vmem:[%s5 + $0x3a8] sm:$0xff]
    %v3475 = vld [vmem:[%s5 + $0x3b0] sm:$0xf]
    %v3476 = vld [vmem:[%s5 + $0x3b4] sm:$0xff]
    %v3477 = vld [vmem:[%s5 + $0x3bc] sm:$0xf]
    %v3478 = vld [vmem:[%s5 + $0x3c0] sm:$0xff]
    %v3479 = vld [vmem:[%s5 + $0x3c8] sm:$0xf]
    %v3480 = vld [vmem:[%s5 + $0x3cc] sm:$0xff]
    %v3481 = vld [vmem:[%s5 + $0x3d4] sm:$0xf]
    %v3482 = vld [vmem:[%s5 + $0x3d8] sm:$0xff]
    %v3483 = vld [vmem:[%s5 + $0x3e0] sm:$0xf]
    %v3484 = vld [vmem:[%s5 + $0x3e4] sm:$0xff]
    %v3485 = vld [vmem:[%s5 + $0x3ec] sm:$0xf]
    %v3486 = vld [vmem:[%s5 + $0x3f0] sm:$0xff]
    %v3487 = vld [vmem:[%s5 + $0x3f8] sm:$0xf]
    %v3488 = vld [vmem:[%s5 + $0x3fc] sm:$0xff]
    %v3489 = vld [vmem:[%s5 + $0x404] sm:$0xf]
    %v3490 = vld [vmem:[%s5 + $0x408] sm:$0xff]
    %v3491 = vld [vmem:[%s5 + $0x410] sm:$0xf]
    %v3492 = vld [vmem:[%s5 + $0x414] sm:$0xff]
    %v3493 = vld [vmem:[%s5 + $0x41c] sm:$0xf]
    %v3494 = vld [vmem:[%s5 + $0x420] sm:$0xff]
    %v3495 = vld [vmem:[%s5 + $0x428] sm:$0xf]
    %v3496 = vld [vmem:[%s5 + $0x42c] sm:$0xff]
    %v3497 = vld [vmem:[%s5 + $0x434] sm:$0xf]
    %v3498 = vld [vmem:[%s5 + $0x438] sm:$0xff]
    %v3499 = vld [vmem:[%s5 + $0x440] sm:$0xf]
    %v3500 = vld [vmem:[%s5 + $0x444] sm:$0xff]
    %v3501 = vld [vmem:[%s5 + $0x44c] sm:$0xf]
    %v3502 = vld [vmem:[%s5 + $0x450] sm:$0xff]
    %v3503 = vld [vmem:[%s5 + $0x458] sm:$0xf]
    %v3504 = vld [vmem:[%s5 + $0x45c] sm:$0xff]
    %v3505 = vld [vmem:[%s5 + $0x464] sm:$0xf]
    %v3506 = vld [vmem:[%s5 + $0x468] sm:$0xff]
    %v3507 = vld [vmem:[%s5 + $0x470] sm:$0xf]
    %v3508 = vld [vmem:[%s5 + $0x474] sm:$0xff]
    %v3509 = vld [vmem:[%s5 + $0x47c] sm:$0xf]
    %v3510 = vld [vmem:[%s5 + $0x480] sm:$0xff]
    %v3511 = vld [vmem:[%s5 + $0x488] sm:$0xf]
    %v3512 = vld [vmem:[%s5 + $0x48c] sm:$0xff]
    %v3513 = vld [vmem:[%s5 + $0x494] sm:$0xf]
    %v3514 = vld [vmem:[%s5 + $0x498] sm:$0xff]
    %v3515 = vld [vmem:[%s5 + $0x4a0] sm:$0xf]
    %v3516 = vld [vmem:[%s5 + $0x4a4] sm:$0xff]
    %v3517 = vld [vmem:[%s5 + $0x4ac] sm:$0xf]
    %v3518 = vld [vmem:[%s5 + $0x4b0] sm:$0xff]
    %v3519 = vld [vmem:[%s5 + $0x4b8] sm:$0xf]
    %v3520 = vld [vmem:[%s5 + $0x4bc] sm:$0xff]
    %v3521 = vld [vmem:[%s5 + $0x4c4] sm:$0xf]
    %v3522 = vld [vmem:[%s5 + $0x4c8] sm:$0xff]
    %v3523 = vld [vmem:[%s5 + $0x4d0] sm:$0xf]
    %v3524 = vld [vmem:[%s5 + $0x4d4] sm:$0xff]
    %v3525 = vld [vmem:[%s5 + $0x4dc] sm:$0xf]
    %v3526 = vld [vmem:[%s5 + $0x4e0] sm:$0xff]
    %v3527 = vld [vmem:[%s5 + $0x4e8] sm:$0xf]
    %v3528 = vld [vmem:[%s5 + $0x4ec] sm:$0xff]
    %v3529 = vld [vmem:[%s5 + $0x4f4] sm:$0xf]
    %v3530 = vld [vmem:[%s5 + $0x4f8] sm:$0xff]
    %v3531 = vld [vmem:[%s5 + $0x500] sm:$0xf]
    %v3532 = vld [vmem:[%s5 + $0x504] sm:$0xff]
    %v3533 = vld [vmem:[%s5 + $0x50c] sm:$0xf]
    %v3534 = vld [vmem:[%s5 + $0x510] sm:$0xff]
    %v3535 = vld [vmem:[%s5 + $0x518] sm:$0xf]
    %v3536 = vld [vmem:[%s5 + $0x51c] sm:$0xff]
    %v3537 = vld [vmem:[%s5 + $0x524] sm:$0xf]
    %v3538 = vld [vmem:[%s5 + $0x528] sm:$0xff]
    %v3539 = vld [vmem:[%s5 + $0x530] sm:$0xf]
    %v3540 = vld [vmem:[%s5 + $0x534] sm:$0xff]
    %v3541 = vld [vmem:[%s5 + $0x53c] sm:$0xf]
    %v3542 = vld [vmem:[%s5 + $0x540] sm:$0xff]
    %v3543 = vld [vmem:[%s5 + $0x548] sm:$0xf]
    %v3544 = vld [vmem:[%s5 + $0x54c] sm:$0xff]
    %v3545 = vld [vmem:[%s5 + $0x554] sm:$0xf]
    %v3546 = vld [vmem:[%s5 + $0x558] sm:$0xff]
    %v3547 = vld [vmem:[%s5 + $0x560] sm:$0xf]
    %v3548 = vld [vmem:[%s5 + $0x564] sm:$0xff]
    %v3549 = vld [vmem:[%s5 + $0x56c] sm:$0xf]
    %v3550 = vld [vmem:[%s5 + $0x570] sm:$0xff]
    %v3551 = vld [vmem:[%s5 + $0x578] sm:$0xf]
    %v3552 = vld [vmem:[%s5 + $0x57c] sm:$0xff]
    %v3553 = vld [vmem:[%s5 + $0x584] sm:$0xf]
    %v3554 = vld [vmem:[%s5 + $0x588] sm:$0xff]
    %v3555 = vld [vmem:[%s5 + $0x590] sm:$0xf]
    %v3556 = vld [vmem:[%s5 + $0x594] sm:$0xff]
    %v3557 = vld [vmem:[%s5 + $0x59c] sm:$0xf]
    %v3558 = vld [vmem:[%s5 + $0x5a0] sm:$0xff]
    %v3559 = vld [vmem:[%s5 + $0x5a8] sm:$0xf]
    %v3560 = vld [vmem:[%s5 + $0x5ac] sm:$0xff]
    %v3561 = vld [vmem:[%s5 + $0x5b4] sm:$0xf]
    %v3562 = vld [vmem:[%s5 + $0x5b8] sm:$0xff]
    %v3563 = vld [vmem:[%s5 + $0x5c0] sm:$0xf]
    %v3564 = vld [vmem:[%s5 + $0x5c4] sm:$0xff]
    %v3565 = vld [vmem:[%s5 + $0x5cc] sm:$0xf]
    %v3566 = vld [vmem:[%s5 + $0x5d0] sm:$0xff]
    %v3567 = vld [vmem:[%s5 + $0x5d8] sm:$0xf]
    %v3568 = vld [vmem:[%s5 + $0x5dc] sm:$0xff]
    %v3569 = vld [vmem:[%s5 + $0x5e4] sm:$0xf]
    %v3570 = vld [vmem:[%s5 + $0x5e8] sm:$0xff]
    %v3571 = vld [vmem:[%s5 + $0x5f0] sm:$0xf]
    %v3572 = vld [vmem:[%s5 + $0x5f4] sm:$0xff]
    %v3573 = vld [vmem:[%s5 + $0x5fc] sm:$0xf]
    %v3574 = vld [vmem:[%s5 + $0x600] sm:$0xff]
    %v3575 = vld [vmem:[%s5 + $0x608] sm:$0xf]
    %v3576 = vld [vmem:[%s5 + $0x60c] sm:$0xff]
    %v3577 = vld [vmem:[%s5 + $0x614] sm:$0xf]
    %v3578 = vld [vmem:[%s5 + $0x618] sm:$0xff]
    %v3579 = vld [vmem:[%s5 + $0x620] sm:$0xf]
    %v3580 = vld [vmem:[%s5 + $0x624] sm:$0xff]
    %v3581 = vld [vmem:[%s5 + $0x62c] sm:$0xf]
    %v3582 = vld [vmem:[%s5 + $0x630] sm:$0xff]
    %v3583 = vld [vmem:[%s5 + $0x638] sm:$0xf]
    %v3584 = vld [vmem:[%s5 + $0x63c] sm:$0xff]
    %v3585 = vld [vmem:[%s5 + $0x644] sm:$0xf]
    %v3586 = vld [vmem:[%s5 + $0x648] sm:$0xff]
    %v3587 = vld [vmem:[%s5 + $0x650] sm:$0xf]
    %v3588 = vld [vmem:[%s5 + $0x654] sm:$0xff]
    %v3589 = vld [vmem:[%s5 + $0x65c] sm:$0xf]
    %v3590 = vld [vmem:[%s5 + $0x660] sm:$0xff]
    %v3591 = vld [vmem:[%s5 + $0x668] sm:$0xf]
    %v3592 = vld [vmem:[%s5 + $0x66c] sm:$0xff]
    %v3593 = vld [vmem:[%s5 + $0x674] sm:$0xf]
    %v3594 = vld [vmem:[%s5 + $0x678] sm:$0xff]
    %v3595 = vld [vmem:[%s5 + $0x680] sm:$0xf]
    %v3596 = vld [vmem:[%s5 + $0x684] sm:$0xff]
    %v3597 = vld [vmem:[%s5 + $0x68c] sm:$0xf]
    %v3598 = vld [vmem:[%s5 + $0x690] sm:$0xff]
    %v3599 = vld [vmem:[%s5 + $0x698] sm:$0xf]
    %v3600 = vld [vmem:[%s5 + $0x69c] sm:$0xff]
    %v3601 = vld [vmem:[%s5 + $0x6a4] sm:$0xf]
    %v3602 = vld [vmem:[%s5 + $0x6a8] sm:$0xff]
    %v3603 = vld [vmem:[%s5 + $0x6b0] sm:$0xf]
    %v3604 = vld [vmem:[%s5 + $0x6b4] sm:$0xff]
    %v3605 = vld [vmem:[%s5 + $0x6bc] sm:$0xf]
    %v3606 = vld [vmem:[%s5 + $0x6c0] sm:$0xff]
    %v3607 = vld [vmem:[%s5 + $0x6c8] sm:$0xf]
    %v3608 = vld [vmem:[%s5 + $0x6cc] sm:$0xff]
    %v3609 = vld [vmem:[%s5 + $0x6d4] sm:$0xf]
    %v3610 = vld [vmem:[%s5 + $0x6d8] sm:$0xff]
    %v3611 = vld [vmem:[%s5 + $0x6e0] sm:$0xf]
    %v3612 = vld [vmem:[%s5 + $0x6e4] sm:$0xff]
    %v3613 = vld [vmem:[%s5 + $0x6ec] sm:$0xf]
    %v3614 = vld [vmem:[%s5 + $0x6f0] sm:$0xff]
    %v3615 = vld [vmem:[%s5 + $0x6f8] sm:$0xf]
    %v3616 = vld [vmem:[%s5 + $0x6fc] sm:$0xff]
    %v3617 = vld [vmem:[%s5 + $0x704] sm:$0xf]
    %v3618 = vld [vmem:[%s5 + $0x708] sm:$0xff]
    %v3619 = vld [vmem:[%s5 + $0x710] sm:$0xf]
    %v3620 = vld [vmem:[%s5 + $0x714] sm:$0xff]
    %v3621 = vld [vmem:[%s5 + $0x71c] sm:$0xf]
    %v3622 = vld [vmem:[%s5 + $0x720] sm:$0xff]
    %v3623 = vld [vmem:[%s5 + $0x728] sm:$0xf]
    %v3624 = vld [vmem:[%s5 + $0x72c] sm:$0xff]
    %v3625 = vld [vmem:[%s5 + $0x734] sm:$0xf]
    %v3626 = vld [vmem:[%s5 + $0x738] sm:$0xff]
    %v3627 = vld [vmem:[%s5 + $0x740] sm:$0xf]
    %v3628 = vld [vmem:[%s5 + $0x744] sm:$0xff]
    %v3629 = vld [vmem:[%s5 + $0x74c] sm:$0xf]
    %v3630 = vld [vmem:[%s5 + $0x750] sm:$0xff]
    %v3631 = vld [vmem:[%s5 + $0x758] sm:$0xf]
    %v3632 = vld [vmem:[%s5 + $0x75c] sm:$0xff]
    %v3633 = vld [vmem:[%s5 + $0x764] sm:$0xf]
    %v3634 = vld [vmem:[%s5 + $0x768] sm:$0xff]
    %v3635 = vld [vmem:[%s5 + $0x770] sm:$0xf]
    %v3636 = vld [vmem:[%s5 + $0x774] sm:$0xff]
    %v3637 = vld [vmem:[%s5 + $0x77c] sm:$0xf]
    %v3638 = vld [vmem:[%s5 + $0x780] sm:$0xff]
    %v3639 = vld [vmem:[%s5 + $0x788] sm:$0xf]
    %v3640 = vld [vmem:[%s5 + $0x78c] sm:$0xff]
    %v3641 = vld [vmem:[%s5 + $0x794] sm:$0xf]
    %v3642 = vld [vmem:[%s5 + $0x798] sm:$0xff]
    %v3643 = vld [vmem:[%s5 + $0x7a0] sm:$0xf]
    %v3644 = vld [vmem:[%s5 + $0x7a4] sm:$0xff]
    %v3645 = vld [vmem:[%s5 + $0x7ac] sm:$0xf]
    %v3646 = vld [vmem:[%s5 + $0x7b0] sm:$0xff]
    %v3647 = vld [vmem:[%s5 + $0x7b8] sm:$0xf]
    %v3648 = vld [vmem:[%s5 + $0x7bc] sm:$0xff]
    %v3649 = vld [vmem:[%s5 + $0x7c4] sm:$0xf]
    %v3650 = vld [vmem:[%s5 + $0x7c8] sm:$0xff]
    %v3651 = vld [vmem:[%s5 + $0x7d0] sm:$0xf]
    %v3652 = vld [vmem:[%s5 + $0x7d4] sm:$0xff]
    %v3653 = vld [vmem:[%s5 + $0x7dc] sm:$0xf]
    %v3654 = vld [vmem:[%s5 + $0x7e0] sm:$0xff]
    %v3655 = vld [vmem:[%s5 + $0x7e8] sm:$0xf]
    %v3656 = vld [vmem:[%s5 + $0x7ec] sm:$0xff]
    %v3657 = vld [vmem:[%s5 + $0x7f4] sm:$0xf]
    %v3658 = vld [vmem:[%s5 + $0x7f8] sm:$0xff]
    %v3659 = vld [vmem:[%s5 + $0x800] sm:$0xf]
    %v3660 = vld [vmem:[%s5 + $0x804] sm:$0xff]
    %v3661 = vld [vmem:[%s5 + $0x80c] sm:$0xf]
    %v3662 = vld [vmem:[%s5 + $0x810] sm:$0xff]
    %v3663 = vld [vmem:[%s5 + $0x818] sm:$0xf]
    %v3664 = vld [vmem:[%s5 + $0x81c] sm:$0xff]
    %v3665 = vld [vmem:[%s5 + $0x824] sm:$0xf]
    %v3666 = vld [vmem:[%s5 + $0x828] sm:$0xff]
    %v3667 = vld [vmem:[%s5 + $0x830] sm:$0xf]
    %v3668 = vld [vmem:[%s5 + $0x834] sm:$0xff]
    %v3669 = vld [vmem:[%s5 + $0x83c] sm:$0xf]
    %v3670 = vld [vmem:[%s5 + $0x840] sm:$0xff]
    %v3671 = vld [vmem:[%s5 + $0x848] sm:$0xf]
    %v3672 = vld [vmem:[%s5 + $0x84c] sm:$0xff]
    %v3673 = vld [vmem:[%s5 + $0x854] sm:$0xf]
    %v3674 = vld [vmem:[%s5 + $0x858] sm:$0xff]
    %v3675 = vld [vmem:[%s5 + $0x860] sm:$0xf]
    %v3676 = vld [vmem:[%s5 + $0x864] sm:$0xff]
    %v3677 = vld [vmem:[%s5 + $0x86c] sm:$0xf]
    %v3678 = vld [vmem:[%s5 + $0x870] sm:$0xff]
    %v3679 = vld [vmem:[%s5 + $0x878] sm:$0xf]
    %v3680 = vld [vmem:[%s5 + $0x87c] sm:$0xff]
    %v3681 = vld [vmem:[%s5 + $0x884] sm:$0xf]
    %v3682 = vld [vmem:[%s5 + $0x888] sm:$0xff]
    %v3683 = vld [vmem:[%s5 + $0x890] sm:$0xf]
    %v3684 = vld [vmem:[%s5 + $0x894] sm:$0xff]
    %v3685 = vld [vmem:[%s5 + $0x89c] sm:$0xf]
    %v3686 = vld [vmem:[%s5 + $0x8a0] sm:$0xff]
    %v3687 = vld [vmem:[%s5 + $0x8a8] sm:$0xf]
    %v3688 = vld [vmem:[%s5 + $0x8ac] sm:$0xff]
    %v3689 = vld [vmem:[%s5 + $0x8b4] sm:$0xf]
    %v3690 = vld [vmem:[%s5 + $0x8b8] sm:$0xff]
    %v3691 = vld [vmem:[%s5 + $0x8c0] sm:$0xf]
    %v3692 = vld [vmem:[%s5 + $0x8c4] sm:$0xff]
    %v3693 = vld [vmem:[%s5 + $0x8cc] sm:$0xf]
    %v3694 = vld [vmem:[%s5 + $0x8d0] sm:$0xff]
    %v3695 = vld [vmem:[%s5 + $0x8d8] sm:$0xf]
    %v3696 = vld [vmem:[%s5 + $0x8dc] sm:$0xff]
    %v3697 = vld [vmem:[%s5 + $0x8e4] sm:$0xf]
    %v3698 = vld [vmem:[%s5 + $0x8e8] sm:$0xff]
    %v3699 = vld [vmem:[%s5 + $0x8f0] sm:$0xf]
    %v3700 = vld [vmem:[%s5 + $0x8f4] sm:$0xff]
    %v3701 = vld [vmem:[%s5 + $0x8fc] sm:$0xf]
    %v3702 = vld [vmem:[%s6] sm:$0x7]
    %v3704 = vperm.slane %v3702, 0
    %v3705 = vperm.slane %v3702, 1
    %v3706 = vperm.slane %v3702, 2
    %v4094 = vunpack.c.l.b16 %v3318
    %v4095 = vunpack.c.h.b16 %v3318
    %v4096 = vunpack.c.l.b16 %v3319
    %v4097 = vunpack.c.l.b16 %v3320
    %v4098 = vunpack.c.h.b16 %v3320
    %v4099 = vunpack.c.l.b16 %v3321
    %v4100 = vunpack.c.l.b16 %v3322
    %v4101 = vunpack.c.h.b16 %v3322
    %v4102 = vunpack.c.l.b16 %v3323
    %v4103 = vunpack.c.l.b16 %v3324
    %v4104 = vunpack.c.h.b16 %v3324
    %v4105 = vunpack.c.l.b16 %v3325
    %v4106 = vunpack.c.l.b16 %v3326
    %v4107 = vunpack.c.h.b16 %v3326
    %v4108 = vunpack.c.l.b16 %v3327
    %v4109 = vunpack.c.l.b16 %v3328
    %v4110 = vunpack.c.h.b16 %v3328
    %v4111 = vunpack.c.l.b16 %v3329
    %v4112 = vunpack.c.l.b16 %v3330
    %v4113 = vunpack.c.h.b16 %v3330
    %v4114 = vunpack.c.l.b16 %v3331
    %v4115 = vunpack.c.l.b16 %v3332
    %v4116 = vunpack.c.h.b16 %v3332
    %v4117 = vunpack.c.l.b16 %v3333
    %v4118 = vunpack.c.l.b16 %v3334
    %v4119 = vunpack.c.h.b16 %v3334
    %v4120 = vunpack.c.l.b16 %v3335
    %v4121 = vunpack.c.l.b16 %v3336
    %v4122 = vunpack.c.h.b16 %v3336
    %v4123 = vunpack.c.l.b16 %v3337
    %v4124 = vunpack.c.l.b16 %v3338
    %v4125 = vunpack.c.h.b16 %v3338
    %v4126 = vunpack.c.l.b16 %v3339
    %v4127 = vunpack.c.l.b16 %v3340
    %v4128 = vunpack.c.h.b16 %v3340
    %v4129 = vunpack.c.l.b16 %v3341
    %v4130 = vunpack.c.l.b16 %v3342
    %v4131 = vunpack.c.h.b16 %v3342
    %v4132 = vunpack.c.l.b16 %v3343
    %v4133 = vunpack.c.l.b16 %v3344
    %v4134 = vunpack.c.h.b16 %v3344
    %v4135 = vunpack.c.l.b16 %v3345
    %v4136 = vunpack.c.l.b16 %v3346
    %v4137 = vunpack.c.h.b16 %v3346
    %v4138 = vunpack.c.l.b16 %v3347
    %v4139 = vunpack.c.l.b16 %v3348
    %v4140 = vunpack.c.h.b16 %v3348
    %v4141 = vunpack.c.l.b16 %v3349
    %v4142 = vunpack.c.l.b16 %v3350
    %v4143 = vunpack.c.h.b16 %v3350
    %v4144 = vunpack.c.l.b16 %v3351
    %v4145 = vunpack.c.l.b16 %v3352
    %v4146 = vunpack.c.h.b16 %v3352
    %v4147 = vunpack.c.l.b16 %v3353
    %v4148 = vunpack.c.l.b16 %v3354
    %v4149 = vunpack.c.h.b16 %v3354
    %v4150 = vunpack.c.l.b16 %v3355
    %v4151 = vunpack.c.l.b16 %v3356
    %v4152 = vunpack.c.h.b16 %v3356
    %v4153 = vunpack.c.l.b16 %v3357
    %v4154 = vunpack.c.l.b16 %v3358
    %v4155 = vunpack.c.h.b16 %v3358
    %v4156 = vunpack.c.l.b16 %v3359
    %v4157 = vunpack.c.l.b16 %v3360
    %v4158 = vunpack.c.h.b16 %v3360
    %v4159 = vunpack.c.l.b16 %v3361
    %v4160 = vunpack.c.l.b16 %v3362
    %v4161 = vunpack.c.h.b16 %v3362
    %v4162 = vunpack.c.l.b16 %v3363
    %v4163 = vunpack.c.l.b16 %v3364
    %v4164 = vunpack.c.h.b16 %v3364
    %v4165 = vunpack.c.l.b16 %v3365
    %v4166 = vunpack.c.l.b16 %v3366
    %v4167 = vunpack.c.h.b16 %v3366
    %v4168 = vunpack.c.l.b16 %v3367
    %v4169 = vunpack.c.l.b16 %v3368
    %v4170 = vunpack.c.h.b16 %v3368
    %v4171 = vunpack.c.l.b16 %v3369
    %v4172 = vunpack.c.l.b16 %v3370
    %v4173 = vunpack.c.h.b16 %v3370
    %v4174 = vunpack.c.l.b16 %v3371
    %v4175 = vunpack.c.l.b16 %v3372
    %v4176 = vunpack.c.h.b16 %v3372
    %v4177 = vunpack.c.l.b16 %v3373
    %v4178 = vunpack.c.l.b16 %v3374
    %v4179 = vunpack.c.h.b16 %v3374
    %v4180 = vunpack.c.l.b16 %v3375
    %v4181 = vunpack.c.l.b16 %v3376
    %v4182 = vunpack.c.h.b16 %v3376
    %v4183 = vunpack.c.l.b16 %v3377
    %v4184 = vunpack.c.l.b16 %v3378
    %v4185 = vunpack.c.h.b16 %v3378
    %v4186 = vunpack.c.l.b16 %v3379
    %v4187 = vunpack.c.l.b16 %v3380
    %v4188 = vunpack.c.h.b16 %v3380
    %v4189 = vunpack.c.l.b16 %v3381
    %v4190 = vunpack.c.l.b16 %v3382
    %v4191 = vunpack.c.h.b16 %v3382
    %v4192 = vunpack.c.l.b16 %v3383
    %v4193 = vunpack.c.l.b16 %v3384
    %v4194 = vunpack.c.h.b16 %v3384
    %v4195 = vunpack.c.l.b16 %v3385
    %v4196 = vunpack.c.l.b16 %v3386
    %v4197 = vunpack.c.h.b16 %v3386
    %v4198 = vunpack.c.l.b16 %v3387
    %v4199 = vunpack.c.l.b16 %v3388
    %v4200 = vunpack.c.h.b16 %v3388
    %v4201 = vunpack.c.l.b16 %v3389
    %v4202 = vunpack.c.l.b16 %v3390
    %v4203 = vunpack.c.h.b16 %v3390
    %v4204 = vunpack.c.l.b16 %v3391
    %v4205 = vunpack.c.l.b16 %v3392
    %v4206 = vunpack.c.h.b16 %v3392
    %v4207 = vunpack.c.l.b16 %v3393
    %v4208 = vunpack.c.l.b16 %v3394
    %v4209 = vunpack.c.h.b16 %v3394
    %v4210 = vunpack.c.l.b16 %v3395
    %v4211 = vunpack.c.l.b16 %v3396
    %v4212 = vunpack.c.h.b16 %v3396
    %v4213 = vunpack.c.l.b16 %v3397
    %v4214 = vunpack.c.l.b16 %v3398
    %v4215 = vunpack.c.h.b16 %v3398
    %v4216 = vunpack.c.l.b16 %v3399
    %v4217 = vunpack.c.l.b16 %v3400
    %v4218 = vunpack.c.h.b16 %v3400
    %v4219 = vunpack.c.l.b16 %v3401
    %v4220 = vunpack.c.l.b16 %v3402
    %v4221 = vunpack.c.h.b16 %v3402
    %v4222 = vunpack.c.l.b16 %v3403
    %v4223 = vunpack.c.l.b16 %v3404
    %v4224 = vunpack.c.h.b16 %v3404
    %v4225 = vunpack.c.l.b16 %v3405
    %v4226 = vunpack.c.l.b16 %v3406
    %v4227 = vunpack.c.h.b16 %v3406
    %v4228 = vunpack.c.l.b16 %v3407
    %v4229 = vunpack.c.l.b16 %v3408
    %v4230 = vunpack.c.h.b16 %v3408
    %v4231 = vunpack.c.l.b16 %v3409
    %v4232 = vunpack.c.l.b16 %v3410
    %v4233 = vunpack.c.h.b16 %v3410
    %v4234 = vunpack.c.l.b16 %v3411
    %v4235 = vunpack.c.l.b16 %v3412
    %v4236 = vunpack.c.h.b16 %v3412
    %v4237 = vunpack.c.l.b16 %v3413
    %v4238 = vunpack.c.l.b16 %v3414
    %v4239 = vunpack.c.h.b16 %v3414
    %v4240 = vunpack.c.l.b16 %v3415
    %v4241 = vunpack.c.l.b16 %v3416
    %v4242 = vunpack.c.h.b16 %v3416
    %v4243 = vunpack.c.l.b16 %v3417
    %v4244 = vunpack.c.l.b16 %v3418
    %v4245 = vunpack.c.h.b16 %v3418
    %v4246 = vunpack.c.l.b16 %v3419
    %v4247 = vunpack.c.l.b16 %v3420
    %v4248 = vunpack.c.h.b16 %v3420
    %v4249 = vunpack.c.l.b16 %v3421
    %v4250 = vunpack.c.l.b16 %v3422
    %v4251 = vunpack.c.h.b16 %v3422
    %v4252 = vunpack.c.l.b16 %v3423
    %v4253 = vunpack.c.l.b16 %v3424
    %v4254 = vunpack.c.h.b16 %v3424
    %v4255 = vunpack.c.l.b16 %v3425
    %v4256 = vunpack.c.l.b16 %v3426
    %v4257 = vunpack.c.h.b16 %v3426
    %v4258 = vunpack.c.l.b16 %v3427
    %v4259 = vunpack.c.l.b16 %v3428
    %v4260 = vunpack.c.h.b16 %v3428
    %v4261 = vunpack.c.l.b16 %v3429
    %v4262 = vunpack.c.l.b16 %v3430
    %v4263 = vunpack.c.h.b16 %v3430
    %v4264 = vunpack.c.l.b16 %v3431
    %v4265 = vunpack.c.l.b16 %v3432
    %v4266 = vunpack.c.h.b16 %v3432
    %v4267 = vunpack.c.l.b16 %v3433
    %v4268 = vunpack.c.l.b16 %v3434
    %v4269 = vunpack.c.h.b16 %v3434
    %v4270 = vunpack.c.l.b16 %v3435
    %v4271 = vunpack.c.l.b16 %v3436
    %v4272 = vunpack.c.h.b16 %v3436
    %v4273 = vunpack.c.l.b16 %v3437
    %v4274 = vunpack.c.l.b16 %v3438
    %v4275 = vunpack.c.h.b16 %v3438
    %v4276 = vunpack.c.l.b16 %v3439
    %v4277 = vunpack.c.l.b16 %v3440
    %v4278 = vunpack.c.h.b16 %v3440
    %v4279 = vunpack.c.l.b16 %v3441
    %v4280 = vunpack.c.l.b16 %v3442
    %v4281 = vunpack.c.h.b16 %v3442
    %v4282 = vunpack.c.l.b16 %v3443
    %v4283 = vunpack.c.l.b16 %v3444
    %v4284 = vunpack.c.h.b16 %v3444
    %v4285 = vunpack.c.l.b16 %v3445
    %v4286 = vunpack.c.l.b16 %v3446
    %v4287 = vunpack.c.h.b16 %v3446
    %v4288 = vunpack.c.l.b16 %v3447
    %v4289 = vunpack.c.l.b16 %v3448
    %v4290 = vunpack.c.h.b16 %v3448
    %v4291 = vunpack.c.l.b16 %v3449
    %v4292 = vunpack.c.l.b16 %v3450
    %v4293 = vunpack.c.h.b16 %v3450
    %v4294 = vunpack.c.l.b16 %v3451
    %v4295 = vunpack.c.l.b16 %v3452
    %v4296 = vunpack.c.h.b16 %v3452
    %v4297 = vunpack.c.l.b16 %v3453
    %v4298 = vunpack.c.l.b16 %v3454
    %v4299 = vunpack.c.h.b16 %v3454
    %v4300 = vunpack.c.l.b16 %v3455
    %v4301 = vunpack.c.l.b16 %v3456
    %v4302 = vunpack.c.h.b16 %v3456
    %v4303 = vunpack.c.l.b16 %v3457
    %v4304 = vunpack.c.l.b16 %v3458
    %v4305 = vunpack.c.h.b16 %v3458
    %v4306 = vunpack.c.l.b16 %v3459
    %v4307 = vunpack.c.l.b16 %v3460
    %v4308 = vunpack.c.h.b16 %v3460
    %v4309 = vunpack.c.l.b16 %v3461
    %v4310 = vunpack.c.l.b16 %v3462
    %v4311 = vunpack.c.h.b16 %v3462
    %v4312 = vunpack.c.l.b16 %v3463
    %v4313 = vunpack.c.l.b16 %v3464
    %v4314 = vunpack.c.h.b16 %v3464
    %v4315 = vunpack.c.l.b16 %v3465
    %v4316 = vunpack.c.l.b16 %v3466
    %v4317 = vunpack.c.h.b16 %v3466
    %v4318 = vunpack.c.l.b16 %v3467
    %v4319 = vunpack.c.l.b16 %v3468
    %v4320 = vunpack.c.h.b16 %v3468
    %v4321 = vunpack.c.l.b16 %v3469
    %v4322 = vunpack.c.l.b16 %v3470
    %v4323 = vunpack.c.h.b16 %v3470
    %v4324 = vunpack.c.l.b16 %v3471
    %v4325 = vunpack.c.l.b16 %v3472
    %v4326 = vunpack.c.h.b16 %v3472
    %v4327 = vunpack.c.l.b16 %v3473
    %v4328 = vunpack.c.l.b16 %v3474
    %v4329 = vunpack.c.h.b16 %v3474
    %v4330 = vunpack.c.l.b16 %v3475
    %v4331 = vunpack.c.l.b16 %v3476
    %v4332 = vunpack.c.h.b16 %v3476
    %v4333 = vunpack.c.l.b16 %v3477
    %v4334 = vunpack.c.l.b16 %v3478
    %v4335 = vunpack.c.h.b16 %v3478
    %v4336 = vunpack.c.l.b16 %v3479
    %v4337 = vunpack.c.l.b16 %v3480
    %v4338 = vunpack.c.h.b16 %v3480
    %v4339 = vunpack.c.l.b16 %v3481
    %v4340 = vunpack.c.l.b16 %v3482
    %v4341 = vunpack.c.h.b16 %v3482
    %v4342 = vunpack.c.l.b16 %v3483
    %v4343 = vunpack.c.l.b16 %v3484
    %v4344 = vunpack.c.h.b16 %v3484
    %v4345 = vunpack.c.l.b16 %v3485
    %v4346 = vunpack.c.l.b16 %v3486
    %v4347 = vunpack.c.h.b16 %v3486
    %v4348 = vunpack.c.l.b16 %v3487
    %v4349 = vunpack.c.l.b16 %v3488
    %v4350 = vunpack.c.h.b16 %v3488
    %v4351 = vunpack.c.l.b16 %v3489
    %v4352 = vunpack.c.l.b16 %v3490
    %v4353 = vunpack.c.h.b16 %v3490
    %v4354 = vunpack.c.l.b16 %v3491
    %v4355 = vunpack.c.l.b16 %v3492
    %v4356 = vunpack.c.h.b16 %v3492
    %v4357 = vunpack.c.l.b16 %v3493
    %v4358 = vunpack.c.l.b16 %v3494
    %v4359 = vunpack.c.h.b16 %v3494
    %v4360 = vunpack.c.l.b16 %v3495
    %v4361 = vunpack.c.l.b16 %v3496
    %v4362 = vunpack.c.h.b16 %v3496
    %v4363 = vunpack.c.l.b16 %v3497
    %v4364 = vunpack.c.l.b16 %v3498
    %v4365 = vunpack.c.h.b16 %v3498
    %v4366 = vunpack.c.l.b16 %v3499
    %v4367 = vunpack.c.l.b16 %v3500
    %v4368 = vunpack.c.h.b16 %v3500
    %v4369 = vunpack.c.l.b16 %v3501
    %v4370 = vunpack.c.l.b16 %v3502
    %v4371 = vunpack.c.h.b16 %v3502
    %v4372 = vunpack.c.l.b16 %v3503
    %v4373 = vunpack.c.l.b16 %v3504
    %v4374 = vunpack.c.h.b16 %v3504
    %v4375 = vunpack.c.l.b16 %v3505
    %v4376 = vunpack.c.l.b16 %v3506
    %v4377 = vunpack.c.h.b16 %v3506
    %v4378 = vunpack.c.l.b16 %v3507
    %v4379 = vunpack.c.l.b16 %v3508
    %v4380 = vunpack.c.h.b16 %v3508
    %v4381 = vunpack.c.l.b16 %v3509
    %v4382 = vunpack.c.l.b16 %v3510
    %v4383 = vunpack.c.h.b16 %v3510
    %v4384 = vunpack.c.l.b16 %v3511
    %v4385 = vunpack.c.l.b16 %v3512
    %v4386 = vunpack.c.h.b16 %v3512
    %v4387 = vunpack.c.l.b16 %v3513
    %v4388 = vunpack.c.l.b16 %v3514
    %v4389 = vunpack.c.h.b16 %v3514
    %v4390 = vunpack.c.l.b16 %v3515
    %v4391 = vunpack.c.l.b16 %v3516
    %v4392 = vunpack.c.h.b16 %v3516
    %v4393 = vunpack.c.l.b16 %v3517
    %v4394 = vunpack.c.l.b16 %v3518
    %v4395 = vunpack.c.h.b16 %v3518
    %v4396 = vunpack.c.l.b16 %v3519
    %v4397 = vunpack.c.l.b16 %v3520
    %v4398 = vunpack.c.h.b16 %v3520
    %v4399 = vunpack.c.l.b16 %v3521
    %v4400 = vunpack.c.l.b16 %v3522
    %v4401 = vunpack.c.h.b16 %v3522
    %v4402 = vunpack.c.l.b16 %v3523
    %v4403 = vunpack.c.l.b16 %v3524
    %v4404 = vunpack.c.h.b16 %v3524
    %v4405 = vunpack.c.l.b16 %v3525
    %v4406 = vunpack.c.l.b16 %v3526
    %v4407 = vunpack.c.h.b16 %v3526
    %v4408 = vunpack.c.l.b16 %v3527
    %v4409 = vunpack.c.l.b16 %v3528
    %v4410 = vunpack.c.h.b16 %v3528
    %v4411 = vunpack.c.l.b16 %v3529
    %v4412 = vunpack.c.l.b16 %v3530
    %v4413 = vunpack.c.h.b16 %v3530
    %v4414 = vunpack.c.l.b16 %v3531
    %v4415 = vunpack.c.l.b16 %v3532
    %v4416 = vunpack.c.h.b16 %v3532
    %v4417 = vunpack.c.l.b16 %v3533
    %v4418 = vunpack.c.l.b16 %v3534
    %v4419 = vunpack.c.h.b16 %v3534
    %v4420 = vunpack.c.l.b16 %v3535
    %v4421 = vunpack.c.l.b16 %v3536
    %v4422 = vunpack.c.h.b16 %v3536
    %v4423 = vunpack.c.l.b16 %v3537
    %v4424 = vunpack.c.l.b16 %v3538
    %v4425 = vunpack.c.h.b16 %v3538
    %v4426 = vunpack.c.l.b16 %v3539
    %v4427 = vunpack.c.l.b16 %v3540
    %v4428 = vunpack.c.h.b16 %v3540
    %v4429 = vunpack.c.l.b16 %v3541
    %v4430 = vunpack.c.l.b16 %v3542
    %v4431 = vunpack.c.h.b16 %v3542
    %v4432 = vunpack.c.l.b16 %v3543
    %v4433 = vunpack.c.l.b16 %v3544
    %v4434 = vunpack.c.h.b16 %v3544
    %v4435 = vunpack.c.l.b16 %v3545
    %v4436 = vunpack.c.l.b16 %v3546
    %v4437 = vunpack.c.h.b16 %v3546
    %v4438 = vunpack.c.l.b16 %v3547
    %v4439 = vunpack.c.l.b16 %v3548
    %v4440 = vunpack.c.h.b16 %v3548
    %v4441 = vunpack.c.l.b16 %v3549
    %v4442 = vunpack.c.l.b16 %v3550
    %v4443 = vunpack.c.h.b16 %v3550
    %v4444 = vunpack.c.l.b16 %v3551
    %v4445 = vunpack.c.l.b16 %v3552
    %v4446 = vunpack.c.h.b16 %v3552
    %v4447 = vunpack.c.l.b16 %v3553
    %v4448 = vunpack.c.l.b16 %v3554
    %v4449 = vunpack.c.h.b16 %v3554
    %v4450 = vunpack.c.l.b16 %v3555
    %v4451 = vunpack.c.l.b16 %v3556
    %v4452 = vunpack.c.h.b16 %v3556
    %v4453 = vunpack.c.l.b16 %v3557
    %v4454 = vunpack.c.l.b16 %v3558
    %v4455 = vunpack.c.h.b16 %v3558
    %v4456 = vunpack.c.l.b16 %v3559
    %v4457 = vunpack.c.l.b16 %v3560
    %v4458 = vunpack.c.h.b16 %v3560
    %v4459 = vunpack.c.l.b16 %v3561
    %v4460 = vunpack.c.l.b16 %v3562
    %v4461 = vunpack.c.h.b16 %v3562
    %v4462 = vunpack.c.l.b16 %v3563
    %v4463 = vunpack.c.l.b16 %v3564
    %v4464 = vunpack.c.h.b16 %v3564
    %v4465 = vunpack.c.l.b16 %v3565
    %v4466 = vunpack.c.l.b16 %v3566
    %v4467 = vunpack.c.h.b16 %v3566
    %v4468 = vunpack.c.l.b16 %v3567
    %v4469 = vunpack.c.l.b16 %v3568
    %v4470 = vunpack.c.h.b16 %v3568
    %v4471 = vunpack.c.l.b16 %v3569
    %v4472 = vunpack.c.l.b16 %v3570
    %v4473 = vunpack.c.h.b16 %v3570
    %v4474 = vunpack.c.l.b16 %v3571
    %v4475 = vunpack.c.l.b16 %v3572
    %v4476 = vunpack.c.h.b16 %v3572
    %v4477 = vunpack.c.l.b16 %v3573
    %v4478 = vunpack.c.l.b16 %v3574
    %v4479 = vunpack.c.h.b16 %v3574
    %v4480 = vunpack.c.l.b16 %v3575
    %v4481 = vunpack.c.l.b16 %v3576
    %v4482 = vunpack.c.h.b16 %v3576
    %v4483 = vunpack.c.l.b16 %v3577
    %v4484 = vunpack.c.l.b16 %v3578
    %v4485 = vunpack.c.h.b16 %v3578
    %v4486 = vunpack.c.l.b16 %v3579
    %v4487 = vunpack.c.l.b16 %v3580
    %v4488 = vunpack.c.h.b16 %v3580
    %v4489 = vunpack.c.l.b16 %v3581
    %v4490 = vunpack.c.l.b16 %v3582
    %v4491 = vunpack.c.h.b16 %v3582
    %v4492 = vunpack.c.l.b16 %v3583
    %v4493 = vunpack.c.l.b16 %v3584
    %v4494 = vunpack.c.h.b16 %v3584
    %v4495 = vunpack.c.l.b16 %v3585
    %v4496 = vunpack.c.l.b16 %v3586
    %v4497 = vunpack.c.h.b16 %v3586
    %v4498 = vunpack.c.l.b16 %v3587
    %v4499 = vunpack.c.l.b16 %v3588
    %v4500 = vunpack.c.h.b16 %v3588
    %v4501 = vunpack.c.l.b16 %v3589
    %v4502 = vunpack.c.l.b16 %v3590
    %v4503 = vunpack.c.h.b16 %v3590
    %v4504 = vunpack.c.l.b16 %v3591
    %v4505 = vunpack.c.l.b16 %v3592
    %v4506 = vunpack.c.h.b16 %v3592
    %v4507 = vunpack.c.l.b16 %v3593
    %v4508 = vunpack.c.l.b16 %v3594
    %v4509 = vunpack.c.h.b16 %v3594
    %v4510 = vunpack.c.l.b16 %v3595
    %v4511 = vunpack.c.l.b16 %v3596
    %v4512 = vunpack.c.h.b16 %v3596
    %v4513 = vunpack.c.l.b16 %v3597
    %v4514 = vunpack.c.l.b16 %v3598
    %v4515 = vunpack.c.h.b16 %v3598
    %v4516 = vunpack.c.l.b16 %v3599
    %v4517 = vunpack.c.l.b16 %v3600
    %v4518 = vunpack.c.h.b16 %v3600
    %v4519 = vunpack.c.l.b16 %v3601
    %v4520 = vunpack.c.l.b16 %v3602
    %v4521 = vunpack.c.h.b16 %v3602
    %v4522 = vunpack.c.l.b16 %v3603
    %v4523 = vunpack.c.l.b16 %v3604
    %v4524 = vunpack.c.h.b16 %v3604
    %v4525 = vunpack.c.l.b16 %v3605
    %v4526 = vunpack.c.l.b16 %v3606
    %v4527 = vunpack.c.h.b16 %v3606
    %v4528 = vunpack.c.l.b16 %v3607
    %v4529 = vunpack.c.l.b16 %v3608
    %v4530 = vunpack.c.h.b16 %v3608
    %v4531 = vunpack.c.l.b16 %v3609
    %v4532 = vunpack.c.l.b16 %v3610
    %v4533 = vunpack.c.h.b16 %v3610
    %v4534 = vunpack.c.l.b16 %v3611
    %v4535 = vunpack.c.l.b16 %v3612
    %v4536 = vunpack.c.h.b16 %v3612
    %v4537 = vunpack.c.l.b16 %v3613
    %v4538 = vunpack.c.l.b16 %v3614
    %v4539 = vunpack.c.h.b16 %v3614
    %v4540 = vunpack.c.l.b16 %v3615
    %v4541 = vunpack.c.l.b16 %v3616
    %v4542 = vunpack.c.h.b16 %v3616
    %v4543 = vunpack.c.l.b16 %v3617
    %v4544 = vunpack.c.l.b16 %v3618
    %v4545 = vunpack.c.h.b16 %v3618
    %v4546 = vunpack.c.l.b16 %v3619
    %v4547 = vunpack.c.l.b16 %v3620
    %v4548 = vunpack.c.h.b16 %v3620
    %v4549 = vunpack.c.l.b16 %v3621
    %v4550 = vunpack.c.l.b16 %v3622
    %v4551 = vunpack.c.h.b16 %v3622
    %v4552 = vunpack.c.l.b16 %v3623
    %v4553 = vunpack.c.l.b16 %v3624
    %v4554 = vunpack.c.h.b16 %v3624
    %v4555 = vunpack.c.l.b16 %v3625
    %v4556 = vunpack.c.l.b16 %v3626
    %v4557 = vunpack.c.h.b16 %v3626
    %v4558 = vunpack.c.l.b16 %v3627
    %v4559 = vunpack.c.l.b16 %v3628
    %v4560 = vunpack.c.h.b16 %v3628
    %v4561 = vunpack.c.l.b16 %v3629
    %v4562 = vunpack.c.l.b16 %v3630
    %v4563 = vunpack.c.h.b16 %v3630
    %v4564 = vunpack.c.l.b16 %v3631
    %v4565 = vunpack.c.l.b16 %v3632
    %v4566 = vunpack.c.h.b16 %v3632
    %v4567 = vunpack.c.l.b16 %v3633
    %v4568 = vunpack.c.l.b16 %v3634
    %v4569 = vunpack.c.h.b16 %v3634
    %v4570 = vunpack.c.l.b16 %v3635
    %v4571 = vunpack.c.l.b16 %v3636
    %v4572 = vunpack.c.h.b16 %v3636
    %v4573 = vunpack.c.l.b16 %v3637
    %v4574 = vunpack.c.l.b16 %v3638
    %v4575 = vunpack.c.h.b16 %v3638
    %v4576 = vunpack.c.l.b16 %v3639
    %v4577 = vunpack.c.l.b16 %v3640
    %v4578 = vunpack.c.h.b16 %v3640
    %v4579 = vunpack.c.l.b16 %v3641
    %v4580 = vunpack.c.l.b16 %v3642
    %v4581 = vunpack.c.h.b16 %v3642
    %v4582 = vunpack.c.l.b16 %v3643
    %v4583 = vunpack.c.l.b16 %v3644
    %v4584 = vunpack.c.h.b16 %v3644
    %v4585 = vunpack.c.l.b16 %v3645
    %v4586 = vunpack.c.l.b16 %v3646
    %v4587 = vunpack.c.h.b16 %v3646
    %v4588 = vunpack.c.l.b16 %v3647
    %v4589 = vunpack.c.l.b16 %v3648
    %v4590 = vunpack.c.h.b16 %v3648
    %v4591 = vunpack.c.l.b16 %v3649
    %v4592 = vunpack.c.l.b16 %v3650
    %v4593 = vunpack.c.h.b16 %v3650
    %v4594 = vunpack.c.l.b16 %v3651
    %v4595 = vunpack.c.l.b16 %v3652
    %v4596 = vunpack.c.h.b16 %v3652
    %v4597 = vunpack.c.l.b16 %v3653
    %v4598 = vunpack.c.l.b16 %v3654
    %v4599 = vunpack.c.h.b16 %v3654
    %v4600 = vunpack.c.l.b16 %v3655
    %v4601 = vunpack.c.l.b16 %v3656
    %v4602 = vunpack.c.h.b16 %v3656
    %v4603 = vunpack.c.l.b16 %v3657
    %v4604 = vunpack.c.l.b16 %v3658
    %v4605 = vunpack.c.h.b16 %v3658
    %v4606 = vunpack.c.l.b16 %v3659
    %v4607 = vunpack.c.l.b16 %v3660
    %v4608 = vunpack.c.h.b16 %v3660
    %v4609 = vunpack.c.l.b16 %v3661
    %v4610 = vunpack.c.l.b16 %v3662
    %v4611 = vunpack.c.h.b16 %v3662
    %v4612 = vunpack.c.l.b16 %v3663
    %v4613 = vunpack.c.l.b16 %v3664
    %v4614 = vunpack.c.h.b16 %v3664
    %v4615 = vunpack.c.l.b16 %v3665
    %v4616 = vunpack.c.l.b16 %v3666
    %v4617 = vunpack.c.h.b16 %v3666
    %v4618 = vunpack.c.l.b16 %v3667
    %v4619 = vunpack.c.l.b16 %v3668
    %v4620 = vunpack.c.h.b16 %v3668
    %v4621 = vunpack.c.l.b16 %v3669
    %v4622 = vunpack.c.l.b16 %v3670
    %v4623 = vunpack.c.h.b16 %v3670
    %v4624 = vunpack.c.l.b16 %v3671
    %v4625 = vunpack.c.l.b16 %v3672
    %v4626 = vunpack.c.h.b16 %v3672
    %v4627 = vunpack.c.l.b16 %v3673
    %v4628 = vunpack.c.l.b16 %v3674
    %v4629 = vunpack.c.h.b16 %v3674
    %v4630 = vunpack.c.l.b16 %v3675
    %v4631 = vunpack.c.l.b16 %v3676
    %v4632 = vunpack.c.h.b16 %v3676
    %v4633 = vunpack.c.l.b16 %v3677
    %v4634 = vunpack.c.l.b16 %v3678
    %v4635 = vunpack.c.h.b16 %v3678
    %v4636 = vunpack.c.l.b16 %v3679
    %v4637 = vunpack.c.l.b16 %v3680
    %v4638 = vunpack.c.h.b16 %v3680
    %v4639 = vunpack.c.l.b16 %v3681
    %v4640 = vunpack.c.l.b16 %v3682
    %v4641 = vunpack.c.h.b16 %v3682
    %v4642 = vunpack.c.l.b16 %v3683
    %v4643 = vunpack.c.l.b16 %v3684
    %v4644 = vunpack.c.h.b16 %v3684
    %v4645 = vunpack.c.l.b16 %v3685
    %v4646 = vunpack.c.l.b16 %v3686
    %v4647 = vunpack.c.h.b16 %v3686
    %v4648 = vunpack.c.l.b16 %v3687
    %v4649 = vunpack.c.l.b16 %v3688
    %v4650 = vunpack.c.h.b16 %v3688
    %v4651 = vunpack.c.l.b16 %v3689
    %v4652 = vunpack.c.l.b16 %v3690
    %v4653 = vunpack.c.h.b16 %v3690
    %v4654 = vunpack.c.l.b16 %v3691
    %v4655 = vunpack.c.l.b16 %v3692
    %v4656 = vunpack.c.h.b16 %v3692
    %v4657 = vunpack.c.l.b16 %v3693
    %v4658 = vunpack.c.l.b16 %v3694
    %v4659 = vunpack.c.h.b16 %v3694
    %v4660 = vunpack.c.l.b16 %v3695
    %v4661 = vunpack.c.l.b16 %v3696
    %v4662 = vunpack.c.h.b16 %v3696
    %v4663 = vunpack.c.l.b16 %v3697
    %v4664 = vunpack.c.l.b16 %v3698
    %v4665 = vunpack.c.h.b16 %v3698
    %v4666 = vunpack.c.l.b16 %v3699
    %v4667 = vunpack.c.l.b16 %v3700
    %v4668 = vunpack.c.h.b16 %v3700
    %v4669 = vunpack.c.l.b16 %v3701
    %v4670 = vpack.c.b16 %v4097, %v4094
    %v4671 = vpack.c.b16 %v4098, %v4095
    %v4672 = vpack.c.b16 %v4099, %v4096
    %v4673 = vpack.c.b16 %v4103, %v4100
    %v4674 = vpack.c.b16 %v4104, %v4101
    %v4675 = vpack.c.b16 %v4105, %v4102
    %v4676 = vpack.c.b16 %v4109, %v4106
    %v4677 = vpack.c.b16 %v4110, %v4107
    %v4678 = vpack.c.b16 %v4111, %v4108
    %v4679 = vpack.c.b16 %v4115, %v4112
    %v4680 = vpack.c.b16 %v4116, %v4113
    %v4681 = vpack.c.b16 %v4117, %v4114
    %v4682 = vpack.c.b16 %v4121, %v4118
    %v4683 = vpack.c.b16 %v4122, %v4119
    %v4684 = vpack.c.b16 %v4123, %v4120
    %v4685 = vpack.c.b16 %v4127, %v4124
    %v4686 = vpack.c.b16 %v4128, %v4125
    %v4687 = vpack.c.b16 %v4129, %v4126
    %v4688 = vpack.c.b16 %v4133, %v4130
    %v4689 = vpack.c.b16 %v4134, %v4131
    %v4690 = vpack.c.b16 %v4135, %v4132
    %v4691 = vpack.c.b16 %v4139, %v4136
    %v4692 = vpack.c.b16 %v4140, %v4137
    %v4693 = vpack.c.b16 %v4141, %v4138
    %v4694 = vpack.c.b16 %v4145, %v4142
    %v4695 = vpack.c.b16 %v4146, %v4143
    %v4696 = vpack.c.b16 %v4147, %v4144
    %v4697 = vpack.c.b16 %v4151, %v4148
    %v4698 = vpack.c.b16 %v4152, %v4149
    %v4699 = vpack.c.b16 %v4153, %v4150
    %v4700 = vpack.c.b16 %v4157, %v4154
    %v4701 = vpack.c.b16 %v4158, %v4155
    %v4702 = vpack.c.b16 %v4159, %v4156
    %v4703 = vpack.c.b16 %v4163, %v4160
    %v4704 = vpack.c.b16 %v4164, %v4161
    %v4705 = vpack.c.b16 %v4165, %v4162
    %v4706 = vpack.c.b16 %v4169, %v4166
    %v4707 = vpack.c.b16 %v4170, %v4167
    %v4708 = vpack.c.b16 %v4171, %v4168
    %v4709 = vpack.c.b16 %v4175, %v4172
    %v4710 = vpack.c.b16 %v4176, %v4173
    %v4711 = vpack.c.b16 %v4177, %v4174
    %v4712 = vpack.c.b16 %v4181, %v4178
    %v4713 = vpack.c.b16 %v4182, %v4179
    %v4714 = vpack.c.b16 %v4183, %v4180
    %v4715 = vpack.c.b16 %v4187, %v4184
    %v4716 = vpack.c.b16 %v4188, %v4185
    %v4717 = vpack.c.b16 %v4189, %v4186
    %v4718 = vpack.c.b16 %v4193, %v4190
    %v4719 = vpack.c.b16 %v4194, %v4191
    %v4720 = vpack.c.b16 %v4195, %v4192
    %v4721 = vpack.c.b16 %v4199, %v4196
    %v4722 = vpack.c.b16 %v4200, %v4197
    %v4723 = vpack.c.b16 %v4201, %v4198
    %v4724 = vpack.c.b16 %v4205, %v4202
    %v4725 = vpack.c.b16 %v4206, %v4203
    %v4726 = vpack.c.b16 %v4207, %v4204
    %v4727 = vpack.c.b16 %v4211, %v4208
    %v4728 = vpack.c.b16 %v4212, %v4209
    %v4729 = vpack.c.b16 %v4213, %v4210
    %v4730 = vpack.c.b16 %v4217, %v4214
    %v4731 = vpack.c.b16 %v4218, %v4215
    %v4732 = vpack.c.b16 %v4219, %v4216
    %v4733 = vpack.c.b16 %v4223, %v4220
    %v4734 = vpack.c.b16 %v4224, %v4221
    %v4735 = vpack.c.b16 %v4225, %v4222
    %v4736 = vpack.c.b16 %v4229, %v4226
    %v4737 = vpack.c.b16 %v4230, %v4227
    %v4738 = vpack.c.b16 %v4231, %v4228
    %v4739 = vpack.c.b16 %v4235, %v4232
    %v4740 = vpack.c.b16 %v4236, %v4233
    %v4741 = vpack.c.b16 %v4237, %v4234
    %v4742 = vpack.c.b16 %v4241, %v4238
    %v4743 = vpack.c.b16 %v4242, %v4239
    %v4744 = vpack.c.b16 %v4243, %v4240
    %v4745 = vpack.c.b16 %v4247, %v4244
    %v4746 = vpack.c.b16 %v4248, %v4245
    %v4747 = vpack.c.b16 %v4249, %v4246
    %v4748 = vpack.c.b16 %v4253, %v4250
    %v4749 = vpack.c.b16 %v4254, %v4251
    %v4750 = vpack.c.b16 %v4255, %v4252
    %v4751 = vpack.c.b16 %v4259, %v4256
    %v4752 = vpack.c.b16 %v4260, %v4257
    %v4753 = vpack.c.b16 %v4261, %v4258
    %v4754 = vpack.c.b16 %v4265, %v4262
    %v4755 = vpack.c.b16 %v4266, %v4263
    %v4756 = vpack.c.b16 %v4267, %v4264
    %v4757 = vpack.c.b16 %v4271, %v4268
    %v4758 = vpack.c.b16 %v4272, %v4269
    %v4759 = vpack.c.b16 %v4273, %v4270
    %v4760 = vpack.c.b16 %v4277, %v4274
    %v4761 = vpack.c.b16 %v4278, %v4275
    %v4762 = vpack.c.b16 %v4279, %v4276
    %v4763 = vpack.c.b16 %v4283, %v4280
    %v4764 = vpack.c.b16 %v4284, %v4281
    %v4765 = vpack.c.b16 %v4285, %v4282
    %v4766 = vpack.c.b16 %v4289, %v4286
    %v4767 = vpack.c.b16 %v4290, %v4287
    %v4768 = vpack.c.b16 %v4291, %v4288
    %v4769 = vpack.c.b16 %v4295, %v4292
    %v4770 = vpack.c.b16 %v4296, %v4293
    %v4771 = vpack.c.b16 %v4297, %v4294
    %v4772 = vpack.c.b16 %v4301, %v4298
    %v4773 = vpack.c.b16 %v4302, %v4299
    %v4774 = vpack.c.b16 %v4303, %v4300
    %v4775 = vpack.c.b16 %v4307, %v4304
    %v4776 = vpack.c.b16 %v4308, %v4305
    %v4777 = vpack.c.b16 %v4309, %v4306
    %v4778 = vpack.c.b16 %v4313, %v4310
    %v4779 = vpack.c.b16 %v4314, %v4311
    %v4780 = vpack.c.b16 %v4315, %v4312
    %v4781 = vpack.c.b16 %v4319, %v4316
    %v4782 = vpack.c.b16 %v4320, %v4317
    %v4783 = vpack.c.b16 %v4321, %v4318
    %v4784 = vpack.c.b16 %v4325, %v4322
    %v4785 = vpack.c.b16 %v4326, %v4323
    %v4786 = vpack.c.b16 %v4327, %v4324
    %v4787 = vpack.c.b16 %v4331, %v4328
    %v4788 = vpack.c.b16 %v4332, %v4329
    %v4789 = vpack.c.b16 %v4333, %v4330
    %v4790 = vpack.c.b16 %v4337, %v4334
    %v4791 = vpack.c.b16 %v4338, %v4335
    %v4792 = vpack.c.b16 %v4339, %v4336
    %v4793 = vpack.c.b16 %v4343, %v4340
    %v4794 = vpack.c.b16 %v4344, %v4341
    %v4795 = vpack.c.b16 %v4345, %v4342
    %v4796 = vpack.c.b16 %v4349, %v4346
    %v4797 = vpack.c.b16 %v4350, %v4347
    %v4798 = vpack.c.b16 %v4351, %v4348
    %v4799 = vpack.c.b16 %v4355, %v4352
    %v4800 = vpack.c.b16 %v4356, %v4353
    %v4801 = vpack.c.b16 %v4357, %v4354
    %v4802 = vpack.c.b16 %v4361, %v4358
    %v4803 = vpack.c.b16 %v4362, %v4359
    %v4804 = vpack.c.b16 %v4363, %v4360
    %v4805 = vpack.c.b16 %v4367, %v4364
    %v4806 = vpack.c.b16 %v4368, %v4365
    %v4807 = vpack.c.b16 %v4369, %v4366
    %v4808 = vpack.c.b16 %v4373, %v4370
    %v4809 = vpack.c.b16 %v4374, %v4371
    %v4810 = vpack.c.b16 %v4375, %v4372
    %v4811 = vpack.c.b16 %v4379, %v4376
    %v4812 = vpack.c.b16 %v4380, %v4377
    %v4813 = vpack.c.b16 %v4381, %v4378
    %v4814 = vpack.c.b16 %v4385, %v4382
    %v4815 = vpack.c.b16 %v4386, %v4383
    %v4816 = vpack.c.b16 %v4387, %v4384
    %v4817 = vpack.c.b16 %v4391, %v4388
    %v4818 = vpack.c.b16 %v4392, %v4389
    %v4819 = vpack.c.b16 %v4393, %v4390
    %v4820 = vpack.c.b16 %v4397, %v4394
    %v4821 = vpack.c.b16 %v4398, %v4395
    %v4822 = vpack.c.b16 %v4399, %v4396
    %v4823 = vpack.c.b16 %v4403, %v4400
    %v4824 = vpack.c.b16 %v4404, %v4401
    %v4825 = vpack.c.b16 %v4405, %v4402
    %v4826 = vpack.c.b16 %v4409, %v4406
    %v4827 = vpack.c.b16 %v4410, %v4407
    %v4828 = vpack.c.b16 %v4411, %v4408
    %v4829 = vpack.c.b16 %v4415, %v4412
    %v4830 = vpack.c.b16 %v4416, %v4413
    %v4831 = vpack.c.b16 %v4417, %v4414
    %v4832 = vpack.c.b16 %v4421, %v4418
    %v4833 = vpack.c.b16 %v4422, %v4419
    %v4834 = vpack.c.b16 %v4423, %v4420
    %v4835 = vpack.c.b16 %v4427, %v4424
    %v4836 = vpack.c.b16 %v4428, %v4425
    %v4837 = vpack.c.b16 %v4429, %v4426
    %v4838 = vpack.c.b16 %v4433, %v4430
    %v4839 = vpack.c.b16 %v4434, %v4431
    %v4840 = vpack.c.b16 %v4435, %v4432
    %v4841 = vpack.c.b16 %v4439, %v4436
    %v4842 = vpack.c.b16 %v4440, %v4437
    %v4843 = vpack.c.b16 %v4441, %v4438
    %v4844 = vpack.c.b16 %v4445, %v4442
    %v4845 = vpack.c.b16 %v4446, %v4443
    %v4846 = vpack.c.b16 %v4447, %v4444
    %v4847 = vpack.c.b16 %v4451, %v4448
    %v4848 = vpack.c.b16 %v4452, %v4449
    %v4849 = vpack.c.b16 %v4453, %v4450
    %v4850 = vpack.c.b16 %v4457, %v4454
    %v4851 = vpack.c.b16 %v4458, %v4455
    %v4852 = vpack.c.b16 %v4459, %v4456
    %v4853 = vpack.c.b16 %v4463, %v4460
    %v4854 = vpack.c.b16 %v4464, %v4461
    %v4855 = vpack.c.b16 %v4465, %v4462
    %v4856 = vpack.c.b16 %v4469, %v4466
    %v4857 = vpack.c.b16 %v4470, %v4467
    %v4858 = vpack.c.b16 %v4471, %v4468
    %v4859 = vpack.c.b16 %v4475, %v4472
    %v4860 = vpack.c.b16 %v4476, %v4473
    %v4861 = vpack.c.b16 %v4477, %v4474
    %v4862 = vpack.c.b16 %v4481, %v4478
    %v4863 = vpack.c.b16 %v4482, %v4479
    %v4864 = vpack.c.b16 %v4483, %v4480
    %v4865 = vpack.c.b16 %v4487, %v4484
    %v4866 = vpack.c.b16 %v4488, %v4485
    %v4867 = vpack.c.b16 %v4489, %v4486
    %v4868 = vpack.c.b16 %v4493, %v4490
    %v4869 = vpack.c.b16 %v4494, %v4491
    %v4870 = vpack.c.b16 %v4495, %v4492
    %v4871 = vpack.c.b16 %v4499, %v4496
    %v4872 = vpack.c.b16 %v4500, %v4497
    %v4873 = vpack.c.b16 %v4501, %v4498
    %v4874 = vpack.c.b16 %v4505, %v4502
    %v4875 = vpack.c.b16 %v4506, %v4503
    %v4876 = vpack.c.b16 %v4507, %v4504
    %v4877 = vpack.c.b16 %v4511, %v4508
    %v4878 = vpack.c.b16 %v4512, %v4509
    %v4879 = vpack.c.b16 %v4513, %v4510
    %v4880 = vpack.c.b16 %v4517, %v4514
    %v4881 = vpack.c.b16 %v4518, %v4515
    %v4882 = vpack.c.b16 %v4519, %v4516
    %v4883 = vpack.c.b16 %v4523, %v4520
    %v4884 = vpack.c.b16 %v4524, %v4521
    %v4885 = vpack.c.b16 %v4525, %v4522
    %v4886 = vpack.c.b16 %v4529, %v4526
    %v4887 = vpack.c.b16 %v4530, %v4527
    %v4888 = vpack.c.b16 %v4531, %v4528
    %v4889 = vpack.c.b16 %v4535, %v4532
    %v4890 = vpack.c.b16 %v4536, %v4533
    %v4891 = vpack.c.b16 %v4537, %v4534
    %v4892 = vpack.c.b16 %v4541, %v4538
    %v4893 = vpack.c.b16 %v4542, %v4539
    %v4894 = vpack.c.b16 %v4543, %v4540
    %v4895 = vpack.c.b16 %v4547, %v4544
    %v4896 = vpack.c.b16 %v4548, %v4545
    %v4897 = vpack.c.b16 %v4549, %v4546
    %v4898 = vpack.c.b16 %v4553, %v4550
    %v4899 = vpack.c.b16 %v4554, %v4551
    %v4900 = vpack.c.b16 %v4555, %v4552
    %v4901 = vpack.c.b16 %v4559, %v4556
    %v4902 = vpack.c.b16 %v4560, %v4557
    %v4903 = vpack.c.b16 %v4561, %v4558
    %v4904 = vpack.c.b16 %v4565, %v4562
    %v4905 = vpack.c.b16 %v4566, %v4563
    %v4906 = vpack.c.b16 %v4567, %v4564
    %v4907 = vpack.c.b16 %v4571, %v4568
    %v4908 = vpack.c.b16 %v4572, %v4569
    %v4909 = vpack.c.b16 %v4573, %v4570
    %v4910 = vpack.c.b16 %v4577, %v4574
    %v4911 = vpack.c.b16 %v4578, %v4575
    %v4912 = vpack.c.b16 %v4579, %v4576
    %v4913 = vpack.c.b16 %v4583, %v4580
    %v4914 = vpack.c.b16 %v4584, %v4581
    %v4915 = vpack.c.b16 %v4585, %v4582
    %v4916 = vpack.c.b16 %v4589, %v4586
    %v4917 = vpack.c.b16 %v4590, %v4587
    %v4918 = vpack.c.b16 %v4591, %v4588
    %v4919 = vpack.c.b16 %v4595, %v4592
    %v4920 = vpack.c.b16 %v4596, %v4593
    %v4921 = vpack.c.b16 %v4597, %v4594
    %v4922 = vpack.c.b16 %v4601, %v4598
    %v4923 = vpack.c.b16 %v4602, %v4599
    %v4924 = vpack.c.b16 %v4603, %v4600
    %v4925 = vpack.c.b16 %v4607, %v4604
    %v4926 = vpack.c.b16 %v4608, %v4605
    %v4927 = vpack.c.b16 %v4609, %v4606
    %v4928 = vpack.c.b16 %v4613, %v4610
    %v4929 = vpack.c.b16 %v4614, %v4611
    %v4930 = vpack.c.b16 %v4615, %v4612
    %v4931 = vpack.c.b16 %v4619, %v4616
    %v4932 = vpack.c.b16 %v4620, %v4617
    %v4933 = vpack.c.b16 %v4621, %v4618
    %v4934 = vpack.c.b16 %v4625, %v4622
    %v4935 = vpack.c.b16 %v4626, %v4623
    %v4936 = vpack.c.b16 %v4627, %v4624
    %v4937 = vpack.c.b16 %v4631, %v4628
    %v4938 = vpack.c.b16 %v4632, %v4629
    %v4939 = vpack.c.b16 %v4633, %v4630
    %v4940 = vpack.c.b16 %v4637, %v4634
    %v4941 = vpack.c.b16 %v4638, %v4635
    %v4942 = vpack.c.b16 %v4639, %v4636
    %v4943 = vpack.c.b16 %v4643, %v4640
    %v4944 = vpack.c.b16 %v4644, %v4641
    %v4945 = vpack.c.b16 %v4645, %v4642
    %v4946 = vpack.c.b16 %v4649, %v4646
    %v4947 = vpack.c.b16 %v4650, %v4647
    %v4948 = vpack.c.b16 %v4651, %v4648
    %v4949 = vpack.c.b16 %v4655, %v4652
    %v4950 = vpack.c.b16 %v4656, %v4653
    %v4951 = vpack.c.b16 %v4657, %v4654
    %v4952 = vpack.c.b16 %v4661, %v4658
    %v4953 = vpack.c.b16 %v4662, %v4659
    %v4954 = vpack.c.b16 %v4663, %v4660
    %v4955 = vpack.c.b16 %v4667, %v4664
    %v4956 = vpack.c.b16 %v4668, %v4665
    %v4957 = vpack.c.b16 %v4669, %v4666
    %5246 = vmatpush.bf16.msra.mxu0 %v4691
    %5247 = vmatpush.bf16.msra.mxu0 %v4688
    %5248 = vmatpush.bf16.msra.mxu0 %v4685
    %5249 = vmatpush.bf16.msra.mxu0 %v4682
    %5250 = vmatpush.bf16.msra.mxu0 %v4679
    %5251 = vmatpush.bf16.msra.mxu0 %v4676
    %5252 = vmatpush.bf16.msra.mxu0 %v4673
    %5253 = vmatpush.bf16.msra.mxu0 %v4670
    %5254 = vmatmul.bf16.gmra.mxu0 %v3270
    %v5255 = vpop.f32.mrf.mxu0
    %v5256 = vadd.f32 %v3704, %v5255
    %v5257 = vpop.f32.mrf.mxu0
    %v5258 = vadd.f32 %v3704, %v5257
    %5259 = vmatmul.bf16.gmra.mxu0 %v3282
    %v5260 = vpop.f32.mrf.mxu0
    %v5261 = vadd.f32 %v3704, %v5260
    %v5262 = vpop.f32.mrf.mxu0
    %v5263 = vadd.f32 %v3704, %v5262
    %5264 = vmatmul.bf16.gmra.mxu0 %v3294
    %v5265 = vpop.f32.mrf.mxu0
    %v5266 = vadd.f32 %v3704, %v5265
    %v5267 = vpop.f32.mrf.mxu0
    %v5268 = vadd.f32 %v3704, %v5267
    %5269 = vmatmul.bf16.gmra.mxu0 %v3306
    %v5270 = vpop.f32.mrf.mxu0
    %v5271 = vadd.f32 %v3704, %v5270
    %v5272 = vpop.f32.mrf.mxu0
    %v5273 = vadd.f32 %v3704, %v5272
    %5274 = vdwg.mxu0
    %5275 = vmatpush.bf16.msra.mxu0 %v4715
    %5276 = vmatpush.bf16.msra.mxu0 %v4712
    %5277 = vmatpush.bf16.msra.mxu0 %v4709
    %5278 = vmatpush.bf16.msra.mxu0 %v4706
    %5279 = vmatpush.bf16.msra.mxu0 %v4703
    %5280 = vmatpush.bf16.msra.mxu0 %v4700
    %5281 = vmatpush.bf16.msra.mxu0 %v4697
    %5282 = vmatpush.bf16.msra.mxu0 %v4694
    %5283 = vmatmul.bf16.gmra.mxu0 %v3271
    %v5284 = vpop.f32.mrf.mxu0
    %v5285 = vadd.f32 %v5256, %v5284
    %v5286 = vpop.f32.mrf.mxu0
    %v5287 = vadd.f32 %v5258, %v5286
    %5288 = vmatmul.bf16.gmra.mxu0 %v3283
    %v5289 = vpop.f32.mrf.mxu0
    %v5290 = vadd.f32 %v5261, %v5289
    %v5291 = vpop.f32.mrf.mxu0
    %v5292 = vadd.f32 %v5263, %v5291
    %5293 = vmatmul.bf16.gmra.mxu0 %v3295
    %v5294 = vpop.f32.mrf.mxu0
    %v5295 = vadd.f32 %v5266, %v5294
    %v5296 = vpop.f32.mrf.mxu0
    %v5297 = vadd.f32 %v5268, %v5296
    %5298 = vmatmul.bf16.gmra.mxu0 %v3307
    %v5299 = vpop.f32.mrf.mxu0
    %v5300 = vadd.f32 %v5271, %v5299
    %v5301 = vpop.f32.mrf.mxu0
    %v5302 = vadd.f32 %v5273, %v5301
    %5303 = vdwg.mxu0
    %5304 = vmatpush.bf16.msra.mxu0 %v4739
    %5305 = vmatpush.bf16.msra.mxu0 %v4736
    %5306 = vmatpush.bf16.msra.mxu0 %v4733
    %5307 = vmatpush.bf16.msra.mxu0 %v4730
    %5308 = vmatpush.bf16.msra.mxu0 %v4727
    %5309 = vmatpush.bf16.msra.mxu0 %v4724
    %5310 = vmatpush.bf16.msra.mxu0 %v4721
    %5311 = vmatpush.bf16.msra.mxu0 %v4718
    %5312 = vmatmul.bf16.gmra.mxu0 %v3272
    %v5313 = vpop.f32.mrf.mxu0
    %v5314 = vadd.f32 %v5285, %v5313
    %v5315 = vpop.f32.mrf.mxu0
    %v5316 = vadd.f32 %v5287, %v5315
    %5317 = vmatmul.bf16.gmra.mxu0 %v3284
    %v5318 = vpop.f32.mrf.mxu0
    %v5319 = vadd.f32 %v5290, %v5318
    %v5320 = vpop.f32.mrf.mxu0
    %v5321 = vadd.f32 %v5292, %v5320
    %5322 = vmatmul.bf16.gmra.mxu0 %v3296
    %v5323 = vpop.f32.mrf.mxu0
    %v5324 = vadd.f32 %v5295, %v5323
    %v5325 = vpop.f32.mrf.mxu0
    %v5326 = vadd.f32 %v5297, %v5325
    %5327 = vmatmul.bf16.gmra.mxu0 %v3308
    %v5328 = vpop.f32.mrf.mxu0
    %v5329 = vadd.f32 %v5300, %v5328
    %v5330 = vpop.f32.mrf.mxu0
    %v5331 = vadd.f32 %v5302, %v5330
    %5332 = vdwg.mxu0
    %5333 = vmatpush.bf16.msra.mxu0 %v4763
    %5334 = vmatpush.bf16.msra.mxu0 %v4760
    %5335 = vmatpush.bf16.msra.mxu0 %v4757
    %5336 = vmatpush.bf16.msra.mxu0 %v4754
    %5337 = vmatpush.bf16.msra.mxu0 %v4751
    %5338 = vmatpush.bf16.msra.mxu0 %v4748
    %5339 = vmatpush.bf16.msra.mxu0 %v4745
    %5340 = vmatpush.bf16.msra.mxu0 %v4742
    %5341 = vmatmul.bf16.gmra.mxu0 %v3273
    %v5342 = vpop.f32.mrf.mxu0
    %v5343 = vadd.f32 %v5314, %v5342
    %v5344 = vpop.f32.mrf.mxu0
    %v5345 = vadd.f32 %v5316, %v5344
    %5346 = vmatmul.bf16.gmra.mxu0 %v3285
    %v5347 = vpop.f32.mrf.mxu0
    %v5348 = vadd.f32 %v5319, %v5347
    %v5349 = vpop.f32.mrf.mxu0
    %v5350 = vadd.f32 %v5321, %v5349
    %5351 = vmatmul.bf16.gmra.mxu0 %v3297
    %v5352 = vpop.f32.mrf.mxu0
    %v5353 = vadd.f32 %v5324, %v5352
    %v5354 = vpop.f32.mrf.mxu0
    %v5355 = vadd.f32 %v5326, %v5354
    %5356 = vmatmul.bf16.gmra.mxu0 %v3309
    %v5357 = vpop.f32.mrf.mxu0
    %v5358 = vadd.f32 %v5329, %v5357
    %v5359 = vpop.f32.mrf.mxu0
    %v5360 = vadd.f32 %v5331, %v5359
    %5361 = vdwg.mxu0
    %5362 = vmatpush.bf16.msra.mxu0 %v4787
    %5363 = vmatpush.bf16.msra.mxu0 %v4784
    %5364 = vmatpush.bf16.msra.mxu0 %v4781
    %5365 = vmatpush.bf16.msra.mxu0 %v4778
    %5366 = vmatpush.bf16.msra.mxu0 %v4775
    %5367 = vmatpush.bf16.msra.mxu0 %v4772
    %5368 = vmatpush.bf16.msra.mxu0 %v4769
    %5369 = vmatpush.bf16.msra.mxu0 %v4766
    %5370 = vmatmul.bf16.gmra.mxu0 %v3274
    %v5371 = vpop.f32.mrf.mxu0
    %v5372 = vadd.f32 %v5343, %v5371
    %v5373 = vpop.f32.mrf.mxu0
    %v5374 = vadd.f32 %v5345, %v5373
    %5375 = vmatmul.bf16.gmra.mxu0 %v3286
    %v5376 = vpop.f32.mrf.mxu0
    %v5377 = vadd.f32 %v5348, %v5376
    %v5378 = vpop.f32.mrf.mxu0
    %v5379 = vadd.f32 %v5350, %v5378
    %5380 = vmatmul.bf16.gmra.mxu0 %v3298
    %v5381 = vpop.f32.mrf.mxu0
    %v5382 = vadd.f32 %v5353, %v5381
    %v5383 = vpop.f32.mrf.mxu0
    %v5384 = vadd.f32 %v5355, %v5383
    %5385 = vmatmul.bf16.gmra.mxu0 %v3310
    %v5386 = vpop.f32.mrf.mxu0
    %v5387 = vadd.f32 %v5358, %v5386
    %v5388 = vpop.f32.mrf.mxu0
    %v5389 = vadd.f32 %v5360, %v5388
    %5390 = vdwg.mxu0
    %5391 = vmatpush.bf16.msra.mxu0 %v4811
    %5392 = vmatpush.bf16.msra.mxu0 %v4808
    %5393 = vmatpush.bf16.msra.mxu0 %v4805
    %5394 = vmatpush.bf16.msra.mxu0 %v4802
    %5395 = vmatpush.bf16.msra.mxu0 %v4799
    %5396 = vmatpush.bf16.msra.mxu0 %v4796
    %5397 = vmatpush.bf16.msra.mxu0 %v4793
    %5398 = vmatpush.bf16.msra.mxu0 %v4790
    %5399 = vmatmul.bf16.gmra.mxu0 %v3275
    %v5400 = vpop.f32.mrf.mxu0
    %v5401 = vadd.f32 %v5372, %v5400
    %v5402 = vpop.f32.mrf.mxu0
    %v5403 = vadd.f32 %v5374, %v5402
    %5404 = vmatmul.bf16.gmra.mxu0 %v3287
    %v5405 = vpop.f32.mrf.mxu0
    %v5406 = vadd.f32 %v5377, %v5405
    %v5407 = vpop.f32.mrf.mxu0
    %v5408 = vadd.f32 %v5379, %v5407
    %5409 = vmatmul.bf16.gmra.mxu0 %v3299
    %v5410 = vpop.f32.mrf.mxu0
    %v5411 = vadd.f32 %v5382, %v5410
    %v5412 = vpop.f32.mrf.mxu0
    %v5413 = vadd.f32 %v5384, %v5412
    %5414 = vmatmul.bf16.gmra.mxu0 %v3311
    %v5415 = vpop.f32.mrf.mxu0
    %v5416 = vadd.f32 %v5387, %v5415
    %v5417 = vpop.f32.mrf.mxu0
    %v5418 = vadd.f32 %v5389, %v5417
    %5419 = vdwg.mxu0
    %5420 = vmatpush.bf16.msra.mxu0 %v4835
    %5421 = vmatpush.bf16.msra.mxu0 %v4832
    %5422 = vmatpush.bf16.msra.mxu0 %v4829
    %5423 = vmatpush.bf16.msra.mxu0 %v4826
    %5424 = vmatpush.bf16.msra.mxu0 %v4823
    %5425 = vmatpush.bf16.msra.mxu0 %v4820
    %5426 = vmatpush.bf16.msra.mxu0 %v4817
    %5427 = vmatpush.bf16.msra.mxu0 %v4814
    %5428 = vmatmul.bf16.gmra.mxu0 %v3276
    %v5429 = vpop.f32.mrf.mxu0
    %v5430 = vadd.f32 %v5401, %v5429
    %v5431 = vpop.f32.mrf.mxu0
    %v5432 = vadd.f32 %v5403, %v5431
    %5433 = vmatmul.bf16.gmra.mxu0 %v3288
    %v5434 = vpop.f32.mrf.mxu0
    %v5435 = vadd.f32 %v5406, %v5434
    %v5436 = vpop.f32.mrf.mxu0
    %v5437 = vadd.f32 %v5408, %v5436
    %5438 = vmatmul.bf16.gmra.mxu0 %v3300
    %v5439 = vpop.f32.mrf.mxu0
    %v5440 = vadd.f32 %v5411, %v5439
    %v5441 = vpop.f32.mrf.mxu0
    %v5442 = vadd.f32 %v5413, %v5441
    %5443 = vmatmul.bf16.gmra.mxu0 %v3312
    %v5444 = vpop.f32.mrf.mxu0
    %v5445 = vadd.f32 %v5416, %v5444
    %v5446 = vpop.f32.mrf.mxu0
    %v5447 = vadd.f32 %v5418, %v5446
    %5448 = vdwg.mxu0
    %5449 = vmatpush.bf16.msra.mxu0 %v4859
    %5450 = vmatpush.bf16.msra.mxu0 %v4856
    %5451 = vmatpush.bf16.msra.mxu0 %v4853
    %5452 = vmatpush.bf16.msra.mxu0 %v4850
    %5453 = vmatpush.bf16.msra.mxu0 %v4847
    %5454 = vmatpush.bf16.msra.mxu0 %v4844
    %5455 = vmatpush.bf16.msra.mxu0 %v4841
    %5456 = vmatpush.bf16.msra.mxu0 %v4838
    %5457 = vmatmul.bf16.gmra.mxu0 %v3277
    %v5458 = vpop.f32.mrf.mxu0
    %v5459 = vadd.f32 %v5430, %v5458
    %v5460 = vpop.f32.mrf.mxu0
    %v5461 = vadd.f32 %v5432, %v5460
    %5462 = vmatmul.bf16.gmra.mxu0 %v3289
    %v5463 = vpop.f32.mrf.mxu0
    %v5464 = vadd.f32 %v5435, %v5463
    %v5465 = vpop.f32.mrf.mxu0
    %v5466 = vadd.f32 %v5437, %v5465
    %5467 = vmatmul.bf16.gmra.mxu0 %v3301
    %v5468 = vpop.f32.mrf.mxu0
    %v5469 = vadd.f32 %v5440, %v5468
    %v5470 = vpop.f32.mrf.mxu0
    %v5471 = vadd.f32 %v5442, %v5470
    %5472 = vmatmul.bf16.gmra.mxu0 %v3313
    %v5473 = vpop.f32.mrf.mxu0
    %v5474 = vadd.f32 %v5445, %v5473
    %v5475 = vpop.f32.mrf.mxu0
    %v5476 = vadd.f32 %v5447, %v5475
    %5477 = vdwg.mxu0
    %5478 = vmatpush.bf16.msra.mxu0 %v4883
    %5479 = vmatpush.bf16.msra.mxu0 %v4880
    %5480 = vmatpush.bf16.msra.mxu0 %v4877
    %5481 = vmatpush.bf16.msra.mxu0 %v4874
    %5482 = vmatpush.bf16.msra.mxu0 %v4871
    %5483 = vmatpush.bf16.msra.mxu0 %v4868
    %5484 = vmatpush.bf16.msra.mxu0 %v4865
    %5485 = vmatpush.bf16.msra.mxu0 %v4862
    %5486 = vmatmul.bf16.gmra.mxu0 %v3278
    %v5487 = vpop.f32.mrf.mxu0
    %v5488 = vadd.f32 %v5459, %v5487
    %v5489 = vpop.f32.mrf.mxu0
    %v5490 = vadd.f32 %v5461, %v5489
    %5491 = vmatmul.bf16.gmra.mxu0 %v3290
    %v5492 = vpop.f32.mrf.mxu0
    %v5493 = vadd.f32 %v5464, %v5492
    %v5494 = vpop.f32.mrf.mxu0
    %v5495 = vadd.f32 %v5466, %v5494
    %5496 = vmatmul.bf16.gmra.mxu0 %v3302
    %v5497 = vpop.f32.mrf.mxu0
    %v5498 = vadd.f32 %v5469, %v5497
    %v5499 = vpop.f32.mrf.mxu0
    %v5500 = vadd.f32 %v5471, %v5499
    %5501 = vmatmul.bf16.gmra.mxu0 %v3314
    %v5502 = vpop.f32.mrf.mxu0
    %v5503 = vadd.f32 %v5474, %v5502
    %v5504 = vpop.f32.mrf.mxu0
    %v5505 = vadd.f32 %v5476, %v5504
    %5506 = vdwg.mxu0
    %5507 = vmatpush.bf16.msra.mxu0 %v4907
    %5508 = vmatpush.bf16.msra.mxu0 %v4904
    %5509 = vmatpush.bf16.msra.mxu0 %v4901
    %5510 = vmatpush.bf16.msra.mxu0 %v4898
    %5511 = vmatpush.bf16.msra.mxu0 %v4895
    %5512 = vmatpush.bf16.msra.mxu0 %v4892
    %5513 = vmatpush.bf16.msra.mxu0 %v4889
    %5514 = vmatpush.bf16.msra.mxu0 %v4886
    %5515 = vmatmul.bf16.gmra.mxu0 %v3279
    %v5516 = vpop.f32.mrf.mxu0
    %v5517 = vadd.f32 %v5488, %v5516
    %v5518 = vpop.f32.mrf.mxu0
    %v5519 = vadd.f32 %v5490, %v5518
    %5520 = vmatmul.bf16.gmra.mxu0 %v3291
    %v5521 = vpop.f32.mrf.mxu0
    %v5522 = vadd.f32 %v5493, %v5521
    %v5523 = vpop.f32.mrf.mxu0
    %v5524 = vadd.f32 %v5495, %v5523
    %5525 = vmatmul.bf16.gmra.mxu0 %v3303
    %v5526 = vpop.f32.mrf.mxu0
    %v5527 = vadd.f32 %v5498, %v5526
    %v5528 = vpop.f32.mrf.mxu0
    %v5529 = vadd.f32 %v5500, %v5528
    %5530 = vmatmul.bf16.gmra.mxu0 %v3315
    %v5531 = vpop.f32.mrf.mxu0
    %v5532 = vadd.f32 %v5503, %v5531
    %v5533 = vpop.f32.mrf.mxu0
    %v5534 = vadd.f32 %v5505, %v5533
    %5535 = vdwg.mxu0
    %5536 = vmatpush.bf16.msra.mxu0 %v4931
    %5537 = vmatpush.bf16.msra.mxu0 %v4928
    %5538 = vmatpush.bf16.msra.mxu0 %v4925
    %5539 = vmatpush.bf16.msra.mxu0 %v4922
    %5540 = vmatpush.bf16.msra.mxu0 %v4919
    %5541 = vmatpush.bf16.msra.mxu0 %v4916
    %5542 = vmatpush.bf16.msra.mxu0 %v4913
    %5543 = vmatpush.bf16.msra.mxu0 %v4910
    %5544 = vmatmul.bf16.gmra.mxu0 %v3280
    %v5545 = vpop.f32.mrf.mxu0
    %v5546 = vadd.f32 %v5517, %v5545
    %v5547 = vpop.f32.mrf.mxu0
    %v5548 = vadd.f32 %v5519, %v5547
    %5549 = vmatmul.bf16.gmra.mxu0 %v3292
    %v5550 = vpop.f32.mrf.mxu0
    %v5551 = vadd.f32 %v5522, %v5550
    %v5552 = vpop.f32.mrf.mxu0
    %v5553 = vadd.f32 %v5524, %v5552
    %5554 = vmatmul.bf16.gmra.mxu0 %v3304
    %v5555 = vpop.f32.mrf.mxu0
    %v5556 = vadd.f32 %v5527, %v5555
    %v5557 = vpop.f32.mrf.mxu0
    %v5558 = vadd.f32 %v5529, %v5557
    %5559 = vmatmul.bf16.gmra.mxu0 %v3316
    %v5560 = vpop.f32.mrf.mxu0
    %v5561 = vadd.f32 %v5532, %v5560
    %v5562 = vpop.f32.mrf.mxu0
    %v5563 = vadd.f32 %v5534, %v5562
    %5564 = vdwg.mxu0
    %5565 = vmatpush.bf16.msra.mxu0 %v4955
    %5566 = vmatpush.bf16.msra.mxu0 %v4952
    %5567 = vmatpush.bf16.msra.mxu0 %v4949
    %5568 = vmatpush.bf16.msra.mxu0 %v4946
    %5569 = vmatpush.bf16.msra.mxu0 %v4943
    %5570 = vmatpush.bf16.msra.mxu0 %v4940
    %5571 = vmatpush.bf16.msra.mxu0 %v4937
    %5572 = vmatpush.bf16.msra.mxu0 %v4934
    %5573 = vmatmul.bf16.gmra.mxu0 %v3281
    %v5574 = vpop.f32.mrf.mxu0
    %v5575 = vadd.f32 %v5546, %v5574
    %v5576 = vpop.f32.mrf.mxu0
    %v5577 = vadd.f32 %v5548, %v5576
    %5578 = vmatmul.bf16.gmra.mxu0 %v3293
    %v5579 = vpop.f32.mrf.mxu0
    %v5580 = vadd.f32 %v5551, %v5579
    %v5581 = vpop.f32.mrf.mxu0
    %v5582 = vadd.f32 %v5553, %v5581
    %5583 = vmatmul.bf16.gmra.mxu0 %v3305
    %v5584 = vpop.f32.mrf.mxu0
    %v5585 = vadd.f32 %v5556, %v5584
    %v5586 = vpop.f32.mrf.mxu0
    %v5587 = vadd.f32 %v5558, %v5586
    %5588 = vmatmul.bf16.gmra.mxu0 %v3317
    %v5589 = vpop.f32.mrf.mxu0
    %v5590 = vadd.f32 %v5561, %v5589
    %v5591 = vpop.f32.mrf.mxu0
    %v5592 = vadd.f32 %v5563, %v5591
    %5593 = vdwg.mxu0
    %5594 = vmatpush.bf16.msra.mxu0 %v4692
    %5595 = vmatpush.bf16.msra.mxu0 %v4689
    %5596 = vmatpush.bf16.msra.mxu0 %v4686
    %5597 = vmatpush.bf16.msra.mxu0 %v4683
    %5598 = vmatpush.bf16.msra.mxu0 %v4680
    %5599 = vmatpush.bf16.msra.mxu0 %v4677
    %5600 = vmatpush.bf16.msra.mxu0 %v4674
    %5601 = vmatpush.bf16.msra.mxu0 %v4671
    %5602 = vmatmul.bf16.gmra.mxu0 %v3270
    %v5603 = vpop.f32.mrf.mxu0
    %v5604 = vadd.f32 %v3705, %v5603
    %v5605 = vpop.f32.mrf.mxu0
    %v5606 = vadd.f32 %v3705, %v5605
    %5607 = vmatmul.bf16.gmra.mxu0 %v3282
    %v5608 = vpop.f32.mrf.mxu0
    %v5609 = vadd.f32 %v3705, %v5608
    %v5610 = vpop.f32.mrf.mxu0
    %v5611 = vadd.f32 %v3705, %v5610
    %5612 = vmatmul.bf16.gmra.mxu0 %v3294
    %v5613 = vpop.f32.mrf.mxu0
    %v5614 = vadd.f32 %v3705, %v5613
    %v5615 = vpop.f32.mrf.mxu0
    %v5616 = vadd.f32 %v3705, %v5615
    %5617 = vmatmul.bf16.gmra.mxu0 %v3306
    %v5618 = vpop.f32.mrf.mxu0
    %v5619 = vadd.f32 %v3705, %v5618
    %v5620 = vpop.f32.mrf.mxu0
    %v5621 = vadd.f32 %v3705, %v5620
    %5622 = vdwg.mxu0
    %5623 = vmatpush.bf16.msra.mxu0 %v4716
    %5624 = vmatpush.bf16.msra.mxu0 %v4713
    %5625 = vmatpush.bf16.msra.mxu0 %v4710
    %5626 = vmatpush.bf16.msra.mxu0 %v4707
    %5627 = vmatpush.bf16.msra.mxu0 %v4704
    %5628 = vmatpush.bf16.msra.mxu0 %v4701
    %5629 = vmatpush.bf16.msra.mxu0 %v4698
    %5630 = vmatpush.bf16.msra.mxu0 %v4695
    %5631 = vmatmul.bf16.gmra.mxu0 %v3271
    %v5632 = vpop.f32.mrf.mxu0
    %v5633 = vadd.f32 %v5604, %v5632
    %v5634 = vpop.f32.mrf.mxu0
    %v5635 = vadd.f32 %v5606, %v5634
    %5636 = vmatmul.bf16.gmra.mxu0 %v3283
    %v5637 = vpop.f32.mrf.mxu0
    %v5638 = vadd.f32 %v5609, %v5637
    %v5639 = vpop.f32.mrf.mxu0
    %v5640 = vadd.f32 %v5611, %v5639
    %5641 = vmatmul.bf16.gmra.mxu0 %v3295
    %v5642 = vpop.f32.mrf.mxu0
    %v5643 = vadd.f32 %v5614, %v5642
    %v5644 = vpop.f32.mrf.mxu0
    %v5645 = vadd.f32 %v5616, %v5644
    %5646 = vmatmul.bf16.gmra.mxu0 %v3307
    %v5647 = vpop.f32.mrf.mxu0
    %v5648 = vadd.f32 %v5619, %v5647
    %v5649 = vpop.f32.mrf.mxu0
    %v5650 = vadd.f32 %v5621, %v5649
    %5651 = vdwg.mxu0
    %5652 = vmatpush.bf16.msra.mxu0 %v4740
    %5653 = vmatpush.bf16.msra.mxu0 %v4737
    %5654 = vmatpush.bf16.msra.mxu0 %v4734
    %5655 = vmatpush.bf16.msra.mxu0 %v4731
    %5656 = vmatpush.bf16.msra.mxu0 %v4728
    %5657 = vmatpush.bf16.msra.mxu0 %v4725
    %5658 = vmatpush.bf16.msra.mxu0 %v4722
    %5659 = vmatpush.bf16.msra.mxu0 %v4719
    %5660 = vmatmul.bf16.gmra.mxu0 %v3272
    %v5661 = vpop.f32.mrf.mxu0
    %v5662 = vadd.f32 %v5633, %v5661
    %v5663 = vpop.f32.mrf.mxu0
    %v5664 = vadd.f32 %v5635, %v5663
    %5665 = vmatmul.bf16.gmra.mxu0 %v3284
    %v5666 = vpop.f32.mrf.mxu0
    %v5667 = vadd.f32 %v5638, %v5666
    %v5668 = vpop.f32.mrf.mxu0
    %v5669 = vadd.f32 %v5640, %v5668
    %5670 = vmatmul.bf16.gmra.mxu0 %v3296
    %v5671 = vpop.f32.mrf.mxu0
    %v5672 = vadd.f32 %v5643, %v5671
    %v5673 = vpop.f32.mrf.mxu0
    %v5674 = vadd.f32 %v5645, %v5673
    %5675 = vmatmul.bf16.gmra.mxu0 %v3308
    %v5676 = vpop.f32.mrf.mxu0
    %v5677 = vadd.f32 %v5648, %v5676
    %v5678 = vpop.f32.mrf.mxu0
    %v5679 = vadd.f32 %v5650, %v5678
    %5680 = vdwg.mxu0
    %5681 = vmatpush.bf16.msra.mxu0 %v4764
    %5682 = vmatpush.bf16.msra.mxu0 %v4761
    %5683 = vmatpush.bf16.msra.mxu0 %v4758
    %5684 = vmatpush.bf16.msra.mxu0 %v4755
    %5685 = vmatpush.bf16.msra.mxu0 %v4752
    %5686 = vmatpush.bf16.msra.mxu0 %v4749
    %5687 = vmatpush.bf16.msra.mxu0 %v4746
    %5688 = vmatpush.bf16.msra.mxu0 %v4743
    %5689 = vmatmul.bf16.gmra.mxu0 %v3273
    %v5690 = vpop.f32.mrf.mxu0
    %v5691 = vadd.f32 %v5662, %v5690
    %v5692 = vpop.f32.mrf.mxu0
    %v5693 = vadd.f32 %v5664, %v5692
    %5694 = vmatmul.bf16.gmra.mxu0 %v3285
    %v5695 = vpop.f32.mrf.mxu0
    %v5696 = vadd.f32 %v5667, %v5695
    %v5697 = vpop.f32.mrf.mxu0
    %v5698 = vadd.f32 %v5669, %v5697
    %5699 = vmatmul.bf16.gmra.mxu0 %v3297
    %v5700 = vpop.f32.mrf.mxu0
    %v5701 = vadd.f32 %v5672, %v5700
    %v5702 = vpop.f32.mrf.mxu0
    %v5703 = vadd.f32 %v5674, %v5702
    %5704 = vmatmul.bf16.gmra.mxu0 %v3309
    %v5705 = vpop.f32.mrf.mxu0
    %v5706 = vadd.f32 %v5677, %v5705
    %v5707 = vpop.f32.mrf.mxu0
    %v5708 = vadd.f32 %v5679, %v5707
    %5709 = vdwg.mxu0
    %5710 = vmatpush.bf16.msra.mxu0 %v4788
    %5711 = vmatpush.bf16.msra.mxu0 %v4785
    %5712 = vmatpush.bf16.msra.mxu0 %v4782
    %5713 = vmatpush.bf16.msra.mxu0 %v4779
    %5714 = vmatpush.bf16.msra.mxu0 %v4776
    %5715 = vmatpush.bf16.msra.mxu0 %v4773
    %5716 = vmatpush.bf16.msra.mxu0 %v4770
    %5717 = vmatpush.bf16.msra.mxu0 %v4767
    %5718 = vmatmul.bf16.gmra.mxu0 %v3274
    %v5719 = vpop.f32.mrf.mxu0
    %v5720 = vadd.f32 %v5691, %v5719
    %v5721 = vpop.f32.mrf.mxu0
    %v5722 = vadd.f32 %v5693, %v5721
    %5723 = vmatmul.bf16.gmra.mxu0 %v3286
    %v5724 = vpop.f32.mrf.mxu0
    %v5725 = vadd.f32 %v5696, %v5724
    %v5726 = vpop.f32.mrf.mxu0
    %v5727 = vadd.f32 %v5698, %v5726
    %5728 = vmatmul.bf16.gmra.mxu0 %v3298
    %v5729 = vpop.f32.mrf.mxu0
    %v5730 = vadd.f32 %v5701, %v5729
    %v5731 = vpop.f32.mrf.mxu0
    %v5732 = vadd.f32 %v5703, %v5731
    %5733 = vmatmul.bf16.gmra.mxu0 %v3310
    %v5734 = vpop.f32.mrf.mxu0
    %v5735 = vadd.f32 %v5706, %v5734
    %v5736 = vpop.f32.mrf.mxu0
    %v5737 = vadd.f32 %v5708, %v5736
    %5738 = vdwg.mxu0
    %5739 = vmatpush.bf16.msra.mxu0 %v4812
    %5740 = vmatpush.bf16.msra.mxu0 %v4809
    %5741 = vmatpush.bf16.msra.mxu0 %v4806
    %5742 = vmatpush.bf16.msra.mxu0 %v4803
    %5743 = vmatpush.bf16.msra.mxu0 %v4800
    %5744 = vmatpush.bf16.msra.mxu0 %v4797
    %5745 = vmatpush.bf16.msra.mxu0 %v4794
    %5746 = vmatpush.bf16.msra.mxu0 %v4791
    %5747 = vmatmul.bf16.gmra.mxu0 %v3275
    %v5748 = vpop.f32.mrf.mxu0
    %v5749 = vadd.f32 %v5720, %v5748
    %v5750 = vpop.f32.mrf.mxu0
    %v5751 = vadd.f32 %v5722, %v5750
    %5752 = vmatmul.bf16.gmra.mxu0 %v3287
    %v5753 = vpop.f32.mrf.mxu0
    %v5754 = vadd.f32 %v5725, %v5753
    %v5755 = vpop.f32.mrf.mxu0
    %v5756 = vadd.f32 %v5727, %v5755
    %5757 = vmatmul.bf16.gmra.mxu0 %v3299
    %v5758 = vpop.f32.mrf.mxu0
    %v5759 = vadd.f32 %v5730, %v5758
    %v5760 = vpop.f32.mrf.mxu0
    %v5761 = vadd.f32 %v5732, %v5760
    %5762 = vmatmul.bf16.gmra.mxu0 %v3311
    %v5763 = vpop.f32.mrf.mxu0
    %v5764 = vadd.f32 %v5735, %v5763
    %v5765 = vpop.f32.mrf.mxu0
    %v5766 = vadd.f32 %v5737, %v5765
    %5767 = vdwg.mxu0
    %5768 = vmatpush.bf16.msra.mxu0 %v4836
    %5769 = vmatpush.bf16.msra.mxu0 %v4833
    %5770 = vmatpush.bf16.msra.mxu0 %v4830
    %5771 = vmatpush.bf16.msra.mxu0 %v4827
    %5772 = vmatpush.bf16.msra.mxu0 %v4824
    %5773 = vmatpush.bf16.msra.mxu0 %v4821
    %5774 = vmatpush.bf16.msra.mxu0 %v4818
    %5775 = vmatpush.bf16.msra.mxu0 %v4815
    %5776 = vmatmul.bf16.gmra.mxu0 %v3276
    %v5777 = vpop.f32.mrf.mxu0
    %v5778 = vadd.f32 %v5749, %v5777
    %v5779 = vpop.f32.mrf.mxu0
    %v5780 = vadd.f32 %v5751, %v5779
    %5781 = vmatmul.bf16.gmra.mxu0 %v3288
    %v5782 = vpop.f32.mrf.mxu0
    %v5783 = vadd.f32 %v5754, %v5782
    %v5784 = vpop.f32.mrf.mxu0
    %v5785 = vadd.f32 %v5756, %v5784
    %5786 = vmatmul.bf16.gmra.mxu0 %v3300
    %v5787 = vpop.f32.mrf.mxu0
    %v5788 = vadd.f32 %v5759, %v5787
    %v5789 = vpop.f32.mrf.mxu0
    %v5790 = vadd.f32 %v5761, %v5789
    %5791 = vmatmul.bf16.gmra.mxu0 %v3312
    %v5792 = vpop.f32.mrf.mxu0
    %v5793 = vadd.f32 %v5764, %v5792
    %v5794 = vpop.f32.mrf.mxu0
    %v5795 = vadd.f32 %v5766, %v5794
    %5796 = vdwg.mxu0
    %5797 = vmatpush.bf16.msra.mxu0 %v4860
    %5798 = vmatpush.bf16.msra.mxu0 %v4857
    %5799 = vmatpush.bf16.msra.mxu0 %v4854
    %5800 = vmatpush.bf16.msra.mxu0 %v4851
    %5801 = vmatpush.bf16.msra.mxu0 %v4848
    %5802 = vmatpush.bf16.msra.mxu0 %v4845
    %5803 = vmatpush.bf16.msra.mxu0 %v4842
    %5804 = vmatpush.bf16.msra.mxu0 %v4839
    %5805 = vmatmul.bf16.gmra.mxu0 %v3277
    %v5806 = vpop.f32.mrf.mxu0
    %v5807 = vadd.f32 %v5778, %v5806
    %v5808 = vpop.f32.mrf.mxu0
    %v5809 = vadd.f32 %v5780, %v5808
    %5810 = vmatmul.bf16.gmra.mxu0 %v3289
    %v5811 = vpop.f32.mrf.mxu0
    %v5812 = vadd.f32 %v5783, %v5811
    %v5813 = vpop.f32.mrf.mxu0
    %v5814 = vadd.f32 %v5785, %v5813
    %5815 = vmatmul.bf16.gmra.mxu0 %v3301
    %v5816 = vpop.f32.mrf.mxu0
    %v5817 = vadd.f32 %v5788, %v5816
    %v5818 = vpop.f32.mrf.mxu0
    %v5819 = vadd.f32 %v5790, %v5818
    %5820 = vmatmul.bf16.gmra.mxu0 %v3313
    %v5821 = vpop.f32.mrf.mxu0
    %v5822 = vadd.f32 %v5793, %v5821
    %v5823 = vpop.f32.mrf.mxu0
    %v5824 = vadd.f32 %v5795, %v5823
    %5825 = vdwg.mxu0
    %5826 = vmatpush.bf16.msra.mxu0 %v4884
    %5827 = vmatpush.bf16.msra.mxu0 %v4881
    %5828 = vmatpush.bf16.msra.mxu0 %v4878
    %5829 = vmatpush.bf16.msra.mxu0 %v4875
    %5830 = vmatpush.bf16.msra.mxu0 %v4872
    %5831 = vmatpush.bf16.msra.mxu0 %v4869
    %5832 = vmatpush.bf16.msra.mxu0 %v4866
    %5833 = vmatpush.bf16.msra.mxu0 %v4863
    %5834 = vmatmul.bf16.gmra.mxu0 %v3278
    %v5835 = vpop.f32.mrf.mxu0
    %v5836 = vadd.f32 %v5807, %v5835
    %v5837 = vpop.f32.mrf.mxu0
    %v5838 = vadd.f32 %v5809, %v5837
    %5839 = vmatmul.bf16.gmra.mxu0 %v3290
    %v5840 = vpop.f32.mrf.mxu0
    %v5841 = vadd.f32 %v5812, %v5840
    %v5842 = vpop.f32.mrf.mxu0
    %v5843 = vadd.f32 %v5814, %v5842
    %5844 = vmatmul.bf16.gmra.mxu0 %v3302
    %v5845 = vpop.f32.mrf.mxu0
    %v5846 = vadd.f32 %v5817, %v5845
    %v5847 = vpop.f32.mrf.mxu0
    %v5848 = vadd.f32 %v5819, %v5847
    %5849 = vmatmul.bf16.gmra.mxu0 %v3314
    %v5850 = vpop.f32.mrf.mxu0
    %v5851 = vadd.f32 %v5822, %v5850
    %v5852 = vpop.f32.mrf.mxu0
    %v5853 = vadd.f32 %v5824, %v5852
    %5854 = vdwg.mxu0
    %5855 = vmatpush.bf16.msra.mxu0 %v4908
    %5856 = vmatpush.bf16.msra.mxu0 %v4905
    %5857 = vmatpush.bf16.msra.mxu0 %v4902
    %5858 = vmatpush.bf16.msra.mxu0 %v4899
    %5859 = vmatpush.bf16.msra.mxu0 %v4896
    %5860 = vmatpush.bf16.msra.mxu0 %v4893
    %5861 = vmatpush.bf16.msra.mxu0 %v4890
    %5862 = vmatpush.bf16.msra.mxu0 %v4887
    %5863 = vmatmul.bf16.gmra.mxu0 %v3279
    %v5864 = vpop.f32.mrf.mxu0
    %v5865 = vadd.f32 %v5836, %v5864
    %v5866 = vpop.f32.mrf.mxu0
    %v5867 = vadd.f32 %v5838, %v5866
    %5868 = vmatmul.bf16.gmra.mxu0 %v3291
    %v5869 = vpop.f32.mrf.mxu0
    %v5870 = vadd.f32 %v5841, %v5869
    %v5871 = vpop.f32.mrf.mxu0
    %v5872 = vadd.f32 %v5843, %v5871
    %5873 = vmatmul.bf16.gmra.mxu0 %v3303
    %v5874 = vpop.f32.mrf.mxu0
    %v5875 = vadd.f32 %v5846, %v5874
    %v5876 = vpop.f32.mrf.mxu0
    %v5877 = vadd.f32 %v5848, %v5876
    %5878 = vmatmul.bf16.gmra.mxu0 %v3315
    %v5879 = vpop.f32.mrf.mxu0
    %v5880 = vadd.f32 %v5851, %v5879
    %v5881 = vpop.f32.mrf.mxu0
    %v5882 = vadd.f32 %v5853, %v5881
    %5883 = vdwg.mxu0
    %5884 = vmatpush.bf16.msra.mxu0 %v4932
    %5885 = vmatpush.bf16.msra.mxu0 %v4929
    %5886 = vmatpush.bf16.msra.mxu0 %v4926
    %5887 = vmatpush.bf16.msra.mxu0 %v4923
    %5888 = vmatpush.bf16.msra.mxu0 %v4920
    %5889 = vmatpush.bf16.msra.mxu0 %v4917
    %5890 = vmatpush.bf16.msra.mxu0 %v4914
    %5891 = vmatpush.bf16.msra.mxu0 %v4911
    %5892 = vmatmul.bf16.gmra.mxu0 %v3280
    %v5893 = vpop.f32.mrf.mxu0
    %v5894 = vadd.f32 %v5865, %v5893
    %v5895 = vpop.f32.mrf.mxu0
    %v5896 = vadd.f32 %v5867, %v5895
    %5897 = vmatmul.bf16.gmra.mxu0 %v3292
    %v5898 = vpop.f32.mrf.mxu0
    %v5899 = vadd.f32 %v5870, %v5898
    %v5900 = vpop.f32.mrf.mxu0
    %v5901 = vadd.f32 %v5872, %v5900
    %5902 = vmatmul.bf16.gmra.mxu0 %v3304
    %v5903 = vpop.f32.mrf.mxu0
    %v5904 = vadd.f32 %v5875, %v5903
    %v5905 = vpop.f32.mrf.mxu0
    %v5906 = vadd.f32 %v5877, %v5905
    %5907 = vmatmul.bf16.gmra.mxu0 %v3316
    %v5908 = vpop.f32.mrf.mxu0
    %v5909 = vadd.f32 %v5880, %v5908
    %v5910 = vpop.f32.mrf.mxu0
    %v5911 = vadd.f32 %v5882, %v5910
    %5912 = vdwg.mxu0
    %5913 = vmatpush.bf16.msra.mxu0 %v4956
    %5914 = vmatpush.bf16.msra.mxu0 %v4953
    %5915 = vmatpush.bf16.msra.mxu0 %v4950
    %5916 = vmatpush.bf16.msra.mxu0 %v4947
    %5917 = vmatpush.bf16.msra.mxu0 %v4944
    %5918 = vmatpush.bf16.msra.mxu0 %v4941
    %5919 = vmatpush.bf16.msra.mxu0 %v4938
    %5920 = vmatpush.bf16.msra.mxu0 %v4935
    %5921 = vmatmul.bf16.gmra.mxu0 %v3281
    %v5922 = vpop.f32.mrf.mxu0
    %v5923 = vadd.f32 %v5894, %v5922
    %v5924 = vpop.f32.mrf.mxu0
    %v5925 = vadd.f32 %v5896, %v5924
    %5926 = vmatmul.bf16.gmra.mxu0 %v3293
    %v5927 = vpop.f32.mrf.mxu0
    %v5928 = vadd.f32 %v5899, %v5927
    %v5929 = vpop.f32.mrf.mxu0
    %v5930 = vadd.f32 %v5901, %v5929
    %5931 = vmatmul.bf16.gmra.mxu0 %v3305
    %v5932 = vpop.f32.mrf.mxu0
    %v5933 = vadd.f32 %v5904, %v5932
    %v5934 = vpop.f32.mrf.mxu0
    %v5935 = vadd.f32 %v5906, %v5934
    %5936 = vmatmul.bf16.gmra.mxu0 %v3317
    %v5937 = vpop.f32.mrf.mxu0
    %v5938 = vadd.f32 %v5909, %v5937
    %v5939 = vpop.f32.mrf.mxu0
    %v5940 = vadd.f32 %v5911, %v5939
    %5941 = vdwg.mxu0
    %5942 = vmatpush.bf16.msra.mxu0 %v4693
    %5943 = vmatpush.bf16.msra.mxu0 %v4690
    %5944 = vmatpush.bf16.msra.mxu0 %v4687
    %5945 = vmatpush.bf16.msra.mxu0 %v4684
    %5946 = vmatpush.bf16.msra.mxu0 %v4681
    %5947 = vmatpush.bf16.msra.mxu0 %v4678
    %5948 = vmatpush.bf16.msra.mxu0 %v4675
    %5949 = vmatpush.bf16.msra.mxu0 %v4672
    %5950 = vmatmul.bf16.gmra.mxu0 %v3270
    %v5951 = vpop.f32.mrf.mxu0
    %v5952 = vadd.f32 %v3706, %v5951
    %v5953 = vpop.f32.mrf.mxu0
    %v5954 = vadd.f32 %v3706, %v5953
    %5955 = vmatmul.bf16.gmra.mxu0 %v3282
    %v5956 = vpop.f32.mrf.mxu0
    %v5957 = vadd.f32 %v3706, %v5956
    %v5958 = vpop.f32.mrf.mxu0
    %v5959 = vadd.f32 %v3706, %v5958
    %5960 = vmatmul.bf16.gmra.mxu0 %v3294
    %v5961 = vpop.f32.mrf.mxu0
    %v5962 = vadd.f32 %v3706, %v5961
    %v5963 = vpop.f32.mrf.mxu0
    %v5964 = vadd.f32 %v3706, %v5963
    %5965 = vmatmul.bf16.gmra.mxu0 %v3306
    %v5966 = vpop.f32.mrf.mxu0
    %v5967 = vadd.f32 %v3706, %v5966
    %v5968 = vpop.f32.mrf.mxu0
    %v5969 = vadd.f32 %v3706, %v5968
    %5970 = vdwg.mxu0
    %5971 = vmatpush.bf16.msra.mxu0 %v4717
    %5972 = vmatpush.bf16.msra.mxu0 %v4714
    %5973 = vmatpush.bf16.msra.mxu0 %v4711
    %5974 = vmatpush.bf16.msra.mxu0 %v4708
    %5975 = vmatpush.bf16.msra.mxu0 %v4705
    %5976 = vmatpush.bf16.msra.mxu0 %v4702
    %5977 = vmatpush.bf16.msra.mxu0 %v4699
    %5978 = vmatpush.bf16.msra.mxu0 %v4696
    %5979 = vmatmul.bf16.gmra.mxu0 %v3271
    %v5980 = vpop.f32.mrf.mxu0
    %v5981 = vadd.f32 %v5952, %v5980
    %v5982 = vpop.f32.mrf.mxu0
    %v5983 = vadd.f32 %v5954, %v5982
    %5984 = vmatmul.bf16.gmra.mxu0 %v3283
    %v5985 = vpop.f32.mrf.mxu0
    %v5986 = vadd.f32 %v5957, %v5985
    %v5987 = vpop.f32.mrf.mxu0
    %v5988 = vadd.f32 %v5959, %v5987
    %5989 = vmatmul.bf16.gmra.mxu0 %v3295
    %v5990 = vpop.f32.mrf.mxu0
    %v5991 = vadd.f32 %v5962, %v5990
    %v5992 = vpop.f32.mrf.mxu0
    %v5993 = vadd.f32 %v5964, %v5992
    %5994 = vmatmul.bf16.gmra.mxu0 %v3307
    %v5995 = vpop.f32.mrf.mxu0
    %v5996 = vadd.f32 %v5967, %v5995
    %v5997 = vpop.f32.mrf.mxu0
    %v5998 = vadd.f32 %v5969, %v5997
    %5999 = vdwg.mxu0
    %6000 = vmatpush.bf16.msra.mxu0 %v4741
    %6001 = vmatpush.bf16.msra.mxu0 %v4738
    %6002 = vmatpush.bf16.msra.mxu0 %v4735
    %6003 = vmatpush.bf16.msra.mxu0 %v4732
    %6004 = vmatpush.bf16.msra.mxu0 %v4729
    %6005 = vmatpush.bf16.msra.mxu0 %v4726
    %6006 = vmatpush.bf16.msra.mxu0 %v4723
    %6007 = vmatpush.bf16.msra.mxu0 %v4720
    %6008 = vmatmul.bf16.gmra.mxu0 %v3272
    %v6009 = vpop.f32.mrf.mxu0
    %v6010 = vadd.f32 %v5981, %v6009
    %v6011 = vpop.f32.mrf.mxu0
    %v6012 = vadd.f32 %v5983, %v6011
    %6013 = vmatmul.bf16.gmra.mxu0 %v3284
    %v6014 = vpop.f32.mrf.mxu0
    %v6015 = vadd.f32 %v5986, %v6014
    %v6016 = vpop.f32.mrf.mxu0
    %v6017 = vadd.f32 %v5988, %v6016
    %6018 = vmatmul.bf16.gmra.mxu0 %v3296
    %v6019 = vpop.f32.mrf.mxu0
    %v6020 = vadd.f32 %v5991, %v6019
    %v6021 = vpop.f32.mrf.mxu0
    %v6022 = vadd.f32 %v5993, %v6021
    %6023 = vmatmul.bf16.gmra.mxu0 %v3308
    %v6024 = vpop.f32.mrf.mxu0
    %v6025 = vadd.f32 %v5996, %v6024
    %v6026 = vpop.f32.mrf.mxu0
    %v6027 = vadd.f32 %v5998, %v6026
    %6028 = vdwg.mxu0
    %6029 = vmatpush.bf16.msra.mxu0 %v4765
    %6030 = vmatpush.bf16.msra.mxu0 %v4762
    %6031 = vmatpush.bf16.msra.mxu0 %v4759
    %6032 = vmatpush.bf16.msra.mxu0 %v4756
    %6033 = vmatpush.bf16.msra.mxu0 %v4753
    %6034 = vmatpush.bf16.msra.mxu0 %v4750
    %6035 = vmatpush.bf16.msra.mxu0 %v4747
    %6036 = vmatpush.bf16.msra.mxu0 %v4744
    %6037 = vmatmul.bf16.gmra.mxu0 %v3273
    %v6038 = vpop.f32.mrf.mxu0
    %v6039 = vadd.f32 %v6010, %v6038
    %v6040 = vpop.f32.mrf.mxu0
    %v6041 = vadd.f32 %v6012, %v6040
    %6042 = vmatmul.bf16.gmra.mxu0 %v3285
    %v6043 = vpop.f32.mrf.mxu0
    %v6044 = vadd.f32 %v6015, %v6043
    %v6045 = vpop.f32.mrf.mxu0
    %v6046 = vadd.f32 %v6017, %v6045
    %6047 = vmatmul.bf16.gmra.mxu0 %v3297
    %v6048 = vpop.f32.mrf.mxu0
    %v6049 = vadd.f32 %v6020, %v6048
    %v6050 = vpop.f32.mrf.mxu0
    %v6051 = vadd.f32 %v6022, %v6050
    %6052 = vmatmul.bf16.gmra.mxu0 %v3309
    %v6053 = vpop.f32.mrf.mxu0
    %v6054 = vadd.f32 %v6025, %v6053
    %v6055 = vpop.f32.mrf.mxu0
    %v6056 = vadd.f32 %v6027, %v6055
    %6057 = vdwg.mxu0
    %6058 = vmatpush.bf16.msra.mxu0 %v4789
    %6059 = vmatpush.bf16.msra.mxu0 %v4786
    %6060 = vmatpush.bf16.msra.mxu0 %v4783
    %6061 = vmatpush.bf16.msra.mxu0 %v4780
    %6062 = vmatpush.bf16.msra.mxu0 %v4777
    %6063 = vmatpush.bf16.msra.mxu0 %v4774
    %6064 = vmatpush.bf16.msra.mxu0 %v4771
    %6065 = vmatpush.bf16.msra.mxu0 %v4768
    %6066 = vmatmul.bf16.gmra.mxu0 %v3274
    %v6067 = vpop.f32.mrf.mxu0
    %v6068 = vadd.f32 %v6039, %v6067
    %v6069 = vpop.f32.mrf.mxu0
    %v6070 = vadd.f32 %v6041, %v6069
    %6071 = vmatmul.bf16.gmra.mxu0 %v3286
    %v6072 = vpop.f32.mrf.mxu0
    %v6073 = vadd.f32 %v6044, %v6072
    %v6074 = vpop.f32.mrf.mxu0
    %v6075 = vadd.f32 %v6046, %v6074
    %6076 = vmatmul.bf16.gmra.mxu0 %v3298
    %v6077 = vpop.f32.mrf.mxu0
    %v6078 = vadd.f32 %v6049, %v6077
    %v6079 = vpop.f32.mrf.mxu0
    %v6080 = vadd.f32 %v6051, %v6079
    %6081 = vmatmul.bf16.gmra.mxu0 %v3310
    %v6082 = vpop.f32.mrf.mxu0
    %v6083 = vadd.f32 %v6054, %v6082
    %v6084 = vpop.f32.mrf.mxu0
    %v6085 = vadd.f32 %v6056, %v6084
    %6086 = vdwg.mxu0
    %6087 = vmatpush.bf16.msra.mxu0 %v4813
    %6088 = vmatpush.bf16.msra.mxu0 %v4810
    %6089 = vmatpush.bf16.msra.mxu0 %v4807
    %6090 = vmatpush.bf16.msra.mxu0 %v4804
    %6091 = vmatpush.bf16.msra.mxu0 %v4801
    %6092 = vmatpush.bf16.msra.mxu0 %v4798
    %6093 = vmatpush.bf16.msra.mxu0 %v4795
    %6094 = vmatpush.bf16.msra.mxu0 %v4792
    %6095 = vmatmul.bf16.gmra.mxu0 %v3275
    %v6096 = vpop.f32.mrf.mxu0
    %v6097 = vadd.f32 %v6068, %v6096
    %v6098 = vpop.f32.mrf.mxu0
    %v6099 = vadd.f32 %v6070, %v6098
    %6100 = vmatmul.bf16.gmra.mxu0 %v3287
    %v6101 = vpop.f32.mrf.mxu0
    %v6102 = vadd.f32 %v6073, %v6101
    %v6103 = vpop.f32.mrf.mxu0
    %v6104 = vadd.f32 %v6075, %v6103
    %6105 = vmatmul.bf16.gmra.mxu0 %v3299
    %v6106 = vpop.f32.mrf.mxu0
    %v6107 = vadd.f32 %v6078, %v6106
    %v6108 = vpop.f32.mrf.mxu0
    %v6109 = vadd.f32 %v6080, %v6108
    %6110 = vmatmul.bf16.gmra.mxu0 %v3311
    %v6111 = vpop.f32.mrf.mxu0
    %v6112 = vadd.f32 %v6083, %v6111
    %v6113 = vpop.f32.mrf.mxu0
    %v6114 = vadd.f32 %v6085, %v6113
    %6115 = vdwg.mxu0
    %6116 = vmatpush.bf16.msra.mxu0 %v4837
    %6117 = vmatpush.bf16.msra.mxu0 %v4834
    %6118 = vmatpush.bf16.msra.mxu0 %v4831
    %6119 = vmatpush.bf16.msra.mxu0 %v4828
    %6120 = vmatpush.bf16.msra.mxu0 %v4825
    %6121 = vmatpush.bf16.msra.mxu0 %v4822
    %6122 = vmatpush.bf16.msra.mxu0 %v4819
    %6123 = vmatpush.bf16.msra.mxu0 %v4816
    %6124 = vmatmul.bf16.gmra.mxu0 %v3276
    %v6125 = vpop.f32.mrf.mxu0
    %v6126 = vadd.f32 %v6097, %v6125
    %v6127 = vpop.f32.mrf.mxu0
    %v6128 = vadd.f32 %v6099, %v6127
    %6129 = vmatmul.bf16.gmra.mxu0 %v3288
    %v6130 = vpop.f32.mrf.mxu0
    %v6131 = vadd.f32 %v6102, %v6130
    %v6132 = vpop.f32.mrf.mxu0
    %v6133 = vadd.f32 %v6104, %v6132
    %6134 = vmatmul.bf16.gmra.mxu0 %v3300
    %v6135 = vpop.f32.mrf.mxu0
    %v6136 = vadd.f32 %v6107, %v6135
    %v6137 = vpop.f32.mrf.mxu0
    %v6138 = vadd.f32 %v6109, %v6137
    %6139 = vmatmul.bf16.gmra.mxu0 %v3312
    %v6140 = vpop.f32.mrf.mxu0
    %v6141 = vadd.f32 %v6112, %v6140
    %v6142 = vpop.f32.mrf.mxu0
    %v6143 = vadd.f32 %v6114, %v6142
    %6144 = vdwg.mxu0
    %6145 = vmatpush.bf16.msra.mxu0 %v4861
    %6146 = vmatpush.bf16.msra.mxu0 %v4858
    %6147 = vmatpush.bf16.msra.mxu0 %v4855
    %6148 = vmatpush.bf16.msra.mxu0 %v4852
    %6149 = vmatpush.bf16.msra.mxu0 %v4849
    %6150 = vmatpush.bf16.msra.mxu0 %v4846
    %6151 = vmatpush.bf16.msra.mxu0 %v4843
    %6152 = vmatpush.bf16.msra.mxu0 %v4840
    %6153 = vmatmul.bf16.gmra.mxu0 %v3277
    %v6154 = vpop.f32.mrf.mxu0
    %v6155 = vadd.f32 %v6126, %v6154
    %v6156 = vpop.f32.mrf.mxu0
    %v6157 = vadd.f32 %v6128, %v6156
    %6158 = vmatmul.bf16.gmra.mxu0 %v3289
    %v6159 = vpop.f32.mrf.mxu0
    %v6160 = vadd.f32 %v6131, %v6159
    %v6161 = vpop.f32.mrf.mxu0
    %v6162 = vadd.f32 %v6133, %v6161
    %6163 = vmatmul.bf16.gmra.mxu0 %v3301
    %v6164 = vpop.f32.mrf.mxu0
    %v6165 = vadd.f32 %v6136, %v6164
    %v6166 = vpop.f32.mrf.mxu0
    %v6167 = vadd.f32 %v6138, %v6166
    %6168 = vmatmul.bf16.gmra.mxu0 %v3313
    %v6169 = vpop.f32.mrf.mxu0
    %v6170 = vadd.f32 %v6141, %v6169
    %v6171 = vpop.f32.mrf.mxu0
    %v6172 = vadd.f32 %v6143, %v6171
    %6173 = vdwg.mxu0
    %6174 = vmatpush.bf16.msra.mxu0 %v4885
    %6175 = vmatpush.bf16.msra.mxu0 %v4882
    %6176 = vmatpush.bf16.msra.mxu0 %v4879
    %6177 = vmatpush.bf16.msra.mxu0 %v4876
    %6178 = vmatpush.bf16.msra.mxu0 %v4873
    %6179 = vmatpush.bf16.msra.mxu0 %v4870
    %6180 = vmatpush.bf16.msra.mxu0 %v4867
    %6181 = vmatpush.bf16.msra.mxu0 %v4864
    %6182 = vmatmul.bf16.gmra.mxu0 %v3278
    %v6183 = vpop.f32.mrf.mxu0
    %v6184 = vadd.f32 %v6155, %v6183
    %v6185 = vpop.f32.mrf.mxu0
    %v6186 = vadd.f32 %v6157, %v6185
    %6187 = vmatmul.bf16.gmra.mxu0 %v3290
    %v6188 = vpop.f32.mrf.mxu0
    %v6189 = vadd.f32 %v6160, %v6188
    %v6190 = vpop.f32.mrf.mxu0
    %v6191 = vadd.f32 %v6162, %v6190
    %6192 = vmatmul.bf16.gmra.mxu0 %v3302
    %v6193 = vpop.f32.mrf.mxu0
    %v6194 = vadd.f32 %v6165, %v6193
    %v6195 = vpop.f32.mrf.mxu0
    %v6196 = vadd.f32 %v6167, %v6195
    %6197 = vmatmul.bf16.gmra.mxu0 %v3314
    %v6198 = vpop.f32.mrf.mxu0
    %v6199 = vadd.f32 %v6170, %v6198
    %v6200 = vpop.f32.mrf.mxu0
    %v6201 = vadd.f32 %v6172, %v6200
    %6202 = vdwg.mxu0
    %6203 = vmatpush.bf16.msra.mxu0 %v4909
    %6204 = vmatpush.bf16.msra.mxu0 %v4906
    %6205 = vmatpush.bf16.msra.mxu0 %v4903
    %6206 = vmatpush.bf16.msra.mxu0 %v4900
    %6207 = vmatpush.bf16.msra.mxu0 %v4897
    %6208 = vmatpush.bf16.msra.mxu0 %v4894
    %6209 = vmatpush.bf16.msra.mxu0 %v4891
    %6210 = vmatpush.bf16.msra.mxu0 %v4888
    %6211 = vmatmul.bf16.gmra.mxu0 %v3279
    %v6212 = vpop.f32.mrf.mxu0
    %v6213 = vadd.f32 %v6184, %v6212
    %v6214 = vpop.f32.mrf.mxu0
    %v6215 = vadd.f32 %v6186, %v6214
    %6216 = vmatmul.bf16.gmra.mxu0 %v3291
    %v6217 = vpop.f32.mrf.mxu0
    %v6218 = vadd.f32 %v6189, %v6217
    %v6219 = vpop.f32.mrf.mxu0
    %v6220 = vadd.f32 %v6191, %v6219
    %6221 = vmatmul.bf16.gmra.mxu0 %v3303
    %v6222 = vpop.f32.mrf.mxu0
    %v6223 = vadd.f32 %v6194, %v6222
    %v6224 = vpop.f32.mrf.mxu0
    %v6225 = vadd.f32 %v6196, %v6224
    %6226 = vmatmul.bf16.gmra.mxu0 %v3315
    %v6227 = vpop.f32.mrf.mxu0
    %v6228 = vadd.f32 %v6199, %v6227
    %v6229 = vpop.f32.mrf.mxu0
    %v6230 = vadd.f32 %v6201, %v6229
    %6231 = vdwg.mxu0
    %6232 = vmatpush.bf16.msra.mxu0 %v4933
    %6233 = vmatpush.bf16.msra.mxu0 %v4930
    %6234 = vmatpush.bf16.msra.mxu0 %v4927
    %6235 = vmatpush.bf16.msra.mxu0 %v4924
    %6236 = vmatpush.bf16.msra.mxu0 %v4921
    %6237 = vmatpush.bf16.msra.mxu0 %v4918
    %6238 = vmatpush.bf16.msra.mxu0 %v4915
    %6239 = vmatpush.bf16.msra.mxu0 %v4912
    %6240 = vmatmul.bf16.gmra.mxu0 %v3280
    %v6241 = vpop.f32.mrf.mxu0
    %v6242 = vadd.f32 %v6213, %v6241
    %v6243 = vpop.f32.mrf.mxu0
    %v6244 = vadd.f32 %v6215, %v6243
    %6245 = vmatmul.bf16.gmra.mxu0 %v3292
    %v6246 = vpop.f32.mrf.mxu0
    %v6247 = vadd.f32 %v6218, %v6246
    %v6248 = vpop.f32.mrf.mxu0
    %v6249 = vadd.f32 %v6220, %v6248
    %6250 = vmatmul.bf16.gmra.mxu0 %v3304
    %v6251 = vpop.f32.mrf.mxu0
    %v6252 = vadd.f32 %v6223, %v6251
    %v6253 = vpop.f32.mrf.mxu0
    %v6254 = vadd.f32 %v6225, %v6253
    %6255 = vmatmul.bf16.gmra.mxu0 %v3316
    %v6256 = vpop.f32.mrf.mxu0
    %v6257 = vadd.f32 %v6228, %v6256
    %v6258 = vpop.f32.mrf.mxu0
    %v6259 = vadd.f32 %v6230, %v6258
    %6260 = vdwg.mxu0
    %6261 = vmatpush.bf16.msra.mxu0 %v4957
    %6262 = vmatpush.bf16.msra.mxu0 %v4954
    %6263 = vmatpush.bf16.msra.mxu0 %v4951
    %6264 = vmatpush.bf16.msra.mxu0 %v4948
    %6265 = vmatpush.bf16.msra.mxu0 %v4945
    %6266 = vmatpush.bf16.msra.mxu0 %v4942
    %6267 = vmatpush.bf16.msra.mxu0 %v4939
    %6268 = vmatpush.bf16.msra.mxu0 %v4936
    %6269 = vmatmul.bf16.gmra.mxu0 %v3281
    %v6270 = vpop.f32.mrf.mxu0
    %v6271 = vadd.f32 %v6242, %v6270
    %v6272 = vpop.f32.mrf.mxu0
    %v6273 = vadd.f32 %v6244, %v6272
    %6274 = vmatmul.bf16.gmra.mxu0 %v3293
    %v6275 = vpop.f32.mrf.mxu0
    %v6276 = vadd.f32 %v6247, %v6275
    %v6277 = vpop.f32.mrf.mxu0
    %v6278 = vadd.f32 %v6249, %v6277
    %6279 = vmatmul.bf16.gmra.mxu0 %v3305
    %v6280 = vpop.f32.mrf.mxu0
    %v6281 = vadd.f32 %v6252, %v6280
    %v6282 = vpop.f32.mrf.mxu0
    %v6283 = vadd.f32 %v6254, %v6282
    %6284 = vmatmul.bf16.gmra.mxu0 %v3317
    %v6285 = vpop.f32.mrf.mxu0
    %v6286 = vadd.f32 %v6257, %v6285
    %v6287 = vpop.f32.mrf.mxu0
    %v6288 = vadd.f32 %v6259, %v6287
    %6289 = vdwg.mxu0
    %v6290 = vadd.f32 %v27, %v5575
    %v6291 = vadd.f32 %v28, %v5923
    %v6292 = vadd.f32 %v29, %v6271
    %v6293 = vadd.f32 %v30, %v5577
    %v6294 = vadd.f32 %v31, %v5925
    %v6295 = vadd.f32 %v32, %v6273
    %v6296 = vadd.f32 %v33, %v5580
    %v6297 = vadd.f32 %v34, %v5928
    %v6298 = vadd.f32 %v35, %v6276
    %v6299 = vadd.f32 %v36, %v5582
    %v6300 = vadd.f32 %v37, %v5930
    %v6301 = vadd.f32 %v38, %v6278
    %v6302 = vadd.f32 %v39, %v5585
    %v6303 = vadd.f32 %v40, %v5933
    %v6304 = vadd.f32 %v41, %v6281
    %v6305 = vadd.f32 %v42, %v5587
    %v6306 = vadd.f32 %v43, %v5935
    %v6307 = vadd.f32 %v44, %v6283
    %v6308 = vadd.f32 %v45, %v5590
    %v6309 = vadd.f32 %v46, %v5938
    %v6310 = vadd.f32 %v47, %v6286
    %v6311 = vadd.f32 %v48, %v5592
    %v6312 = vadd.f32 %v49, %v5940
    %v6313 = vadd.f32 %v50, %v6288
    %6314 = vst [vmem:[#allocation2] sm:$0xff] %v6290
    %6315 = vst [vmem:[#allocation2 + $0x8] sm:$0xff] %v6291
    %6316 = vst [vmem:[#allocation2 + $0x10] sm:$0xff] %v6292
    %6317 = vst [vmem:[#allocation2 + $0x18] sm:$0xff] %v6293
    %6318 = vst [vmem:[#allocation2 + $0x20] sm:$0xff] %v6294
    %6319 = vst [vmem:[#allocation2 + $0x28] sm:$0xff] %v6295
    %6320 = vst [vmem:[#allocation2 + $0x30] sm:$0xff] %v6296
    %6321 = vst [vmem:[#allocation2 + $0x38] sm:$0xff] %v6297
    %6322 = vst [vmem:[#allocation2 + $0x40] sm:$0xff] %v6298
    %6323 = vst [vmem:[#allocation2 + $0x48] sm:$0xff] %v6299
    %6324 = vst [vmem:[#allocation2 + $0x50] sm:$0xff] %v6300
    %6325 = vst [vmem:[#allocation2 + $0x58] sm:$0xff] %v6301
    %6326 = vst [vmem:[#allocation2 + $0x60] sm:$0xff] %v6302
    %6327 = vst [vmem:[#allocation2 + $0x68] sm:$0xff] %v6303
    %6328 = vst [vmem:[#allocation2 + $0x70] sm:$0xff] %v6304
    %6329 = vst [vmem:[#allocation2 + $0x78] sm:$0xff] %v6305
    %6330 = vst [vmem:[#allocation2 + $0x80] sm:$0xff] %v6306
    %6331 = vst [vmem:[#allocation2 + $0x88] sm:$0xff] %v6307
    %6332 = vst [vmem:[#allocation2 + $0x90] sm:$0xff] %v6308
    %6333 = vst [vmem:[#allocation2 + $0x98] sm:$0xff] %v6309
    %6334 = vst [vmem:[#allocation2 + $0xa0] sm:$0xff] %v6310
    %6335 = vst [vmem:[#allocation2 + $0xa8] sm:$0xff] %v6311
    %6336 = vst [vmem:[#allocation2 + $0xb0] sm:$0xff] %v6312
    %6337 = vst [vmem:[#allocation2 + $0xb8] sm:$0xff] %v6313
    // Predicated region
    $region30: #{block_forward.3} parent=1 // pred_check
      _
    $region31: #{block_forward.3} parent=1 // pred_check_branch
      %6339 = sbr.rel (0) target = $region33
    $region32: #{block_forward.3} parent=1 // pred_region
      %6341 = vsyncadd [#allocation3], 0
      %s6342 = sshll.u32 [#allocation2], 4
      %s6343 = int_to_ptr.vmem [resolvable:$true] %s6342
      %s6344 = sshll.u32 %s7, 4
      %s6345 = int_to_ptr.hbm [resolvable:$true] %s6344
      %6350 = dma.vmem_to_hbm [thread:$0]  %s6343, 3072, %s6345, [#allocation3], 384, 384, 24
    $region33: #{block_forward.3} parent=1 // pred_fallthru
      _
    // Predicated region
    $region34: #{block_forward.3} parent=1 // pred_check
      _
    $region35: #{block_forward.3} parent=1 // pred_check_branch
      %6352 = sbr.rel (0) target = $region37
    $region36: #{block_forward.3} parent=1 // pred_region
      %6354 = dma.done [#allocation3], 3072
    $region37: #{block_forward.3} parent=1 // pred_fallthru
      _
    %6355 = vsyncpa [#allocation3], 1

</llo_original>
